<compile_context>
chip_gen: v6e
topology: v6e:2x2x1
jax: 0.10.0
libtpu: 0.0.40
codegen_flags: <defaults>
</compile_context>

<pallas_src>
import functools

import jax
import jax.numpy as jnp
import numpy as np
from jax.experimental import pallas as pl
from jax.experimental.pallas import tpu as pltpu


KERNEL_PARAM_ORDER = (
    "conv1_w", "conv1_b",
    "b0_w", "b0_b",
    "b1a_w", "b1a_b", "b1b_w", "b1b_b",
    "b2a_w", "b2a_b", "b2b_w", "b2b_b",
    "b3a_w", "b3a_b", "b3b_w", "b3b_b",
    "att1_w", "att1_b", "att2_w", "att2_b",
    "mlp1_w", "mlp1_b", "mlp2_w", "mlp2_b",
)


def _gelu_tanh(v):
    # TODO(synk): PyTorch nn.GELU() default is the exact erf form; the tanh
    # approximation is used since erf has no guaranteed Mosaic lowering.
    c = 0.7978845608028654  # sqrt(2/pi)
    return 0.5 * v * (1.0 + jnp.tanh(c * (v + 0.044715 * v * v * v)))


def _sigmoid(v):
    return 1.0 / (1.0 + jnp.exp(-v))


# ------------------------------- kernel --------------------------------------


def _mscablock_kernel(
    x_ref,
    conv1_w, conv1_b,
    b0_w, b0_b,
    b1a_w, b1a_b, b1b_w, b1b_b,
    b2a_w, b2a_b, b2b_w, b2b_b,
    b3a_w, b3a_b, b3b_w, b3b_b,
    att1_w, att1_b, att2_w, att2_b,
    mlp1_w, mlp1_b, mlp2_w, mlp2_b,
    o_ref,
    *, W,
):
    x = x_ref[0]                       # (C, H*W) float32, one batch element
    HW = x.shape[1]

    def dwconv(inp, w_ref, b_ref, kh, kw, acc=None):
        """Depthwise kh x kw conv, 'same' zero padding.

        Weights arrive pre-replicated across the lane axis with the boundary
        masks baked in (w_ref: (kh*kw, C, HW); b_ref: (C, HW), position-
        dependent where needed), so each tap is roll + load + fma only.
        """
        ph, pw = kh // 2, kw // 2
        acc = b_ref[...] if acc is None else acc + b_ref[...]
        for i in range(kh):
            for j in range(kw):
                off = (i - ph) * W + (j - pw)
                # shifted[p] = inp[p + off] (mod HW); wrap-around garbage is
                # killed by the zeros baked into the replicated weights.
                src = inp if off == 0 else pltpu.roll(inp, (-off) % HW, 1)
                acc = acc + w_ref[i * kw + j] * src
        return acc

    # ---- conv1: 3x3 depthwise. norm1 scale folded into the weights, norm1
    # shift folded into the position-dependent bias (exact at boundaries). ----
    y = dwconv(x, conv1_w, conv1_b, 3, 3)

    # ---- MSCA strip branches: share the vertical rolls of y across the
    # 7x1 / 11x1 / 21x1 vertical halves (21 rolls instead of 39). ----
    v1 = b1a_b[...]
    v2 = b2a_b[...]
    v3 = b3a_b[...]
    for di in range(-10, 11):
        off = di * W
        src = y if off == 0 else pltpu.roll(y, (-off) % HW, 1)
        v3 = v3 + b3a_w[di + 10] * src
        if abs(di) <= 5:
            v2 = v2 + b2a_w[di + 5] * src
        if abs(di) <= 3:
            v1 = v1 + b1a_w[di + 3] * src

    # Horizontal halves accumulate straight into s; the 5x5 branch runs last
    # so v1/v2/v3 are dead by then (smaller live set, fewer spills).
    s = dwconv(v1, b1b_w, b1b_b, 1, 7)
    s = dwconv(v2, b2b_w, b2b_b, 1, 11, acc=s)
    s = dwconv(v3, b3b_w, b3b_b, 1, 21, acc=s)
    s = dwconv(y, b0_w, b0_b, 5, 5, acc=s)

    # ---- attention: (conv_fusion ∘ att-1x1 ∘ att-BN) folded into one matmul,
    # then GELU -> 1x1 -> sigmoid (EUP approx reciprocal). ----
    a = jnp.dot(att1_w[...], s, preferred_element_type=jnp.float32) + att1_b[...]
    a = _gelu_tanh(a)
    a = jnp.dot(att2_w[...], a, preferred_element_type=jnp.float32) + att2_b[...]
    att = pl.reciprocal(1.0 + jnp.exp(-a), approx=True)

    # ---- residual 1: x + MSCA(conv1(norm1(x))) where MSCA returns y * att ----
    x1 = x + y * att

    # ---- MLP (norm2 folded into fc1): 1x1 -> GELU -> 1x1 ----
    z = jnp.dot(mlp1_w[...], x1, preferred_element_type=jnp.float32) + mlp1_b[...]
    z = _gelu_tanh(z)
    z = jnp.dot(mlp2_w[...], z, preferred_element_type=jnp.float32) + mlp2_b[...]

    # ---- residual 2 (single lane-dense store: last dim = H*W, mult of 128) ----
    o_ref[0] = x1 + z


# --------------------------- host-side weight prep ---------------------------


def _valid_masks(kh, kw, H, W):
    """(kh*kw, H*W) float32: 1 where the tap's source pixel is in-bounds."""
    hh = np.arange(H * W) // W
    ww = np.arange(H * W) % W
    masks = []
    for i in range(kh):
        for j in range(kw):
            di, dj = i - kh // 2, j - kw // 2
            m = ((hh + di >= 0) & (hh + di < H) &
                 (ww + dj >= 0) & (ww + dj < W))
            masks.append(m.astype(np.float32))
    return np.stack(masks, 0)


def _rep_dw(w, b, H, W, scale=None, shift=None):
    """Replicate a depthwise conv across the lane axis with masks baked in.

    w: (kh, kw, C), b: (C,)-like.  Returns
      w_rep: (kh*kw, C, H*W)  — per-tap weight, zeroed where the tap is OOB,
                                optionally pre-scaled by a preceding BN scale.
      b_rep: (C, H*W)         — bias, plus (if shift given) the exact
                                position-dependent contribution of a preceding
                                BN shift through the in-bounds taps only.
    """
    kh, kw, C = w.shape
    HW = H * W
    masks = jnp.asarray(_valid_masks(kh, kw, H, W), dtype=jnp.float32)  # (taps, HW)
    w_flat = w.reshape(kh * kw, C).astype(jnp.float32)                  # (taps, C)
    w_rep = w_flat[:, :, None] * masks[:, None, :]                      # (taps, C, HW)

    b_rep = jnp.broadcast_to(b.reshape(-1)[:, None].astype(jnp.float32), (C, HW))
    if shift is not None:
        # shift flows through the (unscaled) in-bounds taps only — exact.
        b_rep = b_rep + shift.reshape(-1)[:, None] * jnp.sum(w_rep, axis=0)
    if scale is not None:
        w_rep = w_rep * scale.reshape(1, C, 1)
    return w_rep.astype(jnp.float32), b_rep.astype(jnp.float32)


def prepare_params(p, H, W):
    """One-time weight prep (call once, outside the jitted forward)."""
    C = p["conv1_w"].shape[-1]
    C4 = p["att1_w"].shape[-1]
    q = {}

    n1s, n1t = p["n1_scale"].reshape(-1), p["n1_shift"].reshape(-1)
    q["conv1_w"], q["conv1_b"] = _rep_dw(p["conv1_w"], p["conv1_b"], H, W,
                                         scale=n1s, shift=n1t)
    q["b0_w"], q["b0_b"] = _rep_dw(p["b0_w"], p["b0_b"], H, W)
    q["b1a_w"], q["b1a_b"] = _rep_dw(p["b1a_w"], p["b1a_b"], H, W)
    q["b1b_w"], q["b1b_b"] = _rep_dw(p["b1b_w"], p["b1b_b"], H, W)
    q["b2a_w"], q["b2a_b"] = _rep_dw(p["b2a_w"], p["b2a_b"], H, W)
    q["b2b_w"], q["b2b_b"] = _rep_dw(p["b2b_w"], p["b2b_b"], H, W)
    q["b3a_w"], q["b3a_b"] = _rep_dw(p["b3a_w"], p["b3a_b"], H, W)
    q["b3b_w"], q["b3b_b"] = _rep_dw(p["b3b_w"], p["b3b_b"], H, W)

    # conv_fusion -> att 1x1 -> att BN composed into a single (C/4, C) matmul.
    # Valid: conv_fusion's output is consumed only by the attention branch.
    A_f, b_f = p["fuse_w"].T, p["fuse_b"].reshape(-1)
    s_bn, t_bn = p["attbn_scale"].reshape(-1), p["attbn_shift"].reshape(-1)
    A1 = p["att1_w"].T * s_bn[:, None]
    b1 = p["att1_b"].reshape(-1) * s_bn + t_bn
    q["att1_w"] = A1 @ A_f
    q["att1_b"] = (A1 @ b_f + b1).reshape(C4, 1)
    q["att2_w"] = p["att2_w"].T
    q["att2_b"] = p["att2_b"].reshape(C, 1)

    # norm2 folded into the MLP's first 1x1 (per-channel affine, exact).
    n2s, n2t = p["n2_scale"].reshape(-1), p["n2_shift"].reshape(-1)
    A_m1 = p["mlp1_w"].T
    q["mlp1_w"] = A_m1 * n2s[None, :]
    q["mlp1_b"] = (A_m1 @ n2t + p["mlp1_b"].reshape(-1)).reshape(-1, 1)
    q["mlp2_w"] = p["mlp2_w"].T
    q["mlp2_b"] = p["mlp2_b"].reshape(C, 1)

    return {k: jnp.asarray(v, jnp.float32) for k, v in q.items()}


# -------------------------------- wrapper -------------------------------------


def _full_spec(arr):
    nd = arr.ndim
    return pl.BlockSpec(arr.shape, lambda n, _nd=nd: (0,) * _nd)


@jax.jit
def msca_block_forward(x_nchw, prepared):
    # NCHW kept end-to-end: (N,C,H,W) -> (N,C,H*W) is a free reshape that puts
    # H*W on the 128-lane axis; no transposes around the kernel.
    N, C, H, W = x_nchw.shape
    x = x_nchw.reshape(N, C, H * W).astype(jnp.float32)
    flat = [prepared[k] for k in KERNEL_PARAM_ORDER]

    in_specs = [pl.BlockSpec((1, C, H * W), lambda n: (n, 0, 0))]
    in_specs += [_full_spec(t) for t in flat]

    out = pl.pallas_call(
        functools.partial(_mscablock_kernel, W=W),
        out_shape=jax.ShapeDtypeStruct((N, C, H * W), jnp.float32),
        grid=(N,),
        in_specs=in_specs,
        out_specs=pl.BlockSpec((1, C, H * W), lambda n: (n, 0, 0)),
        compiler_params=pltpu.CompilerParams(
            dimension_semantics=("parallel",),
            vmem_limit_bytes=32 * 1024 * 1024),
    )(x, *flat)

    return out.reshape(N, C, H, W)


# ---------------- deterministic parameter initialization ----------------


def init_params(key, dim):
    d4 = dim // 4
    keys = iter(jax.random.split(key, 64))

    def w(shape, scale=0.1):
        return scale * jax.random.normal(next(keys), shape, dtype=jnp.float32)

    def bias(c):
        return w((1, c), scale=0.05)

    def bn(c):  # fold eval-mode BatchNorm into scale/shift
        gamma = 1.0 + 0.1 * jax.random.normal(next(keys), (1, c), jnp.float32)
        beta = 0.05 * jax.random.normal(next(keys), (1, c), jnp.float32)
        mean = 0.1 * jax.random.normal(next(keys), (1, c), jnp.float32)
        var = 0.5 + jax.random.uniform(next(keys), (1, c), jnp.float32)
        scale = gamma * jax.lax.rsqrt(var + 1e-5)
        shift = beta - mean * scale
        return scale, shift

    p = {}
    p["n1_scale"], p["n1_shift"] = bn(dim)
    p["conv1_w"], p["conv1_b"] = w((3, 3, dim)), bias(dim)
    p["b0_w"], p["b0_b"] = w((5, 5, dim)), bias(dim)
    p["b1a_w"], p["b1a_b"] = w((7, 1, dim)), bias(dim)
    p["b1b_w"], p["b1b_b"] = w((1, 7, dim)), bias(dim)
    p["b2a_w"], p["b2a_b"] = w((11, 1, dim)), bias(dim)
    p["b2b_w"], p["b2b_b"] = w((1, 11, dim)), bias(dim)
    p["b3a_w"], p["b3a_b"] = w((21, 1, dim)), bias(dim)
    p["b3b_w"], p["b3b_b"] = w((1, 21, dim)), bias(dim)
    p["fuse_w"], p["fuse_b"] = w((dim, dim)), bias(dim)
    p["att1_w"], p["att1_b"] = w((dim, d4)), bias(d4)
    p["attbn_scale"], p["attbn_shift"] = bn(d4)
    p["att2_w"], p["att2_b"] = w((d4, dim)), bias(dim)
    p["n2_scale"], p["n2_shift"] = bn(dim)
    p["mlp1_w"], p["mlp1_b"] = w((dim, 4 * dim)), bias(4 * dim)
    p["mlp2_w"], p["mlp2_b"] = w((4 * dim, dim)), bias(dim)
    return p


# -------- plain-JAX reference (independent convs, raw/unfolded params) --------


def reference_forward(x_nchw, p):
    x = jnp.transpose(x_nchw, (0, 2, 3, 1)).astype(jnp.float32)   # NHWC

    def dw(xx, w, b):
        kh, kw, c = w.shape
        out = jax.lax.conv_general_dilated(
            xx, w.reshape(kh, kw, 1, c),
            window_strides=(1, 1),
            padding=((kh // 2, kh // 2), (kw // 2, kw // 2)),
            dimension_numbers=("NHWC", "HWIO", "NHWC"),
            feature_group_count=c)
        return out + b.reshape(1, 1, 1, c)

    def pw(xx, w, b):
        return jnp.einsum("nhwc,cd->nhwd", xx, w) + b.reshape(1, 1, 1, -1)

    def bn(xx, s, t):
        return xx * s.reshape(1, 1, 1, -1) + t.reshape(1, 1, 1, -1)

    shortcut = x
    y = bn(x, p["n1_scale"], p["n1_shift"])
    y = dw(y, p["conv1_w"], p["conv1_b"])
    s = dw(y, p["b0_w"], p["b0_b"])
    s = s + dw(dw(y, p["b1a_w"], p["b1a_b"]), p["b1b_w"], p["b1b_b"])
    s = s + dw(dw(y, p["b2a_w"], p["b2a_b"]), p["b2b_w"], p["b2b_b"])
    s = s + dw(dw(y, p["b3a_w"], p["b3a_b"]), p["b3b_w"], p["b3b_b"])
    s = pw(s, p["fuse_w"], p["fuse_b"])
    a = pw(s, p["att1_w"], p["att1_b"])
    a = bn(a, p["attbn_scale"], p["attbn_shift"])
    a = _gelu_tanh(a)
    a = pw(a, p["att2_w"], p["att2_b"])
    att = _sigmoid(a)
    x1 = shortcut + y * att
    z = bn(x1, p["n2_scale"], p["n2_shift"])
    z = pw(z, p["mlp1_w"], p["mlp1_b"])
    z = _gelu_tanh(z)
    z = pw(z, p["mlp2_w"], p["mlp2_b"])
    out = x1 + z
    return jnp.transpose(out, (0, 3, 1, 2))


if __name__ == "__main__":
    N, C, H, W = 2, 32, 16, 16          # dim=32 so att hidden = 8, mlp hidden = 128
    key = jax.random.PRNGKey(0)
    k_x, k_p = jax.random.split(key)
    x = jax.random.normal(k_x, (N, C, H, W), dtype=jnp.float32)   # NCHW like PyTorch
    params = init_params(k_p, C)

    prepared = prepare_params(params, H, W)    # one-time prep, outside the jit path
    out = jax.block_until_ready(msca_block_forward(x, prepared))
    ref = jax.block_until_ready(reference_forward(x, params))

    assert out.shape == (N, C, H, W)
    assert bool(jnp.all(jnp.isfinite(out)))
    max_err = float(jnp.max(jnp.abs(out - ref)))
    assert max_err < 3e-2, f"kernel/reference mismatch, max abs err = {max_err}"
    print("KERNEL_OK")
</pallas_src>

<mosaic_0001>
module attributes {stable_mosaic.version = 11 : i64} {
  func.func @_mscablock_kernel(%arg0: i32, %arg1: memref<1x32x256xf32, #tpu.memory_space<vmem>>, %arg2: memref<9x32x256xf32, #tpu.memory_space<vmem>>, %arg3: memref<32x256xf32, #tpu.memory_space<vmem>>, %arg4: memref<25x32x256xf32, #tpu.memory_space<vmem>>, %arg5: memref<32x256xf32, #tpu.memory_space<vmem>>, %arg6: memref<7x32x256xf32, #tpu.memory_space<vmem>>, %arg7: memref<32x256xf32, #tpu.memory_space<vmem>>, %arg8: memref<7x32x256xf32, #tpu.memory_space<vmem>>, %arg9: memref<32x256xf32, #tpu.memory_space<vmem>>, %arg10: memref<11x32x256xf32, #tpu.memory_space<vmem>>, %arg11: memref<32x256xf32, #tpu.memory_space<vmem>>, %arg12: memref<11x32x256xf32, #tpu.memory_space<vmem>>, %arg13: memref<32x256xf32, #tpu.memory_space<vmem>>, %arg14: memref<21x32x256xf32, #tpu.memory_space<vmem>>, %arg15: memref<32x256xf32, #tpu.memory_space<vmem>>, %arg16: memref<21x32x256xf32, #tpu.memory_space<vmem>>, %arg17: memref<32x256xf32, #tpu.memory_space<vmem>>, %arg18: memref<8x32xf32, #tpu.memory_space<vmem>>, %arg19: memref<8x1xf32, #tpu.memory_space<vmem>>, %arg20: memref<32x8xf32, #tpu.memory_space<vmem>>, %arg21: memref<32x1xf32, #tpu.memory_space<vmem>>, %arg22: memref<128x32xf32, #tpu.memory_space<vmem>>, %arg23: memref<128x1xf32, #tpu.memory_space<vmem>>, %arg24: memref<32x128xf32, #tpu.memory_space<vmem>>, %arg25: memref<32x1xf32, #tpu.memory_space<vmem>>, %arg26: memref<1x32x256xf32, #tpu.memory_space<vmem>>) attributes {dimension_semantics = [#tpu.dimension_semantics<parallel>], iteration_bounds = array<i64: 2>, scalar_prefetch = 0 : i64, scratch_operands = 0 : i64, tpu.core_type = #tpu.core_type<tc>, window_params = [{transform_indices = @transform_0, window_bounds = array<i64: 1, 32, 256>}, {pipeline_mode = #tpu.pipeline_mode<synchronous>, transform_indices = @transform_1, window_bounds = array<i64: 9, 32, 256>}, {pipeline_mode = #tpu.pipeline_mode<synchronous>, transform_indices = @transform_2, window_bounds = array<i64: 32, 256>}, {pipeline_mode = #tpu.pipeline_mode<synchronous>, transform_indices = @transform_3, window_bounds = array<i64: 25, 32, 256>}, {pipeline_mode = #tpu.pipeline_mode<synchronous>, transform_indices = @transform_4, window_bounds = array<i64: 32, 256>}, {pipeline_mode = #tpu.pipeline_mode<synchronous>, transform_indices = @transform_5, window_bounds = array<i64: 7, 32, 256>}, {pipeline_mode = #tpu.pipeline_mode<synchronous>, transform_indices = @transform_6, window_bounds = array<i64: 32, 256>}, {pipeline_mode = #tpu.pipeline_mode<synchronous>, transform_indices = @transform_7, window_bounds = array<i64: 7, 32, 256>}, {pipeline_mode = #tpu.pipeline_mode<synchronous>, transform_indices = @transform_8, window_bounds = array<i64: 32, 256>}, {pipeline_mode = #tpu.pipeline_mode<synchronous>, transform_indices = @transform_9, window_bounds = array<i64: 11, 32, 256>}, {pipeline_mode = #tpu.pipeline_mode<synchronous>, transform_indices = @transform_10, window_bounds = array<i64: 32, 256>}, {pipeline_mode = #tpu.pipeline_mode<synchronous>, transform_indices = @transform_11, window_bounds = array<i64: 11, 32, 256>}, {pipeline_mode = #tpu.pipeline_mode<synchronous>, transform_indices = @transform_12, window_bounds = array<i64: 32, 256>}, {pipeline_mode = #tpu.pipeline_mode<synchronous>, transform_indices = @transform_13, window_bounds = array<i64: 21, 32, 256>}, {pipeline_mode = #tpu.pipeline_mode<synchronous>, transform_indices = @transform_14, window_bounds = array<i64: 32, 256>}, {pipeline_mode = #tpu.pipeline_mode<synchronous>, transform_indices = @transform_15, window_bounds = array<i64: 21, 32, 256>}, {pipeline_mode = #tpu.pipeline_mode<synchronous>, transform_indices = @transform_16, window_bounds = array<i64: 32, 256>}, {pipeline_mode = #tpu.pipeline_mode<synchronous>, transform_indices = @transform_17, window_bounds = array<i64: 8, 32>}, {pipeline_mode = #tpu.pipeline_mode<synchronous>, transform_indices = @transform_18, window_bounds = array<i64: 8, 1>}, {pipeline_mode = #tpu.pipeline_mode<synchronous>, transform_indices = @transform_19, window_bounds = array<i64: 32, 8>}, {pipeline_mode = #tpu.pipeline_mode<synchronous>, transform_indices = @transform_20, window_bounds = array<i64: 32, 1>}, {pipeline_mode = #tpu.pipeline_mode<synchronous>, transform_indices = @transform_21, window_bounds = array<i64: 128, 32>}, {pipeline_mode = #tpu.pipeline_mode<synchronous>, transform_indices = @transform_22, window_bounds = array<i64: 128, 1>}, {pipeline_mode = #tpu.pipeline_mode<synchronous>, transform_indices = @transform_23, window_bounds = array<i64: 32, 128>}, {pipeline_mode = #tpu.pipeline_mode<synchronous>, transform_indices = @transform_24, window_bounds = array<i64: 32, 1>}, {transform_indices = @transform_25, window_bounds = array<i64: 1, 32, 256>}]} {
    %c0 = arith.constant 0 : index
    %c0_0 = arith.constant 0 : index
    %c0_1 = arith.constant 0 : index
    %0 = vector.load %arg1[%c0, %c0_0, %c0_1] : memref<1x32x256xf32, #tpu.memory_space<vmem>>, vector<1x32x256xf32>
    %1 = vector.shape_cast %0 : vector<1x32x256xf32> to vector<32x256xf32>
    %c0_2 = arith.constant 0 : index
    %c0_3 = arith.constant 0 : index
    %2 = vector.load %arg3[%c0_2, %c0_3] : memref<32x256xf32, #tpu.memory_space<vmem>>, vector<32x256xf32>
    %c17_i32 = arith.constant 17 : i32
    %3 = tpu.dynamic_rotate %1 by %c17_i32 dim 1 : vector<32x256xf32>, i32 -> vector<32x256xf32>
    %c0_4 = arith.constant 0 : index
    %c0_5 = arith.constant 0 : index
    %c0_6 = arith.constant 0 : index
    %4 = vector.load %arg2[%c0_4, %c0_5, %c0_6] : memref<9x32x256xf32, #tpu.memory_space<vmem>>, vector<1x32x256xf32>
    %5 = vector.shape_cast %4 : vector<1x32x256xf32> to vector<32x256xf32>
    %6 = arith.mulf %5, %3 : vector<32x256xf32>
    %7 = arith.addf %2, %6 : vector<32x256xf32>
    %c16_i32 = arith.constant 16 : i32
    %8 = tpu.dynamic_rotate %1 by %c16_i32 dim 1 : vector<32x256xf32>, i32 -> vector<32x256xf32>
    %c1 = arith.constant 1 : index
    %c0_7 = arith.constant 0 : index
    %c0_8 = arith.constant 0 : index
    %9 = vector.load %arg2[%c1, %c0_7, %c0_8] : memref<9x32x256xf32, #tpu.memory_space<vmem>>, vector<1x32x256xf32>
    %10 = vector.shape_cast %9 : vector<1x32x256xf32> to vector<32x256xf32>
    %11 = arith.mulf %10, %8 : vector<32x256xf32>
    %12 = arith.addf %7, %11 : vector<32x256xf32>
    %c15_i32 = arith.constant 15 : i32
    %13 = tpu.dynamic_rotate %1 by %c15_i32 dim 1 : vector<32x256xf32>, i32 -> vector<32x256xf32>
    %c2 = arith.constant 2 : index
    %c0_9 = arith.constant 0 : index
    %c0_10 = arith.constant 0 : index
    %14 = vector.load %arg2[%c2, %c0_9, %c0_10] : memref<9x32x256xf32, #tpu.memory_space<vmem>>, vector<1x32x256xf32>
    %15 = vector.shape_cast %14 : vector<1x32x256xf32> to vector<32x256xf32>
    %16 = arith.mulf %15, %13 : vector<32x256xf32>
    %17 = arith.addf %12, %16 : vector<32x256xf32>
    %c1_i32 = arith.constant 1 : i32
    %18 = tpu.dynamic_rotate %1 by %c1_i32 dim 1 : vector<32x256xf32>, i32 -> vector<32x256xf32>
    %c3 = arith.constant 3 : index
    %c0_11 = arith.constant 0 : index
    %c0_12 = arith.constant 0 : index
    %19 = vector.load %arg2[%c3, %c0_11, %c0_12] : memref<9x32x256xf32, #tpu.memory_space<vmem>>, vector<1x32x256xf32>
    %20 = vector.shape_cast %19 : vector<1x32x256xf32> to vector<32x256xf32>
    %21 = arith.mulf %20, %18 : vector<32x256xf32>
    %22 = arith.addf %17, %21 : vector<32x256xf32>
    %c4 = arith.constant 4 : index
    %c0_13 = arith.constant 0 : index
    %c0_14 = arith.constant 0 : index
    %23 = vector.load %arg2[%c4, %c0_13, %c0_14] : memref<9x32x256xf32, #tpu.memory_space<vmem>>, vector<1x32x256xf32>
    %24 = vector.shape_cast %23 : vector<1x32x256xf32> to vector<32x256xf32>
    %25 = arith.mulf %24, %1 : vector<32x256xf32>
    %26 = arith.addf %22, %25 : vector<32x256xf32>
    %c255_i32 = arith.constant 255 : i32
    %27 = tpu.dynamic_rotate %1 by %c255_i32 dim 1 : vector<32x256xf32>, i32 -> vector<32x256xf32>
    %c5 = arith.constant 5 : index
    %c0_15 = arith.constant 0 : index
    %c0_16 = arith.constant 0 : index
    %28 = vector.load %arg2[%c5, %c0_15, %c0_16] : memref<9x32x256xf32, #tpu.memory_space<vmem>>, vector<1x32x256xf32>
    %29 = vector.shape_cast %28 : vector<1x32x256xf32> to vector<32x256xf32>
    %30 = arith.mulf %29, %27 : vector<32x256xf32>
    %31 = arith.addf %26, %30 : vector<32x256xf32>
    %c241_i32 = arith.constant 241 : i32
    %32 = tpu.dynamic_rotate %1 by %c241_i32 dim 1 : vector<32x256xf32>, i32 -> vector<32x256xf32>
    %c6 = arith.constant 6 : index
    %c0_17 = arith.constant 0 : index
    %c0_18 = arith.constant 0 : index
    %33 = vector.load %arg2[%c6, %c0_17, %c0_18] : memref<9x32x256xf32, #tpu.memory_space<vmem>>, vector<1x32x256xf32>
    %34 = vector.shape_cast %33 : vector<1x32x256xf32> to vector<32x256xf32>
    %35 = arith.mulf %34, %32 : vector<32x256xf32>
    %36 = arith.addf %31, %35 : vector<32x256xf32>
    %c240_i32 = arith.constant 240 : i32
    %37 = tpu.dynamic_rotate %1 by %c240_i32 dim 1 : vector<32x256xf32>, i32 -> vector<32x256xf32>
    %c7 = arith.constant 7 : index
    %c0_19 = arith.constant 0 : index
    %c0_20 = arith.constant 0 : index
    %38 = vector.load %arg2[%c7, %c0_19, %c0_20] : memref<9x32x256xf32, #tpu.memory_space<vmem>>, vector<1x32x256xf32>
    %39 = vector.shape_cast %38 : vector<1x32x256xf32> to vector<32x256xf32>
    %40 = arith.mulf %39, %37 : vector<32x256xf32>
    %41 = arith.addf %36, %40 : vector<32x256xf32>
    %c239_i32 = arith.constant 239 : i32
    %42 = tpu.dynamic_rotate %1 by %c239_i32 dim 1 : vector<32x256xf32>, i32 -> vector<32x256xf32>
    %c8 = arith.constant 8 : index
    %c0_21 = arith.constant 0 : index
    %c0_22 = arith.constant 0 : index
    %43 = vector.load %arg2[%c8, %c0_21, %c0_22] : memref<9x32x256xf32, #tpu.memory_space<vmem>>, vector<1x32x256xf32>
    %44 = vector.shape_cast %43 : vector<1x32x256xf32> to vector<32x256xf32>
    %45 = arith.mulf %44, %42 : vector<32x256xf32>
    %46 = arith.addf %41, %45 : vector<32x256xf32>
    %c0_23 = arith.constant 0 : index
    %c0_24 = arith.constant 0 : index
    %47 = vector.load %arg7[%c0_23, %c0_24] : memref<32x256xf32, #tpu.memory_space<vmem>>, vector<32x256xf32>
    %c0_25 = arith.constant 0 : index
    %c0_26 = arith.constant 0 : index
    %48 = vector.load %arg11[%c0_25, %c0_26] : memref<32x256xf32, #tpu.memory_space<vmem>>, vector<32x256xf32>
    %c0_27 = arith.constant 0 : index
    %c0_28 = arith.constant 0 : index
    %49 = vector.load %arg15[%c0_27, %c0_28] : memref<32x256xf32, #tpu.memory_space<vmem>>, vector<32x256xf32>
    %c160_i32 = arith.constant 160 : i32
    %50 = tpu.dynamic_rotate %46 by %c160_i32 dim 1 : vector<32x256xf32>, i32 -> vector<32x256xf32>
    %c0_29 = arith.constant 0 : index
    %c0_30 = arith.constant 0 : index
    %c0_31 = arith.constant 0 : index
    %51 = vector.load %arg14[%c0_29, %c0_30, %c0_31] : memref<21x32x256xf32, #tpu.memory_space<vmem>>, vector<1x32x256xf32>
    %52 = vector.shape_cast %51 : vector<1x32x256xf32> to vector<32x256xf32>
    %53 = arith.mulf %52, %50 : vector<32x256xf32>
    %54 = arith.addf %49, %53 : vector<32x256xf32>
    %c144_i32 = arith.constant 144 : i32
    %55 = tpu.dynamic_rotate %46 by %c144_i32 dim 1 : vector<32x256xf32>, i32 -> vector<32x256xf32>
    %c1_32 = arith.constant 1 : index
    %c0_33 = arith.constant 0 : index
    %c0_34 = arith.constant 0 : index
    %56 = vector.load %arg14[%c1_32, %c0_33, %c0_34] : memref<21x32x256xf32, #tpu.memory_space<vmem>>, vector<1x32x256xf32>
    %57 = vector.shape_cast %56 : vector<1x32x256xf32> to vector<32x256xf32>
    %58 = arith.mulf %57, %55 : vector<32x256xf32>
    %59 = arith.addf %54, %58 : vector<32x256xf32>
    %c128_i32 = arith.constant 128 : i32
    %60 = tpu.dynamic_rotate %46 by %c128_i32 dim 1 : vector<32x256xf32>, i32 -> vector<32x256xf32>
    %c2_35 = arith.constant 2 : index
    %c0_36 = arith.constant 0 : index
    %c0_37 = arith.constant 0 : index
    %61 = vector.load %arg14[%c2_35, %c0_36, %c0_37] : memref<21x32x256xf32, #tpu.memory_space<vmem>>, vector<1x32x256xf32>
    %62 = vector.shape_cast %61 : vector<1x32x256xf32> to vector<32x256xf32>
    %63 = arith.mulf %62, %60 : vector<32x256xf32>
    %64 = arith.addf %59, %63 : vector<32x256xf32>
    %c112_i32 = arith.constant 112 : i32
    %65 = tpu.dynamic_rotate %46 by %c112_i32 dim 1 : vector<32x256xf32>, i32 -> vector<32x256xf32>
    %c3_38 = arith.constant 3 : index
    %c0_39 = arith.constant 0 : index
    %c0_40 = arith.constant 0 : index
    %66 = vector.load %arg14[%c3_38, %c0_39, %c0_40] : memref<21x32x256xf32, #tpu.memory_space<vmem>>, vector<1x32x256xf32>
    %67 = vector.shape_cast %66 : vector<1x32x256xf32> to vector<32x256xf32>
    %68 = arith.mulf %67, %65 : vector<32x256xf32>
    %69 = arith.addf %64, %68 : vector<32x256xf32>
    %c96_i32 = arith.constant 96 : i32
    %70 = tpu.dynamic_rotate %46 by %c96_i32 dim 1 : vector<32x256xf32>, i32 -> vector<32x256xf32>
    %c4_41 = arith.constant 4 : index
    %c0_42 = arith.constant 0 : index
    %c0_43 = arith.constant 0 : index
    %71 = vector.load %arg14[%c4_41, %c0_42, %c0_43] : memref<21x32x256xf32, #tpu.memory_space<vmem>>, vector<1x32x256xf32>
    %72 = vector.shape_cast %71 : vector<1x32x256xf32> to vector<32x256xf32>
    %73 = arith.mulf %72, %70 : vector<32x256xf32>
    %74 = arith.addf %69, %73 : vector<32x256xf32>
    %c80_i32 = arith.constant 80 : i32
    %75 = tpu.dynamic_rotate %46 by %c80_i32 dim 1 : vector<32x256xf32>, i32 -> vector<32x256xf32>
    %c5_44 = arith.constant 5 : index
    %c0_45 = arith.constant 0 : index
    %c0_46 = arith.constant 0 : index
    %76 = vector.load %arg14[%c5_44, %c0_45, %c0_46] : memref<21x32x256xf32, #tpu.memory_space<vmem>>, vector<1x32x256xf32>
    %77 = vector.shape_cast %76 : vector<1x32x256xf32> to vector<32x256xf32>
    %78 = arith.mulf %77, %75 : vector<32x256xf32>
    %79 = arith.addf %74, %78 : vector<32x256xf32>
    %c0_47 = arith.constant 0 : index
    %c0_48 = arith.constant 0 : index
    %c0_49 = arith.constant 0 : index
    %80 = vector.load %arg10[%c0_47, %c0_48, %c0_49] : memref<11x32x256xf32, #tpu.memory_space<vmem>>, vector<1x32x256xf32>
    %81 = vector.shape_cast %80 : vector<1x32x256xf32> to vector<32x256xf32>
    %82 = arith.mulf %81, %75 : vector<32x256xf32>
    %83 = arith.addf %48, %82 : vector<32x256xf32>
    %c64_i32 = arith.constant 64 : i32
    %84 = tpu.dynamic_rotate %46 by %c64_i32 dim 1 : vector<32x256xf32>, i32 -> vector<32x256xf32>
    %c6_50 = arith.constant 6 : index
    %c0_51 = arith.constant 0 : index
    %c0_52 = arith.constant 0 : index
    %85 = vector.load %arg14[%c6_50, %c0_51, %c0_52] : memref<21x32x256xf32, #tpu.memory_space<vmem>>, vector<1x32x256xf32>
    %86 = vector.shape_cast %85 : vector<1x32x256xf32> to vector<32x256xf32>
    %87 = arith.mulf %86, %84 : vector<32x256xf32>
    %88 = arith.addf %79, %87 : vector<32x256xf32>
    %c1_53 = arith.constant 1 : index
    %c0_54 = arith.constant 0 : index
    %c0_55 = arith.constant 0 : index
    %89 = vector.load %arg10[%c1_53, %c0_54, %c0_55] : memref<11x32x256xf32, #tpu.memory_space<vmem>>, vector<1x32x256xf32>
    %90 = vector.shape_cast %89 : vector<1x32x256xf32> to vector<32x256xf32>
    %91 = arith.mulf %90, %84 : vector<32x256xf32>
    %92 = arith.addf %83, %91 : vector<32x256xf32>
    %c48_i32 = arith.constant 48 : i32
    %93 = tpu.dynamic_rotate %46 by %c48_i32 dim 1 : vector<32x256xf32>, i32 -> vector<32x256xf32>
    %c7_56 = arith.constant 7 : index
    %c0_57 = arith.constant 0 : index
    %c0_58 = arith.constant 0 : index
    %94 = vector.load %arg14[%c7_56, %c0_57, %c0_58] : memref<21x32x256xf32, #tpu.memory_space<vmem>>, vector<1x32x256xf32>
    %95 = vector.shape_cast %94 : vector<1x32x256xf32> to vector<32x256xf32>
    %96 = arith.mulf %95, %93 : vector<32x256xf32>
    %97 = arith.addf %88, %96 : vector<32x256xf32>
    %c2_59 = arith.constant 2 : index
    %c0_60 = arith.constant 0 : index
    %c0_61 = arith.constant 0 : index
    %98 = vector.load %arg10[%c2_59, %c0_60, %c0_61] : memref<11x32x256xf32, #tpu.memory_space<vmem>>, vector<1x32x256xf32>
    %99 = vector.shape_cast %98 : vector<1x32x256xf32> to vector<32x256xf32>
    %100 = arith.mulf %99, %93 : vector<32x256xf32>
    %101 = arith.addf %92, %100 : vector<32x256xf32>
    %c0_62 = arith.constant 0 : index
    %c0_63 = arith.constant 0 : index
    %c0_64 = arith.constant 0 : index
    %102 = vector.load %arg6[%c0_62, %c0_63, %c0_64] : memref<7x32x256xf32, #tpu.memory_space<vmem>>, vector<1x32x256xf32>
    %103 = vector.shape_cast %102 : vector<1x32x256xf32> to vector<32x256xf32>
    %104 = arith.mulf %103, %93 : vector<32x256xf32>
    %105 = arith.addf %47, %104 : vector<32x256xf32>
    %c32_i32 = arith.constant 32 : i32
    %106 = tpu.dynamic_rotate %46 by %c32_i32 dim 1 : vector<32x256xf32>, i32 -> vector<32x256xf32>
    %c8_65 = arith.constant 8 : index
    %c0_66 = arith.constant 0 : index
    %c0_67 = arith.constant 0 : index
    %107 = vector.load %arg14[%c8_65, %c0_66, %c0_67] : memref<21x32x256xf32, #tpu.memory_space<vmem>>, vector<1x32x256xf32>
    %108 = vector.shape_cast %107 : vector<1x32x256xf32> to vector<32x256xf32>
    %109 = arith.mulf %108, %106 : vector<32x256xf32>
    %110 = arith.addf %97, %109 : vector<32x256xf32>
    %c3_68 = arith.constant 3 : index
    %c0_69 = arith.constant 0 : index
    %c0_70 = arith.constant 0 : index
    %111 = vector.load %arg10[%c3_68, %c0_69, %c0_70] : memref<11x32x256xf32, #tpu.memory_space<vmem>>, vector<1x32x256xf32>
    %112 = vector.shape_cast %111 : vector<1x32x256xf32> to vector<32x256xf32>
    %113 = arith.mulf %112, %106 : vector<32x256xf32>
    %114 = arith.addf %101, %113 : vector<32x256xf32>
    %c1_71 = arith.constant 1 : index
    %c0_72 = arith.constant 0 : index
    %c0_73 = arith.constant 0 : index
    %115 = vector.load %arg6[%c1_71, %c0_72, %c0_73] : memref<7x32x256xf32, #tpu.memory_space<vmem>>, vector<1x32x256xf32>
    %116 = vector.shape_cast %115 : vector<1x32x256xf32> to vector<32x256xf32>
    %117 = arith.mulf %116, %106 : vector<32x256xf32>
    %118 = arith.addf %105, %117 : vector<32x256xf32>
    %c16_i32_74 = arith.constant 16 : i32
    %119 = tpu.dynamic_rotate %46 by %c16_i32_74 dim 1 : vector<32x256xf32>, i32 -> vector<32x256xf32>
    %c9 = arith.constant 9 : index
    %c0_75 = arith.constant 0 : index
    %c0_76 = arith.constant 0 : index
    %120 = vector.load %arg14[%c9, %c0_75, %c0_76] : memref<21x32x256xf32, #tpu.memory_space<vmem>>, vector<1x32x256xf32>
    %121 = vector.shape_cast %120 : vector<1x32x256xf32> to vector<32x256xf32>
    %122 = arith.mulf %121, %119 : vector<32x256xf32>
    %123 = arith.addf %110, %122 : vector<32x256xf32>
    %c4_77 = arith.constant 4 : index
    %c0_78 = arith.constant 0 : index
    %c0_79 = arith.constant 0 : index
    %124 = vector.load %arg10[%c4_77, %c0_78, %c0_79] : memref<11x32x256xf32, #tpu.memory_space<vmem>>, vector<1x32x256xf32>
    %125 = vector.shape_cast %124 : vector<1x32x256xf32> to vector<32x256xf32>
    %126 = arith.mulf %125, %119 : vector<32x256xf32>
    %127 = arith.addf %114, %126 : vector<32x256xf32>
    %c2_80 = arith.constant 2 : index
    %c0_81 = arith.constant 0 : index
    %c0_82 = arith.constant 0 : index
    %128 = vector.load %arg6[%c2_80, %c0_81, %c0_82] : memref<7x32x256xf32, #tpu.memory_space<vmem>>, vector<1x32x256xf32>
    %129 = vector.shape_cast %128 : vector<1x32x256xf32> to vector<32x256xf32>
    %130 = arith.mulf %129, %119 : vector<32x256xf32>
    %131 = arith.addf %118, %130 : vector<32x256xf32>
    %c10 = arith.constant 10 : index
    %c0_83 = arith.constant 0 : index
    %c0_84 = arith.constant 0 : index
    %132 = vector.load %arg14[%c10, %c0_83, %c0_84] : memref<21x32x256xf32, #tpu.memory_space<vmem>>, vector<1x32x256xf32>
    %133 = vector.shape_cast %132 : vector<1x32x256xf32> to vector<32x256xf32>
    %134 = arith.mulf %133, %46 : vector<32x256xf32>
    %135 = arith.addf %123, %134 : vector<32x256xf32>
    %c5_85 = arith.constant 5 : index
    %c0_86 = arith.constant 0 : index
    %c0_87 = arith.constant 0 : index
    %136 = vector.load %arg10[%c5_85, %c0_86, %c0_87] : memref<11x32x256xf32, #tpu.memory_space<vmem>>, vector<1x32x256xf32>
    %137 = vector.shape_cast %136 : vector<1x32x256xf32> to vector<32x256xf32>
    %138 = arith.mulf %137, %46 : vector<32x256xf32>
    %139 = arith.addf %127, %138 : vector<32x256xf32>
    %c3_88 = arith.constant 3 : index
    %c0_89 = arith.constant 0 : index
    %c0_90 = arith.constant 0 : index
    %140 = vector.load %arg6[%c3_88, %c0_89, %c0_90] : memref<7x32x256xf32, #tpu.memory_space<vmem>>, vector<1x32x256xf32>
    %141 = vector.shape_cast %140 : vector<1x32x256xf32> to vector<32x256xf32>
    %142 = arith.mulf %141, %46 : vector<32x256xf32>
    %143 = arith.addf %131, %142 : vector<32x256xf32>
    %c240_i32_91 = arith.constant 240 : i32
    %144 = tpu.dynamic_rotate %46 by %c240_i32_91 dim 1 : vector<32x256xf32>, i32 -> vector<32x256xf32>
    %c11 = arith.constant 11 : index
    %c0_92 = arith.constant 0 : index
    %c0_93 = arith.constant 0 : index
    %145 = vector.load %arg14[%c11, %c0_92, %c0_93] : memref<21x32x256xf32, #tpu.memory_space<vmem>>, vector<1x32x256xf32>
    %146 = vector.shape_cast %145 : vector<1x32x256xf32> to vector<32x256xf32>
    %147 = arith.mulf %146, %144 : vector<32x256xf32>
    %148 = arith.addf %135, %147 : vector<32x256xf32>
    %c6_94 = arith.constant 6 : index
    %c0_95 = arith.constant 0 : index
    %c0_96 = arith.constant 0 : index
    %149 = vector.load %arg10[%c6_94, %c0_95, %c0_96] : memref<11x32x256xf32, #tpu.memory_space<vmem>>, vector<1x32x256xf32>
    %150 = vector.shape_cast %149 : vector<1x32x256xf32> to vector<32x256xf32>
    %151 = arith.mulf %150, %144 : vector<32x256xf32>
    %152 = arith.addf %139, %151 : vector<32x256xf32>
    %c4_97 = arith.constant 4 : index
    %c0_98 = arith.constant 0 : index
    %c0_99 = arith.constant 0 : index
    %153 = vector.load %arg6[%c4_97, %c0_98, %c0_99] : memref<7x32x256xf32, #tpu.memory_space<vmem>>, vector<1x32x256xf32>
    %154 = vector.shape_cast %153 : vector<1x32x256xf32> to vector<32x256xf32>
    %155 = arith.mulf %154, %144 : vector<32x256xf32>
    %156 = arith.addf %143, %155 : vector<32x256xf32>
    %c224_i32 = arith.constant 224 : i32
    %157 = tpu.dynamic_rotate %46 by %c224_i32 dim 1 : vector<32x256xf32>, i32 -> vector<32x256xf32>
    %c12 = arith.constant 12 : index
    %c0_100 = arith.constant 0 : index
    %c0_101 = arith.constant 0 : index
    %158 = vector.load %arg14[%c12, %c0_100, %c0_101] : memref<21x32x256xf32, #tpu.memory_space<vmem>>, vector<1x32x256xf32>
    %159 = vector.shape_cast %158 : vector<1x32x256xf32> to vector<32x256xf32>
    %160 = arith.mulf %159, %157 : vector<32x256xf32>
    %161 = arith.addf %148, %160 : vector<32x256xf32>
    %c7_102 = arith.constant 7 : index
    %c0_103 = arith.constant 0 : index
    %c0_104 = arith.constant 0 : index
    %162 = vector.load %arg10[%c7_102, %c0_103, %c0_104] : memref<11x32x256xf32, #tpu.memory_space<vmem>>, vector<1x32x256xf32>
    %163 = vector.shape_cast %162 : vector<1x32x256xf32> to vector<32x256xf32>
    %164 = arith.mulf %163, %157 : vector<32x256xf32>
    %165 = arith.addf %152, %164 : vector<32x256xf32>
    %c5_105 = arith.constant 5 : index
    %c0_106 = arith.constant 0 : index
    %c0_107 = arith.constant 0 : index
    %166 = vector.load %arg6[%c5_105, %c0_106, %c0_107] : memref<7x32x256xf32, #tpu.memory_space<vmem>>, vector<1x32x256xf32>
    %167 = vector.shape_cast %166 : vector<1x32x256xf32> to vector<32x256xf32>
    %168 = arith.mulf %167, %157 : vector<32x256xf32>
    %169 = arith.addf %156, %168 : vector<32x256xf32>
    %c208_i32 = arith.constant 208 : i32
    %170 = tpu.dynamic_rotate %46 by %c208_i32 dim 1 : vector<32x256xf32>, i32 -> vector<32x256xf32>
    %c13 = arith.constant 13 : index
    %c0_108 = arith.constant 0 : index
    %c0_109 = arith.constant 0 : index
    %171 = vector.load %arg14[%c13, %c0_108, %c0_109] : memref<21x32x256xf32, #tpu.memory_space<vmem>>, vector<1x32x256xf32>
    %172 = vector.shape_cast %171 : vector<1x32x256xf32> to vector<32x256xf32>
    %173 = arith.mulf %172, %170 : vector<32x256xf32>
    %174 = arith.addf %161, %173 : vector<32x256xf32>
    %c8_110 = arith.constant 8 : index
    %c0_111 = arith.constant 0 : index
    %c0_112 = arith.constant 0 : index
    %175 = vector.load %arg10[%c8_110, %c0_111, %c0_112] : memref<11x32x256xf32, #tpu.memory_space<vmem>>, vector<1x32x256xf32>
    %176 = vector.shape_cast %175 : vector<1x32x256xf32> to vector<32x256xf32>
    %177 = arith.mulf %176, %170 : vector<32x256xf32>
    %178 = arith.addf %165, %177 : vector<32x256xf32>
    %c6_113 = arith.constant 6 : index
    %c0_114 = arith.constant 0 : index
    %c0_115 = arith.constant 0 : index
    %179 = vector.load %arg6[%c6_113, %c0_114, %c0_115] : memref<7x32x256xf32, #tpu.memory_space<vmem>>, vector<1x32x256xf32>
    %180 = vector.shape_cast %179 : vector<1x32x256xf32> to vector<32x256xf32>
    %181 = arith.mulf %180, %170 : vector<32x256xf32>
    %182 = arith.addf %169, %181 : vector<32x256xf32>
    %c192_i32 = arith.constant 192 : i32
    %183 = tpu.dynamic_rotate %46 by %c192_i32 dim 1 : vector<32x256xf32>, i32 -> vector<32x256xf32>
    %c14 = arith.constant 14 : index
    %c0_116 = arith.constant 0 : index
    %c0_117 = arith.constant 0 : index
    %184 = vector.load %arg14[%c14, %c0_116, %c0_117] : memref<21x32x256xf32, #tpu.memory_space<vmem>>, vector<1x32x256xf32>
    %185 = vector.shape_cast %184 : vector<1x32x256xf32> to vector<32x256xf32>
    %186 = arith.mulf %185, %183 : vector<32x256xf32>
    %187 = arith.addf %174, %186 : vector<32x256xf32>
    %c9_118 = arith.constant 9 : index
    %c0_119 = arith.constant 0 : index
    %c0_120 = arith.constant 0 : index
    %188 = vector.load %arg10[%c9_118, %c0_119, %c0_120] : memref<11x32x256xf32, #tpu.memory_space<vmem>>, vector<1x32x256xf32>
    %189 = vector.shape_cast %188 : vector<1x32x256xf32> to vector<32x256xf32>
    %190 = arith.mulf %189, %183 : vector<32x256xf32>
    %191 = arith.addf %178, %190 : vector<32x256xf32>
    %c176_i32 = arith.constant 176 : i32
    %192 = tpu.dynamic_rotate %46 by %c176_i32 dim 1 : vector<32x256xf32>, i32 -> vector<32x256xf32>
    %c15 = arith.constant 15 : index
    %c0_121 = arith.constant 0 : index
    %c0_122 = arith.constant 0 : index
    %193 = vector.load %arg14[%c15, %c0_121, %c0_122] : memref<21x32x256xf32, #tpu.memory_space<vmem>>, vector<1x32x256xf32>
    %194 = vector.shape_cast %193 : vector<1x32x256xf32> to vector<32x256xf32>
    %195 = arith.mulf %194, %192 : vector<32x256xf32>
    %196 = arith.addf %187, %195 : vector<32x256xf32>
    %c10_123 = arith.constant 10 : index
    %c0_124 = arith.constant 0 : index
    %c0_125 = arith.constant 0 : index
    %197 = vector.load %arg10[%c10_123, %c0_124, %c0_125] : memref<11x32x256xf32, #tpu.memory_space<vmem>>, vector<1x32x256xf32>
    %198 = vector.shape_cast %197 : vector<1x32x256xf32> to vector<32x256xf32>
    %199 = arith.mulf %198, %192 : vector<32x256xf32>
    %200 = arith.addf %191, %199 : vector<32x256xf32>
    %c160_i32_126 = arith.constant 160 : i32
    %201 = tpu.dynamic_rotate %46 by %c160_i32_126 dim 1 : vector<32x256xf32>, i32 -> vector<32x256xf32>
    %c16 = arith.constant 16 : index
    %c0_127 = arith.constant 0 : index
    %c0_128 = arith.constant 0 : index
    %202 = vector.load %arg14[%c16, %c0_127, %c0_128] : memref<21x32x256xf32, #tpu.memory_space<vmem>>, vector<1x32x256xf32>
    %203 = vector.shape_cast %202 : vector<1x32x256xf32> to vector<32x256xf32>
    %204 = arith.mulf %203, %201 : vector<32x256xf32>
    %205 = arith.addf %196, %204 : vector<32x256xf32>
    %c144_i32_129 = arith.constant 144 : i32
    %206 = tpu.dynamic_rotate %46 by %c144_i32_129 dim 1 : vector<32x256xf32>, i32 -> vector<32x256xf32>
    %c17 = arith.constant 17 : index
    %c0_130 = arith.constant 0 : index
    %c0_131 = arith.constant 0 : index
    %207 = vector.load %arg14[%c17, %c0_130, %c0_131] : memref<21x32x256xf32, #tpu.memory_space<vmem>>, vector<1x32x256xf32>
    %208 = vector.shape_cast %207 : vector<1x32x256xf32> to vector<32x256xf32>
    %209 = arith.mulf %208, %206 : vector<32x256xf32>
    %210 = arith.addf %205, %209 : vector<32x256xf32>
    %c128_i32_132 = arith.constant 128 : i32
    %211 = tpu.dynamic_rotate %46 by %c128_i32_132 dim 1 : vector<32x256xf32>, i32 -> vector<32x256xf32>
    %c18 = arith.constant 18 : index
    %c0_133 = arith.constant 0 : index
    %c0_134 = arith.constant 0 : index
    %212 = vector.load %arg14[%c18, %c0_133, %c0_134] : memref<21x32x256xf32, #tpu.memory_space<vmem>>, vector<1x32x256xf32>
    %213 = vector.shape_cast %212 : vector<1x32x256xf32> to vector<32x256xf32>
    %214 = arith.mulf %213, %211 : vector<32x256xf32>
    %215 = arith.addf %210, %214 : vector<32x256xf32>
    %c112_i32_135 = arith.constant 112 : i32
    %216 = tpu.dynamic_rotate %46 by %c112_i32_135 dim 1 : vector<32x256xf32>, i32 -> vector<32x256xf32>
    %c19 = arith.constant 19 : index
    %c0_136 = arith.constant 0 : index
    %c0_137 = arith.constant 0 : index
    %217 = vector.load %arg14[%c19, %c0_136, %c0_137] : memref<21x32x256xf32, #tpu.memory_space<vmem>>, vector<1x32x256xf32>
    %218 = vector.shape_cast %217 : vector<1x32x256xf32> to vector<32x256xf32>
    %219 = arith.mulf %218, %216 : vector<32x256xf32>
    %220 = arith.addf %215, %219 : vector<32x256xf32>
    %c96_i32_138 = arith.constant 96 : i32
    %221 = tpu.dynamic_rotate %46 by %c96_i32_138 dim 1 : vector<32x256xf32>, i32 -> vector<32x256xf32>
    %c20 = arith.constant 20 : index
    %c0_139 = arith.constant 0 : index
    %c0_140 = arith.constant 0 : index
    %222 = vector.load %arg14[%c20, %c0_139, %c0_140] : memref<21x32x256xf32, #tpu.memory_space<vmem>>, vector<1x32x256xf32>
    %223 = vector.shape_cast %222 : vector<1x32x256xf32> to vector<32x256xf32>
    %224 = arith.mulf %223, %221 : vector<32x256xf32>
    %225 = arith.addf %220, %224 : vector<32x256xf32>
    %c0_141 = arith.constant 0 : index
    %c0_142 = arith.constant 0 : index
    %226 = vector.load %arg9[%c0_141, %c0_142] : memref<32x256xf32, #tpu.memory_space<vmem>>, vector<32x256xf32>
    %c3_i32 = arith.constant 3 : i32
    %227 = tpu.dynamic_rotate %182 by %c3_i32 dim 1 : vector<32x256xf32>, i32 -> vector<32x256xf32>
    %c0_143 = arith.constant 0 : index
    %c0_144 = arith.constant 0 : index
    %c0_145 = arith.constant 0 : index
    %228 = vector.load %arg8[%c0_143, %c0_144, %c0_145] : memref<7x32x256xf32, #tpu.memory_space<vmem>>, vector<1x32x256xf32>
    %229 = vector.shape_cast %228 : vector<1x32x256xf32> to vector<32x256xf32>
    %230 = arith.mulf %229, %227 : vector<32x256xf32>
    %231 = arith.addf %226, %230 : vector<32x256xf32>
    %c2_i32 = arith.constant 2 : i32
    %232 = tpu.dynamic_rotate %182 by %c2_i32 dim 1 : vector<32x256xf32>, i32 -> vector<32x256xf32>
    %c1_146 = arith.constant 1 : index
    %c0_147 = arith.constant 0 : index
    %c0_148 = arith.constant 0 : index
    %233 = vector.load %arg8[%c1_146, %c0_147, %c0_148] : memref<7x32x256xf32, #tpu.memory_space<vmem>>, vector<1x32x256xf32>
    %234 = vector.shape_cast %233 : vector<1x32x256xf32> to vector<32x256xf32>
    %235 = arith.mulf %234, %232 : vector<32x256xf32>
    %236 = arith.addf %231, %235 : vector<32x256xf32>
    %c1_i32_149 = arith.constant 1 : i32
    %237 = tpu.dynamic_rotate %182 by %c1_i32_149 dim 1 : vector<32x256xf32>, i32 -> vector<32x256xf32>
    %c2_150 = arith.constant 2 : index
    %c0_151 = arith.constant 0 : index
    %c0_152 = arith.constant 0 : index
    %238 = vector.load %arg8[%c2_150, %c0_151, %c0_152] : memref<7x32x256xf32, #tpu.memory_space<vmem>>, vector<1x32x256xf32>
    %239 = vector.shape_cast %238 : vector<1x32x256xf32> to vector<32x256xf32>
    %240 = arith.mulf %239, %237 : vector<32x256xf32>
    %241 = arith.addf %236, %240 : vector<32x256xf32>
    %c3_153 = arith.constant 3 : index
    %c0_154 = arith.constant 0 : index
    %c0_155 = arith.constant 0 : index
    %242 = vector.load %arg8[%c3_153, %c0_154, %c0_155] : memref<7x32x256xf32, #tpu.memory_space<vmem>>, vector<1x32x256xf32>
    %243 = vector.shape_cast %242 : vector<1x32x256xf32> to vector<32x256xf32>
    %244 = arith.mulf %243, %182 : vector<32x256xf32>
    %245 = arith.addf %241, %244 : vector<32x256xf32>
    %c255_i32_156 = arith.constant 255 : i32
    %246 = tpu.dynamic_rotate %182 by %c255_i32_156 dim 1 : vector<32x256xf32>, i32 -> vector<32x256xf32>
    %c4_157 = arith.constant 4 : index
    %c0_158 = arith.constant 0 : index
    %c0_159 = arith.constant 0 : index
    %247 = vector.load %arg8[%c4_157, %c0_158, %c0_159] : memref<7x32x256xf32, #tpu.memory_space<vmem>>, vector<1x32x256xf32>
    %248 = vector.shape_cast %247 : vector<1x32x256xf32> to vector<32x256xf32>
    %249 = arith.mulf %248, %246 : vector<32x256xf32>
    %250 = arith.addf %245, %249 : vector<32x256xf32>
    %c254_i32 = arith.constant 254 : i32
    %251 = tpu.dynamic_rotate %182 by %c254_i32 dim 1 : vector<32x256xf32>, i32 -> vector<32x256xf32>
    %c5_160 = arith.constant 5 : index
    %c0_161 = arith.constant 0 : index
    %c0_162 = arith.constant 0 : index
    %252 = vector.load %arg8[%c5_160, %c0_161, %c0_162] : memref<7x32x256xf32, #tpu.memory_space<vmem>>, vector<1x32x256xf32>
    %253 = vector.shape_cast %252 : vector<1x32x256xf32> to vector<32x256xf32>
    %254 = arith.mulf %253, %251 : vector<32x256xf32>
    %255 = arith.addf %250, %254 : vector<32x256xf32>
    %c253_i32 = arith.constant 253 : i32
    %256 = tpu.dynamic_rotate %182 by %c253_i32 dim 1 : vector<32x256xf32>, i32 -> vector<32x256xf32>
    %c6_163 = arith.constant 6 : index
    %c0_164 = arith.constant 0 : index
    %c0_165 = arith.constant 0 : index
    %257 = vector.load %arg8[%c6_163, %c0_164, %c0_165] : memref<7x32x256xf32, #tpu.memory_space<vmem>>, vector<1x32x256xf32>
    %258 = vector.shape_cast %257 : vector<1x32x256xf32> to vector<32x256xf32>
    %259 = arith.mulf %258, %256 : vector<32x256xf32>
    %260 = arith.addf %255, %259 : vector<32x256xf32>
    %c0_166 = arith.constant 0 : index
    %c0_167 = arith.constant 0 : index
    %261 = vector.load %arg13[%c0_166, %c0_167] : memref<32x256xf32, #tpu.memory_space<vmem>>, vector<32x256xf32>
    %262 = arith.addf %260, %261 : vector<32x256xf32>
    %c5_i32 = arith.constant 5 : i32
    %263 = tpu.dynamic_rotate %200 by %c5_i32 dim 1 : vector<32x256xf32>, i32 -> vector<32x256xf32>
    %c0_168 = arith.constant 0 : index
    %c0_169 = arith.constant 0 : index
    %c0_170 = arith.constant 0 : index
    %264 = vector.load %arg12[%c0_168, %c0_169, %c0_170] : memref<11x32x256xf32, #tpu.memory_space<vmem>>, vector<1x32x256xf32>
    %265 = vector.shape_cast %264 : vector<1x32x256xf32> to vector<32x256xf32>
    %266 = arith.mulf %265, %263 : vector<32x256xf32>
    %267 = arith.addf %262, %266 : vector<32x256xf32>
    %c4_i32 = arith.constant 4 : i32
    %268 = tpu.dynamic_rotate %200 by %c4_i32 dim 1 : vector<32x256xf32>, i32 -> vector<32x256xf32>
    %c1_171 = arith.constant 1 : index
    %c0_172 = arith.constant 0 : index
    %c0_173 = arith.constant 0 : index
    %269 = vector.load %arg12[%c1_171, %c0_172, %c0_173] : memref<11x32x256xf32, #tpu.memory_space<vmem>>, vector<1x32x256xf32>
    %270 = vector.shape_cast %269 : vector<1x32x256xf32> to vector<32x256xf32>
    %271 = arith.mulf %270, %268 : vector<32x256xf32>
    %272 = arith.addf %267, %271 : vector<32x256xf32>
    %c3_i32_174 = arith.constant 3 : i32
    %273 = tpu.dynamic_rotate %200 by %c3_i32_174 dim 1 : vector<32x256xf32>, i32 -> vector<32x256xf32>
    %c2_175 = arith.constant 2 : index
    %c0_176 = arith.constant 0 : index
    %c0_177 = arith.constant 0 : index
    %274 = vector.load %arg12[%c2_175, %c0_176, %c0_177] : memref<11x32x256xf32, #tpu.memory_space<vmem>>, vector<1x32x256xf32>
    %275 = vector.shape_cast %274 : vector<1x32x256xf32> to vector<32x256xf32>
    %276 = arith.mulf %275, %273 : vector<32x256xf32>
    %277 = arith.addf %272, %276 : vector<32x256xf32>
    %c2_i32_178 = arith.constant 2 : i32
    %278 = tpu.dynamic_rotate %200 by %c2_i32_178 dim 1 : vector<32x256xf32>, i32 -> vector<32x256xf32>
    %c3_179 = arith.constant 3 : index
    %c0_180 = arith.constant 0 : index
    %c0_181 = arith.constant 0 : index
    %279 = vector.load %arg12[%c3_179, %c0_180, %c0_181] : memref<11x32x256xf32, #tpu.memory_space<vmem>>, vector<1x32x256xf32>
    %280 = vector.shape_cast %279 : vector<1x32x256xf32> to vector<32x256xf32>
    %281 = arith.mulf %280, %278 : vector<32x256xf32>
    %282 = arith.addf %277, %281 : vector<32x256xf32>
    %c1_i32_182 = arith.constant 1 : i32
    %283 = tpu.dynamic_rotate %200 by %c1_i32_182 dim 1 : vector<32x256xf32>, i32 -> vector<32x256xf32>
    %c4_183 = arith.constant 4 : index
    %c0_184 = arith.constant 0 : index
    %c0_185 = arith.constant 0 : index
    %284 = vector.load %arg12[%c4_183, %c0_184, %c0_185] : memref<11x32x256xf32, #tpu.memory_space<vmem>>, vector<1x32x256xf32>
    %285 = vector.shape_cast %284 : vector<1x32x256xf32> to vector<32x256xf32>
    %286 = arith.mulf %285, %283 : vector<32x256xf32>
    %287 = arith.addf %282, %286 : vector<32x256xf32>
    %c5_186 = arith.constant 5 : index
    %c0_187 = arith.constant 0 : index
    %c0_188 = arith.constant 0 : index
    %288 = vector.load %arg12[%c5_186, %c0_187, %c0_188] : memref<11x32x256xf32, #tpu.memory_space<vmem>>, vector<1x32x256xf32>
    %289 = vector.shape_cast %288 : vector<1x32x256xf32> to vector<32x256xf32>
    %290 = arith.mulf %289, %200 : vector<32x256xf32>
    %291 = arith.addf %287, %290 : vector<32x256xf32>
    %c255_i32_189 = arith.constant 255 : i32
    %292 = tpu.dynamic_rotate %200 by %c255_i32_189 dim 1 : vector<32x256xf32>, i32 -> vector<32x256xf32>
    %c6_190 = arith.constant 6 : index
    %c0_191 = arith.constant 0 : index
    %c0_192 = arith.constant 0 : index
    %293 = vector.load %arg12[%c6_190, %c0_191, %c0_192] : memref<11x32x256xf32, #tpu.memory_space<vmem>>, vector<1x32x256xf32>
    %294 = vector.shape_cast %293 : vector<1x32x256xf32> to vector<32x256xf32>
    %295 = arith.mulf %294, %292 : vector<32x256xf32>
    %296 = arith.addf %291, %295 : vector<32x256xf32>
    %c254_i32_193 = arith.constant 254 : i32
    %297 = tpu.dynamic_rotate %200 by %c254_i32_193 dim 1 : vector<32x256xf32>, i32 -> vector<32x256xf32>
    %c7_194 = arith.constant 7 : index
    %c0_195 = arith.constant 0 : index
    %c0_196 = arith.constant 0 : index
    %298 = vector.load %arg12[%c7_194, %c0_195, %c0_196] : memref<11x32x256xf32, #tpu.memory_space<vmem>>, vector<1x32x256xf32>
    %299 = vector.shape_cast %298 : vector<1x32x256xf32> to vector<32x256xf32>
    %300 = arith.mulf %299, %297 : vector<32x256xf32>
    %301 = arith.addf %296, %300 : vector<32x256xf32>
    %c253_i32_197 = arith.constant 253 : i32
    %302 = tpu.dynamic_rotate %200 by %c253_i32_197 dim 1 : vector<32x256xf32>, i32 -> vector<32x256xf32>
    %c8_198 = arith.constant 8 : index
    %c0_199 = arith.constant 0 : index
    %c0_200 = arith.constant 0 : index
    %303 = vector.load %arg12[%c8_198, %c0_199, %c0_200] : memref<11x32x256xf32, #tpu.memory_space<vmem>>, vector<1x32x256xf32>
    %304 = vector.shape_cast %303 : vector<1x32x256xf32> to vector<32x256xf32>
    %305 = arith.mulf %304, %302 : vector<32x256xf32>
    %306 = arith.addf %301, %305 : vector<32x256xf32>
    %c252_i32 = arith.constant 252 : i32
    %307 = tpu.dynamic_rotate %200 by %c252_i32 dim 1 : vector<32x256xf32>, i32 -> vector<32x256xf32>
    %c9_201 = arith.constant 9 : index
    %c0_202 = arith.constant 0 : index
    %c0_203 = arith.constant 0 : index
    %308 = vector.load %arg12[%c9_201, %c0_202, %c0_203] : memref<11x32x256xf32, #tpu.memory_space<vmem>>, vector<1x32x256xf32>
    %309 = vector.shape_cast %308 : vector<1x32x256xf32> to vector<32x256xf32>
    %310 = arith.mulf %309, %307 : vector<32x256xf32>
    %311 = arith.addf %306, %310 : vector<32x256xf32>
    %c251_i32 = arith.constant 251 : i32
    %312 = tpu.dynamic_rotate %200 by %c251_i32 dim 1 : vector<32x256xf32>, i32 -> vector<32x256xf32>
    %c10_204 = arith.constant 10 : index
    %c0_205 = arith.constant 0 : index
    %c0_206 = arith.constant 0 : index
    %313 = vector.load %arg12[%c10_204, %c0_205, %c0_206] : memref<11x32x256xf32, #tpu.memory_space<vmem>>, vector<1x32x256xf32>
    %314 = vector.shape_cast %313 : vector<1x32x256xf32> to vector<32x256xf32>
    %315 = arith.mulf %314, %312 : vector<32x256xf32>
    %316 = arith.addf %311, %315 : vector<32x256xf32>
    %c0_207 = arith.constant 0 : index
    %c0_208 = arith.constant 0 : index
    %317 = vector.load %arg17[%c0_207, %c0_208] : memref<32x256xf32, #tpu.memory_space<vmem>>, vector<32x256xf32>
    %318 = arith.addf %316, %317 : vector<32x256xf32>
    %c10_i32 = arith.constant 10 : i32
    %319 = tpu.dynamic_rotate %225 by %c10_i32 dim 1 : vector<32x256xf32>, i32 -> vector<32x256xf32>
    %c0_209 = arith.constant 0 : index
    %c0_210 = arith.constant 0 : index
    %c0_211 = arith.constant 0 : index
    %320 = vector.load %arg16[%c0_209, %c0_210, %c0_211] : memref<21x32x256xf32, #tpu.memory_space<vmem>>, vector<1x32x256xf32>
    %321 = vector.shape_cast %320 : vector<1x32x256xf32> to vector<32x256xf32>
    %322 = arith.mulf %321, %319 : vector<32x256xf32>
    %323 = arith.addf %318, %322 : vector<32x256xf32>
    %c9_i32 = arith.constant 9 : i32
    %324 = tpu.dynamic_rotate %225 by %c9_i32 dim 1 : vector<32x256xf32>, i32 -> vector<32x256xf32>
    %c1_212 = arith.constant 1 : index
    %c0_213 = arith.constant 0 : index
    %c0_214 = arith.constant 0 : index
    %325 = vector.load %arg16[%c1_212, %c0_213, %c0_214] : memref<21x32x256xf32, #tpu.memory_space<vmem>>, vector<1x32x256xf32>
    %326 = vector.shape_cast %325 : vector<1x32x256xf32> to vector<32x256xf32>
    %327 = arith.mulf %326, %324 : vector<32x256xf32>
    %328 = arith.addf %323, %327 : vector<32x256xf32>
    %c8_i32 = arith.constant 8 : i32
    %329 = tpu.dynamic_rotate %225 by %c8_i32 dim 1 : vector<32x256xf32>, i32 -> vector<32x256xf32>
    %c2_215 = arith.constant 2 : index
    %c0_216 = arith.constant 0 : index
    %c0_217 = arith.constant 0 : index
    %330 = vector.load %arg16[%c2_215, %c0_216, %c0_217] : memref<21x32x256xf32, #tpu.memory_space<vmem>>, vector<1x32x256xf32>
    %331 = vector.shape_cast %330 : vector<1x32x256xf32> to vector<32x256xf32>
    %332 = arith.mulf %331, %329 : vector<32x256xf32>
    %333 = arith.addf %328, %332 : vector<32x256xf32>
    %c7_i32 = arith.constant 7 : i32
    %334 = tpu.dynamic_rotate %225 by %c7_i32 dim 1 : vector<32x256xf32>, i32 -> vector<32x256xf32>
    %c3_218 = arith.constant 3 : index
    %c0_219 = arith.constant 0 : index
    %c0_220 = arith.constant 0 : index
    %335 = vector.load %arg16[%c3_218, %c0_219, %c0_220] : memref<21x32x256xf32, #tpu.memory_space<vmem>>, vector<1x32x256xf32>
    %336 = vector.shape_cast %335 : vector<1x32x256xf32> to vector<32x256xf32>
    %337 = arith.mulf %336, %334 : vector<32x256xf32>
    %338 = arith.addf %333, %337 : vector<32x256xf32>
    %c6_i32 = arith.constant 6 : i32
    %339 = tpu.dynamic_rotate %225 by %c6_i32 dim 1 : vector<32x256xf32>, i32 -> vector<32x256xf32>
    %c4_221 = arith.constant 4 : index
    %c0_222 = arith.constant 0 : index
    %c0_223 = arith.constant 0 : index
    %340 = vector.load %arg16[%c4_221, %c0_222, %c0_223] : memref<21x32x256xf32, #tpu.memory_space<vmem>>, vector<1x32x256xf32>
    %341 = vector.shape_cast %340 : vector<1x32x256xf32> to vector<32x256xf32>
    %342 = arith.mulf %341, %339 : vector<32x256xf32>
    %343 = arith.addf %338, %342 : vector<32x256xf32>
    %c5_i32_224 = arith.constant 5 : i32
    %344 = tpu.dynamic_rotate %225 by %c5_i32_224 dim 1 : vector<32x256xf32>, i32 -> vector<32x256xf32>
    %c5_225 = arith.constant 5 : index
    %c0_226 = arith.constant 0 : index
    %c0_227 = arith.constant 0 : index
    %345 = vector.load %arg16[%c5_225, %c0_226, %c0_227] : memref<21x32x256xf32, #tpu.memory_space<vmem>>, vector<1x32x256xf32>
    %346 = vector.shape_cast %345 : vector<1x32x256xf32> to vector<32x256xf32>
    %347 = arith.mulf %346, %344 : vector<32x256xf32>
    %348 = arith.addf %343, %347 : vector<32x256xf32>
    %c4_i32_228 = arith.constant 4 : i32
    %349 = tpu.dynamic_rotate %225 by %c4_i32_228 dim 1 : vector<32x256xf32>, i32 -> vector<32x256xf32>
    %c6_229 = arith.constant 6 : index
    %c0_230 = arith.constant 0 : index
    %c0_231 = arith.constant 0 : index
    %350 = vector.load %arg16[%c6_229, %c0_230, %c0_231] : memref<21x32x256xf32, #tpu.memory_space<vmem>>, vector<1x32x256xf32>
    %351 = vector.shape_cast %350 : vector<1x32x256xf32> to vector<32x256xf32>
    %352 = arith.mulf %351, %349 : vector<32x256xf32>
    %353 = arith.addf %348, %352 : vector<32x256xf32>
    %c3_i32_232 = arith.constant 3 : i32
    %354 = tpu.dynamic_rotate %225 by %c3_i32_232 dim 1 : vector<32x256xf32>, i32 -> vector<32x256xf32>
    %c7_233 = arith.constant 7 : index
    %c0_234 = arith.constant 0 : index
    %c0_235 = arith.constant 0 : index
    %355 = vector.load %arg16[%c7_233, %c0_234, %c0_235] : memref<21x32x256xf32, #tpu.memory_space<vmem>>, vector<1x32x256xf32>
    %356 = vector.shape_cast %355 : vector<1x32x256xf32> to vector<32x256xf32>
    %357 = arith.mulf %356, %354 : vector<32x256xf32>
    %358 = arith.addf %353, %357 : vector<32x256xf32>
    %c2_i32_236 = arith.constant 2 : i32
    %359 = tpu.dynamic_rotate %225 by %c2_i32_236 dim 1 : vector<32x256xf32>, i32 -> vector<32x256xf32>
    %c8_237 = arith.constant 8 : index
    %c0_238 = arith.constant 0 : index
    %c0_239 = arith.constant 0 : index
    %360 = vector.load %arg16[%c8_237, %c0_238, %c0_239] : memref<21x32x256xf32, #tpu.memory_space<vmem>>, vector<1x32x256xf32>
    %361 = vector.shape_cast %360 : vector<1x32x256xf32> to vector<32x256xf32>
    %362 = arith.mulf %361, %359 : vector<32x256xf32>
    %363 = arith.addf %358, %362 : vector<32x256xf32>
    %c1_i32_240 = arith.constant 1 : i32
    %364 = tpu.dynamic_rotate %225 by %c1_i32_240 dim 1 : vector<32x256xf32>, i32 -> vector<32x256xf32>
    %c9_241 = arith.constant 9 : index
    %c0_242 = arith.constant 0 : index
    %c0_243 = arith.constant 0 : index
    %365 = vector.load %arg16[%c9_241, %c0_242, %c0_243] : memref<21x32x256xf32, #tpu.memory_space<vmem>>, vector<1x32x256xf32>
    %366 = vector.shape_cast %365 : vector<1x32x256xf32> to vector<32x256xf32>
    %367 = arith.mulf %366, %364 : vector<32x256xf32>
    %368 = arith.addf %363, %367 : vector<32x256xf32>
    %c10_244 = arith.constant 10 : index
    %c0_245 = arith.constant 0 : index
    %c0_246 = arith.constant 0 : index
    %369 = vector.load %arg16[%c10_244, %c0_245, %c0_246] : memref<21x32x256xf32, #tpu.memory_space<vmem>>, vector<1x32x256xf32>
    %370 = vector.shape_cast %369 : vector<1x32x256xf32> to vector<32x256xf32>
    %371 = arith.mulf %370, %225 : vector<32x256xf32>
    %372 = arith.addf %368, %371 : vector<32x256xf32>
    %c255_i32_247 = arith.constant 255 : i32
    %373 = tpu.dynamic_rotate %225 by %c255_i32_247 dim 1 : vector<32x256xf32>, i32 -> vector<32x256xf32>
    %c11_248 = arith.constant 11 : index
    %c0_249 = arith.constant 0 : index
    %c0_250 = arith.constant 0 : index
    %374 = vector.load %arg16[%c11_248, %c0_249, %c0_250] : memref<21x32x256xf32, #tpu.memory_space<vmem>>, vector<1x32x256xf32>
    %375 = vector.shape_cast %374 : vector<1x32x256xf32> to vector<32x256xf32>
    %376 = arith.mulf %375, %373 : vector<32x256xf32>
    %377 = arith.addf %372, %376 : vector<32x256xf32>
    %c254_i32_251 = arith.constant 254 : i32
    %378 = tpu.dynamic_rotate %225 by %c254_i32_251 dim 1 : vector<32x256xf32>, i32 -> vector<32x256xf32>
    %c12_252 = arith.constant 12 : index
    %c0_253 = arith.constant 0 : index
    %c0_254 = arith.constant 0 : index
    %379 = vector.load %arg16[%c12_252, %c0_253, %c0_254] : memref<21x32x256xf32, #tpu.memory_space<vmem>>, vector<1x32x256xf32>
    %380 = vector.shape_cast %379 : vector<1x32x256xf32> to vector<32x256xf32>
    %381 = arith.mulf %380, %378 : vector<32x256xf32>
    %382 = arith.addf %377, %381 : vector<32x256xf32>
    %c253_i32_255 = arith.constant 253 : i32
    %383 = tpu.dynamic_rotate %225 by %c253_i32_255 dim 1 : vector<32x256xf32>, i32 -> vector<32x256xf32>
    %c13_256 = arith.constant 13 : index
    %c0_257 = arith.constant 0 : index
    %c0_258 = arith.constant 0 : index
    %384 = vector.load %arg16[%c13_256, %c0_257, %c0_258] : memref<21x32x256xf32, #tpu.memory_space<vmem>>, vector<1x32x256xf32>
    %385 = vector.shape_cast %384 : vector<1x32x256xf32> to vector<32x256xf32>
    %386 = arith.mulf %385, %383 : vector<32x256xf32>
    %387 = arith.addf %382, %386 : vector<32x256xf32>
    %c252_i32_259 = arith.constant 252 : i32
    %388 = tpu.dynamic_rotate %225 by %c252_i32_259 dim 1 : vector<32x256xf32>, i32 -> vector<32x256xf32>
    %c14_260 = arith.constant 14 : index
    %c0_261 = arith.constant 0 : index
    %c0_262 = arith.constant 0 : index
    %389 = vector.load %arg16[%c14_260, %c0_261, %c0_262] : memref<21x32x256xf32, #tpu.memory_space<vmem>>, vector<1x32x256xf32>
    %390 = vector.shape_cast %389 : vector<1x32x256xf32> to vector<32x256xf32>
    %391 = arith.mulf %390, %388 : vector<32x256xf32>
    %392 = arith.addf %387, %391 : vector<32x256xf32>
    %c251_i32_263 = arith.constant 251 : i32
    %393 = tpu.dynamic_rotate %225 by %c251_i32_263 dim 1 : vector<32x256xf32>, i32 -> vector<32x256xf32>
    %c15_264 = arith.constant 15 : index
    %c0_265 = arith.constant 0 : index
    %c0_266 = arith.constant 0 : index
    %394 = vector.load %arg16[%c15_264, %c0_265, %c0_266] : memref<21x32x256xf32, #tpu.memory_space<vmem>>, vector<1x32x256xf32>
    %395 = vector.shape_cast %394 : vector<1x32x256xf32> to vector<32x256xf32>
    %396 = arith.mulf %395, %393 : vector<32x256xf32>
    %397 = arith.addf %392, %396 : vector<32x256xf32>
    %c250_i32 = arith.constant 250 : i32
    %398 = tpu.dynamic_rotate %225 by %c250_i32 dim 1 : vector<32x256xf32>, i32 -> vector<32x256xf32>
    %c16_267 = arith.constant 16 : index
    %c0_268 = arith.constant 0 : index
    %c0_269 = arith.constant 0 : index
    %399 = vector.load %arg16[%c16_267, %c0_268, %c0_269] : memref<21x32x256xf32, #tpu.memory_space<vmem>>, vector<1x32x256xf32>
    %400 = vector.shape_cast %399 : vector<1x32x256xf32> to vector<32x256xf32>
    %401 = arith.mulf %400, %398 : vector<32x256xf32>
    %402 = arith.addf %397, %401 : vector<32x256xf32>
    %c249_i32 = arith.constant 249 : i32
    %403 = tpu.dynamic_rotate %225 by %c249_i32 dim 1 : vector<32x256xf32>, i32 -> vector<32x256xf32>
    %c17_270 = arith.constant 17 : index
    %c0_271 = arith.constant 0 : index
    %c0_272 = arith.constant 0 : index
    %404 = vector.load %arg16[%c17_270, %c0_271, %c0_272] : memref<21x32x256xf32, #tpu.memory_space<vmem>>, vector<1x32x256xf32>
    %405 = vector.shape_cast %404 : vector<1x32x256xf32> to vector<32x256xf32>
    %406 = arith.mulf %405, %403 : vector<32x256xf32>
    %407 = arith.addf %402, %406 : vector<32x256xf32>
    %c248_i32 = arith.constant 248 : i32
    %408 = tpu.dynamic_rotate %225 by %c248_i32 dim 1 : vector<32x256xf32>, i32 -> vector<32x256xf32>
    %c18_273 = arith.constant 18 : index
    %c0_274 = arith.constant 0 : index
    %c0_275 = arith.constant 0 : index
    %409 = vector.load %arg16[%c18_273, %c0_274, %c0_275] : memref<21x32x256xf32, #tpu.memory_space<vmem>>, vector<1x32x256xf32>
    %410 = vector.shape_cast %409 : vector<1x32x256xf32> to vector<32x256xf32>
    %411 = arith.mulf %410, %408 : vector<32x256xf32>
    %412 = arith.addf %407, %411 : vector<32x256xf32>
    %c247_i32 = arith.constant 247 : i32
    %413 = tpu.dynamic_rotate %225 by %c247_i32 dim 1 : vector<32x256xf32>, i32 -> vector<32x256xf32>
    %c19_276 = arith.constant 19 : index
    %c0_277 = arith.constant 0 : index
    %c0_278 = arith.constant 0 : index
    %414 = vector.load %arg16[%c19_276, %c0_277, %c0_278] : memref<21x32x256xf32, #tpu.memory_space<vmem>>, vector<1x32x256xf32>
    %415 = vector.shape_cast %414 : vector<1x32x256xf32> to vector<32x256xf32>
    %416 = arith.mulf %415, %413 : vector<32x256xf32>
    %417 = arith.addf %412, %416 : vector<32x256xf32>
    %c246_i32 = arith.constant 246 : i32
    %418 = tpu.dynamic_rotate %225 by %c246_i32 dim 1 : vector<32x256xf32>, i32 -> vector<32x256xf32>
    %c20_279 = arith.constant 20 : index
    %c0_280 = arith.constant 0 : index
    %c0_281 = arith.constant 0 : index
    %419 = vector.load %arg16[%c20_279, %c0_280, %c0_281] : memref<21x32x256xf32, #tpu.memory_space<vmem>>, vector<1x32x256xf32>
    %420 = vector.shape_cast %419 : vector<1x32x256xf32> to vector<32x256xf32>
    %421 = arith.mulf %420, %418 : vector<32x256xf32>
    %422 = arith.addf %417, %421 : vector<32x256xf32>
    %c0_282 = arith.constant 0 : index
    %c0_283 = arith.constant 0 : index
    %423 = vector.load %arg5[%c0_282, %c0_283] : memref<32x256xf32, #tpu.memory_space<vmem>>, vector<32x256xf32>
    %424 = arith.addf %422, %423 : vector<32x256xf32>
    %c34_i32 = arith.constant 34 : i32
    %425 = tpu.dynamic_rotate %46 by %c34_i32 dim 1 : vector<32x256xf32>, i32 -> vector<32x256xf32>
    %c0_284 = arith.constant 0 : index
    %c0_285 = arith.constant 0 : index
    %c0_286 = arith.constant 0 : index
    %426 = vector.load %arg4[%c0_284, %c0_285, %c0_286] : memref<25x32x256xf32, #tpu.memory_space<vmem>>, vector<1x32x256xf32>
    %427 = vector.shape_cast %426 : vector<1x32x256xf32> to vector<32x256xf32>
    %428 = arith.mulf %427, %425 : vector<32x256xf32>
    %429 = arith.addf %424, %428 : vector<32x256xf32>
    %c33_i32 = arith.constant 33 : i32
    %430 = tpu.dynamic_rotate %46 by %c33_i32 dim 1 : vector<32x256xf32>, i32 -> vector<32x256xf32>
    %c1_287 = arith.constant 1 : index
    %c0_288 = arith.constant 0 : index
    %c0_289 = arith.constant 0 : index
    %431 = vector.load %arg4[%c1_287, %c0_288, %c0_289] : memref<25x32x256xf32, #tpu.memory_space<vmem>>, vector<1x32x256xf32>
    %432 = vector.shape_cast %431 : vector<1x32x256xf32> to vector<32x256xf32>
    %433 = arith.mulf %432, %430 : vector<32x256xf32>
    %434 = arith.addf %429, %433 : vector<32x256xf32>
    %c32_i32_290 = arith.constant 32 : i32
    %435 = tpu.dynamic_rotate %46 by %c32_i32_290 dim 1 : vector<32x256xf32>, i32 -> vector<32x256xf32>
    %c2_291 = arith.constant 2 : index
    %c0_292 = arith.constant 0 : index
    %c0_293 = arith.constant 0 : index
    %436 = vector.load %arg4[%c2_291, %c0_292, %c0_293] : memref<25x32x256xf32, #tpu.memory_space<vmem>>, vector<1x32x256xf32>
    %437 = vector.shape_cast %436 : vector<1x32x256xf32> to vector<32x256xf32>
    %438 = arith.mulf %437, %435 : vector<32x256xf32>
    %439 = arith.addf %434, %438 : vector<32x256xf32>
    %c31_i32 = arith.constant 31 : i32
    %440 = tpu.dynamic_rotate %46 by %c31_i32 dim 1 : vector<32x256xf32>, i32 -> vector<32x256xf32>
    %c3_294 = arith.constant 3 : index
    %c0_295 = arith.constant 0 : index
    %c0_296 = arith.constant 0 : index
    %441 = vector.load %arg4[%c3_294, %c0_295, %c0_296] : memref<25x32x256xf32, #tpu.memory_space<vmem>>, vector<1x32x256xf32>
    %442 = vector.shape_cast %441 : vector<1x32x256xf32> to vector<32x256xf32>
    %443 = arith.mulf %442, %440 : vector<32x256xf32>
    %444 = arith.addf %439, %443 : vector<32x256xf32>
    %c30_i32 = arith.constant 30 : i32
    %445 = tpu.dynamic_rotate %46 by %c30_i32 dim 1 : vector<32x256xf32>, i32 -> vector<32x256xf32>
    %c4_297 = arith.constant 4 : index
    %c0_298 = arith.constant 0 : index
    %c0_299 = arith.constant 0 : index
    %446 = vector.load %arg4[%c4_297, %c0_298, %c0_299] : memref<25x32x256xf32, #tpu.memory_space<vmem>>, vector<1x32x256xf32>
    %447 = vector.shape_cast %446 : vector<1x32x256xf32> to vector<32x256xf32>
    %448 = arith.mulf %447, %445 : vector<32x256xf32>
    %449 = arith.addf %444, %448 : vector<32x256xf32>
    %c18_i32 = arith.constant 18 : i32
    %450 = tpu.dynamic_rotate %46 by %c18_i32 dim 1 : vector<32x256xf32>, i32 -> vector<32x256xf32>
    %c5_300 = arith.constant 5 : index
    %c0_301 = arith.constant 0 : index
    %c0_302 = arith.constant 0 : index
    %451 = vector.load %arg4[%c5_300, %c0_301, %c0_302] : memref<25x32x256xf32, #tpu.memory_space<vmem>>, vector<1x32x256xf32>
    %452 = vector.shape_cast %451 : vector<1x32x256xf32> to vector<32x256xf32>
    %453 = arith.mulf %452, %450 : vector<32x256xf32>
    %454 = arith.addf %449, %453 : vector<32x256xf32>
    %c17_i32_303 = arith.constant 17 : i32
    %455 = tpu.dynamic_rotate %46 by %c17_i32_303 dim 1 : vector<32x256xf32>, i32 -> vector<32x256xf32>
    %c6_304 = arith.constant 6 : index
    %c0_305 = arith.constant 0 : index
    %c0_306 = arith.constant 0 : index
    %456 = vector.load %arg4[%c6_304, %c0_305, %c0_306] : memref<25x32x256xf32, #tpu.memory_space<vmem>>, vector<1x32x256xf32>
    %457 = vector.shape_cast %456 : vector<1x32x256xf32> to vector<32x256xf32>
    %458 = arith.mulf %457, %455 : vector<32x256xf32>
    %459 = arith.addf %454, %458 : vector<32x256xf32>
    %c16_i32_307 = arith.constant 16 : i32
    %460 = tpu.dynamic_rotate %46 by %c16_i32_307 dim 1 : vector<32x256xf32>, i32 -> vector<32x256xf32>
    %c7_308 = arith.constant 7 : index
    %c0_309 = arith.constant 0 : index
    %c0_310 = arith.constant 0 : index
    %461 = vector.load %arg4[%c7_308, %c0_309, %c0_310] : memref<25x32x256xf32, #tpu.memory_space<vmem>>, vector<1x32x256xf32>
    %462 = vector.shape_cast %461 : vector<1x32x256xf32> to vector<32x256xf32>
    %463 = arith.mulf %462, %460 : vector<32x256xf32>
    %464 = arith.addf %459, %463 : vector<32x256xf32>
    %c15_i32_311 = arith.constant 15 : i32
    %465 = tpu.dynamic_rotate %46 by %c15_i32_311 dim 1 : vector<32x256xf32>, i32 -> vector<32x256xf32>
    %c8_312 = arith.constant 8 : index
    %c0_313 = arith.constant 0 : index
    %c0_314 = arith.constant 0 : index
    %466 = vector.load %arg4[%c8_312, %c0_313, %c0_314] : memref<25x32x256xf32, #tpu.memory_space<vmem>>, vector<1x32x256xf32>
    %467 = vector.shape_cast %466 : vector<1x32x256xf32> to vector<32x256xf32>
    %468 = arith.mulf %467, %465 : vector<32x256xf32>
    %469 = arith.addf %464, %468 : vector<32x256xf32>
    %c14_i32 = arith.constant 14 : i32
    %470 = tpu.dynamic_rotate %46 by %c14_i32 dim 1 : vector<32x256xf32>, i32 -> vector<32x256xf32>
    %c9_315 = arith.constant 9 : index
    %c0_316 = arith.constant 0 : index
    %c0_317 = arith.constant 0 : index
    %471 = vector.load %arg4[%c9_315, %c0_316, %c0_317] : memref<25x32x256xf32, #tpu.memory_space<vmem>>, vector<1x32x256xf32>
    %472 = vector.shape_cast %471 : vector<1x32x256xf32> to vector<32x256xf32>
    %473 = arith.mulf %472, %470 : vector<32x256xf32>
    %474 = arith.addf %469, %473 : vector<32x256xf32>
    %c2_i32_318 = arith.constant 2 : i32
    %475 = tpu.dynamic_rotate %46 by %c2_i32_318 dim 1 : vector<32x256xf32>, i32 -> vector<32x256xf32>
    %c10_319 = arith.constant 10 : index
    %c0_320 = arith.constant 0 : index
    %c0_321 = arith.constant 0 : index
    %476 = vector.load %arg4[%c10_319, %c0_320, %c0_321] : memref<25x32x256xf32, #tpu.memory_space<vmem>>, vector<1x32x256xf32>
    %477 = vector.shape_cast %476 : vector<1x32x256xf32> to vector<32x256xf32>
    %478 = arith.mulf %477, %475 : vector<32x256xf32>
    %479 = arith.addf %474, %478 : vector<32x256xf32>
    %c1_i32_322 = arith.constant 1 : i32
    %480 = tpu.dynamic_rotate %46 by %c1_i32_322 dim 1 : vector<32x256xf32>, i32 -> vector<32x256xf32>
    %c11_323 = arith.constant 11 : index
    %c0_324 = arith.constant 0 : index
    %c0_325 = arith.constant 0 : index
    %481 = vector.load %arg4[%c11_323, %c0_324, %c0_325] : memref<25x32x256xf32, #tpu.memory_space<vmem>>, vector<1x32x256xf32>
    %482 = vector.shape_cast %481 : vector<1x32x256xf32> to vector<32x256xf32>
    %483 = arith.mulf %482, %480 : vector<32x256xf32>
    %484 = arith.addf %479, %483 : vector<32x256xf32>
    %c12_326 = arith.constant 12 : index
    %c0_327 = arith.constant 0 : index
    %c0_328 = arith.constant 0 : index
    %485 = vector.load %arg4[%c12_326, %c0_327, %c0_328] : memref<25x32x256xf32, #tpu.memory_space<vmem>>, vector<1x32x256xf32>
    %486 = vector.shape_cast %485 : vector<1x32x256xf32> to vector<32x256xf32>
    %487 = arith.mulf %486, %46 : vector<32x256xf32>
    %488 = arith.addf %484, %487 : vector<32x256xf32>
    %c255_i32_329 = arith.constant 255 : i32
    %489 = tpu.dynamic_rotate %46 by %c255_i32_329 dim 1 : vector<32x256xf32>, i32 -> vector<32x256xf32>
    %c13_330 = arith.constant 13 : index
    %c0_331 = arith.constant 0 : index
    %c0_332 = arith.constant 0 : index
    %490 = vector.load %arg4[%c13_330, %c0_331, %c0_332] : memref<25x32x256xf32, #tpu.memory_space<vmem>>, vector<1x32x256xf32>
    %491 = vector.shape_cast %490 : vector<1x32x256xf32> to vector<32x256xf32>
    %492 = arith.mulf %491, %489 : vector<32x256xf32>
    %493 = arith.addf %488, %492 : vector<32x256xf32>
    %c254_i32_333 = arith.constant 254 : i32
    %494 = tpu.dynamic_rotate %46 by %c254_i32_333 dim 1 : vector<32x256xf32>, i32 -> vector<32x256xf32>
    %c14_334 = arith.constant 14 : index
    %c0_335 = arith.constant 0 : index
    %c0_336 = arith.constant 0 : index
    %495 = vector.load %arg4[%c14_334, %c0_335, %c0_336] : memref<25x32x256xf32, #tpu.memory_space<vmem>>, vector<1x32x256xf32>
    %496 = vector.shape_cast %495 : vector<1x32x256xf32> to vector<32x256xf32>
    %497 = arith.mulf %496, %494 : vector<32x256xf32>
    %498 = arith.addf %493, %497 : vector<32x256xf32>
    %c242_i32 = arith.constant 242 : i32
    %499 = tpu.dynamic_rotate %46 by %c242_i32 dim 1 : vector<32x256xf32>, i32 -> vector<32x256xf32>
    %c15_337 = arith.constant 15 : index
    %c0_338 = arith.constant 0 : index
    %c0_339 = arith.constant 0 : index
    %500 = vector.load %arg4[%c15_337, %c0_338, %c0_339] : memref<25x32x256xf32, #tpu.memory_space<vmem>>, vector<1x32x256xf32>
    %501 = vector.shape_cast %500 : vector<1x32x256xf32> to vector<32x256xf32>
    %502 = arith.mulf %501, %499 : vector<32x256xf32>
    %503 = arith.addf %498, %502 : vector<32x256xf32>
    %c241_i32_340 = arith.constant 241 : i32
    %504 = tpu.dynamic_rotate %46 by %c241_i32_340 dim 1 : vector<32x256xf32>, i32 -> vector<32x256xf32>
    %c16_341 = arith.constant 16 : index
    %c0_342 = arith.constant 0 : index
    %c0_343 = arith.constant 0 : index
    %505 = vector.load %arg4[%c16_341, %c0_342, %c0_343] : memref<25x32x256xf32, #tpu.memory_space<vmem>>, vector<1x32x256xf32>
    %506 = vector.shape_cast %505 : vector<1x32x256xf32> to vector<32x256xf32>
    %507 = arith.mulf %506, %504 : vector<32x256xf32>
    %508 = arith.addf %503, %507 : vector<32x256xf32>
    %c240_i32_344 = arith.constant 240 : i32
    %509 = tpu.dynamic_rotate %46 by %c240_i32_344 dim 1 : vector<32x256xf32>, i32 -> vector<32x256xf32>
    %c17_345 = arith.constant 17 : index
    %c0_346 = arith.constant 0 : index
    %c0_347 = arith.constant 0 : index
    %510 = vector.load %arg4[%c17_345, %c0_346, %c0_347] : memref<25x32x256xf32, #tpu.memory_space<vmem>>, vector<1x32x256xf32>
    %511 = vector.shape_cast %510 : vector<1x32x256xf32> to vector<32x256xf32>
    %512 = arith.mulf %511, %509 : vector<32x256xf32>
    %513 = arith.addf %508, %512 : vector<32x256xf32>
    %c239_i32_348 = arith.constant 239 : i32
    %514 = tpu.dynamic_rotate %46 by %c239_i32_348 dim 1 : vector<32x256xf32>, i32 -> vector<32x256xf32>
    %c18_349 = arith.constant 18 : index
    %c0_350 = arith.constant 0 : index
    %c0_351 = arith.constant 0 : index
    %515 = vector.load %arg4[%c18_349, %c0_350, %c0_351] : memref<25x32x256xf32, #tpu.memory_space<vmem>>, vector<1x32x256xf32>
    %516 = vector.shape_cast %515 : vector<1x32x256xf32> to vector<32x256xf32>
    %517 = arith.mulf %516, %514 : vector<32x256xf32>
    %518 = arith.addf %513, %517 : vector<32x256xf32>
    %c238_i32 = arith.constant 238 : i32
    %519 = tpu.dynamic_rotate %46 by %c238_i32 dim 1 : vector<32x256xf32>, i32 -> vector<32x256xf32>
    %c19_352 = arith.constant 19 : index
    %c0_353 = arith.constant 0 : index
    %c0_354 = arith.constant 0 : index
    %520 = vector.load %arg4[%c19_352, %c0_353, %c0_354] : memref<25x32x256xf32, #tpu.memory_space<vmem>>, vector<1x32x256xf32>
    %521 = vector.shape_cast %520 : vector<1x32x256xf32> to vector<32x256xf32>
    %522 = arith.mulf %521, %519 : vector<32x256xf32>
    %523 = arith.addf %518, %522 : vector<32x256xf32>
    %c226_i32 = arith.constant 226 : i32
    %524 = tpu.dynamic_rotate %46 by %c226_i32 dim 1 : vector<32x256xf32>, i32 -> vector<32x256xf32>
    %c20_355 = arith.constant 20 : index
    %c0_356 = arith.constant 0 : index
    %c0_357 = arith.constant 0 : index
    %525 = vector.load %arg4[%c20_355, %c0_356, %c0_357] : memref<25x32x256xf32, #tpu.memory_space<vmem>>, vector<1x32x256xf32>
    %526 = vector.shape_cast %525 : vector<1x32x256xf32> to vector<32x256xf32>
    %527 = arith.mulf %526, %524 : vector<32x256xf32>
    %528 = arith.addf %523, %527 : vector<32x256xf32>
    %c225_i32 = arith.constant 225 : i32
    %529 = tpu.dynamic_rotate %46 by %c225_i32 dim 1 : vector<32x256xf32>, i32 -> vector<32x256xf32>
    %c21 = arith.constant 21 : index
    %c0_358 = arith.constant 0 : index
    %c0_359 = arith.constant 0 : index
    %530 = vector.load %arg4[%c21, %c0_358, %c0_359] : memref<25x32x256xf32, #tpu.memory_space<vmem>>, vector<1x32x256xf32>
    %531 = vector.shape_cast %530 : vector<1x32x256xf32> to vector<32x256xf32>
    %532 = arith.mulf %531, %529 : vector<32x256xf32>
    %533 = arith.addf %528, %532 : vector<32x256xf32>
    %c224_i32_360 = arith.constant 224 : i32
    %534 = tpu.dynamic_rotate %46 by %c224_i32_360 dim 1 : vector<32x256xf32>, i32 -> vector<32x256xf32>
    %c22 = arith.constant 22 : index
    %c0_361 = arith.constant 0 : index
    %c0_362 = arith.constant 0 : index
    %535 = vector.load %arg4[%c22, %c0_361, %c0_362] : memref<25x32x256xf32, #tpu.memory_space<vmem>>, vector<1x32x256xf32>
    %536 = vector.shape_cast %535 : vector<1x32x256xf32> to vector<32x256xf32>
    %537 = arith.mulf %536, %534 : vector<32x256xf32>
    %538 = arith.addf %533, %537 : vector<32x256xf32>
    %c223_i32 = arith.constant 223 : i32
    %539 = tpu.dynamic_rotate %46 by %c223_i32 dim 1 : vector<32x256xf32>, i32 -> vector<32x256xf32>
    %c23 = arith.constant 23 : index
    %c0_363 = arith.constant 0 : index
    %c0_364 = arith.constant 0 : index
    %540 = vector.load %arg4[%c23, %c0_363, %c0_364] : memref<25x32x256xf32, #tpu.memory_space<vmem>>, vector<1x32x256xf32>
    %541 = vector.shape_cast %540 : vector<1x32x256xf32> to vector<32x256xf32>
    %542 = arith.mulf %541, %539 : vector<32x256xf32>
    %543 = arith.addf %538, %542 : vector<32x256xf32>
    %c222_i32 = arith.constant 222 : i32
    %544 = tpu.dynamic_rotate %46 by %c222_i32 dim 1 : vector<32x256xf32>, i32 -> vector<32x256xf32>
    %c24 = arith.constant 24 : index
    %c0_365 = arith.constant 0 : index
    %c0_366 = arith.constant 0 : index
    %545 = vector.load %arg4[%c24, %c0_365, %c0_366] : memref<25x32x256xf32, #tpu.memory_space<vmem>>, vector<1x32x256xf32>
    %546 = vector.shape_cast %545 : vector<1x32x256xf32> to vector<32x256xf32>
    %547 = arith.mulf %546, %544 : vector<32x256xf32>
    %548 = arith.addf %543, %547 : vector<32x256xf32>
    %c0_367 = arith.constant 0 : index
    %c0_368 = arith.constant 0 : index
    %549 = vector.load %arg18[%c0_367, %c0_368] : memref<8x32xf32, #tpu.memory_space<vmem>>, vector<8x32xf32>
    %cst = arith.constant dense<0.000000e+00> : vector<8x256xf32>
    %550 = tpu.matmul %549, %548, %cst {dimension_numbers = #tpu.dot_dimension_numbers<[1], [0], [0], [1], [0, 0, 1, 1], [], []>} : vector<8x32xf32>, vector<32x256xf32>, vector<8x256xf32> -> vector<8x256xf32>
    %c0_369 = arith.constant 0 : index
    %c0_370 = arith.constant 0 : index
    %551 = vector.load %arg19[%c0_369, %c0_370] : memref<8x1xf32, #tpu.memory_space<vmem>>, vector<8x1xf32>
    %552 = vector.broadcast %551 : vector<8x1xf32> to vector<8x256xf32>
    %553 = arith.addf %550, %552 : vector<8x256xf32>
    %cst_371 = arith.constant 5.000000e-01 : f32
    %554 = vector.broadcast %cst_371 : f32 to vector<8x256xf32>
    %555 = arith.mulf %554, %553 : vector<8x256xf32>
    %cst_372 = arith.constant 4.471500e-02 : f32
    %556 = vector.broadcast %cst_372 : f32 to vector<8x256xf32>
    %557 = arith.mulf %556, %553 : vector<8x256xf32>
    %558 = arith.mulf %557, %553 : vector<8x256xf32>
    %559 = arith.mulf %558, %553 : vector<8x256xf32>
    %560 = arith.addf %553, %559 : vector<8x256xf32>
    %cst_373 = arith.constant 0.797884583 : f32
    %561 = vector.broadcast %cst_373 : f32 to vector<8x256xf32>
    %562 = arith.mulf %561, %560 : vector<8x256xf32>
    %563 = math.tanh %562 : vector<8x256xf32>
    %cst_374 = arith.constant 1.000000e+00 : f32
    %564 = vector.broadcast %cst_374 : f32 to vector<8x256xf32>
    %565 = arith.addf %564, %563 : vector<8x256xf32>
    %566 = arith.mulf %555, %565 : vector<8x256xf32>
    %c0_375 = arith.constant 0 : index
    %c0_376 = arith.constant 0 : index
    %567 = vector.load %arg20[%c0_375, %c0_376] : memref<32x8xf32, #tpu.memory_space<vmem>>, vector<32x8xf32>
    %cst_377 = arith.constant dense<0.000000e+00> : vector<32x256xf32>
    %568 = tpu.matmul %567, %566, %cst_377 {dimension_numbers = #tpu.dot_dimension_numbers<[1], [0], [0], [1], [0, 0, 1, 1], [], []>} : vector<32x8xf32>, vector<8x256xf32>, vector<32x256xf32> -> vector<32x256xf32>
    %c0_378 = arith.constant 0 : index
    %c0_379 = arith.constant 0 : index
    %569 = vector.load %arg21[%c0_378, %c0_379] : memref<32x1xf32, #tpu.memory_space<vmem>>, vector<32x1xf32>
    %570 = vector.broadcast %569 : vector<32x1xf32> to vector<32x256xf32>
    %571 = arith.addf %568, %570 : vector<32x256xf32>
    %cst_380 = arith.constant 0.000000e+00 : f32
    %572 = vector.broadcast %cst_380 : f32 to vector<32x256xf32>
    %573 = arith.subf %572, %571 : vector<32x256xf32>
    %574 = math.exp %573 : vector<32x256xf32>
    %cst_381 = arith.constant 1.000000e+00 : f32
    %575 = vector.broadcast %cst_381 : f32 to vector<32x256xf32>
    %576 = arith.addf %575, %574 : vector<32x256xf32>
    %577 = tpu.reciprocal %576 {approx = true} : vector<32x256xf32> -> vector<32x256xf32>
    %578 = arith.mulf %46, %577 : vector<32x256xf32>
    %579 = arith.addf %1, %578 : vector<32x256xf32>
    %c0_382 = arith.constant 0 : index
    %c0_383 = arith.constant 0 : index
    %580 = vector.load %arg22[%c0_382, %c0_383] : memref<128x32xf32, #tpu.memory_space<vmem>>, vector<128x32xf32>
    %cst_384 = arith.constant dense<0.000000e+00> : vector<128x256xf32>
    %581 = tpu.matmul %580, %579, %cst_384 {dimension_numbers = #tpu.dot_dimension_numbers<[1], [0], [0], [1], [0, 0, 1, 1], [], []>} : vector<128x32xf32>, vector<32x256xf32>, vector<128x256xf32> -> vector<128x256xf32>
    %c0_385 = arith.constant 0 : index
    %c0_386 = arith.constant 0 : index
    %582 = vector.load %arg23[%c0_385, %c0_386] : memref<128x1xf32, #tpu.memory_space<vmem>>, vector<128x1xf32>
    %583 = vector.broadcast %582 : vector<128x1xf32> to vector<128x256xf32>
    %584 = arith.addf %581, %583 : vector<128x256xf32>
    %cst_387 = arith.constant 5.000000e-01 : f32
    %585 = vector.broadcast %cst_387 : f32 to vector<128x256xf32>
    %586 = arith.mulf %585, %584 : vector<128x256xf32>
    %cst_388 = arith.constant 4.471500e-02 : f32
    %587 = vector.broadcast %cst_388 : f32 to vector<128x256xf32>
    %588 = arith.mulf %587, %584 : vector<128x256xf32>
    %589 = arith.mulf %588, %584 : vector<128x256xf32>
    %590 = arith.mulf %589, %584 : vector<128x256xf32>
    %591 = arith.addf %584, %590 : vector<128x256xf32>
    %cst_389 = arith.constant 0.797884583 : f32
    %592 = vector.broadcast %cst_389 : f32 to vector<128x256xf32>
    %593 = arith.mulf %592, %591 : vector<128x256xf32>
    %594 = math.tanh %593 : vector<128x256xf32>
    %cst_390 = arith.constant 1.000000e+00 : f32
    %595 = vector.broadcast %cst_390 : f32 to vector<128x256xf32>
    %596 = arith.addf %595, %594 : vector<128x256xf32>
    %597 = arith.mulf %586, %596 : vector<128x256xf32>
    %c0_391 = arith.constant 0 : index
    %c0_392 = arith.constant 0 : index
    %598 = vector.load %arg24[%c0_391, %c0_392] : memref<32x128xf32, #tpu.memory_space<vmem>>, vector<32x128xf32>
    %cst_393 = arith.constant dense<0.000000e+00> : vector<32x256xf32>
    %599 = tpu.matmul %598, %597, %cst_393 {dimension_numbers = #tpu.dot_dimension_numbers<[1], [0], [0], [1], [0, 0, 1, 1], [], []>} : vector<32x128xf32>, vector<128x256xf32>, vector<32x256xf32> -> vector<32x256xf32>
    %c0_394 = arith.constant 0 : index
    %c0_395 = arith.constant 0 : index
    %600 = vector.load %arg25[%c0_394, %c0_395] : memref<32x1xf32, #tpu.memory_space<vmem>>, vector<32x1xf32>
    %601 = vector.broadcast %600 : vector<32x1xf32> to vector<32x256xf32>
    %602 = arith.addf %599, %601 : vector<32x256xf32>
    %603 = arith.addf %579, %602 : vector<32x256xf32>
    %c0_396 = arith.constant 0 : index
    %c0_397 = arith.constant 0 : index
    %c0_398 = arith.constant 0 : index
    %604 = vector.load %arg26[%c0_396, %c0_397, %c0_398] : memref<1x32x256xf32, #tpu.memory_space<vmem>>, vector<1x32x256xf32>
    %605 = vector.shape_cast %604 : vector<1x32x256xf32> to vector<32x256xf32>
    %606 = vector.shape_cast %603 : vector<32x256xf32> to vector<1x32x256xf32>
    tpu.vector_store %arg26[%c0_396, %c0_397, %c0_398], %606 {strides = array<i32>} : memref<1x32x256xf32, #tpu.memory_space<vmem>>, vector<1x32x256xf32>,
    return
  }
  func.func @transform_0(%arg0: i32) -> (i32, i32, i32) {
    %c0_i32 = arith.constant 0 : i32
    %c0_i32_0 = arith.constant 0 : i32
    %c0_i32_1 = arith.constant 0 : i32
    return %arg0, %c0_i32, %c0_i32_0 : i32, i32, i32
  }
  func.func @transform_1(%arg0: i32) -> (i32, i32, i32) {
    %c0_i32 = arith.constant 0 : i32
    %c0_i32_0 = arith.constant 0 : i32
    %c0_i32_1 = arith.constant 0 : i32
    %c0_i32_2 = arith.constant 0 : i32
    return %c0_i32, %c0_i32_0, %c0_i32_1 : i32, i32, i32
  }
  func.func @transform_2(%arg0: i32) -> (i32, i32) {
    %c0_i32 = arith.constant 0 : i32
    %c0_i32_0 = arith.constant 0 : i32
    %c0_i32_1 = arith.constant 0 : i32
    return %c0_i32, %c0_i32_0 : i32, i32
  }
  func.func @transform_3(%arg0: i32) -> (i32, i32, i32) {
    %c0_i32 = arith.constant 0 : i32
    %c0_i32_0 = arith.constant 0 : i32
    %c0_i32_1 = arith.constant 0 : i32
    %c0_i32_2 = arith.constant 0 : i32
    return %c0_i32, %c0_i32_0, %c0_i32_1 : i32, i32, i32
  }
  func.func @transform_4(%arg0: i32) -> (i32, i32) {
    %c0_i32 = arith.constant 0 : i32
    %c0_i32_0 = arith.constant 0 : i32
    %c0_i32_1 = arith.constant 0 : i32
    return %c0_i32, %c0_i32_0 : i32, i32
  }
  func.func @transform_5(%arg0: i32) -> (i32, i32, i32) {
    %c0_i32 = arith.constant 0 : i32
    %c0_i32_0 = arith.constant 0 : i32
    %c0_i32_1 = arith.constant 0 : i32
    %c0_i32_2 = arith.constant 0 : i32
    return %c0_i32, %c0_i32_0, %c0_i32_1 : i32, i32, i32
  }
  func.func @transform_6(%arg0: i32) -> (i32, i32) {
    %c0_i32 = arith.constant 0 : i32
    %c0_i32_0 = arith.constant 0 : i32
    %c0_i32_1 = arith.constant 0 : i32
    return %c0_i32, %c0_i32_0 : i32, i32
  }
  func.func @transform_7(%arg0: i32) -> (i32, i32, i32) {
    %c0_i32 = arith.constant 0 : i32
    %c0_i32_0 = arith.constant 0 : i32
    %c0_i32_1 = arith.constant 0 : i32
    %c0_i32_2 = arith.constant 0 : i32
    return %c0_i32, %c0_i32_0, %c0_i32_1 : i32, i32, i32
  }
  func.func @transform_8(%arg0: i32) -> (i32, i32) {
    %c0_i32 = arith.constant 0 : i32
    %c0_i32_0 = arith.constant 0 : i32
    %c0_i32_1 = arith.constant 0 : i32
    return %c0_i32, %c0_i32_0 : i32, i32
  }
  func.func @transform_9(%arg0: i32) -> (i32, i32, i32) {
    %c0_i32 = arith.constant 0 : i32
    %c0_i32_0 = arith.constant 0 : i32
    %c0_i32_1 = arith.constant 0 : i32
    %c0_i32_2 = arith.constant 0 : i32
    return %c0_i32, %c0_i32_0, %c0_i32_1 : i32, i32, i32
  }
  func.func @transform_10(%arg0: i32) -> (i32, i32) {
    %c0_i32 = arith.constant 0 : i32
    %c0_i32_0 = arith.constant 0 : i32
    %c0_i32_1 = arith.constant 0 : i32
    return %c0_i32, %c0_i32_0 : i32, i32
  }
  func.func @transform_11(%arg0: i32) -> (i32, i32, i32) {
    %c0_i32 = arith.constant 0 : i32
    %c0_i32_0 = arith.constant 0 : i32
    %c0_i32_1 = arith.constant 0 : i32
    %c0_i32_2 = arith.constant 0 : i32
    return %c0_i32, %c0_i32_0, %c0_i32_1 : i32, i32, i32
  }
  func.func @transform_12(%arg0: i32) -> (i32, i32) {
    %c0_i32 = arith.constant 0 : i32
    %c0_i32_0 = arith.constant 0 : i32
    %c0_i32_1 = arith.constant 0 : i32
    return %c0_i32, %c0_i32_0 : i32, i32
  }
  func.func @transform_13(%arg0: i32) -> (i32, i32, i32) {
    %c0_i32 = arith.constant 0 : i32
    %c0_i32_0 = arith.constant 0 : i32
    %c0_i32_1 = arith.constant 0 : i32
    %c0_i32_2 = arith.constant 0 : i32
    return %c0_i32, %c0_i32_0, %c0_i32_1 : i32, i32, i32
  }
  func.func @transform_14(%arg0: i32) -> (i32, i32) {
    %c0_i32 = arith.constant 0 : i32
    %c0_i32_0 = arith.constant 0 : i32
    %c0_i32_1 = arith.constant 0 : i32
    return %c0_i32, %c0_i32_0 : i32, i32
  }
  func.func @transform_15(%arg0: i32) -> (i32, i32, i32) {
    %c0_i32 = arith.constant 0 : i32
    %c0_i32_0 = arith.constant 0 : i32
    %c0_i32_1 = arith.constant 0 : i32
    %c0_i32_2 = arith.constant 0 : i32
    return %c0_i32, %c0_i32_0, %c0_i32_1 : i32, i32, i32
  }
  func.func @transform_16(%arg0: i32) -> (i32, i32) {
    %c0_i32 = arith.constant 0 : i32
    %c0_i32_0 = arith.constant 0 : i32
    %c0_i32_1 = arith.constant 0 : i32
    return %c0_i32, %c0_i32_0 : i32, i32
  }
  func.func @transform_17(%arg0: i32) -> (i32, i32) {
    %c0_i32 = arith.constant 0 : i32
    %c0_i32_0 = arith.constant 0 : i32
    %c0_i32_1 = arith.constant 0 : i32
    return %c0_i32, %c0_i32_0 : i32, i32
  }
  func.func @transform_18(%arg0: i32) -> (i32, i32) {
    %c0_i32 = arith.constant 0 : i32
    %c0_i32_0 = arith.constant 0 : i32
    %c0_i32_1 = arith.constant 0 : i32
    return %c0_i32, %c0_i32_0 : i32, i32
  }
  func.func @transform_19(%arg0: i32) -> (i32, i32) {
    %c0_i32 = arith.constant 0 : i32
    %c0_i32_0 = arith.constant 0 : i32
    %c0_i32_1 = arith.constant 0 : i32
    return %c0_i32, %c0_i32_0 : i32, i32
  }
  func.func @transform_20(%arg0: i32) -> (i32, i32) {
    %c0_i32 = arith.constant 0 : i32
    %c0_i32_0 = arith.constant 0 : i32
    %c0_i32_1 = arith.constant 0 : i32
    return %c0_i32, %c0_i32_0 : i32, i32
  }
  func.func @transform_21(%arg0: i32) -> (i32, i32) {
    %c0_i32 = arith.constant 0 : i32
    %c0_i32_0 = arith.constant 0 : i32
    %c0_i32_1 = arith.constant 0 : i32
    return %c0_i32, %c0_i32_0 : i32, i32
  }
  func.func @transform_22(%arg0: i32) -> (i32, i32) {
    %c0_i32 = arith.constant 0 : i32
    %c0_i32_0 = arith.constant 0 : i32
    %c0_i32_1 = arith.constant 0 : i32
    return %c0_i32, %c0_i32_0 : i32, i32
  }
  func.func @transform_23(%arg0: i32) -> (i32, i32) {
    %c0_i32 = arith.constant 0 : i32
    %c0_i32_0 = arith.constant 0 : i32
    %c0_i32_1 = arith.constant 0 : i32
    return %c0_i32, %c0_i32_0 : i32, i32
  }
  func.func @transform_24(%arg0: i32) -> (i32, i32) {
    %c0_i32 = arith.constant 0 : i32
    %c0_i32_0 = arith.constant 0 : i32
    %c0_i32_1 = arith.constant 0 : i32
    return %c0_i32, %c0_i32_0 : i32, i32
  }
  func.func @transform_25(%arg0: i32) -> (i32, i32, i32) {
    %c0_i32 = arith.constant 0 : i32
    %c0_i32_0 = arith.constant 0 : i32
    %c0_i32_1 = arith.constant 0 : i32
    return %arg0, %c0_i32, %c0_i32_0 : i32, i32, i32
  }
}

</mosaic_0001>

<llo_original>
// kernel: msca_block_forward.1
$region0: #{msca_block_forward.1}
  #allocation0 [shape = 'u32[]', space=smem, size = 0x4, offset = 0x4, fixed_abs, tag = 'smem constant byte address 0x4 - core index']
  #allocation1 [shape = 'u32[144,128]{1,0:T(1,128)}', space=vmem, size = 0x12000, scoped, tag = 'internal scratch']
  %s0 = inlined_call_operand.vmem [shape: f32[2,32,256], index: 0, kind: input, shape index: {}]
  %s1 = inlined_call_operand.hbm [shape: f32[9,32,256], index: 1, kind: input, shape index: {}]
  %s2 = inlined_call_operand.vmem [shape: f32[32,256], index: 2, kind: input, shape index: {}]
  %s3 = inlined_call_operand.hbm [shape: f32[25,32,256], index: 3, kind: input, shape index: {}]
  %s4 = inlined_call_operand.vmem [shape: f32[32,256], index: 4, kind: input, shape index: {}]
  %s5 = inlined_call_operand.hbm [shape: f32[7,32,256], index: 5, kind: input, shape index: {}]
  %s6 = inlined_call_operand.vmem [shape: f32[32,256], index: 6, kind: input, shape index: {}]
  %s7 = inlined_call_operand.hbm [shape: f32[7,32,256], index: 7, kind: input, shape index: {}]
  %s8 = inlined_call_operand.vmem [shape: f32[32,256], index: 8, kind: input, shape index: {}]
  %s9 = inlined_call_operand.vmem [shape: f32[11,32,256], index: 9, kind: input, shape index: {}]
  %s10 = inlined_call_operand.vmem [shape: f32[32,256], index: 10, kind: input, shape index: {}]
  %s11 = inlined_call_operand.hbm [shape: f32[11,32,256], index: 11, kind: input, shape index: {}]
  %s12 = inlined_call_operand.hbm [shape: f32[32,256], index: 12, kind: input, shape index: {}]
  %s13 = inlined_call_operand.hbm [shape: f32[21,32,256], index: 13, kind: input, shape index: {}]
  %s14 = inlined_call_operand.hbm [shape: f32[32,256], index: 14, kind: input, shape index: {}]
  %s15 = inlined_call_operand.hbm [shape: f32[21,32,256], index: 15, kind: input, shape index: {}]
  %s16 = inlined_call_operand.hbm [shape: f32[32,256], index: 16, kind: input, shape index: {}]
  %s17 = inlined_call_operand.vmem [shape: f32[8,32], index: 17, kind: input, shape index: {}]
  %s18 = inlined_call_operand.vmem [shape: f32[8,1], index: 18, kind: input, shape index: {}]
  %s19 = inlined_call_operand.vmem [shape: f32[32,8], index: 19, kind: input, shape index: {}]
  %s20 = inlined_call_operand.vmem [shape: f32[32,1], index: 20, kind: input, shape index: {}]
  %s21 = inlined_call_operand.vmem [shape: f32[128,32], index: 21, kind: input, shape index: {}]
  %s22 = inlined_call_operand.vmem [shape: f32[128,1], index: 22, kind: input, shape index: {}]
  %s23 = inlined_call_operand.hbm [shape: f32[32,128], index: 23, kind: input, shape index: {}]
  %s24 = inlined_call_operand.vmem [shape: f32[32,1], index: 24, kind: input, shape index: {}]
  %s25 = inlined_call_operand.vmem [shape: f32[2,32,256], index: 25, kind: output, shape index: {}]
  %s26 = sld [smem:[#allocation0]]
  $region177: #{msca_block_forward.1} parent=0
    _
  %s28 = ssub.s32 1, %s26
  %s29 = scalar_select 0, %s28, %s26
  $region1: #{msca_block_forward.1} parent=0
    #allocation2 [shape = 'u8[294912]{0}', space=vmem, size = 0x48000, scoped, tag = 'input window, operand 1, single buffered']
    #allocation3 [shape = 's32[2]{0}', space=sflag, size = 0x8, scoped, tag = 'scoped memory for msca_block_forward.1']
    #allocation4 [shape = 'u8[819200]{0}', space=vmem, size = 0xc8000, scoped, tag = 'input window, operand 3, single buffered']
    #allocation5 [shape = 's32[1]{0}', space=sflag, size = 0x4, scoped, tag = 'scoped memory for msca_block_forward.1']
    #allocation6 [shape = 'u8[229376]{0}', space=vmem, size = 0x38000, scoped, tag = 'input window, operand 5, single buffered']
    #allocation7 [shape = 'u8[229376]{0}', space=vmem, size = 0x38000, scoped, tag = 'input window, operand 7, single buffered']
    #allocation8 [shape = 's32[1]{0}', space=sflag, size = 0x4, scoped, tag = 'scoped memory for msca_block_forward.1']
    #allocation9 [shape = 'u8[360448]{0}', space=vmem, size = 0x58000, scoped, tag = 'input window, operand 11, single buffered']
    #allocation10 [shape = 'u8[32768]{0}', space=vmem, size = 0x8000, scoped, tag = 'input window, operand 12, single buffered']
    #allocation11 [shape = 's32[1]{0}', space=sflag, size = 0x4, scoped, tag = 'scoped memory for msca_block_forward.1']
    #allocation12 [shape = 'u8[688128]{0}', space=vmem, size = 0xa8000, scoped, tag = 'input window, operand 13, single buffered']
    #allocation13 [shape = 'u8[32768]{0}', space=vmem, size = 0x8000, scoped, tag = 'input window, operand 14, single buffered']
    #allocation14 [shape = 's32[1]{0}', space=sflag, size = 0x4, scoped, tag = 'scoped memory for msca_block_forward.1']
    #allocation15 [shape = 'u8[688128]{0}', space=vmem, size = 0xa8000, scoped, tag = 'input window, operand 15, single buffered']
    #allocation16 [shape = 'u8[32768]{0}', space=vmem, size = 0x8000, scoped, tag = 'input window, operand 16, single buffered']
    #allocation17 [shape = 's32[1]{0}', space=sflag, size = 0x4, scoped, tag = 'scoped memory for msca_block_forward.1']
    #allocation18 [shape = 'u8[16384]{0}', space=vmem, size = 0x4000, scoped, tag = 'input window, operand 23, single buffered']
    %30 = vsyncpa [#allocation3], 0
    %31 = vsyncpa [#allocation5], 0
    %32 = vsyncpa [#allocation8], 0
    %33 = vsyncpa [#allocation11], 0
    %34 = vsyncpa [#allocation14], 0
    %35 = vsyncpa [#allocation17], 0
    loop: start=0, step=1, limit=4
    $region2: #{msca_block_forward.1} parent=1 // loop_pre_header
      _
    $region3: #{msca_block_forward.1} parent=1 // loop_header
      %s37 = sphi 0, %s41
      %p38 = scmp.ge.s32.totalorder %s37, 4
      %s47 = sphi 0, %s49
      %s50 = sphi 0, %s47
      %s51 = sphi 0, %s50
      %s67 = sphi 0, %s51
      %s71 = sphi 0, %s71
      %s73 = sphi 0, %s71
      %s74 = sphi 0, %s73
      %s88 = sphi 0, %s74
      %s92 = sphi 0, %s92
      %s94 = sphi 0, %s92
      %s95 = sphi 0, %s94
      %s109 = sphi 0, %s95
      %s113 = sphi 0, %s113
      %s115 = sphi 0, %s113
      %s116 = sphi 0, %s115
      %s130 = sphi 0, %s116
      %s134 = sphi 0, %s134
      %s136 = sphi 0, %s134
      %s137 = sphi 0, %s136
      %s151 = sphi 0, %s137
      %s155 = sphi 0, %s155
      %s157 = sphi 0, %s155
      %s158 = sphi 0, %s157
      %s172 = sphi 0, %s158
      %s176 = sphi 0, %s176
      %s178 = sphi 0, %s176
      %s179 = sphi 0, %s178
      %s193 = sphi 0, %s179
      %s197 = sphi 0, %s197
      %s199 = sphi 0, %s197
      %s200 = sphi 0, %s199
      %s214 = sphi 0, %s200
      %s218 = sphi 0, %s218
      %s220 = sphi 0, %s218
      %s221 = sphi 0, %s220
      %s235 = sphi 0, %s221
      %s239 = sphi 0, %s239
      %s241 = sphi 0, %s239
      %s242 = sphi 0, %s241
      %s256 = sphi 0, %s242
      %s260 = sphi 0, %s260
      %s262 = sphi 0, %s260
      %s263 = sphi 0, %s262
      %s277 = sphi 0, %s263
      %s281 = sphi 0, %s281
      %s283 = sphi 0, %s281
      %s284 = sphi 0, %s283
      %s298 = sphi 0, %s284
      %s302 = sphi 0, %s302
      %s304 = sphi 0, %s302
      %s305 = sphi 0, %s304
      %s319 = sphi 0, %s305
      %s323 = sphi 0, %s323
      %s325 = sphi 0, %s323
      %s326 = sphi 0, %s325
      %s340 = sphi 0, %s326
      %s344 = sphi 0, %s344
      %s346 = sphi 0, %s344
      %s347 = sphi 0, %s346
      %s361 = sphi 0, %s347
      %s365 = sphi 0, %s365
      %s367 = sphi 0, %s365
      %s368 = sphi 0, %s367
      %s382 = sphi 0, %s368
      %s386 = sphi 0, %s386
      %s388 = sphi 0, %s386
      %s389 = sphi 0, %s388
      %s403 = sphi 0, %s389
      %s407 = sphi 0, %s407
      %s409 = sphi 0, %s407
      %s410 = sphi 0, %s409
      %s424 = sphi 0, %s410
      %s428 = sphi 0, %s428
      %s430 = sphi 0, %s428
      %s431 = sphi 0, %s430
      %s445 = sphi 0, %s431
      %s449 = sphi 0, %s449
      %s451 = sphi 0, %s449
      %s452 = sphi 0, %s451
      %s466 = sphi 0, %s452
      %s470 = sphi 0, %s470
      %s472 = sphi 0, %s470
      %s473 = sphi 0, %s472
      %s487 = sphi 0, %s473
      %s491 = sphi 0, %s491
      %s493 = sphi 0, %s491
      %s494 = sphi 0, %s493
      %s508 = sphi 0, %s494
      %s512 = sphi 0, %s512
      %s514 = sphi 0, %s512
      %s515 = sphi 0, %s514
      %s529 = sphi 0, %s515
      %s533 = sphi 0, %s533
      %s535 = sphi 0, %s533
      %s536 = sphi 0, %s535
      %s550 = sphi 0, %s536
      %s554 = sphi 0, %s554
      %s556 = sphi 0, %s554
      %s557 = sphi 0, %s556
      %s571 = sphi 0, %s557
      %s577 = sphi 0, %s579
      %s580 = sphi 0, %s577
      %s581 = sphi 0, %s580
      %s597 = sphi 0, %s581
    $region4: #{msca_block_forward.1} parent=1 // loop_header_branch
      %40 = sbr.rel (%p38) target = $region8
    $region5: #{msca_block_forward.1} parent=1 // loop_body
      %s42 = ssub.s32 %s37, 1
      %s43 = ssub.s32 %s37, 2
      %s44 = sadd.s32 %s37, 1
      %s45 = ssub.s32 %s37, %s44
      %p46 = scmp.eq.s32.totalorder %s45, 0
      %s48 = sadd.s32 %s47, 1
      %s49 = scalar_select %p46, %s47, %s48
      %p52 = pneg %p46
      %p53 = scmp.eq.s32.totalorder %s37, 1
      %p54 = por %p52, %p53
      %p55 = scmp.ne.s32.totalorder %s47, %s50
      %p56 = scmp.eq.s32.totalorder %s37, 0
      %p57 = por %p55, %p56
      %p58 = scmp.ne.s32.totalorder %s47, %s50
      %p59 = scmp.eq.s32.totalorder %s42, 1
      %p60 = por %p58, %p59
      %p61 = scmp.ne.s32.totalorder %s50, %s51
      %p62 = scmp.eq.s32.totalorder %s42, 0
      %p63 = por %p61, %p62
      %p64 = scmp.ne.s32.totalorder %s50, %s51
      %p65 = scmp.eq.s32.totalorder %s43, 1
      %p66 = por %p64, %p65
      %p68 = scmp.ne.s32.totalorder %s51, %s67
      %p69 = scmp.eq.s32.totalorder %s43, 0
      %p70 = por %p68, %p69
      %s72 = sadd.s32 %s71, 1
      %p75 = scmp.eq.s32.totalorder %s37, 1
      %p76 = scmp.ne.s32.totalorder %s71, %s73
      %p77 = scmp.eq.s32.totalorder %s37, 0
      %p78 = por %p76, %p77
      %p79 = scmp.ne.s32.totalorder %s71, %s73
      %p80 = scmp.eq.s32.totalorder %s42, 1
      %p81 = por %p79, %p80
      %p82 = scmp.ne.s32.totalorder %s73, %s74
      %p83 = scmp.eq.s32.totalorder %s42, 0
      %p84 = por %p82, %p83
      %p85 = scmp.ne.s32.totalorder %s73, %s74
      %p86 = scmp.eq.s32.totalorder %s43, 1
      %p87 = por %p85, %p86
      %p89 = scmp.ne.s32.totalorder %s74, %s88
      %p90 = scmp.eq.s32.totalorder %s43, 0
      %p91 = por %p89, %p90
      %s93 = sadd.s32 %s92, 1
      %p96 = scmp.eq.s32.totalorder %s37, 1
      %p97 = scmp.ne.s32.totalorder %s92, %s94
      %p98 = scmp.eq.s32.totalorder %s37, 0
      %p99 = por %p97, %p98
      %p100 = scmp.ne.s32.totalorder %s92, %s94
      %p101 = scmp.eq.s32.totalorder %s42, 1
      %p102 = por %p100, %p101
      %p103 = scmp.ne.s32.totalorder %s94, %s95
      %p104 = scmp.eq.s32.totalorder %s42, 0
      %p105 = por %p103, %p104
      %p106 = scmp.ne.s32.totalorder %s94, %s95
      %p107 = scmp.eq.s32.totalorder %s43, 1
      %p108 = por %p106, %p107
      %p110 = scmp.ne.s32.totalorder %s95, %s109
      %p111 = scmp.eq.s32.totalorder %s43, 0
      %p112 = por %p110, %p111
      %s114 = sadd.s32 %s113, 1
      %p117 = scmp.eq.s32.totalorder %s37, 1
      %p118 = scmp.ne.s32.totalorder %s113, %s115
      %p119 = scmp.eq.s32.totalorder %s37, 0
      %p120 = por %p118, %p119
      %p121 = scmp.ne.s32.totalorder %s113, %s115
      %p122 = scmp.eq.s32.totalorder %s42, 1
      %p123 = por %p121, %p122
      %p124 = scmp.ne.s32.totalorder %s115, %s116
      %p125 = scmp.eq.s32.totalorder %s42, 0
      %p126 = por %p124, %p125
      %p127 = scmp.ne.s32.totalorder %s115, %s116
      %p128 = scmp.eq.s32.totalorder %s43, 1
      %p129 = por %p127, %p128
      %p131 = scmp.ne.s32.totalorder %s116, %s130
      %p132 = scmp.eq.s32.totalorder %s43, 0
      %p133 = por %p131, %p132
      %s135 = sadd.s32 %s134, 1
      %p138 = scmp.eq.s32.totalorder %s37, 1
      %p139 = scmp.ne.s32.totalorder %s134, %s136
      %p140 = scmp.eq.s32.totalorder %s37, 0
      %p141 = por %p139, %p140
      %p142 = scmp.ne.s32.totalorder %s134, %s136
      %p143 = scmp.eq.s32.totalorder %s42, 1
      %p144 = por %p142, %p143
      %p145 = scmp.ne.s32.totalorder %s136, %s137
      %p146 = scmp.eq.s32.totalorder %s42, 0
      %p147 = por %p145, %p146
      %p148 = scmp.ne.s32.totalorder %s136, %s137
      %p149 = scmp.eq.s32.totalorder %s43, 1
      %p150 = por %p148, %p149
      %p152 = scmp.ne.s32.totalorder %s137, %s151
      %p153 = scmp.eq.s32.totalorder %s43, 0
      %p154 = por %p152, %p153
      %s156 = sadd.s32 %s155, 1
      %p159 = scmp.eq.s32.totalorder %s37, 1
      %p160 = scmp.ne.s32.totalorder %s155, %s157
      %p161 = scmp.eq.s32.totalorder %s37, 0
      %p162 = por %p160, %p161
      %p163 = scmp.ne.s32.totalorder %s155, %s157
      %p164 = scmp.eq.s32.totalorder %s42, 1
      %p165 = por %p163, %p164
      %p166 = scmp.ne.s32.totalorder %s157, %s158
      %p167 = scmp.eq.s32.totalorder %s42, 0
      %p168 = por %p166, %p167
      %p169 = scmp.ne.s32.totalorder %s157, %s158
      %p170 = scmp.eq.s32.totalorder %s43, 1
      %p171 = por %p169, %p170
      %p173 = scmp.ne.s32.totalorder %s158, %s172
      %p174 = scmp.eq.s32.totalorder %s43, 0
      %p175 = por %p173, %p174
      %s177 = sadd.s32 %s176, 1
      %p180 = scmp.eq.s32.totalorder %s37, 1
      %p181 = scmp.ne.s32.totalorder %s176, %s178
      %p182 = scmp.eq.s32.totalorder %s37, 0
      %p183 = por %p181, %p182
      %p184 = scmp.ne.s32.totalorder %s176, %s178
      %p185 = scmp.eq.s32.totalorder %s42, 1
      %p186 = por %p184, %p185
      %p187 = scmp.ne.s32.totalorder %s178, %s179
      %p188 = scmp.eq.s32.totalorder %s42, 0
      %p189 = por %p187, %p188
      %p190 = scmp.ne.s32.totalorder %s178, %s179
      %p191 = scmp.eq.s32.totalorder %s43, 1
      %p192 = por %p190, %p191
      %p194 = scmp.ne.s32.totalorder %s179, %s193
      %p195 = scmp.eq.s32.totalorder %s43, 0
      %p196 = por %p194, %p195
      %s198 = sadd.s32 %s197, 1
      %p201 = scmp.eq.s32.totalorder %s37, 1
      %p202 = scmp.ne.s32.totalorder %s197, %s199
      %p203 = scmp.eq.s32.totalorder %s37, 0
      %p204 = por %p202, %p203
      %p205 = scmp.ne.s32.totalorder %s197, %s199
      %p206 = scmp.eq.s32.totalorder %s42, 1
      %p207 = por %p205, %p206
      %p208 = scmp.ne.s32.totalorder %s199, %s200
      %p209 = scmp.eq.s32.totalorder %s42, 0
      %p210 = por %p208, %p209
      %p211 = scmp.ne.s32.totalorder %s199, %s200
      %p212 = scmp.eq.s32.totalorder %s43, 1
      %p213 = por %p211, %p212
      %p215 = scmp.ne.s32.totalorder %s200, %s214
      %p216 = scmp.eq.s32.totalorder %s43, 0
      %p217 = por %p215, %p216
      %s219 = sadd.s32 %s218, 1
      %p222 = scmp.eq.s32.totalorder %s37, 1
      %p223 = scmp.ne.s32.totalorder %s218, %s220
      %p224 = scmp.eq.s32.totalorder %s37, 0
      %p225 = por %p223, %p224
      %p226 = scmp.ne.s32.totalorder %s218, %s220
      %p227 = scmp.eq.s32.totalorder %s42, 1
      %p228 = por %p226, %p227
      %p229 = scmp.ne.s32.totalorder %s220, %s221
      %p230 = scmp.eq.s32.totalorder %s42, 0
      %p231 = por %p229, %p230
      %p232 = scmp.ne.s32.totalorder %s220, %s221
      %p233 = scmp.eq.s32.totalorder %s43, 1
      %p234 = por %p232, %p233
      %p236 = scmp.ne.s32.totalorder %s221, %s235
      %p237 = scmp.eq.s32.totalorder %s43, 0
      %p238 = por %p236, %p237
      %s240 = sadd.s32 %s239, 1
      %p243 = scmp.eq.s32.totalorder %s37, 1
      %p244 = scmp.ne.s32.totalorder %s239, %s241
      %p245 = scmp.eq.s32.totalorder %s37, 0
      %p246 = por %p244, %p245
      %p247 = scmp.ne.s32.totalorder %s239, %s241
      %p248 = scmp.eq.s32.totalorder %s42, 1
      %p249 = por %p247, %p248
      %p250 = scmp.ne.s32.totalorder %s241, %s242
      %p251 = scmp.eq.s32.totalorder %s42, 0
      %p252 = por %p250, %p251
      %p253 = scmp.ne.s32.totalorder %s241, %s242
      %p254 = scmp.eq.s32.totalorder %s43, 1
      %p255 = por %p253, %p254
      %p257 = scmp.ne.s32.totalorder %s242, %s256
      %p258 = scmp.eq.s32.totalorder %s43, 0
      %p259 = por %p257, %p258
      %s261 = sadd.s32 %s260, 1
      %p264 = scmp.eq.s32.totalorder %s37, 1
      %p265 = scmp.ne.s32.totalorder %s260, %s262
      %p266 = scmp.eq.s32.totalorder %s37, 0
      %p267 = por %p265, %p266
      %p268 = scmp.ne.s32.totalorder %s260, %s262
      %p269 = scmp.eq.s32.totalorder %s42, 1
      %p270 = por %p268, %p269
      %p271 = scmp.ne.s32.totalorder %s262, %s263
      %p272 = scmp.eq.s32.totalorder %s42, 0
      %p273 = por %p271, %p272
      %p274 = scmp.ne.s32.totalorder %s262, %s263
      %p275 = scmp.eq.s32.totalorder %s43, 1
      %p276 = por %p274, %p275
      %p278 = scmp.ne.s32.totalorder %s263, %s277
      %p279 = scmp.eq.s32.totalorder %s43, 0
      %p280 = por %p278, %p279
      %s282 = sadd.s32 %s281, 1
      %p285 = scmp.eq.s32.totalorder %s37, 1
      %p286 = scmp.ne.s32.totalorder %s281, %s283
      %p287 = scmp.eq.s32.totalorder %s37, 0
      %p288 = por %p286, %p287
      %p289 = scmp.ne.s32.totalorder %s281, %s283
      %p290 = scmp.eq.s32.totalorder %s42, 1
      %p291 = por %p289, %p290
      %p292 = scmp.ne.s32.totalorder %s283, %s284
      %p293 = scmp.eq.s32.totalorder %s42, 0
      %p294 = por %p292, %p293
      %p295 = scmp.ne.s32.totalorder %s283, %s284
      %p296 = scmp.eq.s32.totalorder %s43, 1
      %p297 = por %p295, %p296
      %p299 = scmp.ne.s32.totalorder %s284, %s298
      %p300 = scmp.eq.s32.totalorder %s43, 0
      %p301 = por %p299, %p300
      %s303 = sadd.s32 %s302, 1
      %p306 = scmp.eq.s32.totalorder %s37, 1
      %p307 = scmp.ne.s32.totalorder %s302, %s304
      %p308 = scmp.eq.s32.totalorder %s37, 0
      %p309 = por %p307, %p308
      %p310 = scmp.ne.s32.totalorder %s302, %s304
      %p311 = scmp.eq.s32.totalorder %s42, 1
      %p312 = por %p310, %p311
      %p313 = scmp.ne.s32.totalorder %s304, %s305
      %p314 = scmp.eq.s32.totalorder %s42, 0
      %p315 = por %p313, %p314
      %p316 = scmp.ne.s32.totalorder %s304, %s305
      %p317 = scmp.eq.s32.totalorder %s43, 1
      %p318 = por %p316, %p317
      %p320 = scmp.ne.s32.totalorder %s305, %s319
      %p321 = scmp.eq.s32.totalorder %s43, 0
      %p322 = por %p320, %p321
      %s324 = sadd.s32 %s323, 1
      %p327 = scmp.eq.s32.totalorder %s37, 1
      %p328 = scmp.ne.s32.totalorder %s323, %s325
      %p329 = scmp.eq.s32.totalorder %s37, 0
      %p330 = por %p328, %p329
      %p331 = scmp.ne.s32.totalorder %s323, %s325
      %p332 = scmp.eq.s32.totalorder %s42, 1
      %p333 = por %p331, %p332
      %p334 = scmp.ne.s32.totalorder %s325, %s326
      %p335 = scmp.eq.s32.totalorder %s42, 0
      %p336 = por %p334, %p335
      %p337 = scmp.ne.s32.totalorder %s325, %s326
      %p338 = scmp.eq.s32.totalorder %s43, 1
      %p339 = por %p337, %p338
      %p341 = scmp.ne.s32.totalorder %s326, %s340
      %p342 = scmp.eq.s32.totalorder %s43, 0
      %p343 = por %p341, %p342
      %s345 = sadd.s32 %s344, 1
      %p348 = scmp.eq.s32.totalorder %s37, 1
      %p349 = scmp.ne.s32.totalorder %s344, %s346
      %p350 = scmp.eq.s32.totalorder %s37, 0
      %p351 = por %p349, %p350
      %p352 = scmp.ne.s32.totalorder %s344, %s346
      %p353 = scmp.eq.s32.totalorder %s42, 1
      %p354 = por %p352, %p353
      %p355 = scmp.ne.s32.totalorder %s346, %s347
      %p356 = scmp.eq.s32.totalorder %s42, 0
      %p357 = por %p355, %p356
      %p358 = scmp.ne.s32.totalorder %s346, %s347
      %p359 = scmp.eq.s32.totalorder %s43, 1
      %p360 = por %p358, %p359
      %p362 = scmp.ne.s32.totalorder %s347, %s361
      %p363 = scmp.eq.s32.totalorder %s43, 0
      %p364 = por %p362, %p363
      %s366 = sadd.s32 %s365, 1
      %p369 = scmp.eq.s32.totalorder %s37, 1
      %p370 = scmp.ne.s32.totalorder %s365, %s367
      %p371 = scmp.eq.s32.totalorder %s37, 0
      %p372 = por %p370, %p371
      %p373 = scmp.ne.s32.totalorder %s365, %s367
      %p374 = scmp.eq.s32.totalorder %s42, 1
      %p375 = por %p373, %p374
      %p376 = scmp.ne.s32.totalorder %s367, %s368
      %p377 = scmp.eq.s32.totalorder %s42, 0
      %p378 = por %p376, %p377
      %p379 = scmp.ne.s32.totalorder %s367, %s368
      %p380 = scmp.eq.s32.totalorder %s43, 1
      %p381 = por %p379, %p380
      %p383 = scmp.ne.s32.totalorder %s368, %s382
      %p384 = scmp.eq.s32.totalorder %s43, 0
      %p385 = por %p383, %p384
      %s387 = sadd.s32 %s386, 1
      %p390 = scmp.eq.s32.totalorder %s37, 1
      %p391 = scmp.ne.s32.totalorder %s386, %s388
      %p392 = scmp.eq.s32.totalorder %s37, 0
      %p393 = por %p391, %p392
      %p394 = scmp.ne.s32.totalorder %s386, %s388
      %p395 = scmp.eq.s32.totalorder %s42, 1
      %p396 = por %p394, %p395
      %p397 = scmp.ne.s32.totalorder %s388, %s389
      %p398 = scmp.eq.s32.totalorder %s42, 0
      %p399 = por %p397, %p398
      %p400 = scmp.ne.s32.totalorder %s388, %s389
      %p401 = scmp.eq.s32.totalorder %s43, 1
      %p402 = por %p400, %p401
      %p404 = scmp.ne.s32.totalorder %s389, %s403
      %p405 = scmp.eq.s32.totalorder %s43, 0
      %p406 = por %p404, %p405
      %s408 = sadd.s32 %s407, 1
      %p411 = scmp.eq.s32.totalorder %s37, 1
      %p412 = scmp.ne.s32.totalorder %s407, %s409
      %p413 = scmp.eq.s32.totalorder %s37, 0
      %p414 = por %p412, %p413
      %p415 = scmp.ne.s32.totalorder %s407, %s409
      %p416 = scmp.eq.s32.totalorder %s42, 1
      %p417 = por %p415, %p416
      %p418 = scmp.ne.s32.totalorder %s409, %s410
      %p419 = scmp.eq.s32.totalorder %s42, 0
      %p420 = por %p418, %p419
      %p421 = scmp.ne.s32.totalorder %s409, %s410
      %p422 = scmp.eq.s32.totalorder %s43, 1
      %p423 = por %p421, %p422
      %p425 = scmp.ne.s32.totalorder %s410, %s424
      %p426 = scmp.eq.s32.totalorder %s43, 0
      %p427 = por %p425, %p426
      %s429 = sadd.s32 %s428, 1
      %p432 = scmp.eq.s32.totalorder %s37, 1
      %p433 = scmp.ne.s32.totalorder %s428, %s430
      %p434 = scmp.eq.s32.totalorder %s37, 0
      %p435 = por %p433, %p434
      %p436 = scmp.ne.s32.totalorder %s428, %s430
      %p437 = scmp.eq.s32.totalorder %s42, 1
      %p438 = por %p436, %p437
      %p439 = scmp.ne.s32.totalorder %s430, %s431
      %p440 = scmp.eq.s32.totalorder %s42, 0
      %p441 = por %p439, %p440
      %p442 = scmp.ne.s32.totalorder %s430, %s431
      %p443 = scmp.eq.s32.totalorder %s43, 1
      %p444 = por %p442, %p443
      %p446 = scmp.ne.s32.totalorder %s431, %s445
      %p447 = scmp.eq.s32.totalorder %s43, 0
      %p448 = por %p446, %p447
      %s450 = sadd.s32 %s449, 1
      %p453 = scmp.eq.s32.totalorder %s37, 1
      %p454 = scmp.ne.s32.totalorder %s449, %s451
      %p455 = scmp.eq.s32.totalorder %s37, 0
      %p456 = por %p454, %p455
      %p457 = scmp.ne.s32.totalorder %s449, %s451
      %p458 = scmp.eq.s32.totalorder %s42, 1
      %p459 = por %p457, %p458
      %p460 = scmp.ne.s32.totalorder %s451, %s452
      %p461 = scmp.eq.s32.totalorder %s42, 0
      %p462 = por %p460, %p461
      %p463 = scmp.ne.s32.totalorder %s451, %s452
      %p464 = scmp.eq.s32.totalorder %s43, 1
      %p465 = por %p463, %p464
      %p467 = scmp.ne.s32.totalorder %s452, %s466
      %p468 = scmp.eq.s32.totalorder %s43, 0
      %p469 = por %p467, %p468
      %s471 = sadd.s32 %s470, 1
      %p474 = scmp.eq.s32.totalorder %s37, 1
      %p475 = scmp.ne.s32.totalorder %s470, %s472
      %p476 = scmp.eq.s32.totalorder %s37, 0
      %p477 = por %p475, %p476
      %p478 = scmp.ne.s32.totalorder %s470, %s472
      %p479 = scmp.eq.s32.totalorder %s42, 1
      %p480 = por %p478, %p479
      %p481 = scmp.ne.s32.totalorder %s472, %s473
      %p482 = scmp.eq.s32.totalorder %s42, 0
      %p483 = por %p481, %p482
      %p484 = scmp.ne.s32.totalorder %s472, %s473
      %p485 = scmp.eq.s32.totalorder %s43, 1
      %p486 = por %p484, %p485
      %p488 = scmp.ne.s32.totalorder %s473, %s487
      %p489 = scmp.eq.s32.totalorder %s43, 0
      %p490 = por %p488, %p489
      %s492 = sadd.s32 %s491, 1
      %p495 = scmp.eq.s32.totalorder %s37, 1
      %p496 = scmp.ne.s32.totalorder %s491, %s493
      %p497 = scmp.eq.s32.totalorder %s37, 0
      %p498 = por %p496, %p497
      %p499 = scmp.ne.s32.totalorder %s491, %s493
      %p500 = scmp.eq.s32.totalorder %s42, 1
      %p501 = por %p499, %p500
      %p502 = scmp.ne.s32.totalorder %s493, %s494
      %p503 = scmp.eq.s32.totalorder %s42, 0
      %p504 = por %p502, %p503
      %p505 = scmp.ne.s32.totalorder %s493, %s494
      %p506 = scmp.eq.s32.totalorder %s43, 1
      %p507 = por %p505, %p506
      %p509 = scmp.ne.s32.totalorder %s494, %s508
      %p510 = scmp.eq.s32.totalorder %s43, 0
      %p511 = por %p509, %p510
      %s513 = sadd.s32 %s512, 1
      %p516 = scmp.eq.s32.totalorder %s37, 1
      %p517 = scmp.ne.s32.totalorder %s512, %s514
      %p518 = scmp.eq.s32.totalorder %s37, 0
      %p519 = por %p517, %p518
      %p520 = scmp.ne.s32.totalorder %s512, %s514
      %p521 = scmp.eq.s32.totalorder %s42, 1
      %p522 = por %p520, %p521
      %p523 = scmp.ne.s32.totalorder %s514, %s515
      %p524 = scmp.eq.s32.totalorder %s42, 0
      %p525 = por %p523, %p524
      %p526 = scmp.ne.s32.totalorder %s514, %s515
      %p527 = scmp.eq.s32.totalorder %s43, 1
      %p528 = por %p526, %p527
      %p530 = scmp.ne.s32.totalorder %s515, %s529
      %p531 = scmp.eq.s32.totalorder %s43, 0
      %p532 = por %p530, %p531
      %s534 = sadd.s32 %s533, 1
      %p537 = scmp.eq.s32.totalorder %s37, 1
      %p538 = scmp.ne.s32.totalorder %s533, %s535
      %p539 = scmp.eq.s32.totalorder %s37, 0
      %p540 = por %p538, %p539
      %p541 = scmp.ne.s32.totalorder %s533, %s535
      %p542 = scmp.eq.s32.totalorder %s42, 1
      %p543 = por %p541, %p542
      %p544 = scmp.ne.s32.totalorder %s535, %s536
      %p545 = scmp.eq.s32.totalorder %s42, 0
      %p546 = por %p544, %p545
      %p547 = scmp.ne.s32.totalorder %s535, %s536
      %p548 = scmp.eq.s32.totalorder %s43, 1
      %p549 = por %p547, %p548
      %p551 = scmp.ne.s32.totalorder %s536, %s550
      %p552 = scmp.eq.s32.totalorder %s43, 0
      %p553 = por %p551, %p552
      %s555 = sadd.s32 %s554, 1
      %p558 = scmp.eq.s32.totalorder %s37, 1
      %p559 = scmp.ne.s32.totalorder %s554, %s556
      %p560 = scmp.eq.s32.totalorder %s37, 0
      %p561 = por %p559, %p560
      %p562 = scmp.ne.s32.totalorder %s554, %s556
      %p563 = scmp.eq.s32.totalorder %s42, 1
      %p564 = por %p562, %p563
      %p565 = scmp.ne.s32.totalorder %s556, %s557
      %p566 = scmp.eq.s32.totalorder %s42, 0
      %p567 = por %p565, %p566
      %p568 = scmp.ne.s32.totalorder %s556, %s557
      %p569 = scmp.eq.s32.totalorder %s43, 1
      %p570 = por %p568, %p569
      %p572 = scmp.ne.s32.totalorder %s557, %s571
      %p573 = scmp.eq.s32.totalorder %s43, 0
      %p574 = por %p572, %p573
      %s575 = ssub.s32 %s37, %s44
      %p576 = scmp.eq.s32.totalorder %s575, 0
      %s578 = sadd.s32 %s577, 1
      %s579 = scalar_select %p576, %s577, %s578
      %p582 = pneg %p576
      %p583 = scmp.eq.s32.totalorder %s37, 1
      %p584 = por %p582, %p583
      %p585 = scmp.ne.s32.totalorder %s577, %s580
      %p586 = scmp.eq.s32.totalorder %s37, 0
      %p587 = por %p585, %p586
      %p588 = scmp.ne.s32.totalorder %s577, %s580
      %p589 = scmp.eq.s32.totalorder %s42, 1
      %p590 = por %p588, %p589
      %p591 = scmp.ne.s32.totalorder %s580, %s581
      %p592 = scmp.eq.s32.totalorder %s42, 0
      %p593 = por %p591, %p592
      %p594 = scmp.ne.s32.totalorder %s580, %s581
      %p595 = scmp.eq.s32.totalorder %s43, 1
      %p596 = por %p594, %p595
      %p598 = scmp.ne.s32.totalorder %s581, %s597
      %p599 = scmp.eq.s32.totalorder %s43, 0
      %p600 = por %p598, %p599
      %p601 = scmp.le.s32.totalorder 1, %s37
      %p602 = scmp.lt.s32.totalorder %s37, 3
      %p603 = pnand %p601, %p602
      %p604 = pneg %p603
      // Predicated region
      $region9: #{msca_block_forward.1} parent=5 // pred_check
        _
      $region10: #{msca_block_forward.1} parent=5 // pred_check_branch
        %606 = sbr.rel (%p603) target = $region12
      $region11: #{msca_block_forward.1} parent=5 // pred_region
        %s607 = ssub.s32 %s37, 1
        // Predicated region
        $region13: #{msca_block_forward.1} parent=11 // pred_check
          %p608 = pneg %p84
        $region14: #{msca_block_forward.1} parent=11 // pred_check_branch
          %610 = sbr.rel (%p608) target = $region16
        $region15: #{msca_block_forward.1} parent=11 // pred_region
          %s612 = ssub.s32 9216, 9216
          %613 = vsyncadd [#allocation3], %s612
          %s614 = sshll.u32 [#allocation2], 4
          %s615 = int_to_ptr.vmem [resolvable:$true] %s614
          %620 = dma.hbm_to_vmem [thread:$0]  %s1, 9216, %s615, [#allocation3], 256, 256, 16
        $region16: #{msca_block_forward.1} parent=11 // pred_fallthru
          _
        // Predicated region
        $region17: #{msca_block_forward.1} parent=11 // pred_check
          %p621 = pneg %p105
        $region18: #{msca_block_forward.1} parent=11 // pred_check_branch
          %623 = sbr.rel (%p621) target = $region20
        $region19: #{msca_block_forward.1} parent=11 // pred_region
          _
        $region20: #{msca_block_forward.1} parent=11 // pred_fallthru
          _
        // Predicated region
        $region21: #{msca_block_forward.1} parent=11 // pred_check
          %p624 = pneg %p126
        $region22: #{msca_block_forward.1} parent=11 // pred_check_branch
          %626 = sbr.rel (%p624) target = $region24
        $region23: #{msca_block_forward.1} parent=11 // pred_region
          %s628 = ssub.s32 25600, 25600
          %629 = vsyncadd [#allocation5], %s628
          %s630 = sshll.u32 [#allocation4], 4
          %s631 = int_to_ptr.vmem [resolvable:$true] %s630
          %636 = dma.hbm_to_vmem [thread:$0]  %s3, 25600, %s631, [#allocation5], 256, 256, 16
        $region24: #{msca_block_forward.1} parent=11 // pred_fallthru
          _
        // Predicated region
        $region25: #{msca_block_forward.1} parent=11 // pred_check
          %p637 = pneg %p147
        $region26: #{msca_block_forward.1} parent=11 // pred_check_branch
          %639 = sbr.rel (%p637) target = $region28
        $region27: #{msca_block_forward.1} parent=11 // pred_region
          _
        $region28: #{msca_block_forward.1} parent=11 // pred_fallthru
          _
        // Predicated region
        $region29: #{msca_block_forward.1} parent=11 // pred_check
          %p640 = pneg %p168
        $region30: #{msca_block_forward.1} parent=11 // pred_check_branch
          %642 = sbr.rel (%p640) target = $region32
        $region31: #{msca_block_forward.1} parent=11 // pred_region
          %s644 = ssub.s32 7168, 7168
          %645 = vsyncadd [#allocation5], %s644
          %s646 = sshll.u32 [#allocation6], 4
          %s647 = int_to_ptr.vmem [resolvable:$true] %s646
          %652 = dma.hbm_to_vmem [thread:$0]  %s5, 7168, %s647, [#allocation5], 256, 256, 16
        $region32: #{msca_block_forward.1} parent=11 // pred_fallthru
          _
        // Predicated region
        $region33: #{msca_block_forward.1} parent=11 // pred_check
          %p653 = pneg %p189
        $region34: #{msca_block_forward.1} parent=11 // pred_check_branch
          %655 = sbr.rel (%p653) target = $region36
        $region35: #{msca_block_forward.1} parent=11 // pred_region
          _
        $region36: #{msca_block_forward.1} parent=11 // pred_fallthru
          _
        // Predicated region
        $region37: #{msca_block_forward.1} parent=11 // pred_check
          %p656 = pneg %p210
        $region38: #{msca_block_forward.1} parent=11 // pred_check_branch
          %658 = sbr.rel (%p656) target = $region40
        $region39: #{msca_block_forward.1} parent=11 // pred_region
          %s660 = ssub.s32 7168, 7168
          %661 = vsyncadd [#allocation8], %s660
          %s662 = sshll.u32 [#allocation7], 4
          %s663 = int_to_ptr.vmem [resolvable:$true] %s662
          %668 = dma.hbm_to_vmem [thread:$0]  %s7, 7168, %s663, [#allocation8], 256, 256, 16
        $region40: #{msca_block_forward.1} parent=11 // pred_fallthru
          _
        // Predicated region
        $region41: #{msca_block_forward.1} parent=11 // pred_check
          %p669 = pneg %p231
        $region42: #{msca_block_forward.1} parent=11 // pred_check_branch
          %671 = sbr.rel (%p669) target = $region44
        $region43: #{msca_block_forward.1} parent=11 // pred_region
          _
        $region44: #{msca_block_forward.1} parent=11 // pred_fallthru
          _
        // Predicated region
        $region45: #{msca_block_forward.1} parent=11 // pred_check
          %p672 = pneg %p252
        $region46: #{msca_block_forward.1} parent=11 // pred_check_branch
          %674 = sbr.rel (%p672) target = $region48
        $region47: #{msca_block_forward.1} parent=11 // pred_region
          _
        $region48: #{msca_block_forward.1} parent=11 // pred_fallthru
          _
        // Predicated region
        $region49: #{msca_block_forward.1} parent=11 // pred_check
          %p675 = pneg %p273
        $region50: #{msca_block_forward.1} parent=11 // pred_check_branch
          %677 = sbr.rel (%p675) target = $region52
        $region51: #{msca_block_forward.1} parent=11 // pred_region
          _
        $region52: #{msca_block_forward.1} parent=11 // pred_fallthru
          _
        // Predicated region
        $region53: #{msca_block_forward.1} parent=11 // pred_check
          %p678 = pneg %p294
        $region54: #{msca_block_forward.1} parent=11 // pred_check_branch
          %680 = sbr.rel (%p678) target = $region56
        $region55: #{msca_block_forward.1} parent=11 // pred_region
          %s682 = ssub.s32 11264, 11264
          %683 = vsyncadd [#allocation8], %s682
          %s684 = sshll.u32 [#allocation9], 4
          %s685 = int_to_ptr.vmem [resolvable:$true] %s684
          %690 = dma.hbm_to_vmem [thread:$0]  %s11, 11264, %s685, [#allocation8], 256, 256, 16
        $region56: #{msca_block_forward.1} parent=11 // pred_fallthru
          _
        // Predicated region
        $region57: #{msca_block_forward.1} parent=11 // pred_check
          %p691 = pneg %p315
        $region58: #{msca_block_forward.1} parent=11 // pred_check_branch
          %693 = sbr.rel (%p691) target = $region60
        $region59: #{msca_block_forward.1} parent=11 // pred_region
          %s695 = ssub.s32 1024, 1024
          %696 = vsyncadd [#allocation11], %s695
          %s697 = sshll.u32 [#allocation10], 4
          %s698 = int_to_ptr.vmem [resolvable:$true] %s697
          %703 = dma.hbm_to_vmem [thread:$0]  %s12, 1024, %s698, [#allocation11], 256, 256, 16
        $region60: #{msca_block_forward.1} parent=11 // pred_fallthru
          _
        // Predicated region
        $region61: #{msca_block_forward.1} parent=11 // pred_check
          %p704 = pneg %p336
        $region62: #{msca_block_forward.1} parent=11 // pred_check_branch
          %706 = sbr.rel (%p704) target = $region64
        $region63: #{msca_block_forward.1} parent=11 // pred_region
          %s708 = ssub.s32 21504, 21504
          %709 = vsyncadd [#allocation11], %s708
          %s710 = sshll.u32 [#allocation12], 4
          %s711 = int_to_ptr.vmem [resolvable:$true] %s710
          %716 = dma.hbm_to_vmem [thread:$0]  %s13, 21504, %s711, [#allocation11], 256, 256, 16
        $region64: #{msca_block_forward.1} parent=11 // pred_fallthru
          _
        // Predicated region
        $region65: #{msca_block_forward.1} parent=11 // pred_check
          %p717 = pneg %p357
        $region66: #{msca_block_forward.1} parent=11 // pred_check_branch
          %719 = sbr.rel (%p717) target = $region68
        $region67: #{msca_block_forward.1} parent=11 // pred_region
          %s721 = ssub.s32 1024, 1024
          %722 = vsyncadd [#allocation14], %s721
          %s723 = sshll.u32 [#allocation13], 4
          %s724 = int_to_ptr.vmem [resolvable:$true] %s723
          %729 = dma.hbm_to_vmem [thread:$0]  %s14, 1024, %s724, [#allocation14], 256, 256, 16
        $region68: #{msca_block_forward.1} parent=11 // pred_fallthru
          _
        // Predicated region
        $region69: #{msca_block_forward.1} parent=11 // pred_check
          %p730 = pneg %p378
        $region70: #{msca_block_forward.1} parent=11 // pred_check_branch
          %732 = sbr.rel (%p730) target = $region72
        $region71: #{msca_block_forward.1} parent=11 // pred_region
          %s734 = ssub.s32 21504, 21504
          %735 = vsyncadd [#allocation14], %s734
          %s736 = sshll.u32 [#allocation15], 4
          %s737 = int_to_ptr.vmem [resolvable:$true] %s736
          %742 = dma.hbm_to_vmem [thread:$0]  %s15, 21504, %s737, [#allocation14], 256, 256, 16
        $region72: #{msca_block_forward.1} parent=11 // pred_fallthru
          _
        // Predicated region
        $region73: #{msca_block_forward.1} parent=11 // pred_check
          %p743 = pneg %p399
        $region74: #{msca_block_forward.1} parent=11 // pred_check_branch
          %745 = sbr.rel (%p743) target = $region76
        $region75: #{msca_block_forward.1} parent=11 // pred_region
          %s747 = ssub.s32 1024, 1024
          %748 = vsyncadd [#allocation17], %s747
          %s749 = sshll.u32 [#allocation16], 4
          %s750 = int_to_ptr.vmem [resolvable:$true] %s749
          %755 = dma.hbm_to_vmem [thread:$0]  %s16, 1024, %s750, [#allocation17], 256, 256, 16
        $region76: #{msca_block_forward.1} parent=11 // pred_fallthru
          _
        // Predicated region
        $region77: #{msca_block_forward.1} parent=11 // pred_check
          %p756 = pneg %p420
        $region78: #{msca_block_forward.1} parent=11 // pred_check_branch
          %758 = sbr.rel (%p756) target = $region80
        $region79: #{msca_block_forward.1} parent=11 // pred_region
          _
        $region80: #{msca_block_forward.1} parent=11 // pred_fallthru
          _
        // Predicated region
        $region81: #{msca_block_forward.1} parent=11 // pred_check
          %p759 = pneg %p441
        $region82: #{msca_block_forward.1} parent=11 // pred_check_branch
          %761 = sbr.rel (%p759) target = $region84
        $region83: #{msca_block_forward.1} parent=11 // pred_region
          _
        $region84: #{msca_block_forward.1} parent=11 // pred_fallthru
          _
        // Predicated region
        $region85: #{msca_block_forward.1} parent=11 // pred_check
          %p762 = pneg %p462
        $region86: #{msca_block_forward.1} parent=11 // pred_check_branch
          %764 = sbr.rel (%p762) target = $region88
        $region87: #{msca_block_forward.1} parent=11 // pred_region
          _
        $region88: #{msca_block_forward.1} parent=11 // pred_fallthru
          _
        // Predicated region
        $region89: #{msca_block_forward.1} parent=11 // pred_check
          %p765 = pneg %p483
        $region90: #{msca_block_forward.1} parent=11 // pred_check_branch
          %767 = sbr.rel (%p765) target = $region92
        $region91: #{msca_block_forward.1} parent=11 // pred_region
          _
        $region92: #{msca_block_forward.1} parent=11 // pred_fallthru
          _
        // Predicated region
        $region93: #{msca_block_forward.1} parent=11 // pred_check
          %p768 = pneg %p504
        $region94: #{msca_block_forward.1} parent=11 // pred_check_branch
          %770 = sbr.rel (%p768) target = $region96
        $region95: #{msca_block_forward.1} parent=11 // pred_region
          _
        $region96: #{msca_block_forward.1} parent=11 // pred_fallthru
          _
        // Predicated region
        $region97: #{msca_block_forward.1} parent=11 // pred_check
          %p771 = pneg %p525
        $region98: #{msca_block_forward.1} parent=11 // pred_check_branch
          %773 = sbr.rel (%p771) target = $region100
        $region99: #{msca_block_forward.1} parent=11 // pred_region
          _
        $region100: #{msca_block_forward.1} parent=11 // pred_fallthru
          _
        // Predicated region
        $region101: #{msca_block_forward.1} parent=11 // pred_check
          %p774 = pneg %p546
        $region102: #{msca_block_forward.1} parent=11 // pred_check_branch
          %776 = sbr.rel (%p774) target = $region104
        $region103: #{msca_block_forward.1} parent=11 // pred_region
          %s778 = ssub.s32 512, 512
          %779 = vsyncadd [#allocation17], %s778
          %s780 = sshll.u32 [#allocation18], 4
          %s781 = int_to_ptr.vmem [resolvable:$true] %s780
          %786 = dma.hbm_to_vmem [thread:$0]  %s23, 512, %s781, [#allocation17], 128, 128, 8
        $region104: #{msca_block_forward.1} parent=11 // pred_fallthru
          _
        // Predicated region
        $region105: #{msca_block_forward.1} parent=11 // pred_check
          %p787 = pneg %p567
        $region106: #{msca_block_forward.1} parent=11 // pred_check_branch
          %789 = sbr.rel (%p787) target = $region108
        $region107: #{msca_block_forward.1} parent=11 // pred_region
          _
        $region108: #{msca_block_forward.1} parent=11 // pred_fallthru
          _
      $region12: #{msca_block_forward.1} parent=5 // pred_fallthru
        _
      %p790 = scmp.lt.s32.totalorder %s37, 2
      // Predicated region
      $region109: #{msca_block_forward.1} parent=5 // pred_check
        %p791 = pneg %p790
      $region110: #{msca_block_forward.1} parent=5 // pred_check_branch
        %793 = sbr.rel (%p791) target = $region112
      $region111: #{msca_block_forward.1} parent=5 // pred_region
        // Predicated region
        $region113: #{msca_block_forward.1} parent=111 // pred_check
          %p794 = pneg %p57
        $region114: #{msca_block_forward.1} parent=111 // pred_check_branch
          %796 = sbr.rel (%p794) target = $region116
        $region115: #{msca_block_forward.1} parent=111 // pred_region
          %p797 = scmp.lt.s32.totalorder %s37, 1
          %s798 = scalar_select %p797, %s37, 1
          %s799 = smul.addr %s798, 8
          %s800 = smul.addr %s799, 8
          %s801 = scalar_lea.vmem %s0, %s800
        $region116: #{msca_block_forward.1} parent=111 // pred_fallthru
          _
      $region112: #{msca_block_forward.1} parent=5 // pred_fallthru
        _
      %p802 = scmp.le.s32.totalorder 1, %s37
      %p803 = scmp.lt.s32.totalorder %s37, 3
      %p804 = pnand %p802, %p803
      %p805 = pneg %p804
      // Predicated region
      $region117: #{msca_block_forward.1} parent=5 // pred_check
        _
      $region118: #{msca_block_forward.1} parent=5 // pred_check_branch
        %807 = sbr.rel (%p804) target = $region120
      $region119: #{msca_block_forward.1} parent=5 // pred_region
        %s808 = ssub.s32 %s37, 1
        // Predicated region
        $region121: #{msca_block_forward.1} parent=119 // pred_check
          %p809 = pneg %p84
        $region122: #{msca_block_forward.1} parent=119 // pred_check_branch
          %811 = sbr.rel (%p809) target = $region124
        $region123: #{msca_block_forward.1} parent=119 // pred_region
          %812 = dma.done [#allocation3], 9216
        $region124: #{msca_block_forward.1} parent=119 // pred_fallthru
          _
        // Predicated region
        $region125: #{msca_block_forward.1} parent=119 // pred_check
          %p813 = pneg %p126
        $region126: #{msca_block_forward.1} parent=119 // pred_check_branch
          %815 = sbr.rel (%p813) target = $region128
        $region127: #{msca_block_forward.1} parent=119 // pred_region
          %816 = dma.done [#allocation5], 25600
        $region128: #{msca_block_forward.1} parent=119 // pred_fallthru
          _
        // Predicated region
        $region129: #{msca_block_forward.1} parent=119 // pred_check
          %p817 = pneg %p168
        $region130: #{msca_block_forward.1} parent=119 // pred_check_branch
          %819 = sbr.rel (%p817) target = $region132
        $region131: #{msca_block_forward.1} parent=119 // pred_region
          %820 = dma.done [#allocation5], 7168
        $region132: #{msca_block_forward.1} parent=119 // pred_fallthru
          _
        // Predicated region
        $region133: #{msca_block_forward.1} parent=119 // pred_check
          %p821 = pneg %p210
        $region134: #{msca_block_forward.1} parent=119 // pred_check_branch
          %823 = sbr.rel (%p821) target = $region136
        $region135: #{msca_block_forward.1} parent=119 // pred_region
          %824 = dma.done [#allocation8], 7168
        $region136: #{msca_block_forward.1} parent=119 // pred_fallthru
          _
        // Predicated region
        $region137: #{msca_block_forward.1} parent=119 // pred_check
          %p825 = pneg %p294
        $region138: #{msca_block_forward.1} parent=119 // pred_check_branch
          %827 = sbr.rel (%p825) target = $region140
        $region139: #{msca_block_forward.1} parent=119 // pred_region
          %828 = dma.done [#allocation8], 11264
        $region140: #{msca_block_forward.1} parent=119 // pred_fallthru
          _
        // Predicated region
        $region141: #{msca_block_forward.1} parent=119 // pred_check
          %p829 = pneg %p315
        $region142: #{msca_block_forward.1} parent=119 // pred_check_branch
          %831 = sbr.rel (%p829) target = $region144
        $region143: #{msca_block_forward.1} parent=119 // pred_region
          %832 = dma.done [#allocation11], 1024
        $region144: #{msca_block_forward.1} parent=119 // pred_fallthru
          _
        // Predicated region
        $region145: #{msca_block_forward.1} parent=119 // pred_check
          %p833 = pneg %p336
        $region146: #{msca_block_forward.1} parent=119 // pred_check_branch
          %835 = sbr.rel (%p833) target = $region148
        $region147: #{msca_block_forward.1} parent=119 // pred_region
          %836 = dma.done [#allocation11], 21504
        $region148: #{msca_block_forward.1} parent=119 // pred_fallthru
          _
        // Predicated region
        $region149: #{msca_block_forward.1} parent=119 // pred_check
          %p837 = pneg %p357
        $region150: #{msca_block_forward.1} parent=119 // pred_check_branch
          %839 = sbr.rel (%p837) target = $region152
        $region151: #{msca_block_forward.1} parent=119 // pred_region
          %840 = dma.done [#allocation14], 1024
        $region152: #{msca_block_forward.1} parent=119 // pred_fallthru
          _
        // Predicated region
        $region153: #{msca_block_forward.1} parent=119 // pred_check
          %p841 = pneg %p378
        $region154: #{msca_block_forward.1} parent=119 // pred_check_branch
          %843 = sbr.rel (%p841) target = $region156
        $region155: #{msca_block_forward.1} parent=119 // pred_region
          %844 = dma.done [#allocation14], 21504
        $region156: #{msca_block_forward.1} parent=119 // pred_fallthru
          _
        // Predicated region
        $region157: #{msca_block_forward.1} parent=119 // pred_check
          %p845 = pneg %p399
        $region158: #{msca_block_forward.1} parent=119 // pred_check_branch
          %847 = sbr.rel (%p845) target = $region160
        $region159: #{msca_block_forward.1} parent=119 // pred_region
          %848 = dma.done [#allocation17], 1024
        $region160: #{msca_block_forward.1} parent=119 // pred_fallthru
          _
        // Predicated region
        $region161: #{msca_block_forward.1} parent=119 // pred_check
          %p849 = pneg %p546
        $region162: #{msca_block_forward.1} parent=119 // pred_check_branch
          %851 = sbr.rel (%p849) target = $region164
        $region163: #{msca_block_forward.1} parent=119 // pred_region
          %852 = dma.done [#allocation17], 512
        $region164: #{msca_block_forward.1} parent=119 // pred_fallthru
          _
        %p853 = scmp.lt.s32.totalorder %s42, 1
        %s854 = scalar_select %p853, %s42, 1
        %s855 = smul.addr %s854, 8
        %s856 = smul.addr %s855, 8
        %s857 = scalar_lea.vmem %s0, %s856
        %p858 = pneg %p63
        %p859 = pneg %p60
        %p860 = pneg %p84
        %p861 = pneg %p81
        %p862 = pneg %p105
        %p863 = pneg %p102
        %p864 = pneg %p126
        %p865 = pneg %p123
        %p866 = pneg %p147
        %p867 = pneg %p144
        %p868 = pneg %p168
        %p869 = pneg %p165
        %p870 = pneg %p189
        %p871 = pneg %p186
        %p872 = pneg %p210
        %p873 = pneg %p207
        %p874 = pneg %p231
        %p875 = pneg %p228
        %p876 = pneg %p252
        %p877 = pneg %p249
        %p878 = pneg %p273
        %p879 = pneg %p270
        %p880 = pneg %p294
        %p881 = pneg %p291
        %p882 = pneg %p315
        %p883 = pneg %p312
        %p884 = pneg %p336
        %p885 = pneg %p333
        %p886 = pneg %p357
        %p887 = pneg %p354
        %p888 = pneg %p378
        %p889 = pneg %p375
        %p890 = pneg %p399
        %p891 = pneg %p396
        %p892 = pneg %p420
        %p893 = pneg %p417
        %p894 = pneg %p441
        %p895 = pneg %p438
        %p896 = pneg %p462
        %p897 = pneg %p459
        %p898 = pneg %p483
        %p899 = pneg %p480
        %p900 = pneg %p504
        %p901 = pneg %p501
        %p902 = pneg %p525
        %p903 = pneg %p522
        %p904 = pneg %p546
        %p905 = pneg %p543
        %p906 = pneg %p567
        %p907 = pneg %p564
        %p908 = pneg %p593
        %p909 = pneg %p590
        %p910 = scmp.lt.s32.totalorder %s42, 1
        %s911 = scalar_select %p910, %s42, 1
        %s912 = smul.addr %s911, 8
        %s913 = smul.addr %s912, 8
        %s914 = scalar_lea.vmem %s25, %s913
        %p915 = scmp.lt.s32.totalorder %s42, 1
        %s916 = scalar_select %p915, %s42, 1
        %s917 = smul.addr %s916, 8
        %s918 = smul.addr %s917, 8
        %s919 = scalar_lea.vmem %s0, %s918
        %p920 = scmp.lt.s32.totalorder %s42, 1
        %s921 = scalar_select %p920, %s42, 1
        %s922 = smul.addr %s921, 8
        %s923 = smul.addr %s922, 8
        %s924 = scalar_lea.vmem %s25, %s923
        %v925 = vld [vmem:[%s919] sm:$0xff]
        %v926 = vld [vmem:[%s919 + $0x8] sm:$0xff]
        %v927 = vld [vmem:[%s919 + $0x10] sm:$0xff]
        %v928 = vld [vmem:[%s919 + $0x18] sm:$0xff]
        %v929 = vld [vmem:[%s919 + $0x20] sm:$0xff]
        %v930 = vld [vmem:[%s919 + $0x28] sm:$0xff]
        %v931 = vld [vmem:[%s919 + $0x30] sm:$0xff]
        %v932 = vld [vmem:[%s919 + $0x38] sm:$0xff]
        %v933 = vld [vmem:[%s2] sm:$0xff]
        %v934 = vld [vmem:[%s2 + $0x8] sm:$0xff]
        %v935 = vld [vmem:[%s2 + $0x10] sm:$0xff]
        %v936 = vld [vmem:[%s2 + $0x18] sm:$0xff]
        %v937 = vld [vmem:[%s2 + $0x20] sm:$0xff]
        %v938 = vld [vmem:[%s2 + $0x28] sm:$0xff]
        %v939 = vld [vmem:[%s2 + $0x30] sm:$0xff]
        %v940 = vld [vmem:[%s2 + $0x38] sm:$0xff]
        %941 = vrot.lane.b32.xlu0 %v925, 17
        %v942 = vpop.permute.xlu0 %941
        %943 = vrot.lane.b32.xlu0 %v927, 17
        %v944 = vpop.permute.xlu0 %943
        %945 = vrot.lane.b32.xlu0 %v929, 17
        %v946 = vpop.permute.xlu0 %945
        %947 = vrot.lane.b32.xlu0 %v931, 17
        %v948 = vpop.permute.xlu0 %947
        %949 = vrot.lane.b32.xlu0 %v926, 17
        %v950 = vpop.permute.xlu0 %949
        %951 = vrot.lane.b32.xlu0 %v928, 17
        %v952 = vpop.permute.xlu0 %951
        %953 = vrot.lane.b32.xlu0 %v930, 17
        %v954 = vpop.permute.xlu0 %953
        %955 = vrot.lane.b32.xlu0 %v932, 17
        %v956 = vpop.permute.xlu0 %955
        %v957 = vlaneseq
        %v958 = vand.u32 %v957, 127
        %vm959 = vcmp.lt.s32.totalorder %v958, 17
        %v960 = vsel %vm959, %v942, %v950
        %v961 = vsel %vm959, %v944, %v952
        %v962 = vsel %vm959, %v946, %v954
        %v963 = vsel %vm959, %v948, %v956
        %v964 = vsel %vm959, %v950, %v942
        %v965 = vsel %vm959, %v952, %v944
        %v966 = vsel %vm959, %v954, %v946
        %v967 = vsel %vm959, %v956, %v948
        %v968 = vld [vmem:[#allocation2] sm:$0xff]
        %v969 = vld [vmem:[#allocation2 + $0x8] sm:$0xff]
        %v970 = vld [vmem:[#allocation2 + $0x10] sm:$0xff]
        %v971 = vld [vmem:[#allocation2 + $0x18] sm:$0xff]
        %v972 = vld [vmem:[#allocation2 + $0x20] sm:$0xff]
        %v973 = vld [vmem:[#allocation2 + $0x28] sm:$0xff]
        %v974 = vld [vmem:[#allocation2 + $0x30] sm:$0xff]
        %v975 = vld [vmem:[#allocation2 + $0x38] sm:$0xff]
        %v976 = vmul.f32 %v968, %v964
        %v977 = vmul.f32 %v969, %v960
        %v978 = vmul.f32 %v970, %v965
        %v979 = vmul.f32 %v971, %v961
        %v980 = vmul.f32 %v972, %v966
        %v981 = vmul.f32 %v973, %v962
        %v982 = vmul.f32 %v974, %v967
        %v983 = vmul.f32 %v975, %v963
        %v984 = vadd.f32 %v933, %v976
        %v985 = vadd.f32 %v934, %v977
        %v986 = vadd.f32 %v935, %v978
        %v987 = vadd.f32 %v936, %v979
        %v988 = vadd.f32 %v937, %v980
        %v989 = vadd.f32 %v938, %v981
        %v990 = vadd.f32 %v939, %v982
        %v991 = vadd.f32 %v940, %v983
        %992 = vrot.lane.b32.xlu0 %v925, 16
        %v993 = vpop.permute.xlu0 %992
        %994 = vrot.lane.b32.xlu0 %v927, 16
        %v995 = vpop.permute.xlu0 %994
        %996 = vrot.lane.b32.xlu0 %v929, 16
        %v997 = vpop.permute.xlu0 %996
        %998 = vrot.lane.b32.xlu0 %v931, 16
        %v999 = vpop.permute.xlu0 %998
        %1000 = vrot.lane.b32.xlu0 %v926, 16
        %v1001 = vpop.permute.xlu0 %1000
        %1002 = vrot.lane.b32.xlu0 %v928, 16
        %v1003 = vpop.permute.xlu0 %1002
        %1004 = vrot.lane.b32.xlu0 %v930, 16
        %v1005 = vpop.permute.xlu0 %1004
        %1006 = vrot.lane.b32.xlu0 %v932, 16
        %v1007 = vpop.permute.xlu0 %1006
        %vm1008 = vcmp.lt.s32.totalorder %v958, 16
        %v1009 = vsel %vm1008, %v993, %v1001
        %v1010 = vsel %vm1008, %v995, %v1003
        %v1011 = vsel %vm1008, %v997, %v1005
        %v1012 = vsel %vm1008, %v999, %v1007
        %v1013 = vsel %vm1008, %v1001, %v993
        %v1014 = vsel %vm1008, %v1003, %v995
        %v1015 = vsel %vm1008, %v1005, %v997
        %v1016 = vsel %vm1008, %v1007, %v999
        %s1017 = scalar_lea.vmem [#allocation2], 64
        %v1018 = vld [vmem:[%s1017] sm:$0xff]
        %v1019 = vld [vmem:[%s1017 + $0x8] sm:$0xff]
        %v1020 = vld [vmem:[%s1017 + $0x10] sm:$0xff]
        %v1021 = vld [vmem:[%s1017 + $0x18] sm:$0xff]
        %v1022 = vld [vmem:[%s1017 + $0x20] sm:$0xff]
        %v1023 = vld [vmem:[%s1017 + $0x28] sm:$0xff]
        %v1024 = vld [vmem:[%s1017 + $0x30] sm:$0xff]
        %v1025 = vld [vmem:[%s1017 + $0x38] sm:$0xff]
        %v1026 = vmul.f32 %v1018, %v1013
        %v1027 = vmul.f32 %v1019, %v1009
        %v1028 = vmul.f32 %v1020, %v1014
        %v1029 = vmul.f32 %v1021, %v1010
        %v1030 = vmul.f32 %v1022, %v1015
        %v1031 = vmul.f32 %v1023, %v1011
        %v1032 = vmul.f32 %v1024, %v1016
        %v1033 = vmul.f32 %v1025, %v1012
        %v1034 = vadd.f32 %v984, %v1026
        %v1035 = vadd.f32 %v985, %v1027
        %v1036 = vadd.f32 %v986, %v1028
        %v1037 = vadd.f32 %v987, %v1029
        %v1038 = vadd.f32 %v988, %v1030
        %v1039 = vadd.f32 %v989, %v1031
        %v1040 = vadd.f32 %v990, %v1032
        %v1041 = vadd.f32 %v991, %v1033
        %1042 = vrot.lane.b32.xlu0 %v925, 15
        %v1043 = vpop.permute.xlu0 %1042
        %1044 = vrot.lane.b32.xlu0 %v927, 15
        %v1045 = vpop.permute.xlu0 %1044
        %1046 = vrot.lane.b32.xlu0 %v929, 15
        %v1047 = vpop.permute.xlu0 %1046
        %1048 = vrot.lane.b32.xlu0 %v931, 15
        %v1049 = vpop.permute.xlu0 %1048
        %1050 = vrot.lane.b32.xlu0 %v926, 15
        %v1051 = vpop.permute.xlu0 %1050
        %1052 = vrot.lane.b32.xlu0 %v928, 15
        %v1053 = vpop.permute.xlu0 %1052
        %1054 = vrot.lane.b32.xlu0 %v930, 15
        %v1055 = vpop.permute.xlu0 %1054
        %1056 = vrot.lane.b32.xlu0 %v932, 15
        %v1057 = vpop.permute.xlu0 %1056
        %vm1058 = vcmp.lt.s32.totalorder %v958, 15
        %v1059 = vsel %vm1058, %v1043, %v1051
        %v1060 = vsel %vm1058, %v1045, %v1053
        %v1061 = vsel %vm1058, %v1047, %v1055
        %v1062 = vsel %vm1058, %v1049, %v1057
        %v1063 = vsel %vm1058, %v1051, %v1043
        %v1064 = vsel %vm1058, %v1053, %v1045
        %v1065 = vsel %vm1058, %v1055, %v1047
        %v1066 = vsel %vm1058, %v1057, %v1049
        %s1067 = scalar_lea.vmem [#allocation2], 128
        %v1068 = vld [vmem:[%s1067] sm:$0xff]
        %v1069 = vld [vmem:[%s1067 + $0x8] sm:$0xff]
        %v1070 = vld [vmem:[%s1067 + $0x10] sm:$0xff]
        %v1071 = vld [vmem:[%s1067 + $0x18] sm:$0xff]
        %v1072 = vld [vmem:[%s1067 + $0x20] sm:$0xff]
        %v1073 = vld [vmem:[%s1067 + $0x28] sm:$0xff]
        %v1074 = vld [vmem:[%s1067 + $0x30] sm:$0xff]
        %v1075 = vld [vmem:[%s1067 + $0x38] sm:$0xff]
        %v1076 = vmul.f32 %v1068, %v1063
        %v1077 = vmul.f32 %v1069, %v1059
        %v1078 = vmul.f32 %v1070, %v1064
        %v1079 = vmul.f32 %v1071, %v1060
        %v1080 = vmul.f32 %v1072, %v1065
        %v1081 = vmul.f32 %v1073, %v1061
        %v1082 = vmul.f32 %v1074, %v1066
        %v1083 = vmul.f32 %v1075, %v1062
        %v1084 = vadd.f32 %v1034, %v1076
        %v1085 = vadd.f32 %v1035, %v1077
        %v1086 = vadd.f32 %v1036, %v1078
        %v1087 = vadd.f32 %v1037, %v1079
        %v1088 = vadd.f32 %v1038, %v1080
        %v1089 = vadd.f32 %v1039, %v1081
        %v1090 = vadd.f32 %v1040, %v1082
        %v1091 = vadd.f32 %v1041, %v1083
        %1092 = vrot.lane.b32.xlu0 %v925, 1
        %v1093 = vpop.permute.xlu0 %1092
        %1094 = vrot.lane.b32.xlu0 %v927, 1
        %v1095 = vpop.permute.xlu0 %1094
        %1096 = vrot.lane.b32.xlu0 %v929, 1
        %v1097 = vpop.permute.xlu0 %1096
        %1098 = vrot.lane.b32.xlu0 %v931, 1
        %v1099 = vpop.permute.xlu0 %1098
        %1100 = vrot.lane.b32.xlu0 %v926, 1
        %v1101 = vpop.permute.xlu0 %1100
        %1102 = vrot.lane.b32.xlu0 %v928, 1
        %v1103 = vpop.permute.xlu0 %1102
        %1104 = vrot.lane.b32.xlu0 %v930, 1
        %v1105 = vpop.permute.xlu0 %1104
        %1106 = vrot.lane.b32.xlu0 %v932, 1
        %v1107 = vpop.permute.xlu0 %1106
        %vm1108 = vcmp.lt.s32.totalorder %v958, 1
        %v1109 = vsel %vm1108, %v1093, %v1101
        %v1110 = vsel %vm1108, %v1095, %v1103
        %v1111 = vsel %vm1108, %v1097, %v1105
        %v1112 = vsel %vm1108, %v1099, %v1107
        %v1113 = vsel %vm1108, %v1101, %v1093
        %v1114 = vsel %vm1108, %v1103, %v1095
        %v1115 = vsel %vm1108, %v1105, %v1097
        %v1116 = vsel %vm1108, %v1107, %v1099
        %s1117 = scalar_lea.vmem [#allocation2], 192
        %v1118 = vld [vmem:[%s1117] sm:$0xff]
        %v1119 = vld [vmem:[%s1117 + $0x8] sm:$0xff]
        %v1120 = vld [vmem:[%s1117 + $0x10] sm:$0xff]
        %v1121 = vld [vmem:[%s1117 + $0x18] sm:$0xff]
        %v1122 = vld [vmem:[%s1117 + $0x20] sm:$0xff]
        %v1123 = vld [vmem:[%s1117 + $0x28] sm:$0xff]
        %v1124 = vld [vmem:[%s1117 + $0x30] sm:$0xff]
        %v1125 = vld [vmem:[%s1117 + $0x38] sm:$0xff]
        %v1126 = vmul.f32 %v1118, %v1113
        %v1127 = vmul.f32 %v1119, %v1109
        %v1128 = vmul.f32 %v1120, %v1114
        %v1129 = vmul.f32 %v1121, %v1110
        %v1130 = vmul.f32 %v1122, %v1115
        %v1131 = vmul.f32 %v1123, %v1111
        %v1132 = vmul.f32 %v1124, %v1116
        %v1133 = vmul.f32 %v1125, %v1112
        %v1134 = vadd.f32 %v1084, %v1126
        %v1135 = vadd.f32 %v1085, %v1127
        %v1136 = vadd.f32 %v1086, %v1128
        %v1137 = vadd.f32 %v1087, %v1129
        %v1138 = vadd.f32 %v1088, %v1130
        %v1139 = vadd.f32 %v1089, %v1131
        %v1140 = vadd.f32 %v1090, %v1132
        %v1141 = vadd.f32 %v1091, %v1133
        %s1142 = scalar_lea.vmem [#allocation2], 256
        %v1143 = vld [vmem:[%s1142] sm:$0xff]
        %v1144 = vld [vmem:[%s1142 + $0x8] sm:$0xff]
        %v1145 = vld [vmem:[%s1142 + $0x10] sm:$0xff]
        %v1146 = vld [vmem:[%s1142 + $0x18] sm:$0xff]
        %v1147 = vld [vmem:[%s1142 + $0x20] sm:$0xff]
        %v1148 = vld [vmem:[%s1142 + $0x28] sm:$0xff]
        %v1149 = vld [vmem:[%s1142 + $0x30] sm:$0xff]
        %v1150 = vld [vmem:[%s1142 + $0x38] sm:$0xff]
        %v1151 = vmul.f32 %v1143, %v925
        %v1152 = vmul.f32 %v1144, %v926
        %v1153 = vmul.f32 %v1145, %v927
        %v1154 = vmul.f32 %v1146, %v928
        %v1155 = vmul.f32 %v1147, %v929
        %v1156 = vmul.f32 %v1148, %v930
        %v1157 = vmul.f32 %v1149, %v931
        %v1158 = vmul.f32 %v1150, %v932
        %v1159 = vadd.f32 %v1134, %v1151
        %v1160 = vadd.f32 %v1135, %v1152
        %v1161 = vadd.f32 %v1136, %v1153
        %v1162 = vadd.f32 %v1137, %v1154
        %v1163 = vadd.f32 %v1138, %v1155
        %v1164 = vadd.f32 %v1139, %v1156
        %v1165 = vadd.f32 %v1140, %v1157
        %v1166 = vadd.f32 %v1141, %v1158
        %1167 = vrot.lane.b32.xlu0 %v925, 127
        %v1168 = vpop.permute.xlu0 %1167
        %1169 = vrot.lane.b32.xlu0 %v927, 127
        %v1170 = vpop.permute.xlu0 %1169
        %1171 = vrot.lane.b32.xlu0 %v929, 127
        %v1172 = vpop.permute.xlu0 %1171
        %1173 = vrot.lane.b32.xlu0 %v931, 127
        %v1174 = vpop.permute.xlu0 %1173
        %1175 = vrot.lane.b32.xlu0 %v926, 127
        %v1176 = vpop.permute.xlu0 %1175
        %1177 = vrot.lane.b32.xlu0 %v928, 127
        %v1178 = vpop.permute.xlu0 %1177
        %1179 = vrot.lane.b32.xlu0 %v930, 127
        %v1180 = vpop.permute.xlu0 %1179
        %1181 = vrot.lane.b32.xlu0 %v932, 127
        %v1182 = vpop.permute.xlu0 %1181
        %vm1183 = vcmp.lt.s32.totalorder %v958, 127
        %v1184 = vsel %vm1183, %v1168, %v1176
        %v1185 = vsel %vm1183, %v1170, %v1178
        %v1186 = vsel %vm1183, %v1172, %v1180
        %v1187 = vsel %vm1183, %v1174, %v1182
        %v1188 = vsel %vm1183, %v1176, %v1168
        %v1189 = vsel %vm1183, %v1178, %v1170
        %v1190 = vsel %vm1183, %v1180, %v1172
        %v1191 = vsel %vm1183, %v1182, %v1174
        %s1192 = scalar_lea.vmem [#allocation2], 320
        %v1193 = vld [vmem:[%s1192] sm:$0xff]
        %v1194 = vld [vmem:[%s1192 + $0x8] sm:$0xff]
        %v1195 = vld [vmem:[%s1192 + $0x10] sm:$0xff]
        %v1196 = vld [vmem:[%s1192 + $0x18] sm:$0xff]
        %v1197 = vld [vmem:[%s1192 + $0x20] sm:$0xff]
        %v1198 = vld [vmem:[%s1192 + $0x28] sm:$0xff]
        %v1199 = vld [vmem:[%s1192 + $0x30] sm:$0xff]
        %v1200 = vld [vmem:[%s1192 + $0x38] sm:$0xff]
        %v1201 = vmul.f32 %v1193, %v1184
        %v1202 = vmul.f32 %v1194, %v1188
        %v1203 = vmul.f32 %v1195, %v1185
        %v1204 = vmul.f32 %v1196, %v1189
        %v1205 = vmul.f32 %v1197, %v1186
        %v1206 = vmul.f32 %v1198, %v1190
        %v1207 = vmul.f32 %v1199, %v1187
        %v1208 = vmul.f32 %v1200, %v1191
        %v1209 = vadd.f32 %v1159, %v1201
        %v1210 = vadd.f32 %v1160, %v1202
        %v1211 = vadd.f32 %v1161, %v1203
        %v1212 = vadd.f32 %v1162, %v1204
        %v1213 = vadd.f32 %v1163, %v1205
        %v1214 = vadd.f32 %v1164, %v1206
        %v1215 = vadd.f32 %v1165, %v1207
        %v1216 = vadd.f32 %v1166, %v1208
        %1217 = vrot.lane.b32.xlu0 %v925, 113
        %v1218 = vpop.permute.xlu0 %1217
        %1219 = vrot.lane.b32.xlu0 %v927, 113
        %v1220 = vpop.permute.xlu0 %1219
        %1221 = vrot.lane.b32.xlu0 %v929, 113
        %v1222 = vpop.permute.xlu0 %1221
        %1223 = vrot.lane.b32.xlu0 %v931, 113
        %v1224 = vpop.permute.xlu0 %1223
        %1225 = vrot.lane.b32.xlu0 %v926, 113
        %v1226 = vpop.permute.xlu0 %1225
        %1227 = vrot.lane.b32.xlu0 %v928, 113
        %v1228 = vpop.permute.xlu0 %1227
        %1229 = vrot.lane.b32.xlu0 %v930, 113
        %v1230 = vpop.permute.xlu0 %1229
        %1231 = vrot.lane.b32.xlu0 %v932, 113
        %v1232 = vpop.permute.xlu0 %1231
        %vm1233 = vcmp.lt.s32.totalorder %v958, 113
        %v1234 = vsel %vm1233, %v1218, %v1226
        %v1235 = vsel %vm1233, %v1220, %v1228
        %v1236 = vsel %vm1233, %v1222, %v1230
        %v1237 = vsel %vm1233, %v1224, %v1232
        %v1238 = vsel %vm1233, %v1226, %v1218
        %v1239 = vsel %vm1233, %v1228, %v1220
        %v1240 = vsel %vm1233, %v1230, %v1222
        %v1241 = vsel %vm1233, %v1232, %v1224
        %s1242 = scalar_lea.vmem [#allocation2], 384
        %v1243 = vld [vmem:[%s1242] sm:$0xff]
        %v1244 = vld [vmem:[%s1242 + $0x8] sm:$0xff]
        %v1245 = vld [vmem:[%s1242 + $0x10] sm:$0xff]
        %v1246 = vld [vmem:[%s1242 + $0x18] sm:$0xff]
        %v1247 = vld [vmem:[%s1242 + $0x20] sm:$0xff]
        %v1248 = vld [vmem:[%s1242 + $0x28] sm:$0xff]
        %v1249 = vld [vmem:[%s1242 + $0x30] sm:$0xff]
        %v1250 = vld [vmem:[%s1242 + $0x38] sm:$0xff]
        %v1251 = vmul.f32 %v1243, %v1234
        %v1252 = vmul.f32 %v1244, %v1238
        %v1253 = vmul.f32 %v1245, %v1235
        %v1254 = vmul.f32 %v1246, %v1239
        %v1255 = vmul.f32 %v1247, %v1236
        %v1256 = vmul.f32 %v1248, %v1240
        %v1257 = vmul.f32 %v1249, %v1237
        %v1258 = vmul.f32 %v1250, %v1241
        %v1259 = vadd.f32 %v1209, %v1251
        %v1260 = vadd.f32 %v1210, %v1252
        %v1261 = vadd.f32 %v1211, %v1253
        %v1262 = vadd.f32 %v1212, %v1254
        %v1263 = vadd.f32 %v1213, %v1255
        %v1264 = vadd.f32 %v1214, %v1256
        %v1265 = vadd.f32 %v1215, %v1257
        %v1266 = vadd.f32 %v1216, %v1258
        %1267 = vrot.lane.b32.xlu0 %v925, 112
        %v1268 = vpop.permute.xlu0 %1267
        %1269 = vrot.lane.b32.xlu0 %v927, 112
        %v1270 = vpop.permute.xlu0 %1269
        %1271 = vrot.lane.b32.xlu0 %v929, 112
        %v1272 = vpop.permute.xlu0 %1271
        %1273 = vrot.lane.b32.xlu0 %v931, 112
        %v1274 = vpop.permute.xlu0 %1273
        %1275 = vrot.lane.b32.xlu0 %v926, 112
        %v1276 = vpop.permute.xlu0 %1275
        %1277 = vrot.lane.b32.xlu0 %v928, 112
        %v1278 = vpop.permute.xlu0 %1277
        %1279 = vrot.lane.b32.xlu0 %v930, 112
        %v1280 = vpop.permute.xlu0 %1279
        %1281 = vrot.lane.b32.xlu0 %v932, 112
        %v1282 = vpop.permute.xlu0 %1281
        %vm1283 = vcmp.lt.s32.totalorder %v958, 112
        %v1284 = vsel %vm1283, %v1268, %v1276
        %v1285 = vsel %vm1283, %v1270, %v1278
        %v1286 = vsel %vm1283, %v1272, %v1280
        %v1287 = vsel %vm1283, %v1274, %v1282
        %v1288 = vsel %vm1283, %v1276, %v1268
        %v1289 = vsel %vm1283, %v1278, %v1270
        %v1290 = vsel %vm1283, %v1280, %v1272
        %v1291 = vsel %vm1283, %v1282, %v1274
        %s1292 = scalar_lea.vmem [#allocation2], 448
        %v1293 = vld [vmem:[%s1292] sm:$0xff]
        %v1294 = vld [vmem:[%s1292 + $0x8] sm:$0xff]
        %v1295 = vld [vmem:[%s1292 + $0x10] sm:$0xff]
        %v1296 = vld [vmem:[%s1292 + $0x18] sm:$0xff]
        %v1297 = vld [vmem:[%s1292 + $0x20] sm:$0xff]
        %v1298 = vld [vmem:[%s1292 + $0x28] sm:$0xff]
        %v1299 = vld [vmem:[%s1292 + $0x30] sm:$0xff]
        %v1300 = vld [vmem:[%s1292 + $0x38] sm:$0xff]
        %v1301 = vmul.f32 %v1293, %v1284
        %v1302 = vmul.f32 %v1294, %v1288
        %v1303 = vmul.f32 %v1295, %v1285
        %v1304 = vmul.f32 %v1296, %v1289
        %v1305 = vmul.f32 %v1297, %v1286
        %v1306 = vmul.f32 %v1298, %v1290
        %v1307 = vmul.f32 %v1299, %v1287
        %v1308 = vmul.f32 %v1300, %v1291
        %v1309 = vadd.f32 %v1259, %v1301
        %v1310 = vadd.f32 %v1260, %v1302
        %v1311 = vadd.f32 %v1261, %v1303
        %v1312 = vadd.f32 %v1262, %v1304
        %v1313 = vadd.f32 %v1263, %v1305
        %v1314 = vadd.f32 %v1264, %v1306
        %v1315 = vadd.f32 %v1265, %v1307
        %v1316 = vadd.f32 %v1266, %v1308
        %1317 = vrot.lane.b32.xlu0 %v925, 111
        %v1318 = vpop.permute.xlu0 %1317
        %1319 = vrot.lane.b32.xlu0 %v927, 111
        %v1320 = vpop.permute.xlu0 %1319
        %1321 = vrot.lane.b32.xlu0 %v929, 111
        %v1322 = vpop.permute.xlu0 %1321
        %1323 = vrot.lane.b32.xlu0 %v931, 111
        %v1324 = vpop.permute.xlu0 %1323
        %1325 = vrot.lane.b32.xlu0 %v926, 111
        %v1326 = vpop.permute.xlu0 %1325
        %1327 = vrot.lane.b32.xlu0 %v928, 111
        %v1328 = vpop.permute.xlu0 %1327
        %1329 = vrot.lane.b32.xlu0 %v930, 111
        %v1330 = vpop.permute.xlu0 %1329
        %1331 = vrot.lane.b32.xlu0 %v932, 111
        %v1332 = vpop.permute.xlu0 %1331
        %vm1333 = vcmp.lt.s32.totalorder %v958, 111
        %v1334 = vsel %vm1333, %v1318, %v1326
        %v1335 = vsel %vm1333, %v1320, %v1328
        %v1336 = vsel %vm1333, %v1322, %v1330
        %v1337 = vsel %vm1333, %v1324, %v1332
        %v1338 = vsel %vm1333, %v1326, %v1318
        %v1339 = vsel %vm1333, %v1328, %v1320
        %v1340 = vsel %vm1333, %v1330, %v1322
        %v1341 = vsel %vm1333, %v1332, %v1324
        %s1342 = scalar_lea.vmem [#allocation2], 512
        %v1343 = vld [vmem:[%s1342] sm:$0xff]
        %v1344 = vld [vmem:[%s1342 + $0x8] sm:$0xff]
        %v1345 = vld [vmem:[%s1342 + $0x10] sm:$0xff]
        %v1346 = vld [vmem:[%s1342 + $0x18] sm:$0xff]
        %v1347 = vld [vmem:[%s1342 + $0x20] sm:$0xff]
        %v1348 = vld [vmem:[%s1342 + $0x28] sm:$0xff]
        %v1349 = vld [vmem:[%s1342 + $0x30] sm:$0xff]
        %v1350 = vld [vmem:[%s1342 + $0x38] sm:$0xff]
        %v1351 = vmul.f32 %v1343, %v1334
        %v1352 = vmul.f32 %v1344, %v1338
        %v1353 = vmul.f32 %v1345, %v1335
        %v1354 = vmul.f32 %v1346, %v1339
        %v1355 = vmul.f32 %v1347, %v1336
        %v1356 = vmul.f32 %v1348, %v1340
        %v1357 = vmul.f32 %v1349, %v1337
        %v1358 = vmul.f32 %v1350, %v1341
        %v1359 = vadd.f32 %v1309, %v1351
        %v1360 = vadd.f32 %v1310, %v1352
        %v1361 = vadd.f32 %v1311, %v1353
        %v1362 = vadd.f32 %v1312, %v1354
        %v1363 = vadd.f32 %v1313, %v1355
        %v1364 = vadd.f32 %v1314, %v1356
        %v1365 = vadd.f32 %v1315, %v1357
        %v1366 = vadd.f32 %v1316, %v1358
        %v1367 = vld [vmem:[%s6] sm:$0xff]
        %v1368 = vld [vmem:[%s6 + $0x8] sm:$0xff]
        %v1369 = vld [vmem:[%s6 + $0x10] sm:$0xff]
        %v1370 = vld [vmem:[%s6 + $0x18] sm:$0xff]
        %v1371 = vld [vmem:[%s6 + $0x20] sm:$0xff]
        %v1372 = vld [vmem:[%s6 + $0x28] sm:$0xff]
        %v1373 = vld [vmem:[%s6 + $0x30] sm:$0xff]
        %v1374 = vld [vmem:[%s6 + $0x38] sm:$0xff]
        %v1375 = vld [vmem:[%s10] sm:$0xff]
        %v1376 = vld [vmem:[%s10 + $0x8] sm:$0xff]
        %v1377 = vld [vmem:[%s10 + $0x10] sm:$0xff]
        %v1378 = vld [vmem:[%s10 + $0x18] sm:$0xff]
        %v1379 = vld [vmem:[%s10 + $0x20] sm:$0xff]
        %v1380 = vld [vmem:[%s10 + $0x28] sm:$0xff]
        %v1381 = vld [vmem:[%s10 + $0x30] sm:$0xff]
        %v1382 = vld [vmem:[%s10 + $0x38] sm:$0xff]
        %v1383 = vld [vmem:[#allocation13] sm:$0xff]
        %v1384 = vld [vmem:[#allocation13 + $0x8] sm:$0xff]
        %v1385 = vld [vmem:[#allocation13 + $0x10] sm:$0xff]
        %v1386 = vld [vmem:[#allocation13 + $0x18] sm:$0xff]
        %v1387 = vld [vmem:[#allocation13 + $0x20] sm:$0xff]
        %v1388 = vld [vmem:[#allocation13 + $0x28] sm:$0xff]
        %v1389 = vld [vmem:[#allocation13 + $0x30] sm:$0xff]
        %v1390 = vld [vmem:[#allocation13 + $0x38] sm:$0xff]
        %1391 = vrot.lane.b32.xlu0 %v1359, 32
        %v1392 = vpop.permute.xlu0 %1391
        %1393 = vrot.lane.b32.xlu0 %v1361, 32
        %v1394 = vpop.permute.xlu0 %1393
        %1395 = vrot.lane.b32.xlu0 %v1363, 32
        %v1396 = vpop.permute.xlu0 %1395
        %1397 = vrot.lane.b32.xlu0 %v1365, 32
        %v1398 = vpop.permute.xlu0 %1397
        %1399 = vrot.lane.b32.xlu0 %v1360, 32
        %v1400 = vpop.permute.xlu0 %1399
        %1401 = vrot.lane.b32.xlu0 %v1362, 32
        %v1402 = vpop.permute.xlu0 %1401
        %1403 = vrot.lane.b32.xlu0 %v1364, 32
        %v1404 = vpop.permute.xlu0 %1403
        %1405 = vrot.lane.b32.xlu0 %v1366, 32
        %v1406 = vpop.permute.xlu0 %1405
        %vm1407 = vcmp.lt.s32.totalorder %v958, 32
        %v1408 = vsel %vm1407, %v1392, %v1400
        %v1409 = vsel %vm1407, %v1394, %v1402
        %v1410 = vsel %vm1407, %v1396, %v1404
        %v1411 = vsel %vm1407, %v1398, %v1406
        %v1412 = vsel %vm1407, %v1400, %v1392
        %v1413 = vsel %vm1407, %v1402, %v1394
        %v1414 = vsel %vm1407, %v1404, %v1396
        %v1415 = vsel %vm1407, %v1406, %v1398
        %v1416 = vld [vmem:[#allocation12] sm:$0xff]
        %v1417 = vld [vmem:[#allocation12 + $0x8] sm:$0xff]
        %v1418 = vld [vmem:[#allocation12 + $0x10] sm:$0xff]
        %v1419 = vld [vmem:[#allocation12 + $0x18] sm:$0xff]
        %v1420 = vld [vmem:[#allocation12 + $0x20] sm:$0xff]
        %v1421 = vld [vmem:[#allocation12 + $0x28] sm:$0xff]
        %v1422 = vld [vmem:[#allocation12 + $0x30] sm:$0xff]
        %v1423 = vld [vmem:[#allocation12 + $0x38] sm:$0xff]
        %v1424 = vmul.f32 %v1416, %v1408
        %v1425 = vmul.f32 %v1417, %v1412
        %v1426 = vmul.f32 %v1418, %v1409
        %v1427 = vmul.f32 %v1419, %v1413
        %v1428 = vmul.f32 %v1420, %v1410
        %v1429 = vmul.f32 %v1421, %v1414
        %v1430 = vmul.f32 %v1422, %v1411
        %v1431 = vmul.f32 %v1423, %v1415
        %v1432 = vadd.f32 %v1383, %v1424
        %v1433 = vadd.f32 %v1384, %v1425
        %v1434 = vadd.f32 %v1385, %v1426
        %v1435 = vadd.f32 %v1386, %v1427
        %v1436 = vadd.f32 %v1387, %v1428
        %v1437 = vadd.f32 %v1388, %v1429
        %v1438 = vadd.f32 %v1389, %v1430
        %v1439 = vadd.f32 %v1390, %v1431
        %1440 = vrot.lane.b32.xlu0 %v1359, 16
        %v1441 = vpop.permute.xlu0 %1440
        %1442 = vrot.lane.b32.xlu0 %v1361, 16
        %v1443 = vpop.permute.xlu0 %1442
        %1444 = vrot.lane.b32.xlu0 %v1363, 16
        %v1445 = vpop.permute.xlu0 %1444
        %1446 = vrot.lane.b32.xlu0 %v1365, 16
        %v1447 = vpop.permute.xlu0 %1446
        %1448 = vrot.lane.b32.xlu0 %v1360, 16
        %v1449 = vpop.permute.xlu0 %1448
        %1450 = vrot.lane.b32.xlu0 %v1362, 16
        %v1451 = vpop.permute.xlu0 %1450
        %1452 = vrot.lane.b32.xlu0 %v1364, 16
        %v1453 = vpop.permute.xlu0 %1452
        %1454 = vrot.lane.b32.xlu0 %v1366, 16
        %v1455 = vpop.permute.xlu0 %1454
        %v1456 = vsel %vm1008, %v1441, %v1449
        %v1457 = vsel %vm1008, %v1443, %v1451
        %v1458 = vsel %vm1008, %v1445, %v1453
        %v1459 = vsel %vm1008, %v1447, %v1455
        %v1460 = vsel %vm1008, %v1449, %v1441
        %v1461 = vsel %vm1008, %v1451, %v1443
        %v1462 = vsel %vm1008, %v1453, %v1445
        %v1463 = vsel %vm1008, %v1455, %v1447
        %s1464 = scalar_lea.vmem [#allocation12], 64
        %v1465 = vld [vmem:[%s1464] sm:$0xff]
        %v1466 = vld [vmem:[%s1464 + $0x8] sm:$0xff]
        %v1467 = vld [vmem:[%s1464 + $0x10] sm:$0xff]
        %v1468 = vld [vmem:[%s1464 + $0x18] sm:$0xff]
        %v1469 = vld [vmem:[%s1464 + $0x20] sm:$0xff]
        %v1470 = vld [vmem:[%s1464 + $0x28] sm:$0xff]
        %v1471 = vld [vmem:[%s1464 + $0x30] sm:$0xff]
        %v1472 = vld [vmem:[%s1464 + $0x38] sm:$0xff]
        %v1473 = vmul.f32 %v1465, %v1456
        %v1474 = vmul.f32 %v1466, %v1460
        %v1475 = vmul.f32 %v1467, %v1457
        %v1476 = vmul.f32 %v1468, %v1461
        %v1477 = vmul.f32 %v1469, %v1458
        %v1478 = vmul.f32 %v1470, %v1462
        %v1479 = vmul.f32 %v1471, %v1459
        %v1480 = vmul.f32 %v1472, %v1463
        %v1481 = vadd.f32 %v1432, %v1473
        %v1482 = vadd.f32 %v1433, %v1474
        %v1483 = vadd.f32 %v1434, %v1475
        %v1484 = vadd.f32 %v1435, %v1476
        %v1485 = vadd.f32 %v1436, %v1477
        %v1486 = vadd.f32 %v1437, %v1478
        %v1487 = vadd.f32 %v1438, %v1479
        %v1488 = vadd.f32 %v1439, %v1480
        %s1489 = scalar_lea.vmem [#allocation12], 128
        %v1490 = vld [vmem:[%s1489] sm:$0xff]
        %v1491 = vld [vmem:[%s1489 + $0x8] sm:$0xff]
        %v1492 = vld [vmem:[%s1489 + $0x10] sm:$0xff]
        %v1493 = vld [vmem:[%s1489 + $0x18] sm:$0xff]
        %v1494 = vld [vmem:[%s1489 + $0x20] sm:$0xff]
        %v1495 = vld [vmem:[%s1489 + $0x28] sm:$0xff]
        %v1496 = vld [vmem:[%s1489 + $0x30] sm:$0xff]
        %v1497 = vld [vmem:[%s1489 + $0x38] sm:$0xff]
        %v1498 = vmul.f32 %v1490, %v1360
        %v1499 = vmul.f32 %v1491, %v1359
        %v1500 = vmul.f32 %v1492, %v1362
        %v1501 = vmul.f32 %v1493, %v1361
        %v1502 = vmul.f32 %v1494, %v1364
        %v1503 = vmul.f32 %v1495, %v1363
        %v1504 = vmul.f32 %v1496, %v1366
        %v1505 = vmul.f32 %v1497, %v1365
        %v1506 = vadd.f32 %v1481, %v1498
        %v1507 = vadd.f32 %v1482, %v1499
        %v1508 = vadd.f32 %v1483, %v1500
        %v1509 = vadd.f32 %v1484, %v1501
        %v1510 = vadd.f32 %v1485, %v1502
        %v1511 = vadd.f32 %v1486, %v1503
        %v1512 = vadd.f32 %v1487, %v1504
        %v1513 = vadd.f32 %v1488, %v1505
        %1514 = vrot.lane.b32.xlu0 %v1359, 112
        %v1515 = vpop.permute.xlu0 %1514
        %1516 = vrot.lane.b32.xlu0 %v1361, 112
        %v1517 = vpop.permute.xlu0 %1516
        %1518 = vrot.lane.b32.xlu0 %v1363, 112
        %v1519 = vpop.permute.xlu0 %1518
        %1520 = vrot.lane.b32.xlu0 %v1365, 112
        %v1521 = vpop.permute.xlu0 %1520
        %1522 = vrot.lane.b32.xlu0 %v1360, 112
        %v1523 = vpop.permute.xlu0 %1522
        %1524 = vrot.lane.b32.xlu0 %v1362, 112
        %v1525 = vpop.permute.xlu0 %1524
        %1526 = vrot.lane.b32.xlu0 %v1364, 112
        %v1527 = vpop.permute.xlu0 %1526
        %1528 = vrot.lane.b32.xlu0 %v1366, 112
        %v1529 = vpop.permute.xlu0 %1528
        %v1530 = vsel %vm1283, %v1515, %v1523
        %v1531 = vsel %vm1283, %v1517, %v1525
        %v1532 = vsel %vm1283, %v1519, %v1527
        %v1533 = vsel %vm1283, %v1521, %v1529
        %v1534 = vsel %vm1283, %v1523, %v1515
        %v1535 = vsel %vm1283, %v1525, %v1517
        %v1536 = vsel %vm1283, %v1527, %v1519
        %v1537 = vsel %vm1283, %v1529, %v1521
        %s1538 = scalar_lea.vmem [#allocation12], 192
        %v1539 = vld [vmem:[%s1538] sm:$0xff]
        %v1540 = vld [vmem:[%s1538 + $0x8] sm:$0xff]
        %v1541 = vld [vmem:[%s1538 + $0x10] sm:$0xff]
        %v1542 = vld [vmem:[%s1538 + $0x18] sm:$0xff]
        %v1543 = vld [vmem:[%s1538 + $0x20] sm:$0xff]
        %v1544 = vld [vmem:[%s1538 + $0x28] sm:$0xff]
        %v1545 = vld [vmem:[%s1538 + $0x30] sm:$0xff]
        %v1546 = vld [vmem:[%s1538 + $0x38] sm:$0xff]
        %v1547 = vmul.f32 %v1539, %v1534
        %v1548 = vmul.f32 %v1540, %v1530
        %v1549 = vmul.f32 %v1541, %v1535
        %v1550 = vmul.f32 %v1542, %v1531
        %v1551 = vmul.f32 %v1543, %v1536
        %v1552 = vmul.f32 %v1544, %v1532
        %v1553 = vmul.f32 %v1545, %v1537
        %v1554 = vmul.f32 %v1546, %v1533
        %v1555 = vadd.f32 %v1506, %v1547
        %v1556 = vadd.f32 %v1507, %v1548
        %v1557 = vadd.f32 %v1508, %v1549
        %v1558 = vadd.f32 %v1509, %v1550
        %v1559 = vadd.f32 %v1510, %v1551
        %v1560 = vadd.f32 %v1511, %v1552
        %v1561 = vadd.f32 %v1512, %v1553
        %v1562 = vadd.f32 %v1513, %v1554
        %1563 = vrot.lane.b32.xlu0 %v1359, 96
        %v1564 = vpop.permute.xlu0 %1563
        %1565 = vrot.lane.b32.xlu0 %v1361, 96
        %v1566 = vpop.permute.xlu0 %1565
        %1567 = vrot.lane.b32.xlu0 %v1363, 96
        %v1568 = vpop.permute.xlu0 %1567
        %1569 = vrot.lane.b32.xlu0 %v1365, 96
        %v1570 = vpop.permute.xlu0 %1569
        %1571 = vrot.lane.b32.xlu0 %v1360, 96
        %v1572 = vpop.permute.xlu0 %1571
        %1573 = vrot.lane.b32.xlu0 %v1362, 96
        %v1574 = vpop.permute.xlu0 %1573
        %1575 = vrot.lane.b32.xlu0 %v1364, 96
        %v1576 = vpop.permute.xlu0 %1575
        %1577 = vrot.lane.b32.xlu0 %v1366, 96
        %v1578 = vpop.permute.xlu0 %1577
        %vm1579 = vcmp.lt.s32.totalorder %v958, 96
        %v1580 = vsel %vm1579, %v1564, %v1572
        %v1581 = vsel %vm1579, %v1566, %v1574
        %v1582 = vsel %vm1579, %v1568, %v1576
        %v1583 = vsel %vm1579, %v1570, %v1578
        %v1584 = vsel %vm1579, %v1572, %v1564
        %v1585 = vsel %vm1579, %v1574, %v1566
        %v1586 = vsel %vm1579, %v1576, %v1568
        %v1587 = vsel %vm1579, %v1578, %v1570
        %s1588 = scalar_lea.vmem [#allocation12], 256
        %v1589 = vld [vmem:[%s1588] sm:$0xff]
        %v1590 = vld [vmem:[%s1588 + $0x8] sm:$0xff]
        %v1591 = vld [vmem:[%s1588 + $0x10] sm:$0xff]
        %v1592 = vld [vmem:[%s1588 + $0x18] sm:$0xff]
        %v1593 = vld [vmem:[%s1588 + $0x20] sm:$0xff]
        %v1594 = vld [vmem:[%s1588 + $0x28] sm:$0xff]
        %v1595 = vld [vmem:[%s1588 + $0x30] sm:$0xff]
        %v1596 = vld [vmem:[%s1588 + $0x38] sm:$0xff]
        %v1597 = vmul.f32 %v1589, %v1584
        %v1598 = vmul.f32 %v1590, %v1580
        %v1599 = vmul.f32 %v1591, %v1585
        %v1600 = vmul.f32 %v1592, %v1581
        %v1601 = vmul.f32 %v1593, %v1586
        %v1602 = vmul.f32 %v1594, %v1582
        %v1603 = vmul.f32 %v1595, %v1587
        %v1604 = vmul.f32 %v1596, %v1583
        %v1605 = vadd.f32 %v1555, %v1597
        %v1606 = vadd.f32 %v1556, %v1598
        %v1607 = vadd.f32 %v1557, %v1599
        %v1608 = vadd.f32 %v1558, %v1600
        %v1609 = vadd.f32 %v1559, %v1601
        %v1610 = vadd.f32 %v1560, %v1602
        %v1611 = vadd.f32 %v1561, %v1603
        %v1612 = vadd.f32 %v1562, %v1604
        %1613 = vrot.lane.b32.xlu0 %v1359, 80
        %v1614 = vpop.permute.xlu0 %1613
        %1615 = vrot.lane.b32.xlu0 %v1361, 80
        %v1616 = vpop.permute.xlu0 %1615
        %1617 = vrot.lane.b32.xlu0 %v1363, 80
        %v1618 = vpop.permute.xlu0 %1617
        %1619 = vrot.lane.b32.xlu0 %v1365, 80
        %v1620 = vpop.permute.xlu0 %1619
        %1621 = vrot.lane.b32.xlu0 %v1360, 80
        %v1622 = vpop.permute.xlu0 %1621
        %1623 = vrot.lane.b32.xlu0 %v1362, 80
        %v1624 = vpop.permute.xlu0 %1623
        %1625 = vrot.lane.b32.xlu0 %v1364, 80
        %v1626 = vpop.permute.xlu0 %1625
        %1627 = vrot.lane.b32.xlu0 %v1366, 80
        %v1628 = vpop.permute.xlu0 %1627
        %vm1629 = vcmp.lt.s32.totalorder %v958, 80
        %v1630 = vsel %vm1629, %v1614, %v1622
        %v1631 = vsel %vm1629, %v1616, %v1624
        %v1632 = vsel %vm1629, %v1618, %v1626
        %v1633 = vsel %vm1629, %v1620, %v1628
        %v1634 = vsel %vm1629, %v1622, %v1614
        %v1635 = vsel %vm1629, %v1624, %v1616
        %v1636 = vsel %vm1629, %v1626, %v1618
        %v1637 = vsel %vm1629, %v1628, %v1620
        %s1638 = scalar_lea.vmem [#allocation12], 320
        %v1639 = vld [vmem:[%s1638] sm:$0xff]
        %v1640 = vld [vmem:[%s1638 + $0x8] sm:$0xff]
        %v1641 = vld [vmem:[%s1638 + $0x10] sm:$0xff]
        %v1642 = vld [vmem:[%s1638 + $0x18] sm:$0xff]
        %v1643 = vld [vmem:[%s1638 + $0x20] sm:$0xff]
        %v1644 = vld [vmem:[%s1638 + $0x28] sm:$0xff]
        %v1645 = vld [vmem:[%s1638 + $0x30] sm:$0xff]
        %v1646 = vld [vmem:[%s1638 + $0x38] sm:$0xff]
        %v1647 = vmul.f32 %v1639, %v1634
        %v1648 = vmul.f32 %v1640, %v1630
        %v1649 = vmul.f32 %v1641, %v1635
        %v1650 = vmul.f32 %v1642, %v1631
        %v1651 = vmul.f32 %v1643, %v1636
        %v1652 = vmul.f32 %v1644, %v1632
        %v1653 = vmul.f32 %v1645, %v1637
        %v1654 = vmul.f32 %v1646, %v1633
        %v1655 = vadd.f32 %v1605, %v1647
        %v1656 = vadd.f32 %v1606, %v1648
        %v1657 = vadd.f32 %v1607, %v1649
        %v1658 = vadd.f32 %v1608, %v1650
        %v1659 = vadd.f32 %v1609, %v1651
        %v1660 = vadd.f32 %v1610, %v1652
        %v1661 = vadd.f32 %v1611, %v1653
        %v1662 = vadd.f32 %v1612, %v1654
        %v1663 = vld [vmem:[%s9] sm:$0xff]
        %v1664 = vld [vmem:[%s9 + $0x8] sm:$0xff]
        %v1665 = vld [vmem:[%s9 + $0x10] sm:$0xff]
        %v1666 = vld [vmem:[%s9 + $0x18] sm:$0xff]
        %v1667 = vld [vmem:[%s9 + $0x20] sm:$0xff]
        %v1668 = vld [vmem:[%s9 + $0x28] sm:$0xff]
        %v1669 = vld [vmem:[%s9 + $0x30] sm:$0xff]
        %v1670 = vld [vmem:[%s9 + $0x38] sm:$0xff]
        %v1671 = vmul.f32 %v1663, %v1634
        %v1672 = vmul.f32 %v1664, %v1630
        %v1673 = vmul.f32 %v1665, %v1635
        %v1674 = vmul.f32 %v1666, %v1631
        %v1675 = vmul.f32 %v1667, %v1636
        %v1676 = vmul.f32 %v1668, %v1632
        %v1677 = vmul.f32 %v1669, %v1637
        %v1678 = vmul.f32 %v1670, %v1633
        %v1679 = vadd.f32 %v1375, %v1671
        %v1680 = vadd.f32 %v1376, %v1672
        %v1681 = vadd.f32 %v1377, %v1673
        %v1682 = vadd.f32 %v1378, %v1674
        %v1683 = vadd.f32 %v1379, %v1675
        %v1684 = vadd.f32 %v1380, %v1676
        %v1685 = vadd.f32 %v1381, %v1677
        %v1686 = vadd.f32 %v1382, %v1678
        %1687 = vrot.lane.b32.xlu0 %v1359, 64
        %v1688 = vpop.permute.xlu0 %1687
        %1689 = vrot.lane.b32.xlu0 %v1361, 64
        %v1690 = vpop.permute.xlu0 %1689
        %1691 = vrot.lane.b32.xlu0 %v1363, 64
        %v1692 = vpop.permute.xlu0 %1691
        %1693 = vrot.lane.b32.xlu0 %v1365, 64
        %v1694 = vpop.permute.xlu0 %1693
        %1695 = vrot.lane.b32.xlu0 %v1360, 64
        %v1696 = vpop.permute.xlu0 %1695
        %1697 = vrot.lane.b32.xlu0 %v1362, 64
        %v1698 = vpop.permute.xlu0 %1697
        %1699 = vrot.lane.b32.xlu0 %v1364, 64
        %v1700 = vpop.permute.xlu0 %1699
        %1701 = vrot.lane.b32.xlu0 %v1366, 64
        %v1702 = vpop.permute.xlu0 %1701
        %vm1703 = vcmp.lt.s32.totalorder %v958, 64
        %v1704 = vsel %vm1703, %v1688, %v1696
        %v1705 = vsel %vm1703, %v1690, %v1698
        %v1706 = vsel %vm1703, %v1692, %v1700
        %v1707 = vsel %vm1703, %v1694, %v1702
        %v1708 = vsel %vm1703, %v1696, %v1688
        %v1709 = vsel %vm1703, %v1698, %v1690
        %v1710 = vsel %vm1703, %v1700, %v1692
        %v1711 = vsel %vm1703, %v1702, %v1694
        %s1712 = scalar_lea.vmem [#allocation12], 384
        %v1713 = vld [vmem:[%s1712] sm:$0xff]
        %v1714 = vld [vmem:[%s1712 + $0x8] sm:$0xff]
        %v1715 = vld [vmem:[%s1712 + $0x10] sm:$0xff]
        %v1716 = vld [vmem:[%s1712 + $0x18] sm:$0xff]
        %v1717 = vld [vmem:[%s1712 + $0x20] sm:$0xff]
        %v1718 = vld [vmem:[%s1712 + $0x28] sm:$0xff]
        %v1719 = vld [vmem:[%s1712 + $0x30] sm:$0xff]
        %v1720 = vld [vmem:[%s1712 + $0x38] sm:$0xff]
        %v1721 = vmul.f32 %v1713, %v1708
        %v1722 = vmul.f32 %v1714, %v1704
        %v1723 = vmul.f32 %v1715, %v1709
        %v1724 = vmul.f32 %v1716, %v1705
        %v1725 = vmul.f32 %v1717, %v1710
        %v1726 = vmul.f32 %v1718, %v1706
        %v1727 = vmul.f32 %v1719, %v1711
        %v1728 = vmul.f32 %v1720, %v1707
        %v1729 = vadd.f32 %v1655, %v1721
        %v1730 = vadd.f32 %v1656, %v1722
        %v1731 = vadd.f32 %v1657, %v1723
        %v1732 = vadd.f32 %v1658, %v1724
        %v1733 = vadd.f32 %v1659, %v1725
        %v1734 = vadd.f32 %v1660, %v1726
        %v1735 = vadd.f32 %v1661, %v1727
        %v1736 = vadd.f32 %v1662, %v1728
        %s1737 = scalar_lea.vmem %s9, 64
        %v1738 = vld [vmem:[%s1737] sm:$0xff]
        %v1739 = vld [vmem:[%s1737 + $0x8] sm:$0xff]
        %v1740 = vld [vmem:[%s1737 + $0x10] sm:$0xff]
        %v1741 = vld [vmem:[%s1737 + $0x18] sm:$0xff]
        %v1742 = vld [vmem:[%s1737 + $0x20] sm:$0xff]
        %v1743 = vld [vmem:[%s1737 + $0x28] sm:$0xff]
        %v1744 = vld [vmem:[%s1737 + $0x30] sm:$0xff]
        %v1745 = vld [vmem:[%s1737 + $0x38] sm:$0xff]
        %v1746 = vmul.f32 %v1738, %v1708
        %v1747 = vmul.f32 %v1739, %v1704
        %v1748 = vmul.f32 %v1740, %v1709
        %v1749 = vmul.f32 %v1741, %v1705
        %v1750 = vmul.f32 %v1742, %v1710
        %v1751 = vmul.f32 %v1743, %v1706
        %v1752 = vmul.f32 %v1744, %v1711
        %v1753 = vmul.f32 %v1745, %v1707
        %v1754 = vadd.f32 %v1679, %v1746
        %v1755 = vadd.f32 %v1680, %v1747
        %v1756 = vadd.f32 %v1681, %v1748
        %v1757 = vadd.f32 %v1682, %v1749
        %v1758 = vadd.f32 %v1683, %v1750
        %v1759 = vadd.f32 %v1684, %v1751
        %v1760 = vadd.f32 %v1685, %v1752
        %v1761 = vadd.f32 %v1686, %v1753
        %1762 = vrot.lane.b32.xlu0 %v1359, 48
        %v1763 = vpop.permute.xlu0 %1762
        %1764 = vrot.lane.b32.xlu0 %v1361, 48
        %v1765 = vpop.permute.xlu0 %1764
        %1766 = vrot.lane.b32.xlu0 %v1363, 48
        %v1767 = vpop.permute.xlu0 %1766
        %1768 = vrot.lane.b32.xlu0 %v1365, 48
        %v1769 = vpop.permute.xlu0 %1768
        %1770 = vrot.lane.b32.xlu0 %v1360, 48
        %v1771 = vpop.permute.xlu0 %1770
        %1772 = vrot.lane.b32.xlu0 %v1362, 48
        %v1773 = vpop.permute.xlu0 %1772
        %1774 = vrot.lane.b32.xlu0 %v1364, 48
        %v1775 = vpop.permute.xlu0 %1774
        %1776 = vrot.lane.b32.xlu0 %v1366, 48
        %v1777 = vpop.permute.xlu0 %1776
        %vm1778 = vcmp.lt.s32.totalorder %v958, 48
        %v1779 = vsel %vm1778, %v1763, %v1771
        %v1780 = vsel %vm1778, %v1765, %v1773
        %v1781 = vsel %vm1778, %v1767, %v1775
        %v1782 = vsel %vm1778, %v1769, %v1777
        %v1783 = vsel %vm1778, %v1771, %v1763
        %v1784 = vsel %vm1778, %v1773, %v1765
        %v1785 = vsel %vm1778, %v1775, %v1767
        %v1786 = vsel %vm1778, %v1777, %v1769
        %s1787 = scalar_lea.vmem [#allocation12], 448
        %v1788 = vld [vmem:[%s1787] sm:$0xff]
        %v1789 = vld [vmem:[%s1787 + $0x8] sm:$0xff]
        %v1790 = vld [vmem:[%s1787 + $0x10] sm:$0xff]
        %v1791 = vld [vmem:[%s1787 + $0x18] sm:$0xff]
        %v1792 = vld [vmem:[%s1787 + $0x20] sm:$0xff]
        %v1793 = vld [vmem:[%s1787 + $0x28] sm:$0xff]
        %v1794 = vld [vmem:[%s1787 + $0x30] sm:$0xff]
        %v1795 = vld [vmem:[%s1787 + $0x38] sm:$0xff]
        %v1796 = vmul.f32 %v1788, %v1783
        %v1797 = vmul.f32 %v1789, %v1779
        %v1798 = vmul.f32 %v1790, %v1784
        %v1799 = vmul.f32 %v1791, %v1780
        %v1800 = vmul.f32 %v1792, %v1785
        %v1801 = vmul.f32 %v1793, %v1781
        %v1802 = vmul.f32 %v1794, %v1786
        %v1803 = vmul.f32 %v1795, %v1782
        %v1804 = vadd.f32 %v1729, %v1796
        %v1805 = vadd.f32 %v1730, %v1797
        %v1806 = vadd.f32 %v1731, %v1798
        %v1807 = vadd.f32 %v1732, %v1799
        %v1808 = vadd.f32 %v1733, %v1800
        %v1809 = vadd.f32 %v1734, %v1801
        %v1810 = vadd.f32 %v1735, %v1802
        %v1811 = vadd.f32 %v1736, %v1803
        %s1812 = scalar_lea.vmem %s9, 128
        %v1813 = vld [vmem:[%s1812] sm:$0xff]
        %v1814 = vld [vmem:[%s1812 + $0x8] sm:$0xff]
        %v1815 = vld [vmem:[%s1812 + $0x10] sm:$0xff]
        %v1816 = vld [vmem:[%s1812 + $0x18] sm:$0xff]
        %v1817 = vld [vmem:[%s1812 + $0x20] sm:$0xff]
        %v1818 = vld [vmem:[%s1812 + $0x28] sm:$0xff]
        %v1819 = vld [vmem:[%s1812 + $0x30] sm:$0xff]
        %v1820 = vld [vmem:[%s1812 + $0x38] sm:$0xff]
        %v1821 = vmul.f32 %v1813, %v1783
        %v1822 = vmul.f32 %v1814, %v1779
        %v1823 = vmul.f32 %v1815, %v1784
        %v1824 = vmul.f32 %v1816, %v1780
        %v1825 = vmul.f32 %v1817, %v1785
        %v1826 = vmul.f32 %v1818, %v1781
        %v1827 = vmul.f32 %v1819, %v1786
        %v1828 = vmul.f32 %v1820, %v1782
        %v1829 = vadd.f32 %v1754, %v1821
        %v1830 = vadd.f32 %v1755, %v1822
        %v1831 = vadd.f32 %v1756, %v1823
        %v1832 = vadd.f32 %v1757, %v1824
        %v1833 = vadd.f32 %v1758, %v1825
        %v1834 = vadd.f32 %v1759, %v1826
        %v1835 = vadd.f32 %v1760, %v1827
        %v1836 = vadd.f32 %v1761, %v1828
        %v1837 = vld [vmem:[#allocation6] sm:$0xff]
        %v1838 = vld [vmem:[#allocation6 + $0x8] sm:$0xff]
        %v1839 = vld [vmem:[#allocation6 + $0x10] sm:$0xff]
        %v1840 = vld [vmem:[#allocation6 + $0x18] sm:$0xff]
        %v1841 = vld [vmem:[#allocation6 + $0x20] sm:$0xff]
        %v1842 = vld [vmem:[#allocation6 + $0x28] sm:$0xff]
        %v1843 = vld [vmem:[#allocation6 + $0x30] sm:$0xff]
        %v1844 = vld [vmem:[#allocation6 + $0x38] sm:$0xff]
        %v1845 = vmul.f32 %v1837, %v1783
        %v1846 = vmul.f32 %v1838, %v1779
        %v1847 = vmul.f32 %v1839, %v1784
        %v1848 = vmul.f32 %v1840, %v1780
        %v1849 = vmul.f32 %v1841, %v1785
        %v1850 = vmul.f32 %v1842, %v1781
        %v1851 = vmul.f32 %v1843, %v1786
        %v1852 = vmul.f32 %v1844, %v1782
        %v1853 = vadd.f32 %v1367, %v1845
        %v1854 = vadd.f32 %v1368, %v1846
        %v1855 = vadd.f32 %v1369, %v1847
        %v1856 = vadd.f32 %v1370, %v1848
        %v1857 = vadd.f32 %v1371, %v1849
        %v1858 = vadd.f32 %v1372, %v1850
        %v1859 = vadd.f32 %v1373, %v1851
        %v1860 = vadd.f32 %v1374, %v1852
        %s1861 = scalar_lea.vmem [#allocation12], 512
        %v1862 = vld [vmem:[%s1861] sm:$0xff]
        %v1863 = vld [vmem:[%s1861 + $0x8] sm:$0xff]
        %v1864 = vld [vmem:[%s1861 + $0x10] sm:$0xff]
        %v1865 = vld [vmem:[%s1861 + $0x18] sm:$0xff]
        %v1866 = vld [vmem:[%s1861 + $0x20] sm:$0xff]
        %v1867 = vld [vmem:[%s1861 + $0x28] sm:$0xff]
        %v1868 = vld [vmem:[%s1861 + $0x30] sm:$0xff]
        %v1869 = vld [vmem:[%s1861 + $0x38] sm:$0xff]
        %v1870 = vmul.f32 %v1862, %v1412
        %v1871 = vmul.f32 %v1863, %v1408
        %v1872 = vmul.f32 %v1864, %v1413
        %v1873 = vmul.f32 %v1865, %v1409
        %v1874 = vmul.f32 %v1866, %v1414
        %v1875 = vmul.f32 %v1867, %v1410
        %v1876 = vmul.f32 %v1868, %v1415
        %v1877 = vmul.f32 %v1869, %v1411
        %v1878 = vadd.f32 %v1804, %v1870
        %v1879 = vadd.f32 %v1805, %v1871
        %v1880 = vadd.f32 %v1806, %v1872
        %v1881 = vadd.f32 %v1807, %v1873
        %v1882 = vadd.f32 %v1808, %v1874
        %v1883 = vadd.f32 %v1809, %v1875
        %v1884 = vadd.f32 %v1810, %v1876
        %v1885 = vadd.f32 %v1811, %v1877
        %s1886 = scalar_lea.vmem %s9, 192
        %v1887 = vld [vmem:[%s1886] sm:$0xff]
        %v1888 = vld [vmem:[%s1886 + $0x8] sm:$0xff]
        %v1889 = vld [vmem:[%s1886 + $0x10] sm:$0xff]
        %v1890 = vld [vmem:[%s1886 + $0x18] sm:$0xff]
        %v1891 = vld [vmem:[%s1886 + $0x20] sm:$0xff]
        %v1892 = vld [vmem:[%s1886 + $0x28] sm:$0xff]
        %v1893 = vld [vmem:[%s1886 + $0x30] sm:$0xff]
        %v1894 = vld [vmem:[%s1886 + $0x38] sm:$0xff]
        %v1895 = vmul.f32 %v1887, %v1412
        %v1896 = vmul.f32 %v1888, %v1408
        %v1897 = vmul.f32 %v1889, %v1413
        %v1898 = vmul.f32 %v1890, %v1409
        %v1899 = vmul.f32 %v1891, %v1414
        %v1900 = vmul.f32 %v1892, %v1410
        %v1901 = vmul.f32 %v1893, %v1415
        %v1902 = vmul.f32 %v1894, %v1411
        %v1903 = vadd.f32 %v1829, %v1895
        %v1904 = vadd.f32 %v1830, %v1896
        %v1905 = vadd.f32 %v1831, %v1897
        %v1906 = vadd.f32 %v1832, %v1898
        %v1907 = vadd.f32 %v1833, %v1899
        %v1908 = vadd.f32 %v1834, %v1900
        %v1909 = vadd.f32 %v1835, %v1901
        %v1910 = vadd.f32 %v1836, %v1902
        %s1911 = scalar_lea.vmem [#allocation6], 64
        %v1912 = vld [vmem:[%s1911] sm:$0xff]
        %v1913 = vld [vmem:[%s1911 + $0x8] sm:$0xff]
        %v1914 = vld [vmem:[%s1911 + $0x10] sm:$0xff]
        %v1915 = vld [vmem:[%s1911 + $0x18] sm:$0xff]
        %v1916 = vld [vmem:[%s1911 + $0x20] sm:$0xff]
        %v1917 = vld [vmem:[%s1911 + $0x28] sm:$0xff]
        %v1918 = vld [vmem:[%s1911 + $0x30] sm:$0xff]
        %v1919 = vld [vmem:[%s1911 + $0x38] sm:$0xff]
        %v1920 = vmul.f32 %v1912, %v1412
        %v1921 = vmul.f32 %v1913, %v1408
        %v1922 = vmul.f32 %v1914, %v1413
        %v1923 = vmul.f32 %v1915, %v1409
        %v1924 = vmul.f32 %v1916, %v1414
        %v1925 = vmul.f32 %v1917, %v1410
        %v1926 = vmul.f32 %v1918, %v1415
        %v1927 = vmul.f32 %v1919, %v1411
        %v1928 = vadd.f32 %v1853, %v1920
        %v1929 = vadd.f32 %v1854, %v1921
        %v1930 = vadd.f32 %v1855, %v1922
        %v1931 = vadd.f32 %v1856, %v1923
        %v1932 = vadd.f32 %v1857, %v1924
        %v1933 = vadd.f32 %v1858, %v1925
        %v1934 = vadd.f32 %v1859, %v1926
        %v1935 = vadd.f32 %v1860, %v1927
        %s1936 = scalar_lea.vmem [#allocation12], 576
        %v1937 = vld [vmem:[%s1936] sm:$0xff]
        %v1938 = vld [vmem:[%s1936 + $0x8] sm:$0xff]
        %v1939 = vld [vmem:[%s1936 + $0x10] sm:$0xff]
        %v1940 = vld [vmem:[%s1936 + $0x18] sm:$0xff]
        %v1941 = vld [vmem:[%s1936 + $0x20] sm:$0xff]
        %v1942 = vld [vmem:[%s1936 + $0x28] sm:$0xff]
        %v1943 = vld [vmem:[%s1936 + $0x30] sm:$0xff]
        %v1944 = vld [vmem:[%s1936 + $0x38] sm:$0xff]
        %v1945 = vmul.f32 %v1937, %v1460
        %v1946 = vmul.f32 %v1938, %v1456
        %v1947 = vmul.f32 %v1939, %v1461
        %v1948 = vmul.f32 %v1940, %v1457
        %v1949 = vmul.f32 %v1941, %v1462
        %v1950 = vmul.f32 %v1942, %v1458
        %v1951 = vmul.f32 %v1943, %v1463
        %v1952 = vmul.f32 %v1944, %v1459
        %v1953 = vadd.f32 %v1878, %v1945
        %v1954 = vadd.f32 %v1879, %v1946
        %v1955 = vadd.f32 %v1880, %v1947
        %v1956 = vadd.f32 %v1881, %v1948
        %v1957 = vadd.f32 %v1882, %v1949
        %v1958 = vadd.f32 %v1883, %v1950
        %v1959 = vadd.f32 %v1884, %v1951
        %v1960 = vadd.f32 %v1885, %v1952
        %s1961 = scalar_lea.vmem %s9, 256
        %v1962 = vld [vmem:[%s1961] sm:$0xff]
        %v1963 = vld [vmem:[%s1961 + $0x8] sm:$0xff]
        %v1964 = vld [vmem:[%s1961 + $0x10] sm:$0xff]
        %v1965 = vld [vmem:[%s1961 + $0x18] sm:$0xff]
        %v1966 = vld [vmem:[%s1961 + $0x20] sm:$0xff]
        %v1967 = vld [vmem:[%s1961 + $0x28] sm:$0xff]
        %v1968 = vld [vmem:[%s1961 + $0x30] sm:$0xff]
        %v1969 = vld [vmem:[%s1961 + $0x38] sm:$0xff]
        %v1970 = vmul.f32 %v1962, %v1460
        %v1971 = vmul.f32 %v1963, %v1456
        %v1972 = vmul.f32 %v1964, %v1461
        %v1973 = vmul.f32 %v1965, %v1457
        %v1974 = vmul.f32 %v1966, %v1462
        %v1975 = vmul.f32 %v1967, %v1458
        %v1976 = vmul.f32 %v1968, %v1463
        %v1977 = vmul.f32 %v1969, %v1459
        %v1978 = vadd.f32 %v1903, %v1970
        %v1979 = vadd.f32 %v1904, %v1971
        %v1980 = vadd.f32 %v1905, %v1972
        %v1981 = vadd.f32 %v1906, %v1973
        %v1982 = vadd.f32 %v1907, %v1974
        %v1983 = vadd.f32 %v1908, %v1975
        %v1984 = vadd.f32 %v1909, %v1976
        %v1985 = vadd.f32 %v1910, %v1977
        %s1986 = scalar_lea.vmem [#allocation6], 128
        %v1987 = vld [vmem:[%s1986] sm:$0xff]
        %v1988 = vld [vmem:[%s1986 + $0x8] sm:$0xff]
        %v1989 = vld [vmem:[%s1986 + $0x10] sm:$0xff]
        %v1990 = vld [vmem:[%s1986 + $0x18] sm:$0xff]
        %v1991 = vld [vmem:[%s1986 + $0x20] sm:$0xff]
        %v1992 = vld [vmem:[%s1986 + $0x28] sm:$0xff]
        %v1993 = vld [vmem:[%s1986 + $0x30] sm:$0xff]
        %v1994 = vld [vmem:[%s1986 + $0x38] sm:$0xff]
        %v1995 = vmul.f32 %v1987, %v1460
        %v1996 = vmul.f32 %v1988, %v1456
        %v1997 = vmul.f32 %v1989, %v1461
        %v1998 = vmul.f32 %v1990, %v1457
        %v1999 = vmul.f32 %v1991, %v1462
        %v2000 = vmul.f32 %v1992, %v1458
        %v2001 = vmul.f32 %v1993, %v1463
        %v2002 = vmul.f32 %v1994, %v1459
        %v2003 = vadd.f32 %v1928, %v1995
        %v2004 = vadd.f32 %v1929, %v1996
        %v2005 = vadd.f32 %v1930, %v1997
        %v2006 = vadd.f32 %v1931, %v1998
        %v2007 = vadd.f32 %v1932, %v1999
        %v2008 = vadd.f32 %v1933, %v2000
        %v2009 = vadd.f32 %v1934, %v2001
        %v2010 = vadd.f32 %v1935, %v2002
        %s2011 = scalar_lea.vmem [#allocation12], 640
        %v2012 = vld [vmem:[%s2011] sm:$0xff]
        %v2013 = vld [vmem:[%s2011 + $0x8] sm:$0xff]
        %v2014 = vld [vmem:[%s2011 + $0x10] sm:$0xff]
        %v2015 = vld [vmem:[%s2011 + $0x18] sm:$0xff]
        %v2016 = vld [vmem:[%s2011 + $0x20] sm:$0xff]
        %v2017 = vld [vmem:[%s2011 + $0x28] sm:$0xff]
        %v2018 = vld [vmem:[%s2011 + $0x30] sm:$0xff]
        %v2019 = vld [vmem:[%s2011 + $0x38] sm:$0xff]
        %v2020 = vmul.f32 %v2012, %v1359
        %v2021 = vmul.f32 %v2013, %v1360
        %v2022 = vmul.f32 %v2014, %v1361
        %v2023 = vmul.f32 %v2015, %v1362
        %v2024 = vmul.f32 %v2016, %v1363
        %v2025 = vmul.f32 %v2017, %v1364
        %v2026 = vmul.f32 %v2018, %v1365
        %v2027 = vmul.f32 %v2019, %v1366
        %v2028 = vadd.f32 %v1953, %v2020
        %v2029 = vadd.f32 %v1954, %v2021
        %v2030 = vadd.f32 %v1955, %v2022
        %v2031 = vadd.f32 %v1956, %v2023
        %v2032 = vadd.f32 %v1957, %v2024
        %v2033 = vadd.f32 %v1958, %v2025
        %v2034 = vadd.f32 %v1959, %v2026
        %v2035 = vadd.f32 %v1960, %v2027
        %s2036 = scalar_lea.vmem %s9, 320
        %v2037 = vld [vmem:[%s2036] sm:$0xff]
        %v2038 = vld [vmem:[%s2036 + $0x8] sm:$0xff]
        %v2039 = vld [vmem:[%s2036 + $0x10] sm:$0xff]
        %v2040 = vld [vmem:[%s2036 + $0x18] sm:$0xff]
        %v2041 = vld [vmem:[%s2036 + $0x20] sm:$0xff]
        %v2042 = vld [vmem:[%s2036 + $0x28] sm:$0xff]
        %v2043 = vld [vmem:[%s2036 + $0x30] sm:$0xff]
        %v2044 = vld [vmem:[%s2036 + $0x38] sm:$0xff]
        %v2045 = vmul.f32 %v2037, %v1359
        %v2046 = vmul.f32 %v2038, %v1360
        %v2047 = vmul.f32 %v2039, %v1361
        %v2048 = vmul.f32 %v2040, %v1362
        %v2049 = vmul.f32 %v2041, %v1363
        %v2050 = vmul.f32 %v2042, %v1364
        %v2051 = vmul.f32 %v2043, %v1365
        %v2052 = vmul.f32 %v2044, %v1366
        %v2053 = vadd.f32 %v1978, %v2045
        %v2054 = vadd.f32 %v1979, %v2046
        %v2055 = vadd.f32 %v1980, %v2047
        %v2056 = vadd.f32 %v1981, %v2048
        %v2057 = vadd.f32 %v1982, %v2049
        %v2058 = vadd.f32 %v1983, %v2050
        %v2059 = vadd.f32 %v1984, %v2051
        %v2060 = vadd.f32 %v1985, %v2052
        %s2061 = scalar_lea.vmem [#allocation6], 192
        %v2062 = vld [vmem:[%s2061] sm:$0xff]
        %v2063 = vld [vmem:[%s2061 + $0x8] sm:$0xff]
        %v2064 = vld [vmem:[%s2061 + $0x10] sm:$0xff]
        %v2065 = vld [vmem:[%s2061 + $0x18] sm:$0xff]
        %v2066 = vld [vmem:[%s2061 + $0x20] sm:$0xff]
        %v2067 = vld [vmem:[%s2061 + $0x28] sm:$0xff]
        %v2068 = vld [vmem:[%s2061 + $0x30] sm:$0xff]
        %v2069 = vld [vmem:[%s2061 + $0x38] sm:$0xff]
        %v2070 = vmul.f32 %v2062, %v1359
        %v2071 = vmul.f32 %v2063, %v1360
        %v2072 = vmul.f32 %v2064, %v1361
        %v2073 = vmul.f32 %v2065, %v1362
        %v2074 = vmul.f32 %v2066, %v1363
        %v2075 = vmul.f32 %v2067, %v1364
        %v2076 = vmul.f32 %v2068, %v1365
        %v2077 = vmul.f32 %v2069, %v1366
        %v2078 = vadd.f32 %v2003, %v2070
        %v2079 = vadd.f32 %v2004, %v2071
        %v2080 = vadd.f32 %v2005, %v2072
        %v2081 = vadd.f32 %v2006, %v2073
        %v2082 = vadd.f32 %v2007, %v2074
        %v2083 = vadd.f32 %v2008, %v2075
        %v2084 = vadd.f32 %v2009, %v2076
        %v2085 = vadd.f32 %v2010, %v2077
        %s2086 = scalar_lea.vmem [#allocation12], 704
        %v2087 = vld [vmem:[%s2086] sm:$0xff]
        %v2088 = vld [vmem:[%s2086 + $0x8] sm:$0xff]
        %v2089 = vld [vmem:[%s2086 + $0x10] sm:$0xff]
        %v2090 = vld [vmem:[%s2086 + $0x18] sm:$0xff]
        %v2091 = vld [vmem:[%s2086 + $0x20] sm:$0xff]
        %v2092 = vld [vmem:[%s2086 + $0x28] sm:$0xff]
        %v2093 = vld [vmem:[%s2086 + $0x30] sm:$0xff]
        %v2094 = vld [vmem:[%s2086 + $0x38] sm:$0xff]
        %v2095 = vmul.f32 %v2087, %v1530
        %v2096 = vmul.f32 %v2088, %v1534
        %v2097 = vmul.f32 %v2089, %v1531
        %v2098 = vmul.f32 %v2090, %v1535
        %v2099 = vmul.f32 %v2091, %v1532
        %v2100 = vmul.f32 %v2092, %v1536
        %v2101 = vmul.f32 %v2093, %v1533
        %v2102 = vmul.f32 %v2094, %v1537
        %v2103 = vadd.f32 %v2028, %v2095
        %v2104 = vadd.f32 %v2029, %v2096
        %v2105 = vadd.f32 %v2030, %v2097
        %v2106 = vadd.f32 %v2031, %v2098
        %v2107 = vadd.f32 %v2032, %v2099
        %v2108 = vadd.f32 %v2033, %v2100
        %v2109 = vadd.f32 %v2034, %v2101
        %v2110 = vadd.f32 %v2035, %v2102
        %s2111 = scalar_lea.vmem %s9, 384
        %v2112 = vld [vmem:[%s2111] sm:$0xff]
        %v2113 = vld [vmem:[%s2111 + $0x8] sm:$0xff]
        %v2114 = vld [vmem:[%s2111 + $0x10] sm:$0xff]
        %v2115 = vld [vmem:[%s2111 + $0x18] sm:$0xff]
        %v2116 = vld [vmem:[%s2111 + $0x20] sm:$0xff]
        %v2117 = vld [vmem:[%s2111 + $0x28] sm:$0xff]
        %v2118 = vld [vmem:[%s2111 + $0x30] sm:$0xff]
        %v2119 = vld [vmem:[%s2111 + $0x38] sm:$0xff]
        %v2120 = vmul.f32 %v2112, %v1530
        %v2121 = vmul.f32 %v2113, %v1534
        %v2122 = vmul.f32 %v2114, %v1531
        %v2123 = vmul.f32 %v2115, %v1535
        %v2124 = vmul.f32 %v2116, %v1532
        %v2125 = vmul.f32 %v2117, %v1536
        %v2126 = vmul.f32 %v2118, %v1533
        %v2127 = vmul.f32 %v2119, %v1537
        %v2128 = vadd.f32 %v2053, %v2120
        %v2129 = vadd.f32 %v2054, %v2121
        %v2130 = vadd.f32 %v2055, %v2122
        %v2131 = vadd.f32 %v2056, %v2123
        %v2132 = vadd.f32 %v2057, %v2124
        %v2133 = vadd.f32 %v2058, %v2125
        %v2134 = vadd.f32 %v2059, %v2126
        %v2135 = vadd.f32 %v2060, %v2127
        %s2136 = scalar_lea.vmem [#allocation6], 256
        %v2137 = vld [vmem:[%s2136] sm:$0xff]
        %v2138 = vld [vmem:[%s2136 + $0x8] sm:$0xff]
        %v2139 = vld [vmem:[%s2136 + $0x10] sm:$0xff]
        %v2140 = vld [vmem:[%s2136 + $0x18] sm:$0xff]
        %v2141 = vld [vmem:[%s2136 + $0x20] sm:$0xff]
        %v2142 = vld [vmem:[%s2136 + $0x28] sm:$0xff]
        %v2143 = vld [vmem:[%s2136 + $0x30] sm:$0xff]
        %v2144 = vld [vmem:[%s2136 + $0x38] sm:$0xff]
        %v2145 = vmul.f32 %v2137, %v1530
        %v2146 = vmul.f32 %v2138, %v1534
        %v2147 = vmul.f32 %v2139, %v1531
        %v2148 = vmul.f32 %v2140, %v1535
        %v2149 = vmul.f32 %v2141, %v1532
        %v2150 = vmul.f32 %v2142, %v1536
        %v2151 = vmul.f32 %v2143, %v1533
        %v2152 = vmul.f32 %v2144, %v1537
        %v2153 = vadd.f32 %v2078, %v2145
        %v2154 = vadd.f32 %v2079, %v2146
        %v2155 = vadd.f32 %v2080, %v2147
        %v2156 = vadd.f32 %v2081, %v2148
        %v2157 = vadd.f32 %v2082, %v2149
        %v2158 = vadd.f32 %v2083, %v2150
        %v2159 = vadd.f32 %v2084, %v2151
        %v2160 = vadd.f32 %v2085, %v2152
        %s2161 = scalar_lea.vmem [#allocation12], 768
        %v2162 = vld [vmem:[%s2161] sm:$0xff]
        %v2163 = vld [vmem:[%s2161 + $0x8] sm:$0xff]
        %v2164 = vld [vmem:[%s2161 + $0x10] sm:$0xff]
        %v2165 = vld [vmem:[%s2161 + $0x18] sm:$0xff]
        %v2166 = vld [vmem:[%s2161 + $0x20] sm:$0xff]
        %v2167 = vld [vmem:[%s2161 + $0x28] sm:$0xff]
        %v2168 = vld [vmem:[%s2161 + $0x30] sm:$0xff]
        %v2169 = vld [vmem:[%s2161 + $0x38] sm:$0xff]
        %v2170 = vmul.f32 %v2162, %v1580
        %v2171 = vmul.f32 %v2163, %v1584
        %v2172 = vmul.f32 %v2164, %v1581
        %v2173 = vmul.f32 %v2165, %v1585
        %v2174 = vmul.f32 %v2166, %v1582
        %v2175 = vmul.f32 %v2167, %v1586
        %v2176 = vmul.f32 %v2168, %v1583
        %v2177 = vmul.f32 %v2169, %v1587
        %v2178 = vadd.f32 %v2103, %v2170
        %v2179 = vadd.f32 %v2104, %v2171
        %v2180 = vadd.f32 %v2105, %v2172
        %v2181 = vadd.f32 %v2106, %v2173
        %v2182 = vadd.f32 %v2107, %v2174
        %v2183 = vadd.f32 %v2108, %v2175
        %v2184 = vadd.f32 %v2109, %v2176
        %v2185 = vadd.f32 %v2110, %v2177
        %s2186 = scalar_lea.vmem %s9, 448
        %v2187 = vld [vmem:[%s2186] sm:$0xff]
        %v2188 = vld [vmem:[%s2186 + $0x8] sm:$0xff]
        %v2189 = vld [vmem:[%s2186 + $0x10] sm:$0xff]
        %v2190 = vld [vmem:[%s2186 + $0x18] sm:$0xff]
        %v2191 = vld [vmem:[%s2186 + $0x20] sm:$0xff]
        %v2192 = vld [vmem:[%s2186 + $0x28] sm:$0xff]
        %v2193 = vld [vmem:[%s2186 + $0x30] sm:$0xff]
        %v2194 = vld [vmem:[%s2186 + $0x38] sm:$0xff]
        %v2195 = vmul.f32 %v2187, %v1580
        %v2196 = vmul.f32 %v2188, %v1584
        %v2197 = vmul.f32 %v2189, %v1581
        %v2198 = vmul.f32 %v2190, %v1585
        %v2199 = vmul.f32 %v2191, %v1582
        %v2200 = vmul.f32 %v2192, %v1586
        %v2201 = vmul.f32 %v2193, %v1583
        %v2202 = vmul.f32 %v2194, %v1587
        %v2203 = vadd.f32 %v2128, %v2195
        %v2204 = vadd.f32 %v2129, %v2196
        %v2205 = vadd.f32 %v2130, %v2197
        %v2206 = vadd.f32 %v2131, %v2198
        %v2207 = vadd.f32 %v2132, %v2199
        %v2208 = vadd.f32 %v2133, %v2200
        %v2209 = vadd.f32 %v2134, %v2201
        %v2210 = vadd.f32 %v2135, %v2202
        %s2211 = scalar_lea.vmem [#allocation6], 320
        %v2212 = vld [vmem:[%s2211] sm:$0xff]
        %v2213 = vld [vmem:[%s2211 + $0x8] sm:$0xff]
        %v2214 = vld [vmem:[%s2211 + $0x10] sm:$0xff]
        %v2215 = vld [vmem:[%s2211 + $0x18] sm:$0xff]
        %v2216 = vld [vmem:[%s2211 + $0x20] sm:$0xff]
        %v2217 = vld [vmem:[%s2211 + $0x28] sm:$0xff]
        %v2218 = vld [vmem:[%s2211 + $0x30] sm:$0xff]
        %v2219 = vld [vmem:[%s2211 + $0x38] sm:$0xff]
        %v2220 = vmul.f32 %v2212, %v1580
        %v2221 = vmul.f32 %v2213, %v1584
        %v2222 = vmul.f32 %v2214, %v1581
        %v2223 = vmul.f32 %v2215, %v1585
        %v2224 = vmul.f32 %v2216, %v1582
        %v2225 = vmul.f32 %v2217, %v1586
        %v2226 = vmul.f32 %v2218, %v1583
        %v2227 = vmul.f32 %v2219, %v1587
        %v2228 = vadd.f32 %v2153, %v2220
        %v2229 = vadd.f32 %v2154, %v2221
        %v2230 = vadd.f32 %v2155, %v2222
        %v2231 = vadd.f32 %v2156, %v2223
        %v2232 = vadd.f32 %v2157, %v2224
        %v2233 = vadd.f32 %v2158, %v2225
        %v2234 = vadd.f32 %v2159, %v2226
        %v2235 = vadd.f32 %v2160, %v2227
        %s2236 = scalar_lea.vmem [#allocation12], 832
        %v2237 = vld [vmem:[%s2236] sm:$0xff]
        %v2238 = vld [vmem:[%s2236 + $0x8] sm:$0xff]
        %v2239 = vld [vmem:[%s2236 + $0x10] sm:$0xff]
        %v2240 = vld [vmem:[%s2236 + $0x18] sm:$0xff]
        %v2241 = vld [vmem:[%s2236 + $0x20] sm:$0xff]
        %v2242 = vld [vmem:[%s2236 + $0x28] sm:$0xff]
        %v2243 = vld [vmem:[%s2236 + $0x30] sm:$0xff]
        %v2244 = vld [vmem:[%s2236 + $0x38] sm:$0xff]
        %v2245 = vmul.f32 %v2237, %v1630
        %v2246 = vmul.f32 %v2238, %v1634
        %v2247 = vmul.f32 %v2239, %v1631
        %v2248 = vmul.f32 %v2240, %v1635
        %v2249 = vmul.f32 %v2241, %v1632
        %v2250 = vmul.f32 %v2242, %v1636
        %v2251 = vmul.f32 %v2243, %v1633
        %v2252 = vmul.f32 %v2244, %v1637
        %v2253 = vadd.f32 %v2178, %v2245
        %v2254 = vadd.f32 %v2179, %v2246
        %v2255 = vadd.f32 %v2180, %v2247
        %v2256 = vadd.f32 %v2181, %v2248
        %v2257 = vadd.f32 %v2182, %v2249
        %v2258 = vadd.f32 %v2183, %v2250
        %v2259 = vadd.f32 %v2184, %v2251
        %v2260 = vadd.f32 %v2185, %v2252
        %s2261 = scalar_lea.vmem %s9, 512
        %v2262 = vld [vmem:[%s2261] sm:$0xff]
        %v2263 = vld [vmem:[%s2261 + $0x8] sm:$0xff]
        %v2264 = vld [vmem:[%s2261 + $0x10] sm:$0xff]
        %v2265 = vld [vmem:[%s2261 + $0x18] sm:$0xff]
        %v2266 = vld [vmem:[%s2261 + $0x20] sm:$0xff]
        %v2267 = vld [vmem:[%s2261 + $0x28] sm:$0xff]
        %v2268 = vld [vmem:[%s2261 + $0x30] sm:$0xff]
        %v2269 = vld [vmem:[%s2261 + $0x38] sm:$0xff]
        %v2270 = vmul.f32 %v2262, %v1630
        %v2271 = vmul.f32 %v2263, %v1634
        %v2272 = vmul.f32 %v2264, %v1631
        %v2273 = vmul.f32 %v2265, %v1635
        %v2274 = vmul.f32 %v2266, %v1632
        %v2275 = vmul.f32 %v2267, %v1636
        %v2276 = vmul.f32 %v2268, %v1633
        %v2277 = vmul.f32 %v2269, %v1637
        %v2278 = vadd.f32 %v2203, %v2270
        %v2279 = vadd.f32 %v2204, %v2271
        %v2280 = vadd.f32 %v2205, %v2272
        %v2281 = vadd.f32 %v2206, %v2273
        %v2282 = vadd.f32 %v2207, %v2274
        %v2283 = vadd.f32 %v2208, %v2275
        %v2284 = vadd.f32 %v2209, %v2276
        %v2285 = vadd.f32 %v2210, %v2277
        %s2286 = scalar_lea.vmem [#allocation6], 384
        %v2287 = vld [vmem:[%s2286] sm:$0xff]
        %v2288 = vld [vmem:[%s2286 + $0x8] sm:$0xff]
        %v2289 = vld [vmem:[%s2286 + $0x10] sm:$0xff]
        %v2290 = vld [vmem:[%s2286 + $0x18] sm:$0xff]
        %v2291 = vld [vmem:[%s2286 + $0x20] sm:$0xff]
        %v2292 = vld [vmem:[%s2286 + $0x28] sm:$0xff]
        %v2293 = vld [vmem:[%s2286 + $0x30] sm:$0xff]
        %v2294 = vld [vmem:[%s2286 + $0x38] sm:$0xff]
        %v2295 = vmul.f32 %v2287, %v1630
        %v2296 = vmul.f32 %v2288, %v1634
        %v2297 = vmul.f32 %v2289, %v1631
        %v2298 = vmul.f32 %v2290, %v1635
        %v2299 = vmul.f32 %v2291, %v1632
        %v2300 = vmul.f32 %v2292, %v1636
        %v2301 = vmul.f32 %v2293, %v1633
        %v2302 = vmul.f32 %v2294, %v1637
        %v2303 = vadd.f32 %v2228, %v2295
        %v2304 = vadd.f32 %v2229, %v2296
        %v2305 = vadd.f32 %v2230, %v2297
        %v2306 = vadd.f32 %v2231, %v2298
        %v2307 = vadd.f32 %v2232, %v2299
        %v2308 = vadd.f32 %v2233, %v2300
        %v2309 = vadd.f32 %v2234, %v2301
        %v2310 = vadd.f32 %v2235, %v2302
        %s2311 = scalar_lea.vmem [#allocation12], 896
        %v2312 = vld [vmem:[%s2311] sm:$0xff]
        %v2313 = vld [vmem:[%s2311 + $0x8] sm:$0xff]
        %v2314 = vld [vmem:[%s2311 + $0x10] sm:$0xff]
        %v2315 = vld [vmem:[%s2311 + $0x18] sm:$0xff]
        %v2316 = vld [vmem:[%s2311 + $0x20] sm:$0xff]
        %v2317 = vld [vmem:[%s2311 + $0x28] sm:$0xff]
        %v2318 = vld [vmem:[%s2311 + $0x30] sm:$0xff]
        %v2319 = vld [vmem:[%s2311 + $0x38] sm:$0xff]
        %v2320 = vmul.f32 %v2312, %v1704
        %v2321 = vmul.f32 %v2313, %v1708
        %v2322 = vmul.f32 %v2314, %v1705
        %v2323 = vmul.f32 %v2315, %v1709
        %v2324 = vmul.f32 %v2316, %v1706
        %v2325 = vmul.f32 %v2317, %v1710
        %v2326 = vmul.f32 %v2318, %v1707
        %v2327 = vmul.f32 %v2319, %v1711
        %v2328 = vadd.f32 %v2253, %v2320
        %v2329 = vadd.f32 %v2254, %v2321
        %v2330 = vadd.f32 %v2255, %v2322
        %v2331 = vadd.f32 %v2256, %v2323
        %v2332 = vadd.f32 %v2257, %v2324
        %v2333 = vadd.f32 %v2258, %v2325
        %v2334 = vadd.f32 %v2259, %v2326
        %v2335 = vadd.f32 %v2260, %v2327
        %s2336 = scalar_lea.vmem %s9, 576
        %v2337 = vld [vmem:[%s2336] sm:$0xff]
        %v2338 = vld [vmem:[%s2336 + $0x8] sm:$0xff]
        %v2339 = vld [vmem:[%s2336 + $0x10] sm:$0xff]
        %v2340 = vld [vmem:[%s2336 + $0x18] sm:$0xff]
        %v2341 = vld [vmem:[%s2336 + $0x20] sm:$0xff]
        %v2342 = vld [vmem:[%s2336 + $0x28] sm:$0xff]
        %v2343 = vld [vmem:[%s2336 + $0x30] sm:$0xff]
        %v2344 = vld [vmem:[%s2336 + $0x38] sm:$0xff]
        %v2345 = vmul.f32 %v2337, %v1704
        %v2346 = vmul.f32 %v2338, %v1708
        %v2347 = vmul.f32 %v2339, %v1705
        %v2348 = vmul.f32 %v2340, %v1709
        %v2349 = vmul.f32 %v2341, %v1706
        %v2350 = vmul.f32 %v2342, %v1710
        %v2351 = vmul.f32 %v2343, %v1707
        %v2352 = vmul.f32 %v2344, %v1711
        %v2353 = vadd.f32 %v2278, %v2345
        %v2354 = vadd.f32 %v2279, %v2346
        %v2355 = vadd.f32 %v2280, %v2347
        %v2356 = vadd.f32 %v2281, %v2348
        %v2357 = vadd.f32 %v2282, %v2349
        %v2358 = vadd.f32 %v2283, %v2350
        %v2359 = vadd.f32 %v2284, %v2351
        %v2360 = vadd.f32 %v2285, %v2352
        %s2361 = scalar_lea.vmem [#allocation12], 960
        %v2362 = vld [vmem:[%s2361] sm:$0xff]
        %v2363 = vld [vmem:[%s2361 + $0x8] sm:$0xff]
        %v2364 = vld [vmem:[%s2361 + $0x10] sm:$0xff]
        %v2365 = vld [vmem:[%s2361 + $0x18] sm:$0xff]
        %v2366 = vld [vmem:[%s2361 + $0x20] sm:$0xff]
        %v2367 = vld [vmem:[%s2361 + $0x28] sm:$0xff]
        %v2368 = vld [vmem:[%s2361 + $0x30] sm:$0xff]
        %v2369 = vld [vmem:[%s2361 + $0x38] sm:$0xff]
        %v2370 = vmul.f32 %v2362, %v1779
        %v2371 = vmul.f32 %v2363, %v1783
        %v2372 = vmul.f32 %v2364, %v1780
        %v2373 = vmul.f32 %v2365, %v1784
        %v2374 = vmul.f32 %v2366, %v1781
        %v2375 = vmul.f32 %v2367, %v1785
        %v2376 = vmul.f32 %v2368, %v1782
        %v2377 = vmul.f32 %v2369, %v1786
        %v2378 = vadd.f32 %v2328, %v2370
        %v2379 = vadd.f32 %v2329, %v2371
        %v2380 = vadd.f32 %v2330, %v2372
        %v2381 = vadd.f32 %v2331, %v2373
        %v2382 = vadd.f32 %v2332, %v2374
        %v2383 = vadd.f32 %v2333, %v2375
        %v2384 = vadd.f32 %v2334, %v2376
        %v2385 = vadd.f32 %v2335, %v2377
        %s2386 = scalar_lea.vmem %s9, 640
        %v2387 = vld [vmem:[%s2386] sm:$0xff]
        %v2388 = vld [vmem:[%s2386 + $0x8] sm:$0xff]
        %v2389 = vld [vmem:[%s2386 + $0x10] sm:$0xff]
        %v2390 = vld [vmem:[%s2386 + $0x18] sm:$0xff]
        %v2391 = vld [vmem:[%s2386 + $0x20] sm:$0xff]
        %v2392 = vld [vmem:[%s2386 + $0x28] sm:$0xff]
        %v2393 = vld [vmem:[%s2386 + $0x30] sm:$0xff]
        %v2394 = vld [vmem:[%s2386 + $0x38] sm:$0xff]
        %v2395 = vmul.f32 %v2387, %v1779
        %v2396 = vmul.f32 %v2388, %v1783
        %v2397 = vmul.f32 %v2389, %v1780
        %v2398 = vmul.f32 %v2390, %v1784
        %v2399 = vmul.f32 %v2391, %v1781
        %v2400 = vmul.f32 %v2392, %v1785
        %v2401 = vmul.f32 %v2393, %v1782
        %v2402 = vmul.f32 %v2394, %v1786
        %v2403 = vadd.f32 %v2353, %v2395
        %v2404 = vadd.f32 %v2354, %v2396
        %v2405 = vadd.f32 %v2355, %v2397
        %v2406 = vadd.f32 %v2356, %v2398
        %v2407 = vadd.f32 %v2357, %v2399
        %v2408 = vadd.f32 %v2358, %v2400
        %v2409 = vadd.f32 %v2359, %v2401
        %v2410 = vadd.f32 %v2360, %v2402
        %s2411 = scalar_lea.vmem [#allocation12], 1024
        %v2412 = vld [vmem:[%s2411] sm:$0xff]
        %v2413 = vld [vmem:[%s2411 + $0x8] sm:$0xff]
        %v2414 = vld [vmem:[%s2411 + $0x10] sm:$0xff]
        %v2415 = vld [vmem:[%s2411 + $0x18] sm:$0xff]
        %v2416 = vld [vmem:[%s2411 + $0x20] sm:$0xff]
        %v2417 = vld [vmem:[%s2411 + $0x28] sm:$0xff]
        %v2418 = vld [vmem:[%s2411 + $0x30] sm:$0xff]
        %v2419 = vld [vmem:[%s2411 + $0x38] sm:$0xff]
        %v2420 = vmul.f32 %v2412, %v1408
        %v2421 = vmul.f32 %v2413, %v1412
        %v2422 = vmul.f32 %v2414, %v1409
        %v2423 = vmul.f32 %v2415, %v1413
        %v2424 = vmul.f32 %v2416, %v1410
        %v2425 = vmul.f32 %v2417, %v1414
        %v2426 = vmul.f32 %v2418, %v1411
        %v2427 = vmul.f32 %v2419, %v1415
        %v2428 = vadd.f32 %v2378, %v2420
        %v2429 = vadd.f32 %v2379, %v2421
        %v2430 = vadd.f32 %v2380, %v2422
        %v2431 = vadd.f32 %v2381, %v2423
        %v2432 = vadd.f32 %v2382, %v2424
        %v2433 = vadd.f32 %v2383, %v2425
        %v2434 = vadd.f32 %v2384, %v2426
        %v2435 = vadd.f32 %v2385, %v2427
        %s2436 = scalar_lea.vmem [#allocation12], 1088
        %v2437 = vld [vmem:[%s2436] sm:$0xff]
        %v2438 = vld [vmem:[%s2436 + $0x8] sm:$0xff]
        %v2439 = vld [vmem:[%s2436 + $0x10] sm:$0xff]
        %v2440 = vld [vmem:[%s2436 + $0x18] sm:$0xff]
        %v2441 = vld [vmem:[%s2436 + $0x20] sm:$0xff]
        %v2442 = vld [vmem:[%s2436 + $0x28] sm:$0xff]
        %v2443 = vld [vmem:[%s2436 + $0x30] sm:$0xff]
        %v2444 = vld [vmem:[%s2436 + $0x38] sm:$0xff]
        %v2445 = vmul.f32 %v2437, %v1456
        %v2446 = vmul.f32 %v2438, %v1460
        %v2447 = vmul.f32 %v2439, %v1457
        %v2448 = vmul.f32 %v2440, %v1461
        %v2449 = vmul.f32 %v2441, %v1458
        %v2450 = vmul.f32 %v2442, %v1462
        %v2451 = vmul.f32 %v2443, %v1459
        %v2452 = vmul.f32 %v2444, %v1463
        %v2453 = vadd.f32 %v2428, %v2445
        %v2454 = vadd.f32 %v2429, %v2446
        %v2455 = vadd.f32 %v2430, %v2447
        %v2456 = vadd.f32 %v2431, %v2448
        %v2457 = vadd.f32 %v2432, %v2449
        %v2458 = vadd.f32 %v2433, %v2450
        %v2459 = vadd.f32 %v2434, %v2451
        %v2460 = vadd.f32 %v2435, %v2452
        %s2461 = scalar_lea.vmem [#allocation12], 1152
        %v2462 = vld [vmem:[%s2461] sm:$0xff]
        %v2463 = vld [vmem:[%s2461 + $0x8] sm:$0xff]
        %v2464 = vld [vmem:[%s2461 + $0x10] sm:$0xff]
        %v2465 = vld [vmem:[%s2461 + $0x18] sm:$0xff]
        %v2466 = vld [vmem:[%s2461 + $0x20] sm:$0xff]
        %v2467 = vld [vmem:[%s2461 + $0x28] sm:$0xff]
        %v2468 = vld [vmem:[%s2461 + $0x30] sm:$0xff]
        %v2469 = vld [vmem:[%s2461 + $0x38] sm:$0xff]
        %v2470 = vmul.f32 %v2462, %v1360
        %v2471 = vmul.f32 %v2463, %v1359
        %v2472 = vmul.f32 %v2464, %v1362
        %v2473 = vmul.f32 %v2465, %v1361
        %v2474 = vmul.f32 %v2466, %v1364
        %v2475 = vmul.f32 %v2467, %v1363
        %v2476 = vmul.f32 %v2468, %v1366
        %v2477 = vmul.f32 %v2469, %v1365
        %v2478 = vadd.f32 %v2453, %v2470
        %v2479 = vadd.f32 %v2454, %v2471
        %v2480 = vadd.f32 %v2455, %v2472
        %v2481 = vadd.f32 %v2456, %v2473
        %v2482 = vadd.f32 %v2457, %v2474
        %v2483 = vadd.f32 %v2458, %v2475
        %v2484 = vadd.f32 %v2459, %v2476
        %v2485 = vadd.f32 %v2460, %v2477
        %s2486 = scalar_lea.vmem [#allocation12], 1216
        %v2487 = vld [vmem:[%s2486] sm:$0xff]
        %v2488 = vld [vmem:[%s2486 + $0x8] sm:$0xff]
        %v2489 = vld [vmem:[%s2486 + $0x10] sm:$0xff]
        %v2490 = vld [vmem:[%s2486 + $0x18] sm:$0xff]
        %v2491 = vld [vmem:[%s2486 + $0x20] sm:$0xff]
        %v2492 = vld [vmem:[%s2486 + $0x28] sm:$0xff]
        %v2493 = vld [vmem:[%s2486 + $0x30] sm:$0xff]
        %v2494 = vld [vmem:[%s2486 + $0x38] sm:$0xff]
        %v2495 = vmul.f32 %v2487, %v1534
        %v2496 = vmul.f32 %v2488, %v1530
        %v2497 = vmul.f32 %v2489, %v1535
        %v2498 = vmul.f32 %v2490, %v1531
        %v2499 = vmul.f32 %v2491, %v1536
        %v2500 = vmul.f32 %v2492, %v1532
        %v2501 = vmul.f32 %v2493, %v1537
        %v2502 = vmul.f32 %v2494, %v1533
        %v2503 = vadd.f32 %v2478, %v2495
        %v2504 = vadd.f32 %v2479, %v2496
        %v2505 = vadd.f32 %v2480, %v2497
        %v2506 = vadd.f32 %v2481, %v2498
        %v2507 = vadd.f32 %v2482, %v2499
        %v2508 = vadd.f32 %v2483, %v2500
        %v2509 = vadd.f32 %v2484, %v2501
        %v2510 = vadd.f32 %v2485, %v2502
        %s2511 = scalar_lea.vmem [#allocation12], 1280
        %v2512 = vld [vmem:[%s2511] sm:$0xff]
        %v2513 = vld [vmem:[%s2511 + $0x8] sm:$0xff]
        %v2514 = vld [vmem:[%s2511 + $0x10] sm:$0xff]
        %v2515 = vld [vmem:[%s2511 + $0x18] sm:$0xff]
        %v2516 = vld [vmem:[%s2511 + $0x20] sm:$0xff]
        %v2517 = vld [vmem:[%s2511 + $0x28] sm:$0xff]
        %v2518 = vld [vmem:[%s2511 + $0x30] sm:$0xff]
        %v2519 = vld [vmem:[%s2511 + $0x38] sm:$0xff]
        %v2520 = vmul.f32 %v2512, %v1584
        %v2521 = vmul.f32 %v2513, %v1580
        %v2522 = vmul.f32 %v2514, %v1585
        %v2523 = vmul.f32 %v2515, %v1581
        %v2524 = vmul.f32 %v2516, %v1586
        %v2525 = vmul.f32 %v2517, %v1582
        %v2526 = vmul.f32 %v2518, %v1587
        %v2527 = vmul.f32 %v2519, %v1583
        %v2528 = vadd.f32 %v2503, %v2520
        %v2529 = vadd.f32 %v2504, %v2521
        %v2530 = vadd.f32 %v2505, %v2522
        %v2531 = vadd.f32 %v2506, %v2523
        %v2532 = vadd.f32 %v2507, %v2524
        %v2533 = vadd.f32 %v2508, %v2525
        %v2534 = vadd.f32 %v2509, %v2526
        %v2535 = vadd.f32 %v2510, %v2527
        %v2536 = vld [vmem:[%s8] sm:$0xff]
        %v2537 = vld [vmem:[%s8 + $0x8] sm:$0xff]
        %v2538 = vld [vmem:[%s8 + $0x10] sm:$0xff]
        %v2539 = vld [vmem:[%s8 + $0x18] sm:$0xff]
        %v2540 = vld [vmem:[%s8 + $0x20] sm:$0xff]
        %v2541 = vld [vmem:[%s8 + $0x28] sm:$0xff]
        %v2542 = vld [vmem:[%s8 + $0x30] sm:$0xff]
        %v2543 = vld [vmem:[%s8 + $0x38] sm:$0xff]
        %2544 = vrot.lane.b32.xlu0 %v2303, 3
        %v2545 = vpop.permute.xlu0 %2544
        %2546 = vrot.lane.b32.xlu0 %v2305, 3
        %v2547 = vpop.permute.xlu0 %2546
        %2548 = vrot.lane.b32.xlu0 %v2307, 3
        %v2549 = vpop.permute.xlu0 %2548
        %2550 = vrot.lane.b32.xlu0 %v2309, 3
        %v2551 = vpop.permute.xlu0 %2550
        %2552 = vrot.lane.b32.xlu0 %v2304, 3
        %v2553 = vpop.permute.xlu0 %2552
        %2554 = vrot.lane.b32.xlu0 %v2306, 3
        %v2555 = vpop.permute.xlu0 %2554
        %2556 = vrot.lane.b32.xlu0 %v2308, 3
        %v2557 = vpop.permute.xlu0 %2556
        %2558 = vrot.lane.b32.xlu0 %v2310, 3
        %v2559 = vpop.permute.xlu0 %2558
        %vm2560 = vcmp.lt.s32.totalorder %v958, 3
        %v2561 = vsel %vm2560, %v2545, %v2553
        %v2562 = vsel %vm2560, %v2547, %v2555
        %v2563 = vsel %vm2560, %v2549, %v2557
        %v2564 = vsel %vm2560, %v2551, %v2559
        %v2565 = vsel %vm2560, %v2553, %v2545
        %v2566 = vsel %vm2560, %v2555, %v2547
        %v2567 = vsel %vm2560, %v2557, %v2549
        %v2568 = vsel %vm2560, %v2559, %v2551
        %v2569 = vld [vmem:[#allocation7] sm:$0xff]
        %v2570 = vld [vmem:[#allocation7 + $0x8] sm:$0xff]
        %v2571 = vld [vmem:[#allocation7 + $0x10] sm:$0xff]
        %v2572 = vld [vmem:[#allocation7 + $0x18] sm:$0xff]
        %v2573 = vld [vmem:[#allocation7 + $0x20] sm:$0xff]
        %v2574 = vld [vmem:[#allocation7 + $0x28] sm:$0xff]
        %v2575 = vld [vmem:[#allocation7 + $0x30] sm:$0xff]
        %v2576 = vld [vmem:[#allocation7 + $0x38] sm:$0xff]
        %v2577 = vmul.f32 %v2569, %v2565
        %v2578 = vmul.f32 %v2570, %v2561
        %v2579 = vmul.f32 %v2571, %v2566
        %v2580 = vmul.f32 %v2572, %v2562
        %v2581 = vmul.f32 %v2573, %v2567
        %v2582 = vmul.f32 %v2574, %v2563
        %v2583 = vmul.f32 %v2575, %v2568
        %v2584 = vmul.f32 %v2576, %v2564
        %v2585 = vadd.f32 %v2536, %v2577
        %v2586 = vadd.f32 %v2537, %v2578
        %v2587 = vadd.f32 %v2538, %v2579
        %v2588 = vadd.f32 %v2539, %v2580
        %v2589 = vadd.f32 %v2540, %v2581
        %v2590 = vadd.f32 %v2541, %v2582
        %v2591 = vadd.f32 %v2542, %v2583
        %v2592 = vadd.f32 %v2543, %v2584
        %2593 = vrot.lane.b32.xlu0 %v2303, 2
        %v2594 = vpop.permute.xlu0 %2593
        %2595 = vrot.lane.b32.xlu0 %v2305, 2
        %v2596 = vpop.permute.xlu0 %2595
        %2597 = vrot.lane.b32.xlu0 %v2307, 2
        %v2598 = vpop.permute.xlu0 %2597
        %2599 = vrot.lane.b32.xlu0 %v2309, 2
        %v2600 = vpop.permute.xlu0 %2599
        %2601 = vrot.lane.b32.xlu0 %v2304, 2
        %v2602 = vpop.permute.xlu0 %2601
        %2603 = vrot.lane.b32.xlu0 %v2306, 2
        %v2604 = vpop.permute.xlu0 %2603
        %2605 = vrot.lane.b32.xlu0 %v2308, 2
        %v2606 = vpop.permute.xlu0 %2605
        %2607 = vrot.lane.b32.xlu0 %v2310, 2
        %v2608 = vpop.permute.xlu0 %2607
        %vm2609 = vcmp.lt.s32.totalorder %v958, 2
        %v2610 = vsel %vm2609, %v2594, %v2602
        %v2611 = vsel %vm2609, %v2596, %v2604
        %v2612 = vsel %vm2609, %v2598, %v2606
        %v2613 = vsel %vm2609, %v2600, %v2608
        %v2614 = vsel %vm2609, %v2602, %v2594
        %v2615 = vsel %vm2609, %v2604, %v2596
        %v2616 = vsel %vm2609, %v2606, %v2598
        %v2617 = vsel %vm2609, %v2608, %v2600
        %s2618 = scalar_lea.vmem [#allocation7], 64
        %v2619 = vld [vmem:[%s2618] sm:$0xff]
        %v2620 = vld [vmem:[%s2618 + $0x8] sm:$0xff]
        %v2621 = vld [vmem:[%s2618 + $0x10] sm:$0xff]
        %v2622 = vld [vmem:[%s2618 + $0x18] sm:$0xff]
        %v2623 = vld [vmem:[%s2618 + $0x20] sm:$0xff]
        %v2624 = vld [vmem:[%s2618 + $0x28] sm:$0xff]
        %v2625 = vld [vmem:[%s2618 + $0x30] sm:$0xff]
        %v2626 = vld [vmem:[%s2618 + $0x38] sm:$0xff]
        %v2627 = vmul.f32 %v2619, %v2614
        %v2628 = vmul.f32 %v2620, %v2610
        %v2629 = vmul.f32 %v2621, %v2615
        %v2630 = vmul.f32 %v2622, %v2611
        %v2631 = vmul.f32 %v2623, %v2616
        %v2632 = vmul.f32 %v2624, %v2612
        %v2633 = vmul.f32 %v2625, %v2617
        %v2634 = vmul.f32 %v2626, %v2613
        %v2635 = vadd.f32 %v2585, %v2627
        %v2636 = vadd.f32 %v2586, %v2628
        %v2637 = vadd.f32 %v2587, %v2629
        %v2638 = vadd.f32 %v2588, %v2630
        %v2639 = vadd.f32 %v2589, %v2631
        %v2640 = vadd.f32 %v2590, %v2632
        %v2641 = vadd.f32 %v2591, %v2633
        %v2642 = vadd.f32 %v2592, %v2634
        %2643 = vrot.lane.b32.xlu0 %v2303, 1
        %v2644 = vpop.permute.xlu0 %2643
        %2645 = vrot.lane.b32.xlu0 %v2305, 1
        %v2646 = vpop.permute.xlu0 %2645
        %2647 = vrot.lane.b32.xlu0 %v2307, 1
        %v2648 = vpop.permute.xlu0 %2647
        %2649 = vrot.lane.b32.xlu0 %v2309, 1
        %v2650 = vpop.permute.xlu0 %2649
        %2651 = vrot.lane.b32.xlu0 %v2304, 1
        %v2652 = vpop.permute.xlu0 %2651
        %2653 = vrot.lane.b32.xlu0 %v2306, 1
        %v2654 = vpop.permute.xlu0 %2653
        %2655 = vrot.lane.b32.xlu0 %v2308, 1
        %v2656 = vpop.permute.xlu0 %2655
        %2657 = vrot.lane.b32.xlu0 %v2310, 1
        %v2658 = vpop.permute.xlu0 %2657
        %v2659 = vsel %vm1108, %v2644, %v2652
        %v2660 = vsel %vm1108, %v2646, %v2654
        %v2661 = vsel %vm1108, %v2648, %v2656
        %v2662 = vsel %vm1108, %v2650, %v2658
        %v2663 = vsel %vm1108, %v2652, %v2644
        %v2664 = vsel %vm1108, %v2654, %v2646
        %v2665 = vsel %vm1108, %v2656, %v2648
        %v2666 = vsel %vm1108, %v2658, %v2650
        %s2667 = scalar_lea.vmem [#allocation7], 128
        %v2668 = vld [vmem:[%s2667] sm:$0xff]
        %v2669 = vld [vmem:[%s2667 + $0x8] sm:$0xff]
        %v2670 = vld [vmem:[%s2667 + $0x10] sm:$0xff]
        %v2671 = vld [vmem:[%s2667 + $0x18] sm:$0xff]
        %v2672 = vld [vmem:[%s2667 + $0x20] sm:$0xff]
        %v2673 = vld [vmem:[%s2667 + $0x28] sm:$0xff]
        %v2674 = vld [vmem:[%s2667 + $0x30] sm:$0xff]
        %v2675 = vld [vmem:[%s2667 + $0x38] sm:$0xff]
        %v2676 = vmul.f32 %v2668, %v2663
        %v2677 = vmul.f32 %v2669, %v2659
        %v2678 = vmul.f32 %v2670, %v2664
        %v2679 = vmul.f32 %v2671, %v2660
        %v2680 = vmul.f32 %v2672, %v2665
        %v2681 = vmul.f32 %v2673, %v2661
        %v2682 = vmul.f32 %v2674, %v2666
        %v2683 = vmul.f32 %v2675, %v2662
        %v2684 = vadd.f32 %v2635, %v2676
        %v2685 = vadd.f32 %v2636, %v2677
        %v2686 = vadd.f32 %v2637, %v2678
        %v2687 = vadd.f32 %v2638, %v2679
        %v2688 = vadd.f32 %v2639, %v2680
        %v2689 = vadd.f32 %v2640, %v2681
        %v2690 = vadd.f32 %v2641, %v2682
        %v2691 = vadd.f32 %v2642, %v2683
        %s2692 = scalar_lea.vmem [#allocation7], 192
        %v2693 = vld [vmem:[%s2692] sm:$0xff]
        %v2694 = vld [vmem:[%s2692 + $0x8] sm:$0xff]
        %v2695 = vld [vmem:[%s2692 + $0x10] sm:$0xff]
        %v2696 = vld [vmem:[%s2692 + $0x18] sm:$0xff]
        %v2697 = vld [vmem:[%s2692 + $0x20] sm:$0xff]
        %v2698 = vld [vmem:[%s2692 + $0x28] sm:$0xff]
        %v2699 = vld [vmem:[%s2692 + $0x30] sm:$0xff]
        %v2700 = vld [vmem:[%s2692 + $0x38] sm:$0xff]
        %v2701 = vmul.f32 %v2693, %v2303
        %v2702 = vmul.f32 %v2694, %v2304
        %v2703 = vmul.f32 %v2695, %v2305
        %v2704 = vmul.f32 %v2696, %v2306
        %v2705 = vmul.f32 %v2697, %v2307
        %v2706 = vmul.f32 %v2698, %v2308
        %v2707 = vmul.f32 %v2699, %v2309
        %v2708 = vmul.f32 %v2700, %v2310
        %v2709 = vadd.f32 %v2684, %v2701
        %v2710 = vadd.f32 %v2685, %v2702
        %v2711 = vadd.f32 %v2686, %v2703
        %v2712 = vadd.f32 %v2687, %v2704
        %v2713 = vadd.f32 %v2688, %v2705
        %v2714 = vadd.f32 %v2689, %v2706
        %v2715 = vadd.f32 %v2690, %v2707
        %v2716 = vadd.f32 %v2691, %v2708
        %2717 = vrot.lane.b32.xlu0 %v2303, 127
        %v2718 = vpop.permute.xlu0 %2717
        %2719 = vrot.lane.b32.xlu0 %v2305, 127
        %v2720 = vpop.permute.xlu0 %2719
        %2721 = vrot.lane.b32.xlu0 %v2307, 127
        %v2722 = vpop.permute.xlu0 %2721
        %2723 = vrot.lane.b32.xlu0 %v2309, 127
        %v2724 = vpop.permute.xlu0 %2723
        %2725 = vrot.lane.b32.xlu0 %v2304, 127
        %v2726 = vpop.permute.xlu0 %2725
        %2727 = vrot.lane.b32.xlu0 %v2306, 127
        %v2728 = vpop.permute.xlu0 %2727
        %2729 = vrot.lane.b32.xlu0 %v2308, 127
        %v2730 = vpop.permute.xlu0 %2729
        %2731 = vrot.lane.b32.xlu0 %v2310, 127
        %v2732 = vpop.permute.xlu0 %2731
        %v2733 = vsel %vm1183, %v2718, %v2726
        %v2734 = vsel %vm1183, %v2720, %v2728
        %v2735 = vsel %vm1183, %v2722, %v2730
        %v2736 = vsel %vm1183, %v2724, %v2732
        %v2737 = vsel %vm1183, %v2726, %v2718
        %v2738 = vsel %vm1183, %v2728, %v2720
        %v2739 = vsel %vm1183, %v2730, %v2722
        %v2740 = vsel %vm1183, %v2732, %v2724
        %s2741 = scalar_lea.vmem [#allocation7], 256
        %v2742 = vld [vmem:[%s2741] sm:$0xff]
        %v2743 = vld [vmem:[%s2741 + $0x8] sm:$0xff]
        %v2744 = vld [vmem:[%s2741 + $0x10] sm:$0xff]
        %v2745 = vld [vmem:[%s2741 + $0x18] sm:$0xff]
        %v2746 = vld [vmem:[%s2741 + $0x20] sm:$0xff]
        %v2747 = vld [vmem:[%s2741 + $0x28] sm:$0xff]
        %v2748 = vld [vmem:[%s2741 + $0x30] sm:$0xff]
        %v2749 = vld [vmem:[%s2741 + $0x38] sm:$0xff]
        %v2750 = vmul.f32 %v2742, %v2733
        %v2751 = vmul.f32 %v2743, %v2737
        %v2752 = vmul.f32 %v2744, %v2734
        %v2753 = vmul.f32 %v2745, %v2738
        %v2754 = vmul.f32 %v2746, %v2735
        %v2755 = vmul.f32 %v2747, %v2739
        %v2756 = vmul.f32 %v2748, %v2736
        %v2757 = vmul.f32 %v2749, %v2740
        %v2758 = vadd.f32 %v2709, %v2750
        %v2759 = vadd.f32 %v2710, %v2751
        %v2760 = vadd.f32 %v2711, %v2752
        %v2761 = vadd.f32 %v2712, %v2753
        %v2762 = vadd.f32 %v2713, %v2754
        %v2763 = vadd.f32 %v2714, %v2755
        %v2764 = vadd.f32 %v2715, %v2756
        %v2765 = vadd.f32 %v2716, %v2757
        %2766 = vrot.lane.b32.xlu0 %v2303, 126
        %v2767 = vpop.permute.xlu0 %2766
        %2768 = vrot.lane.b32.xlu0 %v2305, 126
        %v2769 = vpop.permute.xlu0 %2768
        %2770 = vrot.lane.b32.xlu0 %v2307, 126
        %v2771 = vpop.permute.xlu0 %2770
        %2772 = vrot.lane.b32.xlu0 %v2309, 126
        %v2773 = vpop.permute.xlu0 %2772
        %2774 = vrot.lane.b32.xlu0 %v2304, 126
        %v2775 = vpop.permute.xlu0 %2774
        %2776 = vrot.lane.b32.xlu0 %v2306, 126
        %v2777 = vpop.permute.xlu0 %2776
        %2778 = vrot.lane.b32.xlu0 %v2308, 126
        %v2779 = vpop.permute.xlu0 %2778
        %2780 = vrot.lane.b32.xlu0 %v2310, 126
        %v2781 = vpop.permute.xlu0 %2780
        %vm2782 = vcmp.lt.s32.totalorder %v958, 126
        %v2783 = vsel %vm2782, %v2767, %v2775
        %v2784 = vsel %vm2782, %v2769, %v2777
        %v2785 = vsel %vm2782, %v2771, %v2779
        %v2786 = vsel %vm2782, %v2773, %v2781
        %v2787 = vsel %vm2782, %v2775, %v2767
        %v2788 = vsel %vm2782, %v2777, %v2769
        %v2789 = vsel %vm2782, %v2779, %v2771
        %v2790 = vsel %vm2782, %v2781, %v2773
        %s2791 = scalar_lea.vmem [#allocation7], 320
        %v2792 = vld [vmem:[%s2791] sm:$0xff]
        %v2793 = vld [vmem:[%s2791 + $0x8] sm:$0xff]
        %v2794 = vld [vmem:[%s2791 + $0x10] sm:$0xff]
        %v2795 = vld [vmem:[%s2791 + $0x18] sm:$0xff]
        %v2796 = vld [vmem:[%s2791 + $0x20] sm:$0xff]
        %v2797 = vld [vmem:[%s2791 + $0x28] sm:$0xff]
        %v2798 = vld [vmem:[%s2791 + $0x30] sm:$0xff]
        %v2799 = vld [vmem:[%s2791 + $0x38] sm:$0xff]
        %v2800 = vmul.f32 %v2792, %v2783
        %v2801 = vmul.f32 %v2793, %v2787
        %v2802 = vmul.f32 %v2794, %v2784
        %v2803 = vmul.f32 %v2795, %v2788
        %v2804 = vmul.f32 %v2796, %v2785
        %v2805 = vmul.f32 %v2797, %v2789
        %v2806 = vmul.f32 %v2798, %v2786
        %v2807 = vmul.f32 %v2799, %v2790
        %v2808 = vadd.f32 %v2758, %v2800
        %v2809 = vadd.f32 %v2759, %v2801
        %v2810 = vadd.f32 %v2760, %v2802
        %v2811 = vadd.f32 %v2761, %v2803
        %v2812 = vadd.f32 %v2762, %v2804
        %v2813 = vadd.f32 %v2763, %v2805
        %v2814 = vadd.f32 %v2764, %v2806
        %v2815 = vadd.f32 %v2765, %v2807
        %2816 = vrot.lane.b32.xlu0 %v2303, 125
        %v2817 = vpop.permute.xlu0 %2816
        %2818 = vrot.lane.b32.xlu0 %v2305, 125
        %v2819 = vpop.permute.xlu0 %2818
        %2820 = vrot.lane.b32.xlu0 %v2307, 125
        %v2821 = vpop.permute.xlu0 %2820
        %2822 = vrot.lane.b32.xlu0 %v2309, 125
        %v2823 = vpop.permute.xlu0 %2822
        %2824 = vrot.lane.b32.xlu0 %v2304, 125
        %v2825 = vpop.permute.xlu0 %2824
        %2826 = vrot.lane.b32.xlu0 %v2306, 125
        %v2827 = vpop.permute.xlu0 %2826
        %2828 = vrot.lane.b32.xlu0 %v2308, 125
        %v2829 = vpop.permute.xlu0 %2828
        %2830 = vrot.lane.b32.xlu0 %v2310, 125
        %v2831 = vpop.permute.xlu0 %2830
        %vm2832 = vcmp.lt.s32.totalorder %v958, 125
        %v2833 = vsel %vm2832, %v2817, %v2825
        %v2834 = vsel %vm2832, %v2819, %v2827
        %v2835 = vsel %vm2832, %v2821, %v2829
        %v2836 = vsel %vm2832, %v2823, %v2831
        %v2837 = vsel %vm2832, %v2825, %v2817
        %v2838 = vsel %vm2832, %v2827, %v2819
        %v2839 = vsel %vm2832, %v2829, %v2821
        %v2840 = vsel %vm2832, %v2831, %v2823
        %s2841 = scalar_lea.vmem [#allocation7], 384
        %v2842 = vld [vmem:[%s2841] sm:$0xff]
        %v2843 = vld [vmem:[%s2841 + $0x8] sm:$0xff]
        %v2844 = vld [vmem:[%s2841 + $0x10] sm:$0xff]
        %v2845 = vld [vmem:[%s2841 + $0x18] sm:$0xff]
        %v2846 = vld [vmem:[%s2841 + $0x20] sm:$0xff]
        %v2847 = vld [vmem:[%s2841 + $0x28] sm:$0xff]
        %v2848 = vld [vmem:[%s2841 + $0x30] sm:$0xff]
        %v2849 = vld [vmem:[%s2841 + $0x38] sm:$0xff]
        %v2850 = vmul.f32 %v2842, %v2833
        %v2851 = vmul.f32 %v2843, %v2837
        %v2852 = vmul.f32 %v2844, %v2834
        %v2853 = vmul.f32 %v2845, %v2838
        %v2854 = vmul.f32 %v2846, %v2835
        %v2855 = vmul.f32 %v2847, %v2839
        %v2856 = vmul.f32 %v2848, %v2836
        %v2857 = vmul.f32 %v2849, %v2840
        %v2858 = vadd.f32 %v2808, %v2850
        %v2859 = vadd.f32 %v2809, %v2851
        %v2860 = vadd.f32 %v2810, %v2852
        %v2861 = vadd.f32 %v2811, %v2853
        %v2862 = vadd.f32 %v2812, %v2854
        %v2863 = vadd.f32 %v2813, %v2855
        %v2864 = vadd.f32 %v2814, %v2856
        %v2865 = vadd.f32 %v2815, %v2857
        %v2866 = vld [vmem:[#allocation10] sm:$0xff]
        %v2867 = vld [vmem:[#allocation10 + $0x8] sm:$0xff]
        %v2868 = vld [vmem:[#allocation10 + $0x10] sm:$0xff]
        %v2869 = vld [vmem:[#allocation10 + $0x18] sm:$0xff]
        %v2870 = vld [vmem:[#allocation10 + $0x20] sm:$0xff]
        %v2871 = vld [vmem:[#allocation10 + $0x28] sm:$0xff]
        %v2872 = vld [vmem:[#allocation10 + $0x30] sm:$0xff]
        %v2873 = vld [vmem:[#allocation10 + $0x38] sm:$0xff]
        %v2874 = vadd.f32 %v2858, %v2866
        %v2875 = vadd.f32 %v2859, %v2867
        %v2876 = vadd.f32 %v2860, %v2868
        %v2877 = vadd.f32 %v2861, %v2869
        %v2878 = vadd.f32 %v2862, %v2870
        %v2879 = vadd.f32 %v2863, %v2871
        %v2880 = vadd.f32 %v2864, %v2872
        %v2881 = vadd.f32 %v2865, %v2873
        %2882 = vrot.lane.b32.xlu0 %v2403, 5
        %v2883 = vpop.permute.xlu0 %2882
        %2884 = vrot.lane.b32.xlu0 %v2405, 5
        %v2885 = vpop.permute.xlu0 %2884
        %2886 = vrot.lane.b32.xlu0 %v2407, 5
        %v2887 = vpop.permute.xlu0 %2886
        %2888 = vrot.lane.b32.xlu0 %v2409, 5
        %v2889 = vpop.permute.xlu0 %2888
        %2890 = vrot.lane.b32.xlu0 %v2404, 5
        %v2891 = vpop.permute.xlu0 %2890
        %2892 = vrot.lane.b32.xlu0 %v2406, 5
        %v2893 = vpop.permute.xlu0 %2892
        %2894 = vrot.lane.b32.xlu0 %v2408, 5
        %v2895 = vpop.permute.xlu0 %2894
        %2896 = vrot.lane.b32.xlu0 %v2410, 5
        %v2897 = vpop.permute.xlu0 %2896
        %vm2898 = vcmp.lt.s32.totalorder %v958, 5
        %v2899 = vsel %vm2898, %v2883, %v2891
        %v2900 = vsel %vm2898, %v2885, %v2893
        %v2901 = vsel %vm2898, %v2887, %v2895
        %v2902 = vsel %vm2898, %v2889, %v2897
        %v2903 = vsel %vm2898, %v2891, %v2883
        %v2904 = vsel %vm2898, %v2893, %v2885
        %v2905 = vsel %vm2898, %v2895, %v2887
        %v2906 = vsel %vm2898, %v2897, %v2889
        %v2907 = vld [vmem:[#allocation9] sm:$0xff]
        %v2908 = vld [vmem:[#allocation9 + $0x8] sm:$0xff]
        %v2909 = vld [vmem:[#allocation9 + $0x10] sm:$0xff]
        %v2910 = vld [vmem:[#allocation9 + $0x18] sm:$0xff]
        %v2911 = vld [vmem:[#allocation9 + $0x20] sm:$0xff]
        %v2912 = vld [vmem:[#allocation9 + $0x28] sm:$0xff]
        %v2913 = vld [vmem:[#allocation9 + $0x30] sm:$0xff]
        %v2914 = vld [vmem:[#allocation9 + $0x38] sm:$0xff]
        %v2915 = vmul.f32 %v2907, %v2903
        %v2916 = vmul.f32 %v2908, %v2899
        %v2917 = vmul.f32 %v2909, %v2904
        %v2918 = vmul.f32 %v2910, %v2900
        %v2919 = vmul.f32 %v2911, %v2905
        %v2920 = vmul.f32 %v2912, %v2901
        %v2921 = vmul.f32 %v2913, %v2906
        %v2922 = vmul.f32 %v2914, %v2902
        %v2923 = vadd.f32 %v2874, %v2915
        %v2924 = vadd.f32 %v2875, %v2916
        %v2925 = vadd.f32 %v2876, %v2917
        %v2926 = vadd.f32 %v2877, %v2918
        %v2927 = vadd.f32 %v2878, %v2919
        %v2928 = vadd.f32 %v2879, %v2920
        %v2929 = vadd.f32 %v2880, %v2921
        %v2930 = vadd.f32 %v2881, %v2922
        %2931 = vrot.lane.b32.xlu0 %v2403, 4
        %v2932 = vpop.permute.xlu0 %2931
        %2933 = vrot.lane.b32.xlu0 %v2405, 4
        %v2934 = vpop.permute.xlu0 %2933
        %2935 = vrot.lane.b32.xlu0 %v2407, 4
        %v2936 = vpop.permute.xlu0 %2935
        %2937 = vrot.lane.b32.xlu0 %v2409, 4
        %v2938 = vpop.permute.xlu0 %2937
        %2939 = vrot.lane.b32.xlu0 %v2404, 4
        %v2940 = vpop.permute.xlu0 %2939
        %2941 = vrot.lane.b32.xlu0 %v2406, 4
        %v2942 = vpop.permute.xlu0 %2941
        %2943 = vrot.lane.b32.xlu0 %v2408, 4
        %v2944 = vpop.permute.xlu0 %2943
        %2945 = vrot.lane.b32.xlu0 %v2410, 4
        %v2946 = vpop.permute.xlu0 %2945
        %vm2947 = vcmp.lt.s32.totalorder %v958, 4
        %v2948 = vsel %vm2947, %v2932, %v2940
        %v2949 = vsel %vm2947, %v2934, %v2942
        %v2950 = vsel %vm2947, %v2936, %v2944
        %v2951 = vsel %vm2947, %v2938, %v2946
        %v2952 = vsel %vm2947, %v2940, %v2932
        %v2953 = vsel %vm2947, %v2942, %v2934
        %v2954 = vsel %vm2947, %v2944, %v2936
        %v2955 = vsel %vm2947, %v2946, %v2938
        %s2956 = scalar_lea.vmem [#allocation9], 64
        %v2957 = vld [vmem:[%s2956] sm:$0xff]
        %v2958 = vld [vmem:[%s2956 + $0x8] sm:$0xff]
        %v2959 = vld [vmem:[%s2956 + $0x10] sm:$0xff]
        %v2960 = vld [vmem:[%s2956 + $0x18] sm:$0xff]
        %v2961 = vld [vmem:[%s2956 + $0x20] sm:$0xff]
        %v2962 = vld [vmem:[%s2956 + $0x28] sm:$0xff]
        %v2963 = vld [vmem:[%s2956 + $0x30] sm:$0xff]
        %v2964 = vld [vmem:[%s2956 + $0x38] sm:$0xff]
        %v2965 = vmul.f32 %v2957, %v2952
        %v2966 = vmul.f32 %v2958, %v2948
        %v2967 = vmul.f32 %v2959, %v2953
        %v2968 = vmul.f32 %v2960, %v2949
        %v2969 = vmul.f32 %v2961, %v2954
        %v2970 = vmul.f32 %v2962, %v2950
        %v2971 = vmul.f32 %v2963, %v2955
        %v2972 = vmul.f32 %v2964, %v2951
        %v2973 = vadd.f32 %v2923, %v2965
        %v2974 = vadd.f32 %v2924, %v2966
        %v2975 = vadd.f32 %v2925, %v2967
        %v2976 = vadd.f32 %v2926, %v2968
        %v2977 = vadd.f32 %v2927, %v2969
        %v2978 = vadd.f32 %v2928, %v2970
        %v2979 = vadd.f32 %v2929, %v2971
        %v2980 = vadd.f32 %v2930, %v2972
        %2981 = vrot.lane.b32.xlu0 %v2403, 3
        %v2982 = vpop.permute.xlu0 %2981
        %2983 = vrot.lane.b32.xlu0 %v2405, 3
        %v2984 = vpop.permute.xlu0 %2983
        %2985 = vrot.lane.b32.xlu0 %v2407, 3
        %v2986 = vpop.permute.xlu0 %2985
        %2987 = vrot.lane.b32.xlu0 %v2409, 3
        %v2988 = vpop.permute.xlu0 %2987
        %2989 = vrot.lane.b32.xlu0 %v2404, 3
        %v2990 = vpop.permute.xlu0 %2989
        %2991 = vrot.lane.b32.xlu0 %v2406, 3
        %v2992 = vpop.permute.xlu0 %2991
        %2993 = vrot.lane.b32.xlu0 %v2408, 3
        %v2994 = vpop.permute.xlu0 %2993
        %2995 = vrot.lane.b32.xlu0 %v2410, 3
        %v2996 = vpop.permute.xlu0 %2995
        %v2997 = vsel %vm2560, %v2982, %v2990
        %v2998 = vsel %vm2560, %v2984, %v2992
        %v2999 = vsel %vm2560, %v2986, %v2994
        %v3000 = vsel %vm2560, %v2988, %v2996
        %v3001 = vsel %vm2560, %v2990, %v2982
        %v3002 = vsel %vm2560, %v2992, %v2984
        %v3003 = vsel %vm2560, %v2994, %v2986
        %v3004 = vsel %vm2560, %v2996, %v2988
        %s3005 = scalar_lea.vmem [#allocation9], 128
        %v3006 = vld [vmem:[%s3005] sm:$0xff]
        %v3007 = vld [vmem:[%s3005 + $0x8] sm:$0xff]
        %v3008 = vld [vmem:[%s3005 + $0x10] sm:$0xff]
        %v3009 = vld [vmem:[%s3005 + $0x18] sm:$0xff]
        %v3010 = vld [vmem:[%s3005 + $0x20] sm:$0xff]
        %v3011 = vld [vmem:[%s3005 + $0x28] sm:$0xff]
        %v3012 = vld [vmem:[%s3005 + $0x30] sm:$0xff]
        %v3013 = vld [vmem:[%s3005 + $0x38] sm:$0xff]
        %v3014 = vmul.f32 %v3006, %v3001
        %v3015 = vmul.f32 %v3007, %v2997
        %v3016 = vmul.f32 %v3008, %v3002
        %v3017 = vmul.f32 %v3009, %v2998
        %v3018 = vmul.f32 %v3010, %v3003
        %v3019 = vmul.f32 %v3011, %v2999
        %v3020 = vmul.f32 %v3012, %v3004
        %v3021 = vmul.f32 %v3013, %v3000
        %v3022 = vadd.f32 %v2973, %v3014
        %v3023 = vadd.f32 %v2974, %v3015
        %v3024 = vadd.f32 %v2975, %v3016
        %v3025 = vadd.f32 %v2976, %v3017
        %v3026 = vadd.f32 %v2977, %v3018
        %v3027 = vadd.f32 %v2978, %v3019
        %v3028 = vadd.f32 %v2979, %v3020
        %v3029 = vadd.f32 %v2980, %v3021
        %3030 = vrot.lane.b32.xlu0 %v2403, 2
        %v3031 = vpop.permute.xlu0 %3030
        %3032 = vrot.lane.b32.xlu0 %v2405, 2
        %v3033 = vpop.permute.xlu0 %3032
        %3034 = vrot.lane.b32.xlu0 %v2407, 2
        %v3035 = vpop.permute.xlu0 %3034
        %3036 = vrot.lane.b32.xlu0 %v2409, 2
        %v3037 = vpop.permute.xlu0 %3036
        %3038 = vrot.lane.b32.xlu0 %v2404, 2
        %v3039 = vpop.permute.xlu0 %3038
        %3040 = vrot.lane.b32.xlu0 %v2406, 2
        %v3041 = vpop.permute.xlu0 %3040
        %3042 = vrot.lane.b32.xlu0 %v2408, 2
        %v3043 = vpop.permute.xlu0 %3042
        %3044 = vrot.lane.b32.xlu0 %v2410, 2
        %v3045 = vpop.permute.xlu0 %3044
        %v3046 = vsel %vm2609, %v3031, %v3039
        %v3047 = vsel %vm2609, %v3033, %v3041
        %v3048 = vsel %vm2609, %v3035, %v3043
        %v3049 = vsel %vm2609, %v3037, %v3045
        %v3050 = vsel %vm2609, %v3039, %v3031
        %v3051 = vsel %vm2609, %v3041, %v3033
        %v3052 = vsel %vm2609, %v3043, %v3035
        %v3053 = vsel %vm2609, %v3045, %v3037
        %s3054 = scalar_lea.vmem [#allocation9], 192
        %v3055 = vld [vmem:[%s3054] sm:$0xff]
        %v3056 = vld [vmem:[%s3054 + $0x8] sm:$0xff]
        %v3057 = vld [vmem:[%s3054 + $0x10] sm:$0xff]
        %v3058 = vld [vmem:[%s3054 + $0x18] sm:$0xff]
        %v3059 = vld [vmem:[%s3054 + $0x20] sm:$0xff]
        %v3060 = vld [vmem:[%s3054 + $0x28] sm:$0xff]
        %v3061 = vld [vmem:[%s3054 + $0x30] sm:$0xff]
        %v3062 = vld [vmem:[%s3054 + $0x38] sm:$0xff]
        %v3063 = vmul.f32 %v3055, %v3050
        %v3064 = vmul.f32 %v3056, %v3046
        %v3065 = vmul.f32 %v3057, %v3051
        %v3066 = vmul.f32 %v3058, %v3047
        %v3067 = vmul.f32 %v3059, %v3052
        %v3068 = vmul.f32 %v3060, %v3048
        %v3069 = vmul.f32 %v3061, %v3053
        %v3070 = vmul.f32 %v3062, %v3049
        %v3071 = vadd.f32 %v3022, %v3063
        %v3072 = vadd.f32 %v3023, %v3064
        %v3073 = vadd.f32 %v3024, %v3065
        %v3074 = vadd.f32 %v3025, %v3066
        %v3075 = vadd.f32 %v3026, %v3067
        %v3076 = vadd.f32 %v3027, %v3068
        %v3077 = vadd.f32 %v3028, %v3069
        %v3078 = vadd.f32 %v3029, %v3070
        %3079 = vrot.lane.b32.xlu0 %v2403, 1
        %v3080 = vpop.permute.xlu0 %3079
        %3081 = vrot.lane.b32.xlu0 %v2405, 1
        %v3082 = vpop.permute.xlu0 %3081
        %3083 = vrot.lane.b32.xlu0 %v2407, 1
        %v3084 = vpop.permute.xlu0 %3083
        %3085 = vrot.lane.b32.xlu0 %v2409, 1
        %v3086 = vpop.permute.xlu0 %3085
        %3087 = vrot.lane.b32.xlu0 %v2404, 1
        %v3088 = vpop.permute.xlu0 %3087
        %3089 = vrot.lane.b32.xlu0 %v2406, 1
        %v3090 = vpop.permute.xlu0 %3089
        %3091 = vrot.lane.b32.xlu0 %v2408, 1
        %v3092 = vpop.permute.xlu0 %3091
        %3093 = vrot.lane.b32.xlu0 %v2410, 1
        %v3094 = vpop.permute.xlu0 %3093
        %v3095 = vsel %vm1108, %v3080, %v3088
        %v3096 = vsel %vm1108, %v3082, %v3090
        %v3097 = vsel %vm1108, %v3084, %v3092
        %v3098 = vsel %vm1108, %v3086, %v3094
        %v3099 = vsel %vm1108, %v3088, %v3080
        %v3100 = vsel %vm1108, %v3090, %v3082
        %v3101 = vsel %vm1108, %v3092, %v3084
        %v3102 = vsel %vm1108, %v3094, %v3086
        %s3103 = scalar_lea.vmem [#allocation9], 256
        %v3104 = vld [vmem:[%s3103] sm:$0xff]
        %v3105 = vld [vmem:[%s3103 + $0x8] sm:$0xff]
        %v3106 = vld [vmem:[%s3103 + $0x10] sm:$0xff]
        %v3107 = vld [vmem:[%s3103 + $0x18] sm:$0xff]
        %v3108 = vld [vmem:[%s3103 + $0x20] sm:$0xff]
        %v3109 = vld [vmem:[%s3103 + $0x28] sm:$0xff]
        %v3110 = vld [vmem:[%s3103 + $0x30] sm:$0xff]
        %v3111 = vld [vmem:[%s3103 + $0x38] sm:$0xff]
        %v3112 = vmul.f32 %v3104, %v3099
        %v3113 = vmul.f32 %v3105, %v3095
        %v3114 = vmul.f32 %v3106, %v3100
        %v3115 = vmul.f32 %v3107, %v3096
        %v3116 = vmul.f32 %v3108, %v3101
        %v3117 = vmul.f32 %v3109, %v3097
        %v3118 = vmul.f32 %v3110, %v3102
        %v3119 = vmul.f32 %v3111, %v3098
        %v3120 = vadd.f32 %v3071, %v3112
        %v3121 = vadd.f32 %v3072, %v3113
        %v3122 = vadd.f32 %v3073, %v3114
        %v3123 = vadd.f32 %v3074, %v3115
        %v3124 = vadd.f32 %v3075, %v3116
        %v3125 = vadd.f32 %v3076, %v3117
        %v3126 = vadd.f32 %v3077, %v3118
        %v3127 = vadd.f32 %v3078, %v3119
        %s3128 = scalar_lea.vmem [#allocation9], 320
        %v3129 = vld [vmem:[%s3128] sm:$0xff]
        %v3130 = vld [vmem:[%s3128 + $0x8] sm:$0xff]
        %v3131 = vld [vmem:[%s3128 + $0x10] sm:$0xff]
        %v3132 = vld [vmem:[%s3128 + $0x18] sm:$0xff]
        %v3133 = vld [vmem:[%s3128 + $0x20] sm:$0xff]
        %v3134 = vld [vmem:[%s3128 + $0x28] sm:$0xff]
        %v3135 = vld [vmem:[%s3128 + $0x30] sm:$0xff]
        %v3136 = vld [vmem:[%s3128 + $0x38] sm:$0xff]
        %v3137 = vmul.f32 %v3129, %v2403
        %v3138 = vmul.f32 %v3130, %v2404
        %v3139 = vmul.f32 %v3131, %v2405
        %v3140 = vmul.f32 %v3132, %v2406
        %v3141 = vmul.f32 %v3133, %v2407
        %v3142 = vmul.f32 %v3134, %v2408
        %v3143 = vmul.f32 %v3135, %v2409
        %v3144 = vmul.f32 %v3136, %v2410
        %v3145 = vadd.f32 %v3120, %v3137
        %v3146 = vadd.f32 %v3121, %v3138
        %v3147 = vadd.f32 %v3122, %v3139
        %v3148 = vadd.f32 %v3123, %v3140
        %v3149 = vadd.f32 %v3124, %v3141
        %v3150 = vadd.f32 %v3125, %v3142
        %v3151 = vadd.f32 %v3126, %v3143
        %v3152 = vadd.f32 %v3127, %v3144
        %3153 = vrot.lane.b32.xlu0 %v2403, 127
        %v3154 = vpop.permute.xlu0 %3153
        %3155 = vrot.lane.b32.xlu0 %v2405, 127
        %v3156 = vpop.permute.xlu0 %3155
        %3157 = vrot.lane.b32.xlu0 %v2407, 127
        %v3158 = vpop.permute.xlu0 %3157
        %3159 = vrot.lane.b32.xlu0 %v2409, 127
        %v3160 = vpop.permute.xlu0 %3159
        %3161 = vrot.lane.b32.xlu0 %v2404, 127
        %v3162 = vpop.permute.xlu0 %3161
        %3163 = vrot.lane.b32.xlu0 %v2406, 127
        %v3164 = vpop.permute.xlu0 %3163
        %3165 = vrot.lane.b32.xlu0 %v2408, 127
        %v3166 = vpop.permute.xlu0 %3165
        %3167 = vrot.lane.b32.xlu0 %v2410, 127
        %v3168 = vpop.permute.xlu0 %3167
        %v3169 = vsel %vm1183, %v3154, %v3162
        %v3170 = vsel %vm1183, %v3156, %v3164
        %v3171 = vsel %vm1183, %v3158, %v3166
        %v3172 = vsel %vm1183, %v3160, %v3168
        %v3173 = vsel %vm1183, %v3162, %v3154
        %v3174 = vsel %vm1183, %v3164, %v3156
        %v3175 = vsel %vm1183, %v3166, %v3158
        %v3176 = vsel %vm1183, %v3168, %v3160
        %s3177 = scalar_lea.vmem [#allocation9], 384
        %v3178 = vld [vmem:[%s3177] sm:$0xff]
        %v3179 = vld [vmem:[%s3177 + $0x8] sm:$0xff]
        %v3180 = vld [vmem:[%s3177 + $0x10] sm:$0xff]
        %v3181 = vld [vmem:[%s3177 + $0x18] sm:$0xff]
        %v3182 = vld [vmem:[%s3177 + $0x20] sm:$0xff]
        %v3183 = vld [vmem:[%s3177 + $0x28] sm:$0xff]
        %v3184 = vld [vmem:[%s3177 + $0x30] sm:$0xff]
        %v3185 = vld [vmem:[%s3177 + $0x38] sm:$0xff]
        %v3186 = vmul.f32 %v3178, %v3169
        %v3187 = vmul.f32 %v3179, %v3173
        %v3188 = vmul.f32 %v3180, %v3170
        %v3189 = vmul.f32 %v3181, %v3174
        %v3190 = vmul.f32 %v3182, %v3171
        %v3191 = vmul.f32 %v3183, %v3175
        %v3192 = vmul.f32 %v3184, %v3172
        %v3193 = vmul.f32 %v3185, %v3176
        %v3194 = vadd.f32 %v3145, %v3186
        %v3195 = vadd.f32 %v3146, %v3187
        %v3196 = vadd.f32 %v3147, %v3188
        %v3197 = vadd.f32 %v3148, %v3189
        %v3198 = vadd.f32 %v3149, %v3190
        %v3199 = vadd.f32 %v3150, %v3191
        %v3200 = vadd.f32 %v3151, %v3192
        %v3201 = vadd.f32 %v3152, %v3193
        %3202 = vrot.lane.b32.xlu0 %v2403, 126
        %v3203 = vpop.permute.xlu0 %3202
        %3204 = vrot.lane.b32.xlu0 %v2405, 126
        %v3205 = vpop.permute.xlu0 %3204
        %3206 = vrot.lane.b32.xlu0 %v2407, 126
        %v3207 = vpop.permute.xlu0 %3206
        %3208 = vrot.lane.b32.xlu0 %v2409, 126
        %v3209 = vpop.permute.xlu0 %3208
        %3210 = vrot.lane.b32.xlu0 %v2404, 126
        %v3211 = vpop.permute.xlu0 %3210
        %3212 = vrot.lane.b32.xlu0 %v2406, 126
        %v3213 = vpop.permute.xlu0 %3212
        %3214 = vrot.lane.b32.xlu0 %v2408, 126
        %v3215 = vpop.permute.xlu0 %3214
        %3216 = vrot.lane.b32.xlu0 %v2410, 126
        %v3217 = vpop.permute.xlu0 %3216
        %v3218 = vsel %vm2782, %v3203, %v3211
        %v3219 = vsel %vm2782, %v3205, %v3213
        %v3220 = vsel %vm2782, %v3207, %v3215
        %v3221 = vsel %vm2782, %v3209, %v3217
        %v3222 = vsel %vm2782, %v3211, %v3203
        %v3223 = vsel %vm2782, %v3213, %v3205
        %v3224 = vsel %vm2782, %v3215, %v3207
        %v3225 = vsel %vm2782, %v3217, %v3209
        %s3226 = scalar_lea.vmem [#allocation9], 448
        %v3227 = vld [vmem:[%s3226] sm:$0xff]
        %v3228 = vld [vmem:[%s3226 + $0x8] sm:$0xff]
        %v3229 = vld [vmem:[%s3226 + $0x10] sm:$0xff]
        %v3230 = vld [vmem:[%s3226 + $0x18] sm:$0xff]
        %v3231 = vld [vmem:[%s3226 + $0x20] sm:$0xff]
        %v3232 = vld [vmem:[%s3226 + $0x28] sm:$0xff]
        %v3233 = vld [vmem:[%s3226 + $0x30] sm:$0xff]
        %v3234 = vld [vmem:[%s3226 + $0x38] sm:$0xff]
        %v3235 = vmul.f32 %v3227, %v3218
        %v3236 = vmul.f32 %v3228, %v3222
        %v3237 = vmul.f32 %v3229, %v3219
        %v3238 = vmul.f32 %v3230, %v3223
        %v3239 = vmul.f32 %v3231, %v3220
        %v3240 = vmul.f32 %v3232, %v3224
        %v3241 = vmul.f32 %v3233, %v3221
        %v3242 = vmul.f32 %v3234, %v3225
        %v3243 = vadd.f32 %v3194, %v3235
        %v3244 = vadd.f32 %v3195, %v3236
        %v3245 = vadd.f32 %v3196, %v3237
        %v3246 = vadd.f32 %v3197, %v3238
        %v3247 = vadd.f32 %v3198, %v3239
        %v3248 = vadd.f32 %v3199, %v3240
        %v3249 = vadd.f32 %v3200, %v3241
        %v3250 = vadd.f32 %v3201, %v3242
        %3251 = vrot.lane.b32.xlu0 %v2403, 125
        %v3252 = vpop.permute.xlu0 %3251
        %3253 = vrot.lane.b32.xlu0 %v2405, 125
        %v3254 = vpop.permute.xlu0 %3253
        %3255 = vrot.lane.b32.xlu0 %v2407, 125
        %v3256 = vpop.permute.xlu0 %3255
        %3257 = vrot.lane.b32.xlu0 %v2409, 125
        %v3258 = vpop.permute.xlu0 %3257
        %3259 = vrot.lane.b32.xlu0 %v2404, 125
        %v3260 = vpop.permute.xlu0 %3259
        %3261 = vrot.lane.b32.xlu0 %v2406, 125
        %v3262 = vpop.permute.xlu0 %3261
        %3263 = vrot.lane.b32.xlu0 %v2408, 125
        %v3264 = vpop.permute.xlu0 %3263
        %3265 = vrot.lane.b32.xlu0 %v2410, 125
        %v3266 = vpop.permute.xlu0 %3265
        %v3267 = vsel %vm2832, %v3252, %v3260
        %v3268 = vsel %vm2832, %v3254, %v3262
        %v3269 = vsel %vm2832, %v3256, %v3264
        %v3270 = vsel %vm2832, %v3258, %v3266
        %v3271 = vsel %vm2832, %v3260, %v3252
        %v3272 = vsel %vm2832, %v3262, %v3254
        %v3273 = vsel %vm2832, %v3264, %v3256
        %v3274 = vsel %vm2832, %v3266, %v3258
        %s3275 = scalar_lea.vmem [#allocation9], 512
        %v3276 = vld [vmem:[%s3275] sm:$0xff]
        %v3277 = vld [vmem:[%s3275 + $0x8] sm:$0xff]
        %v3278 = vld [vmem:[%s3275 + $0x10] sm:$0xff]
        %v3279 = vld [vmem:[%s3275 + $0x18] sm:$0xff]
        %v3280 = vld [vmem:[%s3275 + $0x20] sm:$0xff]
        %v3281 = vld [vmem:[%s3275 + $0x28] sm:$0xff]
        %v3282 = vld [vmem:[%s3275 + $0x30] sm:$0xff]
        %v3283 = vld [vmem:[%s3275 + $0x38] sm:$0xff]
        %v3284 = vmul.f32 %v3276, %v3267
        %v3285 = vmul.f32 %v3277, %v3271
        %v3286 = vmul.f32 %v3278, %v3268
        %v3287 = vmul.f32 %v3279, %v3272
        %v3288 = vmul.f32 %v3280, %v3269
        %v3289 = vmul.f32 %v3281, %v3273
        %v3290 = vmul.f32 %v3282, %v3270
        %v3291 = vmul.f32 %v3283, %v3274
        %v3292 = vadd.f32 %v3243, %v3284
        %v3293 = vadd.f32 %v3244, %v3285
        %v3294 = vadd.f32 %v3245, %v3286
        %v3295 = vadd.f32 %v3246, %v3287
        %v3296 = vadd.f32 %v3247, %v3288
        %v3297 = vadd.f32 %v3248, %v3289
        %v3298 = vadd.f32 %v3249, %v3290
        %v3299 = vadd.f32 %v3250, %v3291
        %3300 = vrot.lane.b32.xlu0 %v2403, 124
        %v3301 = vpop.permute.xlu0 %3300
        %3302 = vrot.lane.b32.xlu0 %v2405, 124
        %v3303 = vpop.permute.xlu0 %3302
        %3304 = vrot.lane.b32.xlu0 %v2407, 124
        %v3305 = vpop.permute.xlu0 %3304
        %3306 = vrot.lane.b32.xlu0 %v2409, 124
        %v3307 = vpop.permute.xlu0 %3306
        %3308 = vrot.lane.b32.xlu0 %v2404, 124
        %v3309 = vpop.permute.xlu0 %3308
        %3310 = vrot.lane.b32.xlu0 %v2406, 124
        %v3311 = vpop.permute.xlu0 %3310
        %3312 = vrot.lane.b32.xlu0 %v2408, 124
        %v3313 = vpop.permute.xlu0 %3312
        %3314 = vrot.lane.b32.xlu0 %v2410, 124
        %v3315 = vpop.permute.xlu0 %3314
        %vm3316 = vcmp.lt.s32.totalorder %v958, 124
        %v3317 = vsel %vm3316, %v3301, %v3309
        %v3318 = vsel %vm3316, %v3303, %v3311
        %v3319 = vsel %vm3316, %v3305, %v3313
        %v3320 = vsel %vm3316, %v3307, %v3315
        %v3321 = vsel %vm3316, %v3309, %v3301
        %v3322 = vsel %vm3316, %v3311, %v3303
        %v3323 = vsel %vm3316, %v3313, %v3305
        %v3324 = vsel %vm3316, %v3315, %v3307
        %s3325 = scalar_lea.vmem [#allocation9], 576
        %v3326 = vld [vmem:[%s3325] sm:$0xff]
        %v3327 = vld [vmem:[%s3325 + $0x8] sm:$0xff]
        %v3328 = vld [vmem:[%s3325 + $0x10] sm:$0xff]
        %v3329 = vld [vmem:[%s3325 + $0x18] sm:$0xff]
        %v3330 = vld [vmem:[%s3325 + $0x20] sm:$0xff]
        %v3331 = vld [vmem:[%s3325 + $0x28] sm:$0xff]
        %v3332 = vld [vmem:[%s3325 + $0x30] sm:$0xff]
        %v3333 = vld [vmem:[%s3325 + $0x38] sm:$0xff]
        %v3334 = vmul.f32 %v3326, %v3317
        %v3335 = vmul.f32 %v3327, %v3321
        %v3336 = vmul.f32 %v3328, %v3318
        %v3337 = vmul.f32 %v3329, %v3322
        %v3338 = vmul.f32 %v3330, %v3319
        %v3339 = vmul.f32 %v3331, %v3323
        %v3340 = vmul.f32 %v3332, %v3320
        %v3341 = vmul.f32 %v3333, %v3324
        %v3342 = vadd.f32 %v3292, %v3334
        %v3343 = vadd.f32 %v3293, %v3335
        %v3344 = vadd.f32 %v3294, %v3336
        %v3345 = vadd.f32 %v3295, %v3337
        %v3346 = vadd.f32 %v3296, %v3338
        %v3347 = vadd.f32 %v3297, %v3339
        %v3348 = vadd.f32 %v3298, %v3340
        %v3349 = vadd.f32 %v3299, %v3341
        %3350 = vrot.lane.b32.xlu0 %v2403, 123
        %v3351 = vpop.permute.xlu0 %3350
        %3352 = vrot.lane.b32.xlu0 %v2405, 123
        %v3353 = vpop.permute.xlu0 %3352
        %3354 = vrot.lane.b32.xlu0 %v2407, 123
        %v3355 = vpop.permute.xlu0 %3354
        %3356 = vrot.lane.b32.xlu0 %v2409, 123
        %v3357 = vpop.permute.xlu0 %3356
        %3358 = vrot.lane.b32.xlu0 %v2404, 123
        %v3359 = vpop.permute.xlu0 %3358
        %3360 = vrot.lane.b32.xlu0 %v2406, 123
        %v3361 = vpop.permute.xlu0 %3360
        %3362 = vrot.lane.b32.xlu0 %v2408, 123
        %v3363 = vpop.permute.xlu0 %3362
        %3364 = vrot.lane.b32.xlu0 %v2410, 123
        %v3365 = vpop.permute.xlu0 %3364
        %vm3366 = vcmp.lt.s32.totalorder %v958, 123
        %v3367 = vsel %vm3366, %v3351, %v3359
        %v3368 = vsel %vm3366, %v3353, %v3361
        %v3369 = vsel %vm3366, %v3355, %v3363
        %v3370 = vsel %vm3366, %v3357, %v3365
        %v3371 = vsel %vm3366, %v3359, %v3351
        %v3372 = vsel %vm3366, %v3361, %v3353
        %v3373 = vsel %vm3366, %v3363, %v3355
        %v3374 = vsel %vm3366, %v3365, %v3357
        %s3375 = scalar_lea.vmem [#allocation9], 640
        %v3376 = vld [vmem:[%s3375] sm:$0xff]
        %v3377 = vld [vmem:[%s3375 + $0x8] sm:$0xff]
        %v3378 = vld [vmem:[%s3375 + $0x10] sm:$0xff]
        %v3379 = vld [vmem:[%s3375 + $0x18] sm:$0xff]
        %v3380 = vld [vmem:[%s3375 + $0x20] sm:$0xff]
        %v3381 = vld [vmem:[%s3375 + $0x28] sm:$0xff]
        %v3382 = vld [vmem:[%s3375 + $0x30] sm:$0xff]
        %v3383 = vld [vmem:[%s3375 + $0x38] sm:$0xff]
        %v3384 = vmul.f32 %v3376, %v3367
        %v3385 = vmul.f32 %v3377, %v3371
        %v3386 = vmul.f32 %v3378, %v3368
        %v3387 = vmul.f32 %v3379, %v3372
        %v3388 = vmul.f32 %v3380, %v3369
        %v3389 = vmul.f32 %v3381, %v3373
        %v3390 = vmul.f32 %v3382, %v3370
        %v3391 = vmul.f32 %v3383, %v3374
        %v3392 = vadd.f32 %v3342, %v3384
        %v3393 = vadd.f32 %v3343, %v3385
        %v3394 = vadd.f32 %v3344, %v3386
        %v3395 = vadd.f32 %v3345, %v3387
        %v3396 = vadd.f32 %v3346, %v3388
        %v3397 = vadd.f32 %v3347, %v3389
        %v3398 = vadd.f32 %v3348, %v3390
        %v3399 = vadd.f32 %v3349, %v3391
        %v3400 = vld [vmem:[#allocation16] sm:$0xff]
        %v3401 = vld [vmem:[#allocation16 + $0x8] sm:$0xff]
        %v3402 = vld [vmem:[#allocation16 + $0x10] sm:$0xff]
        %v3403 = vld [vmem:[#allocation16 + $0x18] sm:$0xff]
        %v3404 = vld [vmem:[#allocation16 + $0x20] sm:$0xff]
        %v3405 = vld [vmem:[#allocation16 + $0x28] sm:$0xff]
        %v3406 = vld [vmem:[#allocation16 + $0x30] sm:$0xff]
        %v3407 = vld [vmem:[#allocation16 + $0x38] sm:$0xff]
        %v3408 = vadd.f32 %v3392, %v3400
        %v3409 = vadd.f32 %v3393, %v3401
        %v3410 = vadd.f32 %v3394, %v3402
        %v3411 = vadd.f32 %v3395, %v3403
        %v3412 = vadd.f32 %v3396, %v3404
        %v3413 = vadd.f32 %v3397, %v3405
        %v3414 = vadd.f32 %v3398, %v3406
        %v3415 = vadd.f32 %v3399, %v3407
        %3416 = vrot.lane.b32.xlu0 %v2528, 10
        %v3417 = vpop.permute.xlu0 %3416
        %3418 = vrot.lane.b32.xlu0 %v2530, 10
        %v3419 = vpop.permute.xlu0 %3418
        %3420 = vrot.lane.b32.xlu0 %v2532, 10
        %v3421 = vpop.permute.xlu0 %3420
        %3422 = vrot.lane.b32.xlu0 %v2534, 10
        %v3423 = vpop.permute.xlu0 %3422
        %3424 = vrot.lane.b32.xlu0 %v2529, 10
        %v3425 = vpop.permute.xlu0 %3424
        %3426 = vrot.lane.b32.xlu0 %v2531, 10
        %v3427 = vpop.permute.xlu0 %3426
        %3428 = vrot.lane.b32.xlu0 %v2533, 10
        %v3429 = vpop.permute.xlu0 %3428
        %3430 = vrot.lane.b32.xlu0 %v2535, 10
        %v3431 = vpop.permute.xlu0 %3430
        %vm3432 = vcmp.lt.s32.totalorder %v958, 10
        %v3433 = vsel %vm3432, %v3417, %v3425
        %v3434 = vsel %vm3432, %v3419, %v3427
        %v3435 = vsel %vm3432, %v3421, %v3429
        %v3436 = vsel %vm3432, %v3423, %v3431
        %v3437 = vsel %vm3432, %v3425, %v3417
        %v3438 = vsel %vm3432, %v3427, %v3419
        %v3439 = vsel %vm3432, %v3429, %v3421
        %v3440 = vsel %vm3432, %v3431, %v3423
        %v3441 = vld [vmem:[#allocation15] sm:$0xff]
        %v3442 = vld [vmem:[#allocation15 + $0x8] sm:$0xff]
        %v3443 = vld [vmem:[#allocation15 + $0x10] sm:$0xff]
        %v3444 = vld [vmem:[#allocation15 + $0x18] sm:$0xff]
        %v3445 = vld [vmem:[#allocation15 + $0x20] sm:$0xff]
        %v3446 = vld [vmem:[#allocation15 + $0x28] sm:$0xff]
        %v3447 = vld [vmem:[#allocation15 + $0x30] sm:$0xff]
        %v3448 = vld [vmem:[#allocation15 + $0x38] sm:$0xff]
        %v3449 = vmul.f32 %v3441, %v3437
        %v3450 = vmul.f32 %v3442, %v3433
        %v3451 = vmul.f32 %v3443, %v3438
        %v3452 = vmul.f32 %v3444, %v3434
        %v3453 = vmul.f32 %v3445, %v3439
        %v3454 = vmul.f32 %v3446, %v3435
        %v3455 = vmul.f32 %v3447, %v3440
        %v3456 = vmul.f32 %v3448, %v3436
        %v3457 = vadd.f32 %v3408, %v3449
        %v3458 = vadd.f32 %v3409, %v3450
        %v3459 = vadd.f32 %v3410, %v3451
        %v3460 = vadd.f32 %v3411, %v3452
        %v3461 = vadd.f32 %v3412, %v3453
        %v3462 = vadd.f32 %v3413, %v3454
        %v3463 = vadd.f32 %v3414, %v3455
        %v3464 = vadd.f32 %v3415, %v3456
        %3465 = vrot.lane.b32.xlu0 %v2528, 9
        %v3466 = vpop.permute.xlu0 %3465
        %3467 = vrot.lane.b32.xlu0 %v2530, 9
        %v3468 = vpop.permute.xlu0 %3467
        %3469 = vrot.lane.b32.xlu0 %v2532, 9
        %v3470 = vpop.permute.xlu0 %3469
        %3471 = vrot.lane.b32.xlu0 %v2534, 9
        %v3472 = vpop.permute.xlu0 %3471
        %3473 = vrot.lane.b32.xlu0 %v2529, 9
        %v3474 = vpop.permute.xlu0 %3473
        %3475 = vrot.lane.b32.xlu0 %v2531, 9
        %v3476 = vpop.permute.xlu0 %3475
        %3477 = vrot.lane.b32.xlu0 %v2533, 9
        %v3478 = vpop.permute.xlu0 %3477
        %3479 = vrot.lane.b32.xlu0 %v2535, 9
        %v3480 = vpop.permute.xlu0 %3479
        %vm3481 = vcmp.lt.s32.totalorder %v958, 9
        %v3482 = vsel %vm3481, %v3466, %v3474
        %v3483 = vsel %vm3481, %v3468, %v3476
        %v3484 = vsel %vm3481, %v3470, %v3478
        %v3485 = vsel %vm3481, %v3472, %v3480
        %v3486 = vsel %vm3481, %v3474, %v3466
        %v3487 = vsel %vm3481, %v3476, %v3468
        %v3488 = vsel %vm3481, %v3478, %v3470
        %v3489 = vsel %vm3481, %v3480, %v3472
        %s3490 = scalar_lea.vmem [#allocation15], 64
        %v3491 = vld [vmem:[%s3490] sm:$0xff]
        %v3492 = vld [vmem:[%s3490 + $0x8] sm:$0xff]
        %v3493 = vld [vmem:[%s3490 + $0x10] sm:$0xff]
        %v3494 = vld [vmem:[%s3490 + $0x18] sm:$0xff]
        %v3495 = vld [vmem:[%s3490 + $0x20] sm:$0xff]
        %v3496 = vld [vmem:[%s3490 + $0x28] sm:$0xff]
        %v3497 = vld [vmem:[%s3490 + $0x30] sm:$0xff]
        %v3498 = vld [vmem:[%s3490 + $0x38] sm:$0xff]
        %v3499 = vmul.f32 %v3491, %v3486
        %v3500 = vmul.f32 %v3492, %v3482
        %v3501 = vmul.f32 %v3493, %v3487
        %v3502 = vmul.f32 %v3494, %v3483
        %v3503 = vmul.f32 %v3495, %v3488
        %v3504 = vmul.f32 %v3496, %v3484
        %v3505 = vmul.f32 %v3497, %v3489
        %v3506 = vmul.f32 %v3498, %v3485
        %v3507 = vadd.f32 %v3457, %v3499
        %v3508 = vadd.f32 %v3458, %v3500
        %v3509 = vadd.f32 %v3459, %v3501
        %v3510 = vadd.f32 %v3460, %v3502
        %v3511 = vadd.f32 %v3461, %v3503
        %v3512 = vadd.f32 %v3462, %v3504
        %v3513 = vadd.f32 %v3463, %v3505
        %v3514 = vadd.f32 %v3464, %v3506
        %3515 = vrot.lane.b32.xlu0 %v2528, 8
        %v3516 = vpop.permute.xlu0 %3515
        %3517 = vrot.lane.b32.xlu0 %v2530, 8
        %v3518 = vpop.permute.xlu0 %3517
        %3519 = vrot.lane.b32.xlu0 %v2532, 8
        %v3520 = vpop.permute.xlu0 %3519
        %3521 = vrot.lane.b32.xlu0 %v2534, 8
        %v3522 = vpop.permute.xlu0 %3521
        %3523 = vrot.lane.b32.xlu0 %v2529, 8
        %v3524 = vpop.permute.xlu0 %3523
        %3525 = vrot.lane.b32.xlu0 %v2531, 8
        %v3526 = vpop.permute.xlu0 %3525
        %3527 = vrot.lane.b32.xlu0 %v2533, 8
        %v3528 = vpop.permute.xlu0 %3527
        %3529 = vrot.lane.b32.xlu0 %v2535, 8
        %v3530 = vpop.permute.xlu0 %3529
        %vm3531 = vcmp.lt.s32.totalorder %v958, 8
        %v3532 = vsel %vm3531, %v3516, %v3524
        %v3533 = vsel %vm3531, %v3518, %v3526
        %v3534 = vsel %vm3531, %v3520, %v3528
        %v3535 = vsel %vm3531, %v3522, %v3530
        %v3536 = vsel %vm3531, %v3524, %v3516
        %v3537 = vsel %vm3531, %v3526, %v3518
        %v3538 = vsel %vm3531, %v3528, %v3520
        %v3539 = vsel %vm3531, %v3530, %v3522
        %s3540 = scalar_lea.vmem [#allocation15], 128
        %v3541 = vld [vmem:[%s3540] sm:$0xff]
        %v3542 = vld [vmem:[%s3540 + $0x8] sm:$0xff]
        %v3543 = vld [vmem:[%s3540 + $0x10] sm:$0xff]
        %v3544 = vld [vmem:[%s3540 + $0x18] sm:$0xff]
        %v3545 = vld [vmem:[%s3540 + $0x20] sm:$0xff]
        %v3546 = vld [vmem:[%s3540 + $0x28] sm:$0xff]
        %v3547 = vld [vmem:[%s3540 + $0x30] sm:$0xff]
        %v3548 = vld [vmem:[%s3540 + $0x38] sm:$0xff]
        %v3549 = vmul.f32 %v3541, %v3536
        %v3550 = vmul.f32 %v3542, %v3532
        %v3551 = vmul.f32 %v3543, %v3537
        %v3552 = vmul.f32 %v3544, %v3533
        %v3553 = vmul.f32 %v3545, %v3538
        %v3554 = vmul.f32 %v3546, %v3534
        %v3555 = vmul.f32 %v3547, %v3539
        %v3556 = vmul.f32 %v3548, %v3535
        %v3557 = vadd.f32 %v3507, %v3549
        %v3558 = vadd.f32 %v3508, %v3550
        %v3559 = vadd.f32 %v3509, %v3551
        %v3560 = vadd.f32 %v3510, %v3552
        %v3561 = vadd.f32 %v3511, %v3553
        %v3562 = vadd.f32 %v3512, %v3554
        %v3563 = vadd.f32 %v3513, %v3555
        %v3564 = vadd.f32 %v3514, %v3556
        %3565 = vrot.lane.b32.xlu0 %v2528, 7
        %v3566 = vpop.permute.xlu0 %3565
        %3567 = vrot.lane.b32.xlu0 %v2530, 7
        %v3568 = vpop.permute.xlu0 %3567
        %3569 = vrot.lane.b32.xlu0 %v2532, 7
        %v3570 = vpop.permute.xlu0 %3569
        %3571 = vrot.lane.b32.xlu0 %v2534, 7
        %v3572 = vpop.permute.xlu0 %3571
        %3573 = vrot.lane.b32.xlu0 %v2529, 7
        %v3574 = vpop.permute.xlu0 %3573
        %3575 = vrot.lane.b32.xlu0 %v2531, 7
        %v3576 = vpop.permute.xlu0 %3575
        %3577 = vrot.lane.b32.xlu0 %v2533, 7
        %v3578 = vpop.permute.xlu0 %3577
        %3579 = vrot.lane.b32.xlu0 %v2535, 7
        %v3580 = vpop.permute.xlu0 %3579
        %vm3581 = vcmp.lt.s32.totalorder %v958, 7
        %v3582 = vsel %vm3581, %v3566, %v3574
        %v3583 = vsel %vm3581, %v3568, %v3576
        %v3584 = vsel %vm3581, %v3570, %v3578
        %v3585 = vsel %vm3581, %v3572, %v3580
        %v3586 = vsel %vm3581, %v3574, %v3566
        %v3587 = vsel %vm3581, %v3576, %v3568
        %v3588 = vsel %vm3581, %v3578, %v3570
        %v3589 = vsel %vm3581, %v3580, %v3572
        %s3590 = scalar_lea.vmem [#allocation15], 192
        %v3591 = vld [vmem:[%s3590] sm:$0xff]
        %v3592 = vld [vmem:[%s3590 + $0x8] sm:$0xff]
        %v3593 = vld [vmem:[%s3590 + $0x10] sm:$0xff]
        %v3594 = vld [vmem:[%s3590 + $0x18] sm:$0xff]
        %v3595 = vld [vmem:[%s3590 + $0x20] sm:$0xff]
        %v3596 = vld [vmem:[%s3590 + $0x28] sm:$0xff]
        %v3597 = vld [vmem:[%s3590 + $0x30] sm:$0xff]
        %v3598 = vld [vmem:[%s3590 + $0x38] sm:$0xff]
        %v3599 = vmul.f32 %v3591, %v3586
        %v3600 = vmul.f32 %v3592, %v3582
        %v3601 = vmul.f32 %v3593, %v3587
        %v3602 = vmul.f32 %v3594, %v3583
        %v3603 = vmul.f32 %v3595, %v3588
        %v3604 = vmul.f32 %v3596, %v3584
        %v3605 = vmul.f32 %v3597, %v3589
        %v3606 = vmul.f32 %v3598, %v3585
        %v3607 = vadd.f32 %v3557, %v3599
        %v3608 = vadd.f32 %v3558, %v3600
        %v3609 = vadd.f32 %v3559, %v3601
        %v3610 = vadd.f32 %v3560, %v3602
        %v3611 = vadd.f32 %v3561, %v3603
        %v3612 = vadd.f32 %v3562, %v3604
        %v3613 = vadd.f32 %v3563, %v3605
        %v3614 = vadd.f32 %v3564, %v3606
        %3615 = vrot.lane.b32.xlu0 %v2528, 6
        %v3616 = vpop.permute.xlu0 %3615
        %3617 = vrot.lane.b32.xlu0 %v2530, 6
        %v3618 = vpop.permute.xlu0 %3617
        %3619 = vrot.lane.b32.xlu0 %v2532, 6
        %v3620 = vpop.permute.xlu0 %3619
        %3621 = vrot.lane.b32.xlu0 %v2534, 6
        %v3622 = vpop.permute.xlu0 %3621
        %3623 = vrot.lane.b32.xlu0 %v2529, 6
        %v3624 = vpop.permute.xlu0 %3623
        %3625 = vrot.lane.b32.xlu0 %v2531, 6
        %v3626 = vpop.permute.xlu0 %3625
        %3627 = vrot.lane.b32.xlu0 %v2533, 6
        %v3628 = vpop.permute.xlu0 %3627
        %3629 = vrot.lane.b32.xlu0 %v2535, 6
        %v3630 = vpop.permute.xlu0 %3629
        %vm3631 = vcmp.lt.s32.totalorder %v958, 6
        %v3632 = vsel %vm3631, %v3616, %v3624
        %v3633 = vsel %vm3631, %v3618, %v3626
        %v3634 = vsel %vm3631, %v3620, %v3628
        %v3635 = vsel %vm3631, %v3622, %v3630
        %v3636 = vsel %vm3631, %v3624, %v3616
        %v3637 = vsel %vm3631, %v3626, %v3618
        %v3638 = vsel %vm3631, %v3628, %v3620
        %v3639 = vsel %vm3631, %v3630, %v3622
        %s3640 = scalar_lea.vmem [#allocation15], 256
        %v3641 = vld [vmem:[%s3640] sm:$0xff]
        %v3642 = vld [vmem:[%s3640 + $0x8] sm:$0xff]
        %v3643 = vld [vmem:[%s3640 + $0x10] sm:$0xff]
        %v3644 = vld [vmem:[%s3640 + $0x18] sm:$0xff]
        %v3645 = vld [vmem:[%s3640 + $0x20] sm:$0xff]
        %v3646 = vld [vmem:[%s3640 + $0x28] sm:$0xff]
        %v3647 = vld [vmem:[%s3640 + $0x30] sm:$0xff]
        %v3648 = vld [vmem:[%s3640 + $0x38] sm:$0xff]
        %v3649 = vmul.f32 %v3641, %v3636
        %v3650 = vmul.f32 %v3642, %v3632
        %v3651 = vmul.f32 %v3643, %v3637
        %v3652 = vmul.f32 %v3644, %v3633
        %v3653 = vmul.f32 %v3645, %v3638
        %v3654 = vmul.f32 %v3646, %v3634
        %v3655 = vmul.f32 %v3647, %v3639
        %v3656 = vmul.f32 %v3648, %v3635
        %v3657 = vadd.f32 %v3607, %v3649
        %v3658 = vadd.f32 %v3608, %v3650
        %v3659 = vadd.f32 %v3609, %v3651
        %v3660 = vadd.f32 %v3610, %v3652
        %v3661 = vadd.f32 %v3611, %v3653
        %v3662 = vadd.f32 %v3612, %v3654
        %v3663 = vadd.f32 %v3613, %v3655
        %v3664 = vadd.f32 %v3614, %v3656
        %3665 = vrot.lane.b32.xlu0 %v2528, 5
        %v3666 = vpop.permute.xlu0 %3665
        %3667 = vrot.lane.b32.xlu0 %v2530, 5
        %v3668 = vpop.permute.xlu0 %3667
        %3669 = vrot.lane.b32.xlu0 %v2532, 5
        %v3670 = vpop.permute.xlu0 %3669
        %3671 = vrot.lane.b32.xlu0 %v2534, 5
        %v3672 = vpop.permute.xlu0 %3671
        %3673 = vrot.lane.b32.xlu0 %v2529, 5
        %v3674 = vpop.permute.xlu0 %3673
        %3675 = vrot.lane.b32.xlu0 %v2531, 5
        %v3676 = vpop.permute.xlu0 %3675
        %3677 = vrot.lane.b32.xlu0 %v2533, 5
        %v3678 = vpop.permute.xlu0 %3677
        %3679 = vrot.lane.b32.xlu0 %v2535, 5
        %v3680 = vpop.permute.xlu0 %3679
        %v3681 = vsel %vm2898, %v3666, %v3674
        %v3682 = vsel %vm2898, %v3668, %v3676
        %v3683 = vsel %vm2898, %v3670, %v3678
        %v3684 = vsel %vm2898, %v3672, %v3680
        %v3685 = vsel %vm2898, %v3674, %v3666
        %v3686 = vsel %vm2898, %v3676, %v3668
        %v3687 = vsel %vm2898, %v3678, %v3670
        %v3688 = vsel %vm2898, %v3680, %v3672
        %s3689 = scalar_lea.vmem [#allocation15], 320
        %v3690 = vld [vmem:[%s3689] sm:$0xff]
        %v3691 = vld [vmem:[%s3689 + $0x8] sm:$0xff]
        %v3692 = vld [vmem:[%s3689 + $0x10] sm:$0xff]
        %v3693 = vld [vmem:[%s3689 + $0x18] sm:$0xff]
        %v3694 = vld [vmem:[%s3689 + $0x20] sm:$0xff]
        %v3695 = vld [vmem:[%s3689 + $0x28] sm:$0xff]
        %v3696 = vld [vmem:[%s3689 + $0x30] sm:$0xff]
        %v3697 = vld [vmem:[%s3689 + $0x38] sm:$0xff]
        %v3698 = vmul.f32 %v3690, %v3685
        %v3699 = vmul.f32 %v3691, %v3681
        %v3700 = vmul.f32 %v3692, %v3686
        %v3701 = vmul.f32 %v3693, %v3682
        %v3702 = vmul.f32 %v3694, %v3687
        %v3703 = vmul.f32 %v3695, %v3683
        %v3704 = vmul.f32 %v3696, %v3688
        %v3705 = vmul.f32 %v3697, %v3684
        %v3706 = vadd.f32 %v3657, %v3698
        %v3707 = vadd.f32 %v3658, %v3699
        %v3708 = vadd.f32 %v3659, %v3700
        %v3709 = vadd.f32 %v3660, %v3701
        %v3710 = vadd.f32 %v3661, %v3702
        %v3711 = vadd.f32 %v3662, %v3703
        %v3712 = vadd.f32 %v3663, %v3704
        %v3713 = vadd.f32 %v3664, %v3705
        %3714 = vrot.lane.b32.xlu0 %v2528, 4
        %v3715 = vpop.permute.xlu0 %3714
        %3716 = vrot.lane.b32.xlu0 %v2530, 4
        %v3717 = vpop.permute.xlu0 %3716
        %3718 = vrot.lane.b32.xlu0 %v2532, 4
        %v3719 = vpop.permute.xlu0 %3718
        %3720 = vrot.lane.b32.xlu0 %v2534, 4
        %v3721 = vpop.permute.xlu0 %3720
        %3722 = vrot.lane.b32.xlu0 %v2529, 4
        %v3723 = vpop.permute.xlu0 %3722
        %3724 = vrot.lane.b32.xlu0 %v2531, 4
        %v3725 = vpop.permute.xlu0 %3724
        %3726 = vrot.lane.b32.xlu0 %v2533, 4
        %v3727 = vpop.permute.xlu0 %3726
        %3728 = vrot.lane.b32.xlu0 %v2535, 4
        %v3729 = vpop.permute.xlu0 %3728
        %v3730 = vsel %vm2947, %v3715, %v3723
        %v3731 = vsel %vm2947, %v3717, %v3725
        %v3732 = vsel %vm2947, %v3719, %v3727
        %v3733 = vsel %vm2947, %v3721, %v3729
        %v3734 = vsel %vm2947, %v3723, %v3715
        %v3735 = vsel %vm2947, %v3725, %v3717
        %v3736 = vsel %vm2947, %v3727, %v3719
        %v3737 = vsel %vm2947, %v3729, %v3721
        %s3738 = scalar_lea.vmem [#allocation15], 384
        %v3739 = vld [vmem:[%s3738] sm:$0xff]
        %v3740 = vld [vmem:[%s3738 + $0x8] sm:$0xff]
        %v3741 = vld [vmem:[%s3738 + $0x10] sm:$0xff]
        %v3742 = vld [vmem:[%s3738 + $0x18] sm:$0xff]
        %v3743 = vld [vmem:[%s3738 + $0x20] sm:$0xff]
        %v3744 = vld [vmem:[%s3738 + $0x28] sm:$0xff]
        %v3745 = vld [vmem:[%s3738 + $0x30] sm:$0xff]
        %v3746 = vld [vmem:[%s3738 + $0x38] sm:$0xff]
        %v3747 = vmul.f32 %v3739, %v3734
        %v3748 = vmul.f32 %v3740, %v3730
        %v3749 = vmul.f32 %v3741, %v3735
        %v3750 = vmul.f32 %v3742, %v3731
        %v3751 = vmul.f32 %v3743, %v3736
        %v3752 = vmul.f32 %v3744, %v3732
        %v3753 = vmul.f32 %v3745, %v3737
        %v3754 = vmul.f32 %v3746, %v3733
        %v3755 = vadd.f32 %v3706, %v3747
        %v3756 = vadd.f32 %v3707, %v3748
        %v3757 = vadd.f32 %v3708, %v3749
        %v3758 = vadd.f32 %v3709, %v3750
        %v3759 = vadd.f32 %v3710, %v3751
        %v3760 = vadd.f32 %v3711, %v3752
        %v3761 = vadd.f32 %v3712, %v3753
        %v3762 = vadd.f32 %v3713, %v3754
        %3763 = vrot.lane.b32.xlu0 %v2528, 3
        %v3764 = vpop.permute.xlu0 %3763
        %3765 = vrot.lane.b32.xlu0 %v2530, 3
        %v3766 = vpop.permute.xlu0 %3765
        %3767 = vrot.lane.b32.xlu0 %v2532, 3
        %v3768 = vpop.permute.xlu0 %3767
        %3769 = vrot.lane.b32.xlu0 %v2534, 3
        %v3770 = vpop.permute.xlu0 %3769
        %3771 = vrot.lane.b32.xlu0 %v2529, 3
        %v3772 = vpop.permute.xlu0 %3771
        %3773 = vrot.lane.b32.xlu0 %v2531, 3
        %v3774 = vpop.permute.xlu0 %3773
        %3775 = vrot.lane.b32.xlu0 %v2533, 3
        %v3776 = vpop.permute.xlu0 %3775
        %3777 = vrot.lane.b32.xlu0 %v2535, 3
        %v3778 = vpop.permute.xlu0 %3777
        %v3779 = vsel %vm2560, %v3764, %v3772
        %v3780 = vsel %vm2560, %v3766, %v3774
        %v3781 = vsel %vm2560, %v3768, %v3776
        %v3782 = vsel %vm2560, %v3770, %v3778
        %v3783 = vsel %vm2560, %v3772, %v3764
        %v3784 = vsel %vm2560, %v3774, %v3766
        %v3785 = vsel %vm2560, %v3776, %v3768
        %v3786 = vsel %vm2560, %v3778, %v3770
        %s3787 = scalar_lea.vmem [#allocation15], 448
        %v3788 = vld [vmem:[%s3787] sm:$0xff]
        %v3789 = vld [vmem:[%s3787 + $0x8] sm:$0xff]
        %v3790 = vld [vmem:[%s3787 + $0x10] sm:$0xff]
        %v3791 = vld [vmem:[%s3787 + $0x18] sm:$0xff]
        %v3792 = vld [vmem:[%s3787 + $0x20] sm:$0xff]
        %v3793 = vld [vmem:[%s3787 + $0x28] sm:$0xff]
        %v3794 = vld [vmem:[%s3787 + $0x30] sm:$0xff]
        %v3795 = vld [vmem:[%s3787 + $0x38] sm:$0xff]
        %v3796 = vmul.f32 %v3788, %v3783
        %v3797 = vmul.f32 %v3789, %v3779
        %v3798 = vmul.f32 %v3790, %v3784
        %v3799 = vmul.f32 %v3791, %v3780
        %v3800 = vmul.f32 %v3792, %v3785
        %v3801 = vmul.f32 %v3793, %v3781
        %v3802 = vmul.f32 %v3794, %v3786
        %v3803 = vmul.f32 %v3795, %v3782
        %v3804 = vadd.f32 %v3755, %v3796
        %v3805 = vadd.f32 %v3756, %v3797
        %v3806 = vadd.f32 %v3757, %v3798
        %v3807 = vadd.f32 %v3758, %v3799
        %v3808 = vadd.f32 %v3759, %v3800
        %v3809 = vadd.f32 %v3760, %v3801
        %v3810 = vadd.f32 %v3761, %v3802
        %v3811 = vadd.f32 %v3762, %v3803
        %3812 = vrot.lane.b32.xlu0 %v2528, 2
        %v3813 = vpop.permute.xlu0 %3812
        %3814 = vrot.lane.b32.xlu0 %v2530, 2
        %v3815 = vpop.permute.xlu0 %3814
        %3816 = vrot.lane.b32.xlu0 %v2532, 2
        %v3817 = vpop.permute.xlu0 %3816
        %3818 = vrot.lane.b32.xlu0 %v2534, 2
        %v3819 = vpop.permute.xlu0 %3818
        %3820 = vrot.lane.b32.xlu0 %v2529, 2
        %v3821 = vpop.permute.xlu0 %3820
        %3822 = vrot.lane.b32.xlu0 %v2531, 2
        %v3823 = vpop.permute.xlu0 %3822
        %3824 = vrot.lane.b32.xlu0 %v2533, 2
        %v3825 = vpop.permute.xlu0 %3824
        %3826 = vrot.lane.b32.xlu0 %v2535, 2
        %v3827 = vpop.permute.xlu0 %3826
        %v3828 = vsel %vm2609, %v3813, %v3821
        %v3829 = vsel %vm2609, %v3815, %v3823
        %v3830 = vsel %vm2609, %v3817, %v3825
        %v3831 = vsel %vm2609, %v3819, %v3827
        %v3832 = vsel %vm2609, %v3821, %v3813
        %v3833 = vsel %vm2609, %v3823, %v3815
        %v3834 = vsel %vm2609, %v3825, %v3817
        %v3835 = vsel %vm2609, %v3827, %v3819
        %s3836 = scalar_lea.vmem [#allocation15], 512
        %v3837 = vld [vmem:[%s3836] sm:$0xff]
        %v3838 = vld [vmem:[%s3836 + $0x8] sm:$0xff]
        %v3839 = vld [vmem:[%s3836 + $0x10] sm:$0xff]
        %v3840 = vld [vmem:[%s3836 + $0x18] sm:$0xff]
        %v3841 = vld [vmem:[%s3836 + $0x20] sm:$0xff]
        %v3842 = vld [vmem:[%s3836 + $0x28] sm:$0xff]
        %v3843 = vld [vmem:[%s3836 + $0x30] sm:$0xff]
        %v3844 = vld [vmem:[%s3836 + $0x38] sm:$0xff]
        %v3845 = vmul.f32 %v3837, %v3832
        %v3846 = vmul.f32 %v3838, %v3828
        %v3847 = vmul.f32 %v3839, %v3833
        %v3848 = vmul.f32 %v3840, %v3829
        %v3849 = vmul.f32 %v3841, %v3834
        %v3850 = vmul.f32 %v3842, %v3830
        %v3851 = vmul.f32 %v3843, %v3835
        %v3852 = vmul.f32 %v3844, %v3831
        %v3853 = vadd.f32 %v3804, %v3845
        %v3854 = vadd.f32 %v3805, %v3846
        %v3855 = vadd.f32 %v3806, %v3847
        %v3856 = vadd.f32 %v3807, %v3848
        %v3857 = vadd.f32 %v3808, %v3849
        %v3858 = vadd.f32 %v3809, %v3850
        %v3859 = vadd.f32 %v3810, %v3851
        %v3860 = vadd.f32 %v3811, %v3852
        %3861 = vrot.lane.b32.xlu0 %v2528, 1
        %v3862 = vpop.permute.xlu0 %3861
        %3863 = vrot.lane.b32.xlu0 %v2530, 1
        %v3864 = vpop.permute.xlu0 %3863
        %3865 = vrot.lane.b32.xlu0 %v2532, 1
        %v3866 = vpop.permute.xlu0 %3865
        %3867 = vrot.lane.b32.xlu0 %v2534, 1
        %v3868 = vpop.permute.xlu0 %3867
        %3869 = vrot.lane.b32.xlu0 %v2529, 1
        %v3870 = vpop.permute.xlu0 %3869
        %3871 = vrot.lane.b32.xlu0 %v2531, 1
        %v3872 = vpop.permute.xlu0 %3871
        %3873 = vrot.lane.b32.xlu0 %v2533, 1
        %v3874 = vpop.permute.xlu0 %3873
        %3875 = vrot.lane.b32.xlu0 %v2535, 1
        %v3876 = vpop.permute.xlu0 %3875
        %v3877 = vsel %vm1108, %v3862, %v3870
        %v3878 = vsel %vm1108, %v3864, %v3872
        %v3879 = vsel %vm1108, %v3866, %v3874
        %v3880 = vsel %vm1108, %v3868, %v3876
        %v3881 = vsel %vm1108, %v3870, %v3862
        %v3882 = vsel %vm1108, %v3872, %v3864
        %v3883 = vsel %vm1108, %v3874, %v3866
        %v3884 = vsel %vm1108, %v3876, %v3868
        %s3885 = scalar_lea.vmem [#allocation15], 576
        %v3886 = vld [vmem:[%s3885] sm:$0xff]
        %v3887 = vld [vmem:[%s3885 + $0x8] sm:$0xff]
        %v3888 = vld [vmem:[%s3885 + $0x10] sm:$0xff]
        %v3889 = vld [vmem:[%s3885 + $0x18] sm:$0xff]
        %v3890 = vld [vmem:[%s3885 + $0x20] sm:$0xff]
        %v3891 = vld [vmem:[%s3885 + $0x28] sm:$0xff]
        %v3892 = vld [vmem:[%s3885 + $0x30] sm:$0xff]
        %v3893 = vld [vmem:[%s3885 + $0x38] sm:$0xff]
        %v3894 = vmul.f32 %v3886, %v3881
        %v3895 = vmul.f32 %v3887, %v3877
        %v3896 = vmul.f32 %v3888, %v3882
        %v3897 = vmul.f32 %v3889, %v3878
        %v3898 = vmul.f32 %v3890, %v3883
        %v3899 = vmul.f32 %v3891, %v3879
        %v3900 = vmul.f32 %v3892, %v3884
        %v3901 = vmul.f32 %v3893, %v3880
        %v3902 = vadd.f32 %v3853, %v3894
        %v3903 = vadd.f32 %v3854, %v3895
        %v3904 = vadd.f32 %v3855, %v3896
        %v3905 = vadd.f32 %v3856, %v3897
        %v3906 = vadd.f32 %v3857, %v3898
        %v3907 = vadd.f32 %v3858, %v3899
        %v3908 = vadd.f32 %v3859, %v3900
        %v3909 = vadd.f32 %v3860, %v3901
        %s3910 = scalar_lea.vmem [#allocation15], 640
        %v3911 = vld [vmem:[%s3910] sm:$0xff]
        %v3912 = vld [vmem:[%s3910 + $0x8] sm:$0xff]
        %v3913 = vld [vmem:[%s3910 + $0x10] sm:$0xff]
        %v3914 = vld [vmem:[%s3910 + $0x18] sm:$0xff]
        %v3915 = vld [vmem:[%s3910 + $0x20] sm:$0xff]
        %v3916 = vld [vmem:[%s3910 + $0x28] sm:$0xff]
        %v3917 = vld [vmem:[%s3910 + $0x30] sm:$0xff]
        %v3918 = vld [vmem:[%s3910 + $0x38] sm:$0xff]
        %v3919 = vmul.f32 %v3911, %v2528
        %v3920 = vmul.f32 %v3912, %v2529
        %v3921 = vmul.f32 %v3913, %v2530
        %v3922 = vmul.f32 %v3914, %v2531
        %v3923 = vmul.f32 %v3915, %v2532
        %v3924 = vmul.f32 %v3916, %v2533
        %v3925 = vmul.f32 %v3917, %v2534
        %v3926 = vmul.f32 %v3918, %v2535
        %v3927 = vadd.f32 %v3902, %v3919
        %v3928 = vadd.f32 %v3903, %v3920
        %v3929 = vadd.f32 %v3904, %v3921
        %v3930 = vadd.f32 %v3905, %v3922
        %v3931 = vadd.f32 %v3906, %v3923
        %v3932 = vadd.f32 %v3907, %v3924
        %v3933 = vadd.f32 %v3908, %v3925
        %v3934 = vadd.f32 %v3909, %v3926
        %3935 = vrot.lane.b32.xlu0 %v2528, 127
        %v3936 = vpop.permute.xlu0 %3935
        %3937 = vrot.lane.b32.xlu0 %v2530, 127
        %v3938 = vpop.permute.xlu0 %3937
        %3939 = vrot.lane.b32.xlu0 %v2532, 127
        %v3940 = vpop.permute.xlu0 %3939
        %3941 = vrot.lane.b32.xlu0 %v2534, 127
        %v3942 = vpop.permute.xlu0 %3941
        %3943 = vrot.lane.b32.xlu0 %v2529, 127
        %v3944 = vpop.permute.xlu0 %3943
        %3945 = vrot.lane.b32.xlu0 %v2531, 127
        %v3946 = vpop.permute.xlu0 %3945
        %3947 = vrot.lane.b32.xlu0 %v2533, 127
        %v3948 = vpop.permute.xlu0 %3947
        %3949 = vrot.lane.b32.xlu0 %v2535, 127
        %v3950 = vpop.permute.xlu0 %3949
        %v3951 = vsel %vm1183, %v3936, %v3944
        %v3952 = vsel %vm1183, %v3938, %v3946
        %v3953 = vsel %vm1183, %v3940, %v3948
        %v3954 = vsel %vm1183, %v3942, %v3950
        %v3955 = vsel %vm1183, %v3944, %v3936
        %v3956 = vsel %vm1183, %v3946, %v3938
        %v3957 = vsel %vm1183, %v3948, %v3940
        %v3958 = vsel %vm1183, %v3950, %v3942
        %s3959 = scalar_lea.vmem [#allocation15], 704
        %v3960 = vld [vmem:[%s3959] sm:$0xff]
        %v3961 = vld [vmem:[%s3959 + $0x8] sm:$0xff]
        %v3962 = vld [vmem:[%s3959 + $0x10] sm:$0xff]
        %v3963 = vld [vmem:[%s3959 + $0x18] sm:$0xff]
        %v3964 = vld [vmem:[%s3959 + $0x20] sm:$0xff]
        %v3965 = vld [vmem:[%s3959 + $0x28] sm:$0xff]
        %v3966 = vld [vmem:[%s3959 + $0x30] sm:$0xff]
        %v3967 = vld [vmem:[%s3959 + $0x38] sm:$0xff]
        %v3968 = vmul.f32 %v3960, %v3951
        %v3969 = vmul.f32 %v3961, %v3955
        %v3970 = vmul.f32 %v3962, %v3952
        %v3971 = vmul.f32 %v3963, %v3956
        %v3972 = vmul.f32 %v3964, %v3953
        %v3973 = vmul.f32 %v3965, %v3957
        %v3974 = vmul.f32 %v3966, %v3954
        %v3975 = vmul.f32 %v3967, %v3958
        %v3976 = vadd.f32 %v3927, %v3968
        %v3977 = vadd.f32 %v3928, %v3969
        %v3978 = vadd.f32 %v3929, %v3970
        %v3979 = vadd.f32 %v3930, %v3971
        %v3980 = vadd.f32 %v3931, %v3972
        %v3981 = vadd.f32 %v3932, %v3973
        %v3982 = vadd.f32 %v3933, %v3974
        %v3983 = vadd.f32 %v3934, %v3975
        %3984 = vrot.lane.b32.xlu0 %v2528, 126
        %v3985 = vpop.permute.xlu0 %3984
        %3986 = vrot.lane.b32.xlu0 %v2530, 126
        %v3987 = vpop.permute.xlu0 %3986
        %3988 = vrot.lane.b32.xlu0 %v2532, 126
        %v3989 = vpop.permute.xlu0 %3988
        %3990 = vrot.lane.b32.xlu0 %v2534, 126
        %v3991 = vpop.permute.xlu0 %3990
        %3992 = vrot.lane.b32.xlu0 %v2529, 126
        %v3993 = vpop.permute.xlu0 %3992
        %3994 = vrot.lane.b32.xlu0 %v2531, 126
        %v3995 = vpop.permute.xlu0 %3994
        %3996 = vrot.lane.b32.xlu0 %v2533, 126
        %v3997 = vpop.permute.xlu0 %3996
        %3998 = vrot.lane.b32.xlu0 %v2535, 126
        %v3999 = vpop.permute.xlu0 %3998
        %v4000 = vsel %vm2782, %v3985, %v3993
        %v4001 = vsel %vm2782, %v3987, %v3995
        %v4002 = vsel %vm2782, %v3989, %v3997
        %v4003 = vsel %vm2782, %v3991, %v3999
        %v4004 = vsel %vm2782, %v3993, %v3985
        %v4005 = vsel %vm2782, %v3995, %v3987
        %v4006 = vsel %vm2782, %v3997, %v3989
        %v4007 = vsel %vm2782, %v3999, %v3991
        %s4008 = scalar_lea.vmem [#allocation15], 768
        %v4009 = vld [vmem:[%s4008] sm:$0xff]
        %v4010 = vld [vmem:[%s4008 + $0x8] sm:$0xff]
        %v4011 = vld [vmem:[%s4008 + $0x10] sm:$0xff]
        %v4012 = vld [vmem:[%s4008 + $0x18] sm:$0xff]
        %v4013 = vld [vmem:[%s4008 + $0x20] sm:$0xff]
        %v4014 = vld [vmem:[%s4008 + $0x28] sm:$0xff]
        %v4015 = vld [vmem:[%s4008 + $0x30] sm:$0xff]
        %v4016 = vld [vmem:[%s4008 + $0x38] sm:$0xff]
        %v4017 = vmul.f32 %v4009, %v4000
        %v4018 = vmul.f32 %v4010, %v4004
        %v4019 = vmul.f32 %v4011, %v4001
        %v4020 = vmul.f32 %v4012, %v4005
        %v4021 = vmul.f32 %v4013, %v4002
        %v4022 = vmul.f32 %v4014, %v4006
        %v4023 = vmul.f32 %v4015, %v4003
        %v4024 = vmul.f32 %v4016, %v4007
        %v4025 = vadd.f32 %v3976, %v4017
        %v4026 = vadd.f32 %v3977, %v4018
        %v4027 = vadd.f32 %v3978, %v4019
        %v4028 = vadd.f32 %v3979, %v4020
        %v4029 = vadd.f32 %v3980, %v4021
        %v4030 = vadd.f32 %v3981, %v4022
        %v4031 = vadd.f32 %v3982, %v4023
        %v4032 = vadd.f32 %v3983, %v4024
        %4033 = vrot.lane.b32.xlu0 %v2528, 125
        %v4034 = vpop.permute.xlu0 %4033
        %4035 = vrot.lane.b32.xlu0 %v2530, 125
        %v4036 = vpop.permute.xlu0 %4035
        %4037 = vrot.lane.b32.xlu0 %v2532, 125
        %v4038 = vpop.permute.xlu0 %4037
        %4039 = vrot.lane.b32.xlu0 %v2534, 125
        %v4040 = vpop.permute.xlu0 %4039
        %4041 = vrot.lane.b32.xlu0 %v2529, 125
        %v4042 = vpop.permute.xlu0 %4041
        %4043 = vrot.lane.b32.xlu0 %v2531, 125
        %v4044 = vpop.permute.xlu0 %4043
        %4045 = vrot.lane.b32.xlu0 %v2533, 125
        %v4046 = vpop.permute.xlu0 %4045
        %4047 = vrot.lane.b32.xlu0 %v2535, 125
        %v4048 = vpop.permute.xlu0 %4047
        %v4049 = vsel %vm2832, %v4034, %v4042
        %v4050 = vsel %vm2832, %v4036, %v4044
        %v4051 = vsel %vm2832, %v4038, %v4046
        %v4052 = vsel %vm2832, %v4040, %v4048
        %v4053 = vsel %vm2832, %v4042, %v4034
        %v4054 = vsel %vm2832, %v4044, %v4036
        %v4055 = vsel %vm2832, %v4046, %v4038
        %v4056 = vsel %vm2832, %v4048, %v4040
        %s4057 = scalar_lea.vmem [#allocation15], 832
        %v4058 = vld [vmem:[%s4057] sm:$0xff]
        %v4059 = vld [vmem:[%s4057 + $0x8] sm:$0xff]
        %v4060 = vld [vmem:[%s4057 + $0x10] sm:$0xff]
        %v4061 = vld [vmem:[%s4057 + $0x18] sm:$0xff]
        %v4062 = vld [vmem:[%s4057 + $0x20] sm:$0xff]
        %v4063 = vld [vmem:[%s4057 + $0x28] sm:$0xff]
        %v4064 = vld [vmem:[%s4057 + $0x30] sm:$0xff]
        %v4065 = vld [vmem:[%s4057 + $0x38] sm:$0xff]
        %v4066 = vmul.f32 %v4058, %v4049
        %v4067 = vmul.f32 %v4059, %v4053
        %v4068 = vmul.f32 %v4060, %v4050
        %v4069 = vmul.f32 %v4061, %v4054
        %v4070 = vmul.f32 %v4062, %v4051
        %v4071 = vmul.f32 %v4063, %v4055
        %v4072 = vmul.f32 %v4064, %v4052
        %v4073 = vmul.f32 %v4065, %v4056
        %v4074 = vadd.f32 %v4025, %v4066
        %v4075 = vadd.f32 %v4026, %v4067
        %v4076 = vadd.f32 %v4027, %v4068
        %v4077 = vadd.f32 %v4028, %v4069
        %v4078 = vadd.f32 %v4029, %v4070
        %v4079 = vadd.f32 %v4030, %v4071
        %v4080 = vadd.f32 %v4031, %v4072
        %v4081 = vadd.f32 %v4032, %v4073
        %4082 = vrot.lane.b32.xlu0 %v2528, 124
        %v4083 = vpop.permute.xlu0 %4082
        %4084 = vrot.lane.b32.xlu0 %v2530, 124
        %v4085 = vpop.permute.xlu0 %4084
        %4086 = vrot.lane.b32.xlu0 %v2532, 124
        %v4087 = vpop.permute.xlu0 %4086
        %4088 = vrot.lane.b32.xlu0 %v2534, 124
        %v4089 = vpop.permute.xlu0 %4088
        %4090 = vrot.lane.b32.xlu0 %v2529, 124
        %v4091 = vpop.permute.xlu0 %4090
        %4092 = vrot.lane.b32.xlu0 %v2531, 124
        %v4093 = vpop.permute.xlu0 %4092
        %4094 = vrot.lane.b32.xlu0 %v2533, 124
        %v4095 = vpop.permute.xlu0 %4094
        %4096 = vrot.lane.b32.xlu0 %v2535, 124
        %v4097 = vpop.permute.xlu0 %4096
        %v4098 = vsel %vm3316, %v4083, %v4091
        %v4099 = vsel %vm3316, %v4085, %v4093
        %v4100 = vsel %vm3316, %v4087, %v4095
        %v4101 = vsel %vm3316, %v4089, %v4097
        %v4102 = vsel %vm3316, %v4091, %v4083
        %v4103 = vsel %vm3316, %v4093, %v4085
        %v4104 = vsel %vm3316, %v4095, %v4087
        %v4105 = vsel %vm3316, %v4097, %v4089
        %s4106 = scalar_lea.vmem [#allocation15], 896
        %v4107 = vld [vmem:[%s4106] sm:$0xff]
        %v4108 = vld [vmem:[%s4106 + $0x8] sm:$0xff]
        %v4109 = vld [vmem:[%s4106 + $0x10] sm:$0xff]
        %v4110 = vld [vmem:[%s4106 + $0x18] sm:$0xff]
        %v4111 = vld [vmem:[%s4106 + $0x20] sm:$0xff]
        %v4112 = vld [vmem:[%s4106 + $0x28] sm:$0xff]
        %v4113 = vld [vmem:[%s4106 + $0x30] sm:$0xff]
        %v4114 = vld [vmem:[%s4106 + $0x38] sm:$0xff]
        %v4115 = vmul.f32 %v4107, %v4098
        %v4116 = vmul.f32 %v4108, %v4102
        %v4117 = vmul.f32 %v4109, %v4099
        %v4118 = vmul.f32 %v4110, %v4103
        %v4119 = vmul.f32 %v4111, %v4100
        %v4120 = vmul.f32 %v4112, %v4104
        %v4121 = vmul.f32 %v4113, %v4101
        %v4122 = vmul.f32 %v4114, %v4105
        %v4123 = vadd.f32 %v4074, %v4115
        %v4124 = vadd.f32 %v4075, %v4116
        %v4125 = vadd.f32 %v4076, %v4117
        %v4126 = vadd.f32 %v4077, %v4118
        %v4127 = vadd.f32 %v4078, %v4119
        %v4128 = vadd.f32 %v4079, %v4120
        %v4129 = vadd.f32 %v4080, %v4121
        %v4130 = vadd.f32 %v4081, %v4122
        %4131 = vrot.lane.b32.xlu0 %v2528, 123
        %v4132 = vpop.permute.xlu0 %4131
        %4133 = vrot.lane.b32.xlu0 %v2530, 123
        %v4134 = vpop.permute.xlu0 %4133
        %4135 = vrot.lane.b32.xlu0 %v2532, 123
        %v4136 = vpop.permute.xlu0 %4135
        %4137 = vrot.lane.b32.xlu0 %v2534, 123
        %v4138 = vpop.permute.xlu0 %4137
        %4139 = vrot.lane.b32.xlu0 %v2529, 123
        %v4140 = vpop.permute.xlu0 %4139
        %4141 = vrot.lane.b32.xlu0 %v2531, 123
        %v4142 = vpop.permute.xlu0 %4141
        %4143 = vrot.lane.b32.xlu0 %v2533, 123
        %v4144 = vpop.permute.xlu0 %4143
        %4145 = vrot.lane.b32.xlu0 %v2535, 123
        %v4146 = vpop.permute.xlu0 %4145
        %v4147 = vsel %vm3366, %v4132, %v4140
        %v4148 = vsel %vm3366, %v4134, %v4142
        %v4149 = vsel %vm3366, %v4136, %v4144
        %v4150 = vsel %vm3366, %v4138, %v4146
        %v4151 = vsel %vm3366, %v4140, %v4132
        %v4152 = vsel %vm3366, %v4142, %v4134
        %v4153 = vsel %vm3366, %v4144, %v4136
        %v4154 = vsel %vm3366, %v4146, %v4138
        %s4155 = scalar_lea.vmem [#allocation15], 960
        %v4156 = vld [vmem:[%s4155] sm:$0xff]
        %v4157 = vld [vmem:[%s4155 + $0x8] sm:$0xff]
        %v4158 = vld [vmem:[%s4155 + $0x10] sm:$0xff]
        %v4159 = vld [vmem:[%s4155 + $0x18] sm:$0xff]
        %v4160 = vld [vmem:[%s4155 + $0x20] sm:$0xff]
        %v4161 = vld [vmem:[%s4155 + $0x28] sm:$0xff]
        %v4162 = vld [vmem:[%s4155 + $0x30] sm:$0xff]
        %v4163 = vld [vmem:[%s4155 + $0x38] sm:$0xff]
        %v4164 = vmul.f32 %v4156, %v4147
        %v4165 = vmul.f32 %v4157, %v4151
        %v4166 = vmul.f32 %v4158, %v4148
        %v4167 = vmul.f32 %v4159, %v4152
        %v4168 = vmul.f32 %v4160, %v4149
        %v4169 = vmul.f32 %v4161, %v4153
        %v4170 = vmul.f32 %v4162, %v4150
        %v4171 = vmul.f32 %v4163, %v4154
        %v4172 = vadd.f32 %v4123, %v4164
        %v4173 = vadd.f32 %v4124, %v4165
        %v4174 = vadd.f32 %v4125, %v4166
        %v4175 = vadd.f32 %v4126, %v4167
        %v4176 = vadd.f32 %v4127, %v4168
        %v4177 = vadd.f32 %v4128, %v4169
        %v4178 = vadd.f32 %v4129, %v4170
        %v4179 = vadd.f32 %v4130, %v4171
        %4180 = vrot.lane.b32.xlu0 %v2528, 122
        %v4181 = vpop.permute.xlu0 %4180
        %4182 = vrot.lane.b32.xlu0 %v2530, 122
        %v4183 = vpop.permute.xlu0 %4182
        %4184 = vrot.lane.b32.xlu0 %v2532, 122
        %v4185 = vpop.permute.xlu0 %4184
        %4186 = vrot.lane.b32.xlu0 %v2534, 122
        %v4187 = vpop.permute.xlu0 %4186
        %4188 = vrot.lane.b32.xlu0 %v2529, 122
        %v4189 = vpop.permute.xlu0 %4188
        %4190 = vrot.lane.b32.xlu0 %v2531, 122
        %v4191 = vpop.permute.xlu0 %4190
        %4192 = vrot.lane.b32.xlu0 %v2533, 122
        %v4193 = vpop.permute.xlu0 %4192
        %4194 = vrot.lane.b32.xlu0 %v2535, 122
        %v4195 = vpop.permute.xlu0 %4194
        %vm4196 = vcmp.lt.s32.totalorder %v958, 122
        %v4197 = vsel %vm4196, %v4181, %v4189
        %v4198 = vsel %vm4196, %v4183, %v4191
        %v4199 = vsel %vm4196, %v4185, %v4193
        %v4200 = vsel %vm4196, %v4187, %v4195
        %v4201 = vsel %vm4196, %v4189, %v4181
        %v4202 = vsel %vm4196, %v4191, %v4183
        %v4203 = vsel %vm4196, %v4193, %v4185
        %v4204 = vsel %vm4196, %v4195, %v4187
        %s4205 = scalar_lea.vmem [#allocation15], 1024
        %v4206 = vld [vmem:[%s4205] sm:$0xff]
        %v4207 = vld [vmem:[%s4205 + $0x8] sm:$0xff]
        %v4208 = vld [vmem:[%s4205 + $0x10] sm:$0xff]
        %v4209 = vld [vmem:[%s4205 + $0x18] sm:$0xff]
        %v4210 = vld [vmem:[%s4205 + $0x20] sm:$0xff]
        %v4211 = vld [vmem:[%s4205 + $0x28] sm:$0xff]
        %v4212 = vld [vmem:[%s4205 + $0x30] sm:$0xff]
        %v4213 = vld [vmem:[%s4205 + $0x38] sm:$0xff]
        %v4214 = vmul.f32 %v4206, %v4197
        %v4215 = vmul.f32 %v4207, %v4201
        %v4216 = vmul.f32 %v4208, %v4198
        %v4217 = vmul.f32 %v4209, %v4202
        %v4218 = vmul.f32 %v4210, %v4199
        %v4219 = vmul.f32 %v4211, %v4203
        %v4220 = vmul.f32 %v4212, %v4200
        %v4221 = vmul.f32 %v4213, %v4204
        %v4222 = vadd.f32 %v4172, %v4214
        %v4223 = vadd.f32 %v4173, %v4215
        %v4224 = vadd.f32 %v4174, %v4216
        %v4225 = vadd.f32 %v4175, %v4217
        %v4226 = vadd.f32 %v4176, %v4218
        %v4227 = vadd.f32 %v4177, %v4219
        %v4228 = vadd.f32 %v4178, %v4220
        %v4229 = vadd.f32 %v4179, %v4221
        %4230 = vrot.lane.b32.xlu0 %v2528, 121
        %v4231 = vpop.permute.xlu0 %4230
        %4232 = vrot.lane.b32.xlu0 %v2530, 121
        %v4233 = vpop.permute.xlu0 %4232
        %4234 = vrot.lane.b32.xlu0 %v2532, 121
        %v4235 = vpop.permute.xlu0 %4234
        %4236 = vrot.lane.b32.xlu0 %v2534, 121
        %v4237 = vpop.permute.xlu0 %4236
        %4238 = vrot.lane.b32.xlu0 %v2529, 121
        %v4239 = vpop.permute.xlu0 %4238
        %4240 = vrot.lane.b32.xlu0 %v2531, 121
        %v4241 = vpop.permute.xlu0 %4240
        %4242 = vrot.lane.b32.xlu0 %v2533, 121
        %v4243 = vpop.permute.xlu0 %4242
        %4244 = vrot.lane.b32.xlu0 %v2535, 121
        %v4245 = vpop.permute.xlu0 %4244
        %vm4246 = vcmp.lt.s32.totalorder %v958, 121
        %v4247 = vsel %vm4246, %v4231, %v4239
        %v4248 = vsel %vm4246, %v4233, %v4241
        %v4249 = vsel %vm4246, %v4235, %v4243
        %v4250 = vsel %vm4246, %v4237, %v4245
        %v4251 = vsel %vm4246, %v4239, %v4231
        %v4252 = vsel %vm4246, %v4241, %v4233
        %v4253 = vsel %vm4246, %v4243, %v4235
        %v4254 = vsel %vm4246, %v4245, %v4237
        %s4255 = scalar_lea.vmem [#allocation15], 1088
        %v4256 = vld [vmem:[%s4255] sm:$0xff]
        %v4257 = vld [vmem:[%s4255 + $0x8] sm:$0xff]
        %v4258 = vld [vmem:[%s4255 + $0x10] sm:$0xff]
        %v4259 = vld [vmem:[%s4255 + $0x18] sm:$0xff]
        %v4260 = vld [vmem:[%s4255 + $0x20] sm:$0xff]
        %v4261 = vld [vmem:[%s4255 + $0x28] sm:$0xff]
        %v4262 = vld [vmem:[%s4255 + $0x30] sm:$0xff]
        %v4263 = vld [vmem:[%s4255 + $0x38] sm:$0xff]
        %v4264 = vmul.f32 %v4256, %v4247
        %v4265 = vmul.f32 %v4257, %v4251
        %v4266 = vmul.f32 %v4258, %v4248
        %v4267 = vmul.f32 %v4259, %v4252
        %v4268 = vmul.f32 %v4260, %v4249
        %v4269 = vmul.f32 %v4261, %v4253
        %v4270 = vmul.f32 %v4262, %v4250
        %v4271 = vmul.f32 %v4263, %v4254
        %v4272 = vadd.f32 %v4222, %v4264
        %v4273 = vadd.f32 %v4223, %v4265
        %v4274 = vadd.f32 %v4224, %v4266
        %v4275 = vadd.f32 %v4225, %v4267
        %v4276 = vadd.f32 %v4226, %v4268
        %v4277 = vadd.f32 %v4227, %v4269
        %v4278 = vadd.f32 %v4228, %v4270
        %v4279 = vadd.f32 %v4229, %v4271
        %4280 = vrot.lane.b32.xlu0 %v2528, 120
        %v4281 = vpop.permute.xlu0 %4280
        %4282 = vrot.lane.b32.xlu0 %v2530, 120
        %v4283 = vpop.permute.xlu0 %4282
        %4284 = vrot.lane.b32.xlu0 %v2532, 120
        %v4285 = vpop.permute.xlu0 %4284
        %4286 = vrot.lane.b32.xlu0 %v2534, 120
        %v4287 = vpop.permute.xlu0 %4286
        %4288 = vrot.lane.b32.xlu0 %v2529, 120
        %v4289 = vpop.permute.xlu0 %4288
        %4290 = vrot.lane.b32.xlu0 %v2531, 120
        %v4291 = vpop.permute.xlu0 %4290
        %4292 = vrot.lane.b32.xlu0 %v2533, 120
        %v4293 = vpop.permute.xlu0 %4292
        %4294 = vrot.lane.b32.xlu0 %v2535, 120
        %v4295 = vpop.permute.xlu0 %4294
        %vm4296 = vcmp.lt.s32.totalorder %v958, 120
        %v4297 = vsel %vm4296, %v4281, %v4289
        %v4298 = vsel %vm4296, %v4283, %v4291
        %v4299 = vsel %vm4296, %v4285, %v4293
        %v4300 = vsel %vm4296, %v4287, %v4295
        %v4301 = vsel %vm4296, %v4289, %v4281
        %v4302 = vsel %vm4296, %v4291, %v4283
        %v4303 = vsel %vm4296, %v4293, %v4285
        %v4304 = vsel %vm4296, %v4295, %v4287
        %s4305 = scalar_lea.vmem [#allocation15], 1152
        %v4306 = vld [vmem:[%s4305] sm:$0xff]
        %v4307 = vld [vmem:[%s4305 + $0x8] sm:$0xff]
        %v4308 = vld [vmem:[%s4305 + $0x10] sm:$0xff]
        %v4309 = vld [vmem:[%s4305 + $0x18] sm:$0xff]
        %v4310 = vld [vmem:[%s4305 + $0x20] sm:$0xff]
        %v4311 = vld [vmem:[%s4305 + $0x28] sm:$0xff]
        %v4312 = vld [vmem:[%s4305 + $0x30] sm:$0xff]
        %v4313 = vld [vmem:[%s4305 + $0x38] sm:$0xff]
        %v4314 = vmul.f32 %v4306, %v4297
        %v4315 = vmul.f32 %v4307, %v4301
        %v4316 = vmul.f32 %v4308, %v4298
        %v4317 = vmul.f32 %v4309, %v4302
        %v4318 = vmul.f32 %v4310, %v4299
        %v4319 = vmul.f32 %v4311, %v4303
        %v4320 = vmul.f32 %v4312, %v4300
        %v4321 = vmul.f32 %v4313, %v4304
        %v4322 = vadd.f32 %v4272, %v4314
        %v4323 = vadd.f32 %v4273, %v4315
        %v4324 = vadd.f32 %v4274, %v4316
        %v4325 = vadd.f32 %v4275, %v4317
        %v4326 = vadd.f32 %v4276, %v4318
        %v4327 = vadd.f32 %v4277, %v4319
        %v4328 = vadd.f32 %v4278, %v4320
        %v4329 = vadd.f32 %v4279, %v4321
        %4330 = vrot.lane.b32.xlu0 %v2528, 119
        %v4331 = vpop.permute.xlu0 %4330
        %4332 = vrot.lane.b32.xlu0 %v2530, 119
        %v4333 = vpop.permute.xlu0 %4332
        %4334 = vrot.lane.b32.xlu0 %v2532, 119
        %v4335 = vpop.permute.xlu0 %4334
        %4336 = vrot.lane.b32.xlu0 %v2534, 119
        %v4337 = vpop.permute.xlu0 %4336
        %4338 = vrot.lane.b32.xlu0 %v2529, 119
        %v4339 = vpop.permute.xlu0 %4338
        %4340 = vrot.lane.b32.xlu0 %v2531, 119
        %v4341 = vpop.permute.xlu0 %4340
        %4342 = vrot.lane.b32.xlu0 %v2533, 119
        %v4343 = vpop.permute.xlu0 %4342
        %4344 = vrot.lane.b32.xlu0 %v2535, 119
        %v4345 = vpop.permute.xlu0 %4344
        %vm4346 = vcmp.lt.s32.totalorder %v958, 119
        %v4347 = vsel %vm4346, %v4331, %v4339
        %v4348 = vsel %vm4346, %v4333, %v4341
        %v4349 = vsel %vm4346, %v4335, %v4343
        %v4350 = vsel %vm4346, %v4337, %v4345
        %v4351 = vsel %vm4346, %v4339, %v4331
        %v4352 = vsel %vm4346, %v4341, %v4333
        %v4353 = vsel %vm4346, %v4343, %v4335
        %v4354 = vsel %vm4346, %v4345, %v4337
        %s4355 = scalar_lea.vmem [#allocation15], 1216
        %v4356 = vld [vmem:[%s4355] sm:$0xff]
        %v4357 = vld [vmem:[%s4355 + $0x8] sm:$0xff]
        %v4358 = vld [vmem:[%s4355 + $0x10] sm:$0xff]
        %v4359 = vld [vmem:[%s4355 + $0x18] sm:$0xff]
        %v4360 = vld [vmem:[%s4355 + $0x20] sm:$0xff]
        %v4361 = vld [vmem:[%s4355 + $0x28] sm:$0xff]
        %v4362 = vld [vmem:[%s4355 + $0x30] sm:$0xff]
        %v4363 = vld [vmem:[%s4355 + $0x38] sm:$0xff]
        %v4364 = vmul.f32 %v4356, %v4347
        %v4365 = vmul.f32 %v4357, %v4351
        %v4366 = vmul.f32 %v4358, %v4348
        %v4367 = vmul.f32 %v4359, %v4352
        %v4368 = vmul.f32 %v4360, %v4349
        %v4369 = vmul.f32 %v4361, %v4353
        %v4370 = vmul.f32 %v4362, %v4350
        %v4371 = vmul.f32 %v4363, %v4354
        %v4372 = vadd.f32 %v4322, %v4364
        %v4373 = vadd.f32 %v4323, %v4365
        %v4374 = vadd.f32 %v4324, %v4366
        %v4375 = vadd.f32 %v4325, %v4367
        %v4376 = vadd.f32 %v4326, %v4368
        %v4377 = vadd.f32 %v4327, %v4369
        %v4378 = vadd.f32 %v4328, %v4370
        %v4379 = vadd.f32 %v4329, %v4371
        %4380 = vrot.lane.b32.xlu0 %v2528, 118
        %v4381 = vpop.permute.xlu0 %4380
        %4382 = vrot.lane.b32.xlu0 %v2530, 118
        %v4383 = vpop.permute.xlu0 %4382
        %4384 = vrot.lane.b32.xlu0 %v2532, 118
        %v4385 = vpop.permute.xlu0 %4384
        %4386 = vrot.lane.b32.xlu0 %v2534, 118
        %v4387 = vpop.permute.xlu0 %4386
        %4388 = vrot.lane.b32.xlu0 %v2529, 118
        %v4389 = vpop.permute.xlu0 %4388
        %4390 = vrot.lane.b32.xlu0 %v2531, 118
        %v4391 = vpop.permute.xlu0 %4390
        %4392 = vrot.lane.b32.xlu0 %v2533, 118
        %v4393 = vpop.permute.xlu0 %4392
        %4394 = vrot.lane.b32.xlu0 %v2535, 118
        %v4395 = vpop.permute.xlu0 %4394
        %vm4396 = vcmp.lt.s32.totalorder %v958, 118
        %v4397 = vsel %vm4396, %v4381, %v4389
        %v4398 = vsel %vm4396, %v4383, %v4391
        %v4399 = vsel %vm4396, %v4385, %v4393
        %v4400 = vsel %vm4396, %v4387, %v4395
        %v4401 = vsel %vm4396, %v4389, %v4381
        %v4402 = vsel %vm4396, %v4391, %v4383
        %v4403 = vsel %vm4396, %v4393, %v4385
        %v4404 = vsel %vm4396, %v4395, %v4387
        %s4405 = scalar_lea.vmem [#allocation15], 1280
        %v4406 = vld [vmem:[%s4405] sm:$0xff]
        %v4407 = vld [vmem:[%s4405 + $0x8] sm:$0xff]
        %v4408 = vld [vmem:[%s4405 + $0x10] sm:$0xff]
        %v4409 = vld [vmem:[%s4405 + $0x18] sm:$0xff]
        %v4410 = vld [vmem:[%s4405 + $0x20] sm:$0xff]
        %v4411 = vld [vmem:[%s4405 + $0x28] sm:$0xff]
        %v4412 = vld [vmem:[%s4405 + $0x30] sm:$0xff]
        %v4413 = vld [vmem:[%s4405 + $0x38] sm:$0xff]
        %v4414 = vmul.f32 %v4406, %v4397
        %v4415 = vmul.f32 %v4407, %v4401
        %v4416 = vmul.f32 %v4408, %v4398
        %v4417 = vmul.f32 %v4409, %v4402
        %v4418 = vmul.f32 %v4410, %v4399
        %v4419 = vmul.f32 %v4411, %v4403
        %v4420 = vmul.f32 %v4412, %v4400
        %v4421 = vmul.f32 %v4413, %v4404
        %v4422 = vadd.f32 %v4372, %v4414
        %v4423 = vadd.f32 %v4373, %v4415
        %v4424 = vadd.f32 %v4374, %v4416
        %v4425 = vadd.f32 %v4375, %v4417
        %v4426 = vadd.f32 %v4376, %v4418
        %v4427 = vadd.f32 %v4377, %v4419
        %v4428 = vadd.f32 %v4378, %v4420
        %v4429 = vadd.f32 %v4379, %v4421
        %v4430 = vld [vmem:[%s4] sm:$0xff]
        %v4431 = vld [vmem:[%s4 + $0x8] sm:$0xff]
        %v4432 = vld [vmem:[%s4 + $0x10] sm:$0xff]
        %v4433 = vld [vmem:[%s4 + $0x18] sm:$0xff]
        %v4434 = vld [vmem:[%s4 + $0x20] sm:$0xff]
        %v4435 = vld [vmem:[%s4 + $0x28] sm:$0xff]
        %v4436 = vld [vmem:[%s4 + $0x30] sm:$0xff]
        %v4437 = vld [vmem:[%s4 + $0x38] sm:$0xff]
        %v4438 = vadd.f32 %v4422, %v4430
        %v4439 = vadd.f32 %v4423, %v4431
        %v4440 = vadd.f32 %v4424, %v4432
        %v4441 = vadd.f32 %v4425, %v4433
        %v4442 = vadd.f32 %v4426, %v4434
        %v4443 = vadd.f32 %v4427, %v4435
        %v4444 = vadd.f32 %v4428, %v4436
        %v4445 = vadd.f32 %v4429, %v4437
        %4446 = vrot.lane.b32.xlu0 %v1359, 34
        %v4447 = vpop.permute.xlu0 %4446
        %4448 = vrot.lane.b32.xlu0 %v1361, 34
        %v4449 = vpop.permute.xlu0 %4448
        %4450 = vrot.lane.b32.xlu0 %v1363, 34
        %v4451 = vpop.permute.xlu0 %4450
        %4452 = vrot.lane.b32.xlu0 %v1365, 34
        %v4453 = vpop.permute.xlu0 %4452
        %4454 = vrot.lane.b32.xlu0 %v1360, 34
        %v4455 = vpop.permute.xlu0 %4454
        %4456 = vrot.lane.b32.xlu0 %v1362, 34
        %v4457 = vpop.permute.xlu0 %4456
        %4458 = vrot.lane.b32.xlu0 %v1364, 34
        %v4459 = vpop.permute.xlu0 %4458
        %4460 = vrot.lane.b32.xlu0 %v1366, 34
        %v4461 = vpop.permute.xlu0 %4460
        %vm4462 = vcmp.lt.s32.totalorder %v958, 34
        %v4463 = vsel %vm4462, %v4447, %v4455
        %v4464 = vsel %vm4462, %v4449, %v4457
        %v4465 = vsel %vm4462, %v4451, %v4459
        %v4466 = vsel %vm4462, %v4453, %v4461
        %v4467 = vsel %vm4462, %v4455, %v4447
        %v4468 = vsel %vm4462, %v4457, %v4449
        %v4469 = vsel %vm4462, %v4459, %v4451
        %v4470 = vsel %vm4462, %v4461, %v4453
        %v4471 = vld [vmem:[#allocation4] sm:$0xff]
        %v4472 = vld [vmem:[#allocation4 + $0x8] sm:$0xff]
        %v4473 = vld [vmem:[#allocation4 + $0x10] sm:$0xff]
        %v4474 = vld [vmem:[#allocation4 + $0x18] sm:$0xff]
        %v4475 = vld [vmem:[#allocation4 + $0x20] sm:$0xff]
        %v4476 = vld [vmem:[#allocation4 + $0x28] sm:$0xff]
        %v4477 = vld [vmem:[#allocation4 + $0x30] sm:$0xff]
        %v4478 = vld [vmem:[#allocation4 + $0x38] sm:$0xff]
        %v4479 = vmul.f32 %v4471, %v4467
        %v4480 = vmul.f32 %v4472, %v4463
        %v4481 = vmul.f32 %v4473, %v4468
        %v4482 = vmul.f32 %v4474, %v4464
        %v4483 = vmul.f32 %v4475, %v4469
        %v4484 = vmul.f32 %v4476, %v4465
        %v4485 = vmul.f32 %v4477, %v4470
        %v4486 = vmul.f32 %v4478, %v4466
        %v4487 = vadd.f32 %v4438, %v4479
        %v4488 = vadd.f32 %v4439, %v4480
        %v4489 = vadd.f32 %v4440, %v4481
        %v4490 = vadd.f32 %v4441, %v4482
        %v4491 = vadd.f32 %v4442, %v4483
        %v4492 = vadd.f32 %v4443, %v4484
        %v4493 = vadd.f32 %v4444, %v4485
        %v4494 = vadd.f32 %v4445, %v4486
        %4495 = vrot.lane.b32.xlu0 %v1359, 33
        %v4496 = vpop.permute.xlu0 %4495
        %4497 = vrot.lane.b32.xlu0 %v1361, 33
        %v4498 = vpop.permute.xlu0 %4497
        %4499 = vrot.lane.b32.xlu0 %v1363, 33
        %v4500 = vpop.permute.xlu0 %4499
        %4501 = vrot.lane.b32.xlu0 %v1365, 33
        %v4502 = vpop.permute.xlu0 %4501
        %4503 = vrot.lane.b32.xlu0 %v1360, 33
        %v4504 = vpop.permute.xlu0 %4503
        %4505 = vrot.lane.b32.xlu0 %v1362, 33
        %v4506 = vpop.permute.xlu0 %4505
        %4507 = vrot.lane.b32.xlu0 %v1364, 33
        %v4508 = vpop.permute.xlu0 %4507
        %4509 = vrot.lane.b32.xlu0 %v1366, 33
        %v4510 = vpop.permute.xlu0 %4509
        %vm4511 = vcmp.lt.s32.totalorder %v958, 33
        %v4512 = vsel %vm4511, %v4496, %v4504
        %v4513 = vsel %vm4511, %v4498, %v4506
        %v4514 = vsel %vm4511, %v4500, %v4508
        %v4515 = vsel %vm4511, %v4502, %v4510
        %v4516 = vsel %vm4511, %v4504, %v4496
        %v4517 = vsel %vm4511, %v4506, %v4498
        %v4518 = vsel %vm4511, %v4508, %v4500
        %v4519 = vsel %vm4511, %v4510, %v4502
        %s4520 = scalar_lea.vmem [#allocation4], 64
        %v4521 = vld [vmem:[%s4520] sm:$0xff]
        %v4522 = vld [vmem:[%s4520 + $0x8] sm:$0xff]
        %v4523 = vld [vmem:[%s4520 + $0x10] sm:$0xff]
        %v4524 = vld [vmem:[%s4520 + $0x18] sm:$0xff]
        %v4525 = vld [vmem:[%s4520 + $0x20] sm:$0xff]
        %v4526 = vld [vmem:[%s4520 + $0x28] sm:$0xff]
        %v4527 = vld [vmem:[%s4520 + $0x30] sm:$0xff]
        %v4528 = vld [vmem:[%s4520 + $0x38] sm:$0xff]
        %v4529 = vmul.f32 %v4521, %v4516
        %v4530 = vmul.f32 %v4522, %v4512
        %v4531 = vmul.f32 %v4523, %v4517
        %v4532 = vmul.f32 %v4524, %v4513
        %v4533 = vmul.f32 %v4525, %v4518
        %v4534 = vmul.f32 %v4526, %v4514
        %v4535 = vmul.f32 %v4527, %v4519
        %v4536 = vmul.f32 %v4528, %v4515
        %v4537 = vadd.f32 %v4487, %v4529
        %v4538 = vadd.f32 %v4488, %v4530
        %v4539 = vadd.f32 %v4489, %v4531
        %v4540 = vadd.f32 %v4490, %v4532
        %v4541 = vadd.f32 %v4491, %v4533
        %v4542 = vadd.f32 %v4492, %v4534
        %v4543 = vadd.f32 %v4493, %v4535
        %v4544 = vadd.f32 %v4494, %v4536
        %s4545 = scalar_lea.vmem [#allocation4], 128
        %v4546 = vld [vmem:[%s4545] sm:$0xff]
        %v4547 = vld [vmem:[%s4545 + $0x8] sm:$0xff]
        %v4548 = vld [vmem:[%s4545 + $0x10] sm:$0xff]
        %v4549 = vld [vmem:[%s4545 + $0x18] sm:$0xff]
        %v4550 = vld [vmem:[%s4545 + $0x20] sm:$0xff]
        %v4551 = vld [vmem:[%s4545 + $0x28] sm:$0xff]
        %v4552 = vld [vmem:[%s4545 + $0x30] sm:$0xff]
        %v4553 = vld [vmem:[%s4545 + $0x38] sm:$0xff]
        %v4554 = vmul.f32 %v4546, %v1412
        %v4555 = vmul.f32 %v4547, %v1408
        %v4556 = vmul.f32 %v4548, %v1413
        %v4557 = vmul.f32 %v4549, %v1409
        %v4558 = vmul.f32 %v4550, %v1414
        %v4559 = vmul.f32 %v4551, %v1410
        %v4560 = vmul.f32 %v4552, %v1415
        %v4561 = vmul.f32 %v4553, %v1411
        %v4562 = vadd.f32 %v4537, %v4554
        %v4563 = vadd.f32 %v4538, %v4555
        %v4564 = vadd.f32 %v4539, %v4556
        %v4565 = vadd.f32 %v4540, %v4557
        %v4566 = vadd.f32 %v4541, %v4558
        %v4567 = vadd.f32 %v4542, %v4559
        %v4568 = vadd.f32 %v4543, %v4560
        %v4569 = vadd.f32 %v4544, %v4561
        %4570 = vrot.lane.b32.xlu0 %v1359, 31
        %v4571 = vpop.permute.xlu0 %4570
        %4572 = vrot.lane.b32.xlu0 %v1361, 31
        %v4573 = vpop.permute.xlu0 %4572
        %4574 = vrot.lane.b32.xlu0 %v1363, 31
        %v4575 = vpop.permute.xlu0 %4574
        %4576 = vrot.lane.b32.xlu0 %v1365, 31
        %v4577 = vpop.permute.xlu0 %4576
        %4578 = vrot.lane.b32.xlu0 %v1360, 31
        %v4579 = vpop.permute.xlu0 %4578
        %4580 = vrot.lane.b32.xlu0 %v1362, 31
        %v4581 = vpop.permute.xlu0 %4580
        %4582 = vrot.lane.b32.xlu0 %v1364, 31
        %v4583 = vpop.permute.xlu0 %4582
        %4584 = vrot.lane.b32.xlu0 %v1366, 31
        %v4585 = vpop.permute.xlu0 %4584
        %vm4586 = vcmp.lt.s32.totalorder %v958, 31
        %v4587 = vsel %vm4586, %v4571, %v4579
        %v4588 = vsel %vm4586, %v4573, %v4581
        %v4589 = vsel %vm4586, %v4575, %v4583
        %v4590 = vsel %vm4586, %v4577, %v4585
        %v4591 = vsel %vm4586, %v4579, %v4571
        %v4592 = vsel %vm4586, %v4581, %v4573
        %v4593 = vsel %vm4586, %v4583, %v4575
        %v4594 = vsel %vm4586, %v4585, %v4577
        %s4595 = scalar_lea.vmem [#allocation4], 192
        %v4596 = vld [vmem:[%s4595] sm:$0xff]
        %v4597 = vld [vmem:[%s4595 + $0x8] sm:$0xff]
        %v4598 = vld [vmem:[%s4595 + $0x10] sm:$0xff]
        %v4599 = vld [vmem:[%s4595 + $0x18] sm:$0xff]
        %v4600 = vld [vmem:[%s4595 + $0x20] sm:$0xff]
        %v4601 = vld [vmem:[%s4595 + $0x28] sm:$0xff]
        %v4602 = vld [vmem:[%s4595 + $0x30] sm:$0xff]
        %v4603 = vld [vmem:[%s4595 + $0x38] sm:$0xff]
        %v4604 = vmul.f32 %v4596, %v4591
        %v4605 = vmul.f32 %v4597, %v4587
        %v4606 = vmul.f32 %v4598, %v4592
        %v4607 = vmul.f32 %v4599, %v4588
        %v4608 = vmul.f32 %v4600, %v4593
        %v4609 = vmul.f32 %v4601, %v4589
        %v4610 = vmul.f32 %v4602, %v4594
        %v4611 = vmul.f32 %v4603, %v4590
        %v4612 = vadd.f32 %v4562, %v4604
        %v4613 = vadd.f32 %v4563, %v4605
        %v4614 = vadd.f32 %v4564, %v4606
        %v4615 = vadd.f32 %v4565, %v4607
        %v4616 = vadd.f32 %v4566, %v4608
        %v4617 = vadd.f32 %v4567, %v4609
        %v4618 = vadd.f32 %v4568, %v4610
        %v4619 = vadd.f32 %v4569, %v4611
        %4620 = vrot.lane.b32.xlu0 %v1359, 30
        %v4621 = vpop.permute.xlu0 %4620
        %4622 = vrot.lane.b32.xlu0 %v1361, 30
        %v4623 = vpop.permute.xlu0 %4622
        %4624 = vrot.lane.b32.xlu0 %v1363, 30
        %v4625 = vpop.permute.xlu0 %4624
        %4626 = vrot.lane.b32.xlu0 %v1365, 30
        %v4627 = vpop.permute.xlu0 %4626
        %4628 = vrot.lane.b32.xlu0 %v1360, 30
        %v4629 = vpop.permute.xlu0 %4628
        %4630 = vrot.lane.b32.xlu0 %v1362, 30
        %v4631 = vpop.permute.xlu0 %4630
        %4632 = vrot.lane.b32.xlu0 %v1364, 30
        %v4633 = vpop.permute.xlu0 %4632
        %4634 = vrot.lane.b32.xlu0 %v1366, 30
        %v4635 = vpop.permute.xlu0 %4634
        %vm4636 = vcmp.lt.s32.totalorder %v958, 30
        %v4637 = vsel %vm4636, %v4621, %v4629
        %v4638 = vsel %vm4636, %v4623, %v4631
        %v4639 = vsel %vm4636, %v4625, %v4633
        %v4640 = vsel %vm4636, %v4627, %v4635
        %v4641 = vsel %vm4636, %v4629, %v4621
        %v4642 = vsel %vm4636, %v4631, %v4623
        %v4643 = vsel %vm4636, %v4633, %v4625
        %v4644 = vsel %vm4636, %v4635, %v4627
        %s4645 = scalar_lea.vmem [#allocation4], 256
        %v4646 = vld [vmem:[%s4645] sm:$0xff]
        %v4647 = vld [vmem:[%s4645 + $0x8] sm:$0xff]
        %v4648 = vld [vmem:[%s4645 + $0x10] sm:$0xff]
        %v4649 = vld [vmem:[%s4645 + $0x18] sm:$0xff]
        %v4650 = vld [vmem:[%s4645 + $0x20] sm:$0xff]
        %v4651 = vld [vmem:[%s4645 + $0x28] sm:$0xff]
        %v4652 = vld [vmem:[%s4645 + $0x30] sm:$0xff]
        %v4653 = vld [vmem:[%s4645 + $0x38] sm:$0xff]
        %v4654 = vmul.f32 %v4646, %v4641
        %v4655 = vmul.f32 %v4647, %v4637
        %v4656 = vmul.f32 %v4648, %v4642
        %v4657 = vmul.f32 %v4649, %v4638
        %v4658 = vmul.f32 %v4650, %v4643
        %v4659 = vmul.f32 %v4651, %v4639
        %v4660 = vmul.f32 %v4652, %v4644
        %v4661 = vmul.f32 %v4653, %v4640
        %v4662 = vadd.f32 %v4612, %v4654
        %v4663 = vadd.f32 %v4613, %v4655
        %v4664 = vadd.f32 %v4614, %v4656
        %v4665 = vadd.f32 %v4615, %v4657
        %v4666 = vadd.f32 %v4616, %v4658
        %v4667 = vadd.f32 %v4617, %v4659
        %v4668 = vadd.f32 %v4618, %v4660
        %v4669 = vadd.f32 %v4619, %v4661
        %4670 = vrot.lane.b32.xlu0 %v1359, 18
        %v4671 = vpop.permute.xlu0 %4670
        %4672 = vrot.lane.b32.xlu0 %v1361, 18
        %v4673 = vpop.permute.xlu0 %4672
        %4674 = vrot.lane.b32.xlu0 %v1363, 18
        %v4675 = vpop.permute.xlu0 %4674
        %4676 = vrot.lane.b32.xlu0 %v1365, 18
        %v4677 = vpop.permute.xlu0 %4676
        %4678 = vrot.lane.b32.xlu0 %v1360, 18
        %v4679 = vpop.permute.xlu0 %4678
        %4680 = vrot.lane.b32.xlu0 %v1362, 18
        %v4681 = vpop.permute.xlu0 %4680
        %4682 = vrot.lane.b32.xlu0 %v1364, 18
        %v4683 = vpop.permute.xlu0 %4682
        %4684 = vrot.lane.b32.xlu0 %v1366, 18
        %v4685 = vpop.permute.xlu0 %4684
        %vm4686 = vcmp.lt.s32.totalorder %v958, 18
        %v4687 = vsel %vm4686, %v4671, %v4679
        %v4688 = vsel %vm4686, %v4673, %v4681
        %v4689 = vsel %vm4686, %v4675, %v4683
        %v4690 = vsel %vm4686, %v4677, %v4685
        %v4691 = vsel %vm4686, %v4679, %v4671
        %v4692 = vsel %vm4686, %v4681, %v4673
        %v4693 = vsel %vm4686, %v4683, %v4675
        %v4694 = vsel %vm4686, %v4685, %v4677
        %s4695 = scalar_lea.vmem [#allocation4], 320
        %v4696 = vld [vmem:[%s4695] sm:$0xff]
        %v4697 = vld [vmem:[%s4695 + $0x8] sm:$0xff]
        %v4698 = vld [vmem:[%s4695 + $0x10] sm:$0xff]
        %v4699 = vld [vmem:[%s4695 + $0x18] sm:$0xff]
        %v4700 = vld [vmem:[%s4695 + $0x20] sm:$0xff]
        %v4701 = vld [vmem:[%s4695 + $0x28] sm:$0xff]
        %v4702 = vld [vmem:[%s4695 + $0x30] sm:$0xff]
        %v4703 = vld [vmem:[%s4695 + $0x38] sm:$0xff]
        %v4704 = vmul.f32 %v4696, %v4691
        %v4705 = vmul.f32 %v4697, %v4687
        %v4706 = vmul.f32 %v4698, %v4692
        %v4707 = vmul.f32 %v4699, %v4688
        %v4708 = vmul.f32 %v4700, %v4693
        %v4709 = vmul.f32 %v4701, %v4689
        %v4710 = vmul.f32 %v4702, %v4694
        %v4711 = vmul.f32 %v4703, %v4690
        %v4712 = vadd.f32 %v4662, %v4704
        %v4713 = vadd.f32 %v4663, %v4705
        %v4714 = vadd.f32 %v4664, %v4706
        %v4715 = vadd.f32 %v4665, %v4707
        %v4716 = vadd.f32 %v4666, %v4708
        %v4717 = vadd.f32 %v4667, %v4709
        %v4718 = vadd.f32 %v4668, %v4710
        %v4719 = vadd.f32 %v4669, %v4711
        %4720 = vrot.lane.b32.xlu0 %v1359, 17
        %v4721 = vpop.permute.xlu0 %4720
        %4722 = vrot.lane.b32.xlu0 %v1361, 17
        %v4723 = vpop.permute.xlu0 %4722
        %4724 = vrot.lane.b32.xlu0 %v1363, 17
        %v4725 = vpop.permute.xlu0 %4724
        %4726 = vrot.lane.b32.xlu0 %v1365, 17
        %v4727 = vpop.permute.xlu0 %4726
        %4728 = vrot.lane.b32.xlu0 %v1360, 17
        %v4729 = vpop.permute.xlu0 %4728
        %4730 = vrot.lane.b32.xlu0 %v1362, 17
        %v4731 = vpop.permute.xlu0 %4730
        %4732 = vrot.lane.b32.xlu0 %v1364, 17
        %v4733 = vpop.permute.xlu0 %4732
        %4734 = vrot.lane.b32.xlu0 %v1366, 17
        %v4735 = vpop.permute.xlu0 %4734
        %v4736 = vsel %vm959, %v4721, %v4729
        %v4737 = vsel %vm959, %v4723, %v4731
        %v4738 = vsel %vm959, %v4725, %v4733
        %v4739 = vsel %vm959, %v4727, %v4735
        %v4740 = vsel %vm959, %v4729, %v4721
        %v4741 = vsel %vm959, %v4731, %v4723
        %v4742 = vsel %vm959, %v4733, %v4725
        %v4743 = vsel %vm959, %v4735, %v4727
        %s4744 = scalar_lea.vmem [#allocation4], 384
        %v4745 = vld [vmem:[%s4744] sm:$0xff]
        %v4746 = vld [vmem:[%s4744 + $0x8] sm:$0xff]
        %v4747 = vld [vmem:[%s4744 + $0x10] sm:$0xff]
        %v4748 = vld [vmem:[%s4744 + $0x18] sm:$0xff]
        %v4749 = vld [vmem:[%s4744 + $0x20] sm:$0xff]
        %v4750 = vld [vmem:[%s4744 + $0x28] sm:$0xff]
        %v4751 = vld [vmem:[%s4744 + $0x30] sm:$0xff]
        %v4752 = vld [vmem:[%s4744 + $0x38] sm:$0xff]
        %v4753 = vmul.f32 %v4745, %v4740
        %v4754 = vmul.f32 %v4746, %v4736
        %v4755 = vmul.f32 %v4747, %v4741
        %v4756 = vmul.f32 %v4748, %v4737
        %v4757 = vmul.f32 %v4749, %v4742
        %v4758 = vmul.f32 %v4750, %v4738
        %v4759 = vmul.f32 %v4751, %v4743
        %v4760 = vmul.f32 %v4752, %v4739
        %v4761 = vadd.f32 %v4712, %v4753
        %v4762 = vadd.f32 %v4713, %v4754
        %v4763 = vadd.f32 %v4714, %v4755
        %v4764 = vadd.f32 %v4715, %v4756
        %v4765 = vadd.f32 %v4716, %v4757
        %v4766 = vadd.f32 %v4717, %v4758
        %v4767 = vadd.f32 %v4718, %v4759
        %v4768 = vadd.f32 %v4719, %v4760
        %s4769 = scalar_lea.vmem [#allocation4], 448
        %v4770 = vld [vmem:[%s4769] sm:$0xff]
        %v4771 = vld [vmem:[%s4769 + $0x8] sm:$0xff]
        %v4772 = vld [vmem:[%s4769 + $0x10] sm:$0xff]
        %v4773 = vld [vmem:[%s4769 + $0x18] sm:$0xff]
        %v4774 = vld [vmem:[%s4769 + $0x20] sm:$0xff]
        %v4775 = vld [vmem:[%s4769 + $0x28] sm:$0xff]
        %v4776 = vld [vmem:[%s4769 + $0x30] sm:$0xff]
        %v4777 = vld [vmem:[%s4769 + $0x38] sm:$0xff]
        %v4778 = vmul.f32 %v4770, %v1460
        %v4779 = vmul.f32 %v4771, %v1456
        %v4780 = vmul.f32 %v4772, %v1461
        %v4781 = vmul.f32 %v4773, %v1457
        %v4782 = vmul.f32 %v4774, %v1462
        %v4783 = vmul.f32 %v4775, %v1458
        %v4784 = vmul.f32 %v4776, %v1463
        %v4785 = vmul.f32 %v4777, %v1459
        %v4786 = vadd.f32 %v4761, %v4778
        %v4787 = vadd.f32 %v4762, %v4779
        %v4788 = vadd.f32 %v4763, %v4780
        %v4789 = vadd.f32 %v4764, %v4781
        %v4790 = vadd.f32 %v4765, %v4782
        %v4791 = vadd.f32 %v4766, %v4783
        %v4792 = vadd.f32 %v4767, %v4784
        %v4793 = vadd.f32 %v4768, %v4785
        %4794 = vrot.lane.b32.xlu0 %v1359, 15
        %v4795 = vpop.permute.xlu0 %4794
        %4796 = vrot.lane.b32.xlu0 %v1361, 15
        %v4797 = vpop.permute.xlu0 %4796
        %4798 = vrot.lane.b32.xlu0 %v1363, 15
        %v4799 = vpop.permute.xlu0 %4798
        %4800 = vrot.lane.b32.xlu0 %v1365, 15
        %v4801 = vpop.permute.xlu0 %4800
        %4802 = vrot.lane.b32.xlu0 %v1360, 15
        %v4803 = vpop.permute.xlu0 %4802
        %4804 = vrot.lane.b32.xlu0 %v1362, 15
        %v4805 = vpop.permute.xlu0 %4804
        %4806 = vrot.lane.b32.xlu0 %v1364, 15
        %v4807 = vpop.permute.xlu0 %4806
        %4808 = vrot.lane.b32.xlu0 %v1366, 15
        %v4809 = vpop.permute.xlu0 %4808
        %v4810 = vsel %vm1058, %v4795, %v4803
        %v4811 = vsel %vm1058, %v4797, %v4805
        %v4812 = vsel %vm1058, %v4799, %v4807
        %v4813 = vsel %vm1058, %v4801, %v4809
        %v4814 = vsel %vm1058, %v4803, %v4795
        %v4815 = vsel %vm1058, %v4805, %v4797
        %v4816 = vsel %vm1058, %v4807, %v4799
        %v4817 = vsel %vm1058, %v4809, %v4801
        %s4818 = scalar_lea.vmem [#allocation4], 512
        %v4819 = vld [vmem:[%s4818] sm:$0xff]
        %v4820 = vld [vmem:[%s4818 + $0x8] sm:$0xff]
        %v4821 = vld [vmem:[%s4818 + $0x10] sm:$0xff]
        %v4822 = vld [vmem:[%s4818 + $0x18] sm:$0xff]
        %v4823 = vld [vmem:[%s4818 + $0x20] sm:$0xff]
        %v4824 = vld [vmem:[%s4818 + $0x28] sm:$0xff]
        %v4825 = vld [vmem:[%s4818 + $0x30] sm:$0xff]
        %v4826 = vld [vmem:[%s4818 + $0x38] sm:$0xff]
        %v4827 = vmul.f32 %v4819, %v4814
        %v4828 = vmul.f32 %v4820, %v4810
        %v4829 = vmul.f32 %v4821, %v4815
        %v4830 = vmul.f32 %v4822, %v4811
        %v4831 = vmul.f32 %v4823, %v4816
        %v4832 = vmul.f32 %v4824, %v4812
        %v4833 = vmul.f32 %v4825, %v4817
        %v4834 = vmul.f32 %v4826, %v4813
        %v4835 = vadd.f32 %v4786, %v4827
        %v4836 = vadd.f32 %v4787, %v4828
        %v4837 = vadd.f32 %v4788, %v4829
        %v4838 = vadd.f32 %v4789, %v4830
        %v4839 = vadd.f32 %v4790, %v4831
        %v4840 = vadd.f32 %v4791, %v4832
        %v4841 = vadd.f32 %v4792, %v4833
        %v4842 = vadd.f32 %v4793, %v4834
        %4843 = vrot.lane.b32.xlu0 %v1359, 14
        %v4844 = vpop.permute.xlu0 %4843
        %4845 = vrot.lane.b32.xlu0 %v1361, 14
        %v4846 = vpop.permute.xlu0 %4845
        %4847 = vrot.lane.b32.xlu0 %v1363, 14
        %v4848 = vpop.permute.xlu0 %4847
        %4849 = vrot.lane.b32.xlu0 %v1365, 14
        %v4850 = vpop.permute.xlu0 %4849
        %4851 = vrot.lane.b32.xlu0 %v1360, 14
        %v4852 = vpop.permute.xlu0 %4851
        %4853 = vrot.lane.b32.xlu0 %v1362, 14
        %v4854 = vpop.permute.xlu0 %4853
        %4855 = vrot.lane.b32.xlu0 %v1364, 14
        %v4856 = vpop.permute.xlu0 %4855
        %4857 = vrot.lane.b32.xlu0 %v1366, 14
        %v4858 = vpop.permute.xlu0 %4857
        %vm4859 = vcmp.lt.s32.totalorder %v958, 14
        %v4860 = vsel %vm4859, %v4844, %v4852
        %v4861 = vsel %vm4859, %v4846, %v4854
        %v4862 = vsel %vm4859, %v4848, %v4856
        %v4863 = vsel %vm4859, %v4850, %v4858
        %v4864 = vsel %vm4859, %v4852, %v4844
        %v4865 = vsel %vm4859, %v4854, %v4846
        %v4866 = vsel %vm4859, %v4856, %v4848
        %v4867 = vsel %vm4859, %v4858, %v4850
        %s4868 = scalar_lea.vmem [#allocation4], 576
        %v4869 = vld [vmem:[%s4868] sm:$0xff]
        %v4870 = vld [vmem:[%s4868 + $0x8] sm:$0xff]
        %v4871 = vld [vmem:[%s4868 + $0x10] sm:$0xff]
        %v4872 = vld [vmem:[%s4868 + $0x18] sm:$0xff]
        %v4873 = vld [vmem:[%s4868 + $0x20] sm:$0xff]
        %v4874 = vld [vmem:[%s4868 + $0x28] sm:$0xff]
        %v4875 = vld [vmem:[%s4868 + $0x30] sm:$0xff]
        %v4876 = vld [vmem:[%s4868 + $0x38] sm:$0xff]
        %v4877 = vmul.f32 %v4869, %v4864
        %v4878 = vmul.f32 %v4870, %v4860
        %v4879 = vmul.f32 %v4871, %v4865
        %v4880 = vmul.f32 %v4872, %v4861
        %v4881 = vmul.f32 %v4873, %v4866
        %v4882 = vmul.f32 %v4874, %v4862
        %v4883 = vmul.f32 %v4875, %v4867
        %v4884 = vmul.f32 %v4876, %v4863
        %v4885 = vadd.f32 %v4835, %v4877
        %v4886 = vadd.f32 %v4836, %v4878
        %v4887 = vadd.f32 %v4837, %v4879
        %v4888 = vadd.f32 %v4838, %v4880
        %v4889 = vadd.f32 %v4839, %v4881
        %v4890 = vadd.f32 %v4840, %v4882
        %v4891 = vadd.f32 %v4841, %v4883
        %v4892 = vadd.f32 %v4842, %v4884
        %4893 = vrot.lane.b32.xlu0 %v1359, 2
        %v4894 = vpop.permute.xlu0 %4893
        %4895 = vrot.lane.b32.xlu0 %v1361, 2
        %v4896 = vpop.permute.xlu0 %4895
        %4897 = vrot.lane.b32.xlu0 %v1363, 2
        %v4898 = vpop.permute.xlu0 %4897
        %4899 = vrot.lane.b32.xlu0 %v1365, 2
        %v4900 = vpop.permute.xlu0 %4899
        %4901 = vrot.lane.b32.xlu0 %v1360, 2
        %v4902 = vpop.permute.xlu0 %4901
        %4903 = vrot.lane.b32.xlu0 %v1362, 2
        %v4904 = vpop.permute.xlu0 %4903
        %4905 = vrot.lane.b32.xlu0 %v1364, 2
        %v4906 = vpop.permute.xlu0 %4905
        %4907 = vrot.lane.b32.xlu0 %v1366, 2
        %v4908 = vpop.permute.xlu0 %4907
        %v4909 = vsel %vm2609, %v4894, %v4902
        %v4910 = vsel %vm2609, %v4896, %v4904
        %v4911 = vsel %vm2609, %v4898, %v4906
        %v4912 = vsel %vm2609, %v4900, %v4908
        %v4913 = vsel %vm2609, %v4902, %v4894
        %v4914 = vsel %vm2609, %v4904, %v4896
        %v4915 = vsel %vm2609, %v4906, %v4898
        %v4916 = vsel %vm2609, %v4908, %v4900
        %s4917 = scalar_lea.vmem [#allocation4], 640
        %v4918 = vld [vmem:[%s4917] sm:$0xff]
        %v4919 = vld [vmem:[%s4917 + $0x8] sm:$0xff]
        %v4920 = vld [vmem:[%s4917 + $0x10] sm:$0xff]
        %v4921 = vld [vmem:[%s4917 + $0x18] sm:$0xff]
        %v4922 = vld [vmem:[%s4917 + $0x20] sm:$0xff]
        %v4923 = vld [vmem:[%s4917 + $0x28] sm:$0xff]
        %v4924 = vld [vmem:[%s4917 + $0x30] sm:$0xff]
        %v4925 = vld [vmem:[%s4917 + $0x38] sm:$0xff]
        %v4926 = vmul.f32 %v4918, %v4913
        %v4927 = vmul.f32 %v4919, %v4909
        %v4928 = vmul.f32 %v4920, %v4914
        %v4929 = vmul.f32 %v4921, %v4910
        %v4930 = vmul.f32 %v4922, %v4915
        %v4931 = vmul.f32 %v4923, %v4911
        %v4932 = vmul.f32 %v4924, %v4916
        %v4933 = vmul.f32 %v4925, %v4912
        %v4934 = vadd.f32 %v4885, %v4926
        %v4935 = vadd.f32 %v4886, %v4927
        %v4936 = vadd.f32 %v4887, %v4928
        %v4937 = vadd.f32 %v4888, %v4929
        %v4938 = vadd.f32 %v4889, %v4930
        %v4939 = vadd.f32 %v4890, %v4931
        %v4940 = vadd.f32 %v4891, %v4932
        %v4941 = vadd.f32 %v4892, %v4933
        %4942 = vrot.lane.b32.xlu0 %v1359, 1
        %v4943 = vpop.permute.xlu0 %4942
        %4944 = vrot.lane.b32.xlu0 %v1361, 1
        %v4945 = vpop.permute.xlu0 %4944
        %4946 = vrot.lane.b32.xlu0 %v1363, 1
        %v4947 = vpop.permute.xlu0 %4946
        %4948 = vrot.lane.b32.xlu0 %v1365, 1
        %v4949 = vpop.permute.xlu0 %4948
        %4950 = vrot.lane.b32.xlu0 %v1360, 1
        %v4951 = vpop.permute.xlu0 %4950
        %4952 = vrot.lane.b32.xlu0 %v1362, 1
        %v4953 = vpop.permute.xlu0 %4952
        %4954 = vrot.lane.b32.xlu0 %v1364, 1
        %v4955 = vpop.permute.xlu0 %4954
        %4956 = vrot.lane.b32.xlu0 %v1366, 1
        %v4957 = vpop.permute.xlu0 %4956
        %v4958 = vsel %vm1108, %v4943, %v4951
        %v4959 = vsel %vm1108, %v4945, %v4953
        %v4960 = vsel %vm1108, %v4947, %v4955
        %v4961 = vsel %vm1108, %v4949, %v4957
        %v4962 = vsel %vm1108, %v4951, %v4943
        %v4963 = vsel %vm1108, %v4953, %v4945
        %v4964 = vsel %vm1108, %v4955, %v4947
        %v4965 = vsel %vm1108, %v4957, %v4949
        %s4966 = scalar_lea.vmem [#allocation4], 704
        %v4967 = vld [vmem:[%s4966] sm:$0xff]
        %v4968 = vld [vmem:[%s4966 + $0x8] sm:$0xff]
        %v4969 = vld [vmem:[%s4966 + $0x10] sm:$0xff]
        %v4970 = vld [vmem:[%s4966 + $0x18] sm:$0xff]
        %v4971 = vld [vmem:[%s4966 + $0x20] sm:$0xff]
        %v4972 = vld [vmem:[%s4966 + $0x28] sm:$0xff]
        %v4973 = vld [vmem:[%s4966 + $0x30] sm:$0xff]
        %v4974 = vld [vmem:[%s4966 + $0x38] sm:$0xff]
        %v4975 = vmul.f32 %v4967, %v4962
        %v4976 = vmul.f32 %v4968, %v4958
        %v4977 = vmul.f32 %v4969, %v4963
        %v4978 = vmul.f32 %v4970, %v4959
        %v4979 = vmul.f32 %v4971, %v4964
        %v4980 = vmul.f32 %v4972, %v4960
        %v4981 = vmul.f32 %v4973, %v4965
        %v4982 = vmul.f32 %v4974, %v4961
        %v4983 = vadd.f32 %v4934, %v4975
        %v4984 = vadd.f32 %v4935, %v4976
        %v4985 = vadd.f32 %v4936, %v4977
        %v4986 = vadd.f32 %v4937, %v4978
        %v4987 = vadd.f32 %v4938, %v4979
        %v4988 = vadd.f32 %v4939, %v4980
        %v4989 = vadd.f32 %v4940, %v4981
        %v4990 = vadd.f32 %v4941, %v4982
        %s4991 = scalar_lea.vmem [#allocation4], 768
        %v4992 = vld [vmem:[%s4991] sm:$0xff]
        %v4993 = vld [vmem:[%s4991 + $0x8] sm:$0xff]
        %v4994 = vld [vmem:[%s4991 + $0x10] sm:$0xff]
        %v4995 = vld [vmem:[%s4991 + $0x18] sm:$0xff]
        %v4996 = vld [vmem:[%s4991 + $0x20] sm:$0xff]
        %v4997 = vld [vmem:[%s4991 + $0x28] sm:$0xff]
        %v4998 = vld [vmem:[%s4991 + $0x30] sm:$0xff]
        %v4999 = vld [vmem:[%s4991 + $0x38] sm:$0xff]
        %v5000 = vmul.f32 %v4992, %v1359
        %v5001 = vmul.f32 %v4993, %v1360
        %v5002 = vmul.f32 %v4994, %v1361
        %v5003 = vmul.f32 %v4995, %v1362
        %v5004 = vmul.f32 %v4996, %v1363
        %v5005 = vmul.f32 %v4997, %v1364
        %v5006 = vmul.f32 %v4998, %v1365
        %v5007 = vmul.f32 %v4999, %v1366
        %v5008 = vadd.f32 %v4983, %v5000
        %v5009 = vadd.f32 %v4984, %v5001
        %v5010 = vadd.f32 %v4985, %v5002
        %v5011 = vadd.f32 %v4986, %v5003
        %v5012 = vadd.f32 %v4987, %v5004
        %v5013 = vadd.f32 %v4988, %v5005
        %v5014 = vadd.f32 %v4989, %v5006
        %v5015 = vadd.f32 %v4990, %v5007
        %5016 = vrot.lane.b32.xlu0 %v1359, 127
        %v5017 = vpop.permute.xlu0 %5016
        %5018 = vrot.lane.b32.xlu0 %v1361, 127
        %v5019 = vpop.permute.xlu0 %5018
        %5020 = vrot.lane.b32.xlu0 %v1363, 127
        %v5021 = vpop.permute.xlu0 %5020
        %5022 = vrot.lane.b32.xlu0 %v1365, 127
        %v5023 = vpop.permute.xlu0 %5022
        %5024 = vrot.lane.b32.xlu0 %v1360, 127
        %v5025 = vpop.permute.xlu0 %5024
        %5026 = vrot.lane.b32.xlu0 %v1362, 127
        %v5027 = vpop.permute.xlu0 %5026
        %5028 = vrot.lane.b32.xlu0 %v1364, 127
        %v5029 = vpop.permute.xlu0 %5028
        %5030 = vrot.lane.b32.xlu0 %v1366, 127
        %v5031 = vpop.permute.xlu0 %5030
        %v5032 = vsel %vm1183, %v5017, %v5025
        %v5033 = vsel %vm1183, %v5019, %v5027
        %v5034 = vsel %vm1183, %v5021, %v5029
        %v5035 = vsel %vm1183, %v5023, %v5031
        %v5036 = vsel %vm1183, %v5025, %v5017
        %v5037 = vsel %vm1183, %v5027, %v5019
        %v5038 = vsel %vm1183, %v5029, %v5021
        %v5039 = vsel %vm1183, %v5031, %v5023
        %s5040 = scalar_lea.vmem [#allocation4], 832
        %v5041 = vld [vmem:[%s5040] sm:$0xff]
        %v5042 = vld [vmem:[%s5040 + $0x8] sm:$0xff]
        %v5043 = vld [vmem:[%s5040 + $0x10] sm:$0xff]
        %v5044 = vld [vmem:[%s5040 + $0x18] sm:$0xff]
        %v5045 = vld [vmem:[%s5040 + $0x20] sm:$0xff]
        %v5046 = vld [vmem:[%s5040 + $0x28] sm:$0xff]
        %v5047 = vld [vmem:[%s5040 + $0x30] sm:$0xff]
        %v5048 = vld [vmem:[%s5040 + $0x38] sm:$0xff]
        %v5049 = vmul.f32 %v5041, %v5032
        %v5050 = vmul.f32 %v5042, %v5036
        %v5051 = vmul.f32 %v5043, %v5033
        %v5052 = vmul.f32 %v5044, %v5037
        %v5053 = vmul.f32 %v5045, %v5034
        %v5054 = vmul.f32 %v5046, %v5038
        %v5055 = vmul.f32 %v5047, %v5035
        %v5056 = vmul.f32 %v5048, %v5039
        %v5057 = vadd.f32 %v5008, %v5049
        %v5058 = vadd.f32 %v5009, %v5050
        %v5059 = vadd.f32 %v5010, %v5051
        %v5060 = vadd.f32 %v5011, %v5052
        %v5061 = vadd.f32 %v5012, %v5053
        %v5062 = vadd.f32 %v5013, %v5054
        %v5063 = vadd.f32 %v5014, %v5055
        %v5064 = vadd.f32 %v5015, %v5056
        %5065 = vrot.lane.b32.xlu0 %v1359, 126
        %v5066 = vpop.permute.xlu0 %5065
        %5067 = vrot.lane.b32.xlu0 %v1361, 126
        %v5068 = vpop.permute.xlu0 %5067
        %5069 = vrot.lane.b32.xlu0 %v1363, 126
        %v5070 = vpop.permute.xlu0 %5069
        %5071 = vrot.lane.b32.xlu0 %v1365, 126
        %v5072 = vpop.permute.xlu0 %5071
        %5073 = vrot.lane.b32.xlu0 %v1360, 126
        %v5074 = vpop.permute.xlu0 %5073
        %5075 = vrot.lane.b32.xlu0 %v1362, 126
        %v5076 = vpop.permute.xlu0 %5075
        %5077 = vrot.lane.b32.xlu0 %v1364, 126
        %v5078 = vpop.permute.xlu0 %5077
        %5079 = vrot.lane.b32.xlu0 %v1366, 126
        %v5080 = vpop.permute.xlu0 %5079
        %v5081 = vsel %vm2782, %v5066, %v5074
        %v5082 = vsel %vm2782, %v5068, %v5076
        %v5083 = vsel %vm2782, %v5070, %v5078
        %v5084 = vsel %vm2782, %v5072, %v5080
        %v5085 = vsel %vm2782, %v5074, %v5066
        %v5086 = vsel %vm2782, %v5076, %v5068
        %v5087 = vsel %vm2782, %v5078, %v5070
        %v5088 = vsel %vm2782, %v5080, %v5072
        %s5089 = scalar_lea.vmem [#allocation4], 896
        %v5090 = vld [vmem:[%s5089] sm:$0xff]
        %v5091 = vld [vmem:[%s5089 + $0x8] sm:$0xff]
        %v5092 = vld [vmem:[%s5089 + $0x10] sm:$0xff]
        %v5093 = vld [vmem:[%s5089 + $0x18] sm:$0xff]
        %v5094 = vld [vmem:[%s5089 + $0x20] sm:$0xff]
        %v5095 = vld [vmem:[%s5089 + $0x28] sm:$0xff]
        %v5096 = vld [vmem:[%s5089 + $0x30] sm:$0xff]
        %v5097 = vld [vmem:[%s5089 + $0x38] sm:$0xff]
        %v5098 = vmul.f32 %v5090, %v5081
        %v5099 = vmul.f32 %v5091, %v5085
        %v5100 = vmul.f32 %v5092, %v5082
        %v5101 = vmul.f32 %v5093, %v5086
        %v5102 = vmul.f32 %v5094, %v5083
        %v5103 = vmul.f32 %v5095, %v5087
        %v5104 = vmul.f32 %v5096, %v5084
        %v5105 = vmul.f32 %v5097, %v5088
        %v5106 = vadd.f32 %v5057, %v5098
        %v5107 = vadd.f32 %v5058, %v5099
        %v5108 = vadd.f32 %v5059, %v5100
        %v5109 = vadd.f32 %v5060, %v5101
        %v5110 = vadd.f32 %v5061, %v5102
        %v5111 = vadd.f32 %v5062, %v5103
        %v5112 = vadd.f32 %v5063, %v5104
        %v5113 = vadd.f32 %v5064, %v5105
        %5114 = vrot.lane.b32.xlu0 %v1359, 114
        %v5115 = vpop.permute.xlu0 %5114
        %5116 = vrot.lane.b32.xlu0 %v1361, 114
        %v5117 = vpop.permute.xlu0 %5116
        %5118 = vrot.lane.b32.xlu0 %v1363, 114
        %v5119 = vpop.permute.xlu0 %5118
        %5120 = vrot.lane.b32.xlu0 %v1365, 114
        %v5121 = vpop.permute.xlu0 %5120
        %5122 = vrot.lane.b32.xlu0 %v1360, 114
        %v5123 = vpop.permute.xlu0 %5122
        %5124 = vrot.lane.b32.xlu0 %v1362, 114
        %v5125 = vpop.permute.xlu0 %5124
        %5126 = vrot.lane.b32.xlu0 %v1364, 114
        %v5127 = vpop.permute.xlu0 %5126
        %5128 = vrot.lane.b32.xlu0 %v1366, 114
        %v5129 = vpop.permute.xlu0 %5128
        %vm5130 = vcmp.lt.s32.totalorder %v958, 114
        %v5131 = vsel %vm5130, %v5115, %v5123
        %v5132 = vsel %vm5130, %v5117, %v5125
        %v5133 = vsel %vm5130, %v5119, %v5127
        %v5134 = vsel %vm5130, %v5121, %v5129
        %v5135 = vsel %vm5130, %v5123, %v5115
        %v5136 = vsel %vm5130, %v5125, %v5117
        %v5137 = vsel %vm5130, %v5127, %v5119
        %v5138 = vsel %vm5130, %v5129, %v5121
        %s5139 = scalar_lea.vmem [#allocation4], 960
        %v5140 = vld [vmem:[%s5139] sm:$0xff]
        %v5141 = vld [vmem:[%s5139 + $0x8] sm:$0xff]
        %v5142 = vld [vmem:[%s5139 + $0x10] sm:$0xff]
        %v5143 = vld [vmem:[%s5139 + $0x18] sm:$0xff]
        %v5144 = vld [vmem:[%s5139 + $0x20] sm:$0xff]
        %v5145 = vld [vmem:[%s5139 + $0x28] sm:$0xff]
        %v5146 = vld [vmem:[%s5139 + $0x30] sm:$0xff]
        %v5147 = vld [vmem:[%s5139 + $0x38] sm:$0xff]
        %v5148 = vmul.f32 %v5140, %v5131
        %v5149 = vmul.f32 %v5141, %v5135
        %v5150 = vmul.f32 %v5142, %v5132
        %v5151 = vmul.f32 %v5143, %v5136
        %v5152 = vmul.f32 %v5144, %v5133
        %v5153 = vmul.f32 %v5145, %v5137
        %v5154 = vmul.f32 %v5146, %v5134
        %v5155 = vmul.f32 %v5147, %v5138
        %v5156 = vadd.f32 %v5106, %v5148
        %v5157 = vadd.f32 %v5107, %v5149
        %v5158 = vadd.f32 %v5108, %v5150
        %v5159 = vadd.f32 %v5109, %v5151
        %v5160 = vadd.f32 %v5110, %v5152
        %v5161 = vadd.f32 %v5111, %v5153
        %v5162 = vadd.f32 %v5112, %v5154
        %v5163 = vadd.f32 %v5113, %v5155
        %5164 = vrot.lane.b32.xlu0 %v1359, 113
        %v5165 = vpop.permute.xlu0 %5164
        %5166 = vrot.lane.b32.xlu0 %v1361, 113
        %v5167 = vpop.permute.xlu0 %5166
        %5168 = vrot.lane.b32.xlu0 %v1363, 113
        %v5169 = vpop.permute.xlu0 %5168
        %5170 = vrot.lane.b32.xlu0 %v1365, 113
        %v5171 = vpop.permute.xlu0 %5170
        %5172 = vrot.lane.b32.xlu0 %v1360, 113
        %v5173 = vpop.permute.xlu0 %5172
        %5174 = vrot.lane.b32.xlu0 %v1362, 113
        %v5175 = vpop.permute.xlu0 %5174
        %5176 = vrot.lane.b32.xlu0 %v1364, 113
        %v5177 = vpop.permute.xlu0 %5176
        %5178 = vrot.lane.b32.xlu0 %v1366, 113
        %v5179 = vpop.permute.xlu0 %5178
        %v5180 = vsel %vm1233, %v5165, %v5173
        %v5181 = vsel %vm1233, %v5167, %v5175
        %v5182 = vsel %vm1233, %v5169, %v5177
        %v5183 = vsel %vm1233, %v5171, %v5179
        %v5184 = vsel %vm1233, %v5173, %v5165
        %v5185 = vsel %vm1233, %v5175, %v5167
        %v5186 = vsel %vm1233, %v5177, %v5169
        %v5187 = vsel %vm1233, %v5179, %v5171
        %s5188 = scalar_lea.vmem [#allocation4], 1024
        %v5189 = vld [vmem:[%s5188] sm:$0xff]
        %v5190 = vld [vmem:[%s5188 + $0x8] sm:$0xff]
        %v5191 = vld [vmem:[%s5188 + $0x10] sm:$0xff]
        %v5192 = vld [vmem:[%s5188 + $0x18] sm:$0xff]
        %v5193 = vld [vmem:[%s5188 + $0x20] sm:$0xff]
        %v5194 = vld [vmem:[%s5188 + $0x28] sm:$0xff]
        %v5195 = vld [vmem:[%s5188 + $0x30] sm:$0xff]
        %v5196 = vld [vmem:[%s5188 + $0x38] sm:$0xff]
        %v5197 = vmul.f32 %v5189, %v5180
        %v5198 = vmul.f32 %v5190, %v5184
        %v5199 = vmul.f32 %v5191, %v5181
        %v5200 = vmul.f32 %v5192, %v5185
        %v5201 = vmul.f32 %v5193, %v5182
        %v5202 = vmul.f32 %v5194, %v5186
        %v5203 = vmul.f32 %v5195, %v5183
        %v5204 = vmul.f32 %v5196, %v5187
        %v5205 = vadd.f32 %v5156, %v5197
        %v5206 = vadd.f32 %v5157, %v5198
        %v5207 = vadd.f32 %v5158, %v5199
        %v5208 = vadd.f32 %v5159, %v5200
        %v5209 = vadd.f32 %v5160, %v5201
        %v5210 = vadd.f32 %v5161, %v5202
        %v5211 = vadd.f32 %v5162, %v5203
        %v5212 = vadd.f32 %v5163, %v5204
        %s5213 = scalar_lea.vmem [#allocation4], 1088
        %v5214 = vld [vmem:[%s5213] sm:$0xff]
        %v5215 = vld [vmem:[%s5213 + $0x8] sm:$0xff]
        %v5216 = vld [vmem:[%s5213 + $0x10] sm:$0xff]
        %v5217 = vld [vmem:[%s5213 + $0x18] sm:$0xff]
        %v5218 = vld [vmem:[%s5213 + $0x20] sm:$0xff]
        %v5219 = vld [vmem:[%s5213 + $0x28] sm:$0xff]
        %v5220 = vld [vmem:[%s5213 + $0x30] sm:$0xff]
        %v5221 = vld [vmem:[%s5213 + $0x38] sm:$0xff]
        %v5222 = vmul.f32 %v5214, %v1530
        %v5223 = vmul.f32 %v5215, %v1534
        %v5224 = vmul.f32 %v5216, %v1531
        %v5225 = vmul.f32 %v5217, %v1535
        %v5226 = vmul.f32 %v5218, %v1532
        %v5227 = vmul.f32 %v5219, %v1536
        %v5228 = vmul.f32 %v5220, %v1533
        %v5229 = vmul.f32 %v5221, %v1537
        %v5230 = vadd.f32 %v5205, %v5222
        %v5231 = vadd.f32 %v5206, %v5223
        %v5232 = vadd.f32 %v5207, %v5224
        %v5233 = vadd.f32 %v5208, %v5225
        %v5234 = vadd.f32 %v5209, %v5226
        %v5235 = vadd.f32 %v5210, %v5227
        %v5236 = vadd.f32 %v5211, %v5228
        %v5237 = vadd.f32 %v5212, %v5229
        %5238 = vrot.lane.b32.xlu0 %v1359, 111
        %v5239 = vpop.permute.xlu0 %5238
        %5240 = vrot.lane.b32.xlu0 %v1361, 111
        %v5241 = vpop.permute.xlu0 %5240
        %5242 = vrot.lane.b32.xlu0 %v1363, 111
        %v5243 = vpop.permute.xlu0 %5242
        %5244 = vrot.lane.b32.xlu0 %v1365, 111
        %v5245 = vpop.permute.xlu0 %5244
        %5246 = vrot.lane.b32.xlu0 %v1360, 111
        %v5247 = vpop.permute.xlu0 %5246
        %5248 = vrot.lane.b32.xlu0 %v1362, 111
        %v5249 = vpop.permute.xlu0 %5248
        %5250 = vrot.lane.b32.xlu0 %v1364, 111
        %v5251 = vpop.permute.xlu0 %5250
        %5252 = vrot.lane.b32.xlu0 %v1366, 111
        %v5253 = vpop.permute.xlu0 %5252
        %v5254 = vsel %vm1333, %v5239, %v5247
        %v5255 = vsel %vm1333, %v5241, %v5249
        %v5256 = vsel %vm1333, %v5243, %v5251
        %v5257 = vsel %vm1333, %v5245, %v5253
        %v5258 = vsel %vm1333, %v5247, %v5239
        %v5259 = vsel %vm1333, %v5249, %v5241
        %v5260 = vsel %vm1333, %v5251, %v5243
        %v5261 = vsel %vm1333, %v5253, %v5245
        %s5262 = scalar_lea.vmem [#allocation4], 1152
        %v5263 = vld [vmem:[%s5262] sm:$0xff]
        %v5264 = vld [vmem:[%s5262 + $0x8] sm:$0xff]
        %v5265 = vld [vmem:[%s5262 + $0x10] sm:$0xff]
        %v5266 = vld [vmem:[%s5262 + $0x18] sm:$0xff]
        %v5267 = vld [vmem:[%s5262 + $0x20] sm:$0xff]
        %v5268 = vld [vmem:[%s5262 + $0x28] sm:$0xff]
        %v5269 = vld [vmem:[%s5262 + $0x30] sm:$0xff]
        %v5270 = vld [vmem:[%s5262 + $0x38] sm:$0xff]
        %v5271 = vmul.f32 %v5263, %v5254
        %v5272 = vmul.f32 %v5264, %v5258
        %v5273 = vmul.f32 %v5265, %v5255
        %v5274 = vmul.f32 %v5266, %v5259
        %v5275 = vmul.f32 %v5267, %v5256
        %v5276 = vmul.f32 %v5268, %v5260
        %v5277 = vmul.f32 %v5269, %v5257
        %v5278 = vmul.f32 %v5270, %v5261
        %v5279 = vadd.f32 %v5230, %v5271
        %v5280 = vadd.f32 %v5231, %v5272
        %v5281 = vadd.f32 %v5232, %v5273
        %v5282 = vadd.f32 %v5233, %v5274
        %v5283 = vadd.f32 %v5234, %v5275
        %v5284 = vadd.f32 %v5235, %v5276
        %v5285 = vadd.f32 %v5236, %v5277
        %v5286 = vadd.f32 %v5237, %v5278
        %5287 = vrot.lane.b32.xlu0 %v1359, 110
        %v5288 = vpop.permute.xlu0 %5287
        %5289 = vrot.lane.b32.xlu0 %v1361, 110
        %v5290 = vpop.permute.xlu0 %5289
        %5291 = vrot.lane.b32.xlu0 %v1363, 110
        %v5292 = vpop.permute.xlu0 %5291
        %5293 = vrot.lane.b32.xlu0 %v1365, 110
        %v5294 = vpop.permute.xlu0 %5293
        %5295 = vrot.lane.b32.xlu0 %v1360, 110
        %v5296 = vpop.permute.xlu0 %5295
        %5297 = vrot.lane.b32.xlu0 %v1362, 110
        %v5298 = vpop.permute.xlu0 %5297
        %5299 = vrot.lane.b32.xlu0 %v1364, 110
        %v5300 = vpop.permute.xlu0 %5299
        %5301 = vrot.lane.b32.xlu0 %v1366, 110
        %v5302 = vpop.permute.xlu0 %5301
        %vm5303 = vcmp.lt.s32.totalorder %v958, 110
        %v5304 = vsel %vm5303, %v5288, %v5296
        %v5305 = vsel %vm5303, %v5290, %v5298
        %v5306 = vsel %vm5303, %v5292, %v5300
        %v5307 = vsel %vm5303, %v5294, %v5302
        %v5308 = vsel %vm5303, %v5296, %v5288
        %v5309 = vsel %vm5303, %v5298, %v5290
        %v5310 = vsel %vm5303, %v5300, %v5292
        %v5311 = vsel %vm5303, %v5302, %v5294
        %s5312 = scalar_lea.vmem [#allocation4], 1216
        %v5313 = vld [vmem:[%s5312] sm:$0xff]
        %v5314 = vld [vmem:[%s5312 + $0x8] sm:$0xff]
        %v5315 = vld [vmem:[%s5312 + $0x10] sm:$0xff]
        %v5316 = vld [vmem:[%s5312 + $0x18] sm:$0xff]
        %v5317 = vld [vmem:[%s5312 + $0x20] sm:$0xff]
        %v5318 = vld [vmem:[%s5312 + $0x28] sm:$0xff]
        %v5319 = vld [vmem:[%s5312 + $0x30] sm:$0xff]
        %v5320 = vld [vmem:[%s5312 + $0x38] sm:$0xff]
        %v5321 = vmul.f32 %v5313, %v5304
        %v5322 = vmul.f32 %v5314, %v5308
        %v5323 = vmul.f32 %v5315, %v5305
        %v5324 = vmul.f32 %v5316, %v5309
        %v5325 = vmul.f32 %v5317, %v5306
        %v5326 = vmul.f32 %v5318, %v5310
        %v5327 = vmul.f32 %v5319, %v5307
        %v5328 = vmul.f32 %v5320, %v5311
        %v5329 = vadd.f32 %v5279, %v5321
        %v5330 = vadd.f32 %v5280, %v5322
        %v5331 = vadd.f32 %v5281, %v5323
        %v5332 = vadd.f32 %v5282, %v5324
        %v5333 = vadd.f32 %v5283, %v5325
        %v5334 = vadd.f32 %v5284, %v5326
        %v5335 = vadd.f32 %v5285, %v5327
        %v5336 = vadd.f32 %v5286, %v5328
        %5337 = vrot.lane.b32.xlu0 %v1359, 98
        %v5338 = vpop.permute.xlu0 %5337
        %5339 = vrot.lane.b32.xlu0 %v1361, 98
        %v5340 = vpop.permute.xlu0 %5339
        %5341 = vrot.lane.b32.xlu0 %v1363, 98
        %v5342 = vpop.permute.xlu0 %5341
        %5343 = vrot.lane.b32.xlu0 %v1365, 98
        %v5344 = vpop.permute.xlu0 %5343
        %5345 = vrot.lane.b32.xlu0 %v1360, 98
        %v5346 = vpop.permute.xlu0 %5345
        %5347 = vrot.lane.b32.xlu0 %v1362, 98
        %v5348 = vpop.permute.xlu0 %5347
        %5349 = vrot.lane.b32.xlu0 %v1364, 98
        %v5350 = vpop.permute.xlu0 %5349
        %5351 = vrot.lane.b32.xlu0 %v1366, 98
        %v5352 = vpop.permute.xlu0 %5351
        %vm5353 = vcmp.lt.s32.totalorder %v958, 98
        %v5354 = vsel %vm5353, %v5338, %v5346
        %v5355 = vsel %vm5353, %v5340, %v5348
        %v5356 = vsel %vm5353, %v5342, %v5350
        %v5357 = vsel %vm5353, %v5344, %v5352
        %v5358 = vsel %vm5353, %v5346, %v5338
        %v5359 = vsel %vm5353, %v5348, %v5340
        %v5360 = vsel %vm5353, %v5350, %v5342
        %v5361 = vsel %vm5353, %v5352, %v5344
        %s5362 = scalar_lea.vmem [#allocation4], 1280
        %v5363 = vld [vmem:[%s5362] sm:$0xff]
        %v5364 = vld [vmem:[%s5362 + $0x8] sm:$0xff]
        %v5365 = vld [vmem:[%s5362 + $0x10] sm:$0xff]
        %v5366 = vld [vmem:[%s5362 + $0x18] sm:$0xff]
        %v5367 = vld [vmem:[%s5362 + $0x20] sm:$0xff]
        %v5368 = vld [vmem:[%s5362 + $0x28] sm:$0xff]
        %v5369 = vld [vmem:[%s5362 + $0x30] sm:$0xff]
        %v5370 = vld [vmem:[%s5362 + $0x38] sm:$0xff]
        %v5371 = vmul.f32 %v5363, %v5354
        %v5372 = vmul.f32 %v5364, %v5358
        %v5373 = vmul.f32 %v5365, %v5355
        %v5374 = vmul.f32 %v5366, %v5359
        %v5375 = vmul.f32 %v5367, %v5356
        %v5376 = vmul.f32 %v5368, %v5360
        %v5377 = vmul.f32 %v5369, %v5357
        %v5378 = vmul.f32 %v5370, %v5361
        %v5379 = vadd.f32 %v5329, %v5371
        %v5380 = vadd.f32 %v5330, %v5372
        %v5381 = vadd.f32 %v5331, %v5373
        %v5382 = vadd.f32 %v5332, %v5374
        %v5383 = vadd.f32 %v5333, %v5375
        %v5384 = vadd.f32 %v5334, %v5376
        %v5385 = vadd.f32 %v5335, %v5377
        %v5386 = vadd.f32 %v5336, %v5378
        %5387 = vrot.lane.b32.xlu0 %v1359, 97
        %v5388 = vpop.permute.xlu0 %5387
        %5389 = vrot.lane.b32.xlu0 %v1361, 97
        %v5390 = vpop.permute.xlu0 %5389
        %5391 = vrot.lane.b32.xlu0 %v1363, 97
        %v5392 = vpop.permute.xlu0 %5391
        %5393 = vrot.lane.b32.xlu0 %v1365, 97
        %v5394 = vpop.permute.xlu0 %5393
        %5395 = vrot.lane.b32.xlu0 %v1360, 97
        %v5396 = vpop.permute.xlu0 %5395
        %5397 = vrot.lane.b32.xlu0 %v1362, 97
        %v5398 = vpop.permute.xlu0 %5397
        %5399 = vrot.lane.b32.xlu0 %v1364, 97
        %v5400 = vpop.permute.xlu0 %5399
        %5401 = vrot.lane.b32.xlu0 %v1366, 97
        %v5402 = vpop.permute.xlu0 %5401
        %vm5403 = vcmp.lt.s32.totalorder %v958, 97
        %v5404 = vsel %vm5403, %v5388, %v5396
        %v5405 = vsel %vm5403, %v5390, %v5398
        %v5406 = vsel %vm5403, %v5392, %v5400
        %v5407 = vsel %vm5403, %v5394, %v5402
        %v5408 = vsel %vm5403, %v5396, %v5388
        %v5409 = vsel %vm5403, %v5398, %v5390
        %v5410 = vsel %vm5403, %v5400, %v5392
        %v5411 = vsel %vm5403, %v5402, %v5394
        %s5412 = scalar_lea.vmem [#allocation4], 1344
        %v5413 = vld [vmem:[%s5412] sm:$0xff]
        %v5414 = vld [vmem:[%s5412 + $0x8] sm:$0xff]
        %v5415 = vld [vmem:[%s5412 + $0x10] sm:$0xff]
        %v5416 = vld [vmem:[%s5412 + $0x18] sm:$0xff]
        %v5417 = vld [vmem:[%s5412 + $0x20] sm:$0xff]
        %v5418 = vld [vmem:[%s5412 + $0x28] sm:$0xff]
        %v5419 = vld [vmem:[%s5412 + $0x30] sm:$0xff]
        %v5420 = vld [vmem:[%s5412 + $0x38] sm:$0xff]
        %v5421 = vmul.f32 %v5413, %v5404
        %v5422 = vmul.f32 %v5414, %v5408
        %v5423 = vmul.f32 %v5415, %v5405
        %v5424 = vmul.f32 %v5416, %v5409
        %v5425 = vmul.f32 %v5417, %v5406
        %v5426 = vmul.f32 %v5418, %v5410
        %v5427 = vmul.f32 %v5419, %v5407
        %v5428 = vmul.f32 %v5420, %v5411
        %v5429 = vadd.f32 %v5379, %v5421
        %v5430 = vadd.f32 %v5380, %v5422
        %v5431 = vadd.f32 %v5381, %v5423
        %v5432 = vadd.f32 %v5382, %v5424
        %v5433 = vadd.f32 %v5383, %v5425
        %v5434 = vadd.f32 %v5384, %v5426
        %v5435 = vadd.f32 %v5385, %v5427
        %v5436 = vadd.f32 %v5386, %v5428
        %s5437 = scalar_lea.vmem [#allocation4], 1408
        %v5438 = vld [vmem:[%s5437] sm:$0xff]
        %v5439 = vld [vmem:[%s5437 + $0x8] sm:$0xff]
        %v5440 = vld [vmem:[%s5437 + $0x10] sm:$0xff]
        %v5441 = vld [vmem:[%s5437 + $0x18] sm:$0xff]
        %v5442 = vld [vmem:[%s5437 + $0x20] sm:$0xff]
        %v5443 = vld [vmem:[%s5437 + $0x28] sm:$0xff]
        %v5444 = vld [vmem:[%s5437 + $0x30] sm:$0xff]
        %v5445 = vld [vmem:[%s5437 + $0x38] sm:$0xff]
        %v5446 = vmul.f32 %v5438, %v1580
        %v5447 = vmul.f32 %v5439, %v1584
        %v5448 = vmul.f32 %v5440, %v1581
        %v5449 = vmul.f32 %v5441, %v1585
        %v5450 = vmul.f32 %v5442, %v1582
        %v5451 = vmul.f32 %v5443, %v1586
        %v5452 = vmul.f32 %v5444, %v1583
        %v5453 = vmul.f32 %v5445, %v1587
        %v5454 = vadd.f32 %v5429, %v5446
        %v5455 = vadd.f32 %v5430, %v5447
        %v5456 = vadd.f32 %v5431, %v5448
        %v5457 = vadd.f32 %v5432, %v5449
        %v5458 = vadd.f32 %v5433, %v5450
        %v5459 = vadd.f32 %v5434, %v5451
        %v5460 = vadd.f32 %v5435, %v5452
        %v5461 = vadd.f32 %v5436, %v5453
        %5462 = vrot.lane.b32.xlu0 %v1359, 95
        %v5463 = vpop.permute.xlu0 %5462
        %5464 = vrot.lane.b32.xlu0 %v1361, 95
        %v5465 = vpop.permute.xlu0 %5464
        %5466 = vrot.lane.b32.xlu0 %v1363, 95
        %v5467 = vpop.permute.xlu0 %5466
        %5468 = vrot.lane.b32.xlu0 %v1365, 95
        %v5469 = vpop.permute.xlu0 %5468
        %5470 = vrot.lane.b32.xlu0 %v1360, 95
        %v5471 = vpop.permute.xlu0 %5470
        %5472 = vrot.lane.b32.xlu0 %v1362, 95
        %v5473 = vpop.permute.xlu0 %5472
        %5474 = vrot.lane.b32.xlu0 %v1364, 95
        %v5475 = vpop.permute.xlu0 %5474
        %5476 = vrot.lane.b32.xlu0 %v1366, 95
        %v5477 = vpop.permute.xlu0 %5476
        %vm5478 = vcmp.lt.s32.totalorder %v958, 95
        %v5479 = vsel %vm5478, %v5463, %v5471
        %v5480 = vsel %vm5478, %v5465, %v5473
        %v5481 = vsel %vm5478, %v5467, %v5475
        %v5482 = vsel %vm5478, %v5469, %v5477
        %v5483 = vsel %vm5478, %v5471, %v5463
        %v5484 = vsel %vm5478, %v5473, %v5465
        %v5485 = vsel %vm5478, %v5475, %v5467
        %v5486 = vsel %vm5478, %v5477, %v5469
        %s5487 = scalar_lea.vmem [#allocation4], 1472
        %v5488 = vld [vmem:[%s5487] sm:$0xff]
        %v5489 = vld [vmem:[%s5487 + $0x8] sm:$0xff]
        %v5490 = vld [vmem:[%s5487 + $0x10] sm:$0xff]
        %v5491 = vld [vmem:[%s5487 + $0x18] sm:$0xff]
        %v5492 = vld [vmem:[%s5487 + $0x20] sm:$0xff]
        %v5493 = vld [vmem:[%s5487 + $0x28] sm:$0xff]
        %v5494 = vld [vmem:[%s5487 + $0x30] sm:$0xff]
        %v5495 = vld [vmem:[%s5487 + $0x38] sm:$0xff]
        %v5496 = vmul.f32 %v5488, %v5479
        %v5497 = vmul.f32 %v5489, %v5483
        %v5498 = vmul.f32 %v5490, %v5480
        %v5499 = vmul.f32 %v5491, %v5484
        %v5500 = vmul.f32 %v5492, %v5481
        %v5501 = vmul.f32 %v5493, %v5485
        %v5502 = vmul.f32 %v5494, %v5482
        %v5503 = vmul.f32 %v5495, %v5486
        %v5504 = vadd.f32 %v5454, %v5496
        %v5505 = vadd.f32 %v5455, %v5497
        %v5506 = vadd.f32 %v5456, %v5498
        %v5507 = vadd.f32 %v5457, %v5499
        %v5508 = vadd.f32 %v5458, %v5500
        %v5509 = vadd.f32 %v5459, %v5501
        %v5510 = vadd.f32 %v5460, %v5502
        %v5511 = vadd.f32 %v5461, %v5503
        %5512 = vrot.lane.b32.xlu0 %v1359, 94
        %v5513 = vpop.permute.xlu0 %5512
        %5514 = vrot.lane.b32.xlu0 %v1361, 94
        %v5515 = vpop.permute.xlu0 %5514
        %5516 = vrot.lane.b32.xlu0 %v1363, 94
        %v5517 = vpop.permute.xlu0 %5516
        %5518 = vrot.lane.b32.xlu0 %v1365, 94
        %v5519 = vpop.permute.xlu0 %5518
        %5520 = vrot.lane.b32.xlu0 %v1360, 94
        %v5521 = vpop.permute.xlu0 %5520
        %5522 = vrot.lane.b32.xlu0 %v1362, 94
        %v5523 = vpop.permute.xlu0 %5522
        %5524 = vrot.lane.b32.xlu0 %v1364, 94
        %v5525 = vpop.permute.xlu0 %5524
        %5526 = vrot.lane.b32.xlu0 %v1366, 94
        %v5527 = vpop.permute.xlu0 %5526
        %vm5528 = vcmp.lt.s32.totalorder %v958, 94
        %v5529 = vsel %vm5528, %v5513, %v5521
        %v5530 = vsel %vm5528, %v5515, %v5523
        %v5531 = vsel %vm5528, %v5517, %v5525
        %v5532 = vsel %vm5528, %v5519, %v5527
        %v5533 = vsel %vm5528, %v5521, %v5513
        %v5534 = vsel %vm5528, %v5523, %v5515
        %v5535 = vsel %vm5528, %v5525, %v5517
        %v5536 = vsel %vm5528, %v5527, %v5519
        %s5537 = scalar_lea.vmem [#allocation4], 1536
        %v5538 = vld [vmem:[%s5537] sm:$0xff]
        %v5539 = vld [vmem:[%s5537 + $0x8] sm:$0xff]
        %v5540 = vld [vmem:[%s5537 + $0x10] sm:$0xff]
        %v5541 = vld [vmem:[%s5537 + $0x18] sm:$0xff]
        %v5542 = vld [vmem:[%s5537 + $0x20] sm:$0xff]
        %v5543 = vld [vmem:[%s5537 + $0x28] sm:$0xff]
        %v5544 = vld [vmem:[%s5537 + $0x30] sm:$0xff]
        %v5545 = vld [vmem:[%s5537 + $0x38] sm:$0xff]
        %v5546 = vmul.f32 %v5538, %v5529
        %v5547 = vmul.f32 %v5539, %v5533
        %v5548 = vmul.f32 %v5540, %v5530
        %v5549 = vmul.f32 %v5541, %v5534
        %v5550 = vmul.f32 %v5542, %v5531
        %v5551 = vmul.f32 %v5543, %v5535
        %v5552 = vmul.f32 %v5544, %v5532
        %v5553 = vmul.f32 %v5545, %v5536
        %v5554 = vadd.f32 %v5504, %v5546
        %v5555 = vadd.f32 %v5505, %v5547
        %v5556 = vadd.f32 %v5506, %v5548
        %v5557 = vadd.f32 %v5507, %v5549
        %v5558 = vadd.f32 %v5508, %v5550
        %v5559 = vadd.f32 %v5509, %v5551
        %v5560 = vadd.f32 %v5510, %v5552
        %v5561 = vadd.f32 %v5511, %v5553
        %v5562 = vld [vmem:[%s17] sm:$0xff]
        %v5563 = vld [vmem:[%s18] sm:$0xff]
        %5565 = vset.pattern.permute.xlu0 0
        %5566 = vperm.xlu0 %5565, %v5563
        %v5567 = vpop.permute.xlu0 %5566
        %vm5569 = vcmask 261120
        %v5571 = vsel %vm5569, %v5562, 0
        %5573 = vmatprep.subr.mxu0 0.0
        %5574 = vmatpush1.msra.mxu0 0.0
        %5575 = vmatprep.subr.mxu0 0.0
        %5576 = vmatpush1.msra.mxu0 0.0
        %5577 = vmatprep.subr.mxu0 0.0
        %5578 = vmatpush1.msra.mxu0 0.0
        %5579 = vmatprep.subr.mxu0 0.0
        %5580 = vmatpush1.msra.mxu0 0.0
        %5581 = vmatprep.subr.mxu0 0.0
        %5582 = vmatpush1.msra.mxu0 0.0
        %5583 = vmatprep.subr.mxu0 0.0
        %5584 = vmatpush1.msra.mxu0 0.0
        %5585 = vmatprep.subr.mxu0 0.0
        %5586 = vmatpush1.msra.mxu0 0.0
        %5587 = vmatprep.subr.mxu0 0.0
        %5588 = vmatpush1.msra.mxu0 0.0
        %5589 = vmatprep.subr.mxu0 0.0
        %5590 = vmatpush1.msra.mxu0 0.0
        %5591 = vmatprep.subr.mxu0 0.0
        %5592 = vmatpush1.msra.mxu0 0.0
        %5593 = vmatprep.subr.mxu0 0.0
        %5594 = vmatpush1.msra.mxu0 0.0
        %5595 = vmatprep.subr.mxu0 0.0
        %5596 = vmatpush1.msra.mxu0 0.0
        %5597 = vmatprep.subr.mxu0 %v5561
        %5598 = vmatpush1.msra.mxu0 %v5560
        %5599 = vmatprep.subr.mxu0 %v5559
        %5600 = vmatpush1.msra.mxu0 %v5558
        %5601 = vmatprep.subr.mxu0 %v5557
        %5602 = vmatpush1.msra.mxu0 %v5556
        %5603 = vmatprep.subr.mxu0 %v5555
        %5604 = vmatpush1.msra.mxu0 %v5554
        %5605 = vmatprep.subr.mxu0 0.0
        %5606 = vmatpush2.msra.mxu0 0.0
        %5607 = vmatprep.subr.mxu0 0.0
        %5608 = vmatpush2.msra.mxu0 0.0
        %5609 = vmatprep.subr.mxu0 0.0
        %5610 = vmatpush2.msra.mxu0 0.0
        %5611 = vmatprep.subr.mxu0 0.0
        %5612 = vmatpush2.msra.mxu0 0.0
        %5613 = vmatprep.subr.mxu0 0.0
        %5614 = vmatpush2.msra.mxu0 0.0
        %5615 = vmatprep.subr.mxu0 0.0
        %5616 = vmatpush2.msra.mxu0 0.0
        %5617 = vmatprep.subr.mxu0 0.0
        %5618 = vmatpush2.msra.mxu0 0.0
        %5619 = vmatprep.subr.mxu0 0.0
        %5620 = vmatpush2.msra.mxu0 0.0
        %5621 = vmatprep.subr.mxu0 0.0
        %5622 = vmatpush2.msra.mxu0 0.0
        %5623 = vmatprep.subr.mxu0 0.0
        %5624 = vmatpush2.msra.mxu0 0.0
        %5625 = vmatprep.subr.mxu0 0.0
        %5626 = vmatpush2.msra.mxu0 0.0
        %5627 = vmatprep.subr.mxu0 0.0
        %5628 = vmatpush2.msra.mxu0 0.0
        %5629 = vmatprep.subr.mxu0 0.0
        %5630 = vmatpush2.msra.mxu0 0.0
        %5631 = vmatprep.subr.mxu0 0.0
        %5632 = vmatpush2.msra.mxu0 0.0
        %5633 = vmatprep.subr.mxu0 0.0
        %5634 = vmatpush2.msra.mxu0 0.0
        %5635 = vmatprep.subr.mxu0 0.0
        %5636 = vmatpush2.msra.mxu0 0.0
        %5637 = vmatprep.mubr.f32.mxu0 0.0
        %5638 = vmatmul.mubr.f32.gmra.mxu0 %v5571
        %v5639 = vpop.f32.mrf.mxu0
        %v5640 = vadd.f32 %v5567, %v5639
        %v5641 = vpop.f32.mrf.mxu0
        %v5642 = vadd.f32 %v5567, %v5641
        %5643 = vdwg.mxu0
        %v5644 = vmul.f32 %v5640, 0.5
        %v5645 = vmul.f32 %v5642, 0.5
        %v5646 = vmul.f32 %v5640, 0.044715
        %v5647 = vmul.f32 %v5642, 0.044715
        %v5648 = vmul.f32 %v5646, %v5640
        %v5649 = vmul.f32 %v5647, %v5642
        %v5650 = vmul.f32 %v5648, %v5640
        %v5651 = vmul.f32 %v5649, %v5642
        %v5652 = vadd.f32 %v5640, %v5650
        %v5653 = vadd.f32 %v5642, %v5651
        %v5654 = vmul.f32 %v5652, 0.7978846
        %v5655 = vmul.f32 %v5653, 0.7978846
        %v5656 = vtanh.pop %v5654
        %v5657 = vtanh.pop %v5655
        %v5658 = vadd.f32 %v5656, 1.0
        %v5659 = vadd.f32 %v5657, 1.0
        %v5660 = vmul.f32 %v5644, %v5658
        %v5661 = vmul.f32 %v5645, %v5659
        %v5662 = vld [vmem:[%s19] sm:$0xff]
        %v5663 = vld [vmem:[%s19 + $0x8] sm:$0xff]
        %v5664 = vld [vmem:[%s19 + $0x10] sm:$0xff]
        %v5665 = vld [vmem:[%s19 + $0x18] sm:$0xff]
        %v5666 = vld [vmem:[%s20] sm:$0xff]
        %v5667 = vld [vmem:[%s20 + $0x8] sm:$0xff]
        %v5668 = vld [vmem:[%s20 + $0x10] sm:$0xff]
        %v5669 = vld [vmem:[%s20 + $0x18] sm:$0xff]
        %5671 = vset.pattern.permute.xlu0 0
        %5672 = vperm.xlu0 %5671, %v5666
        %v5673 = vpop.permute.xlu0 %5672
        %5676 = vset.pattern.permute.xlu0 0
        %5677 = vperm.xlu0 %5676, %v5667
        %v5678 = vpop.permute.xlu0 %5677
        %5681 = vset.pattern.permute.xlu0 0
        %5682 = vperm.xlu0 %5681, %v5668
        %v5683 = vpop.permute.xlu0 %5682
        %5686 = vset.pattern.permute.xlu0 0
        %5687 = vperm.xlu0 %5686, %v5669
        %v5688 = vpop.permute.xlu0 %5687
        %vm5690 = vcmask 64512
        %v5692 = vsel %vm5690, %v5662, 0
        %v5695 = vsel %vm5690, %v5663, 0
        %v5698 = vsel %vm5690, %v5664, 0
        %v5701 = vsel %vm5690, %v5665, 0
        %5703 = vmatprep.subr.mxu0 0.0
        %5704 = vmatpush1.msra.mxu0 0.0
        %5705 = vmatprep.subr.mxu0 0.0
        %5706 = vmatpush1.msra.mxu0 0.0
        %5707 = vmatprep.subr.mxu0 0.0
        %5708 = vmatpush1.msra.mxu0 0.0
        %5709 = vmatprep.subr.mxu0 0.0
        %5710 = vmatpush1.msra.mxu0 0.0
        %5711 = vmatprep.subr.mxu0 0.0
        %5712 = vmatpush1.msra.mxu0 0.0
        %5713 = vmatprep.subr.mxu0 0.0
        %5714 = vmatpush1.msra.mxu0 0.0
        %5715 = vmatprep.subr.mxu0 0.0
        %5716 = vmatpush1.msra.mxu0 0.0
        %5717 = vmatprep.subr.mxu0 0.0
        %5718 = vmatpush1.msra.mxu0 0.0
        %5719 = vmatprep.subr.mxu0 0.0
        %5720 = vmatpush1.msra.mxu0 0.0
        %5721 = vmatprep.subr.mxu0 0.0
        %5722 = vmatpush1.msra.mxu0 0.0
        %5723 = vmatprep.subr.mxu0 0.0
        %5724 = vmatpush1.msra.mxu0 0.0
        %5725 = vmatprep.subr.mxu0 0.0
        %5726 = vmatpush1.msra.mxu0 0.0
        %5727 = vmatprep.subr.mxu0 0.0
        %5728 = vmatpush1.msra.mxu0 0.0
        %5729 = vmatprep.subr.mxu0 0.0
        %5730 = vmatpush1.msra.mxu0 0.0
        %5731 = vmatprep.subr.mxu0 0.0
        %5732 = vmatpush1.msra.mxu0 0.0
        %5733 = vmatprep.subr.mxu0 %v5661
        %5734 = vmatpush1.msra.mxu0 %v5660
        %5735 = vmatprep.subr.mxu0 0.0
        %5736 = vmatpush2.msra.mxu0 0.0
        %5737 = vmatprep.subr.mxu0 0.0
        %5738 = vmatpush2.msra.mxu0 0.0
        %5739 = vmatprep.subr.mxu0 0.0
        %5740 = vmatpush2.msra.mxu0 0.0
        %5741 = vmatprep.subr.mxu0 0.0
        %5742 = vmatpush2.msra.mxu0 0.0
        %5743 = vmatprep.subr.mxu0 0.0
        %5744 = vmatpush2.msra.mxu0 0.0
        %5745 = vmatprep.subr.mxu0 0.0
        %5746 = vmatpush2.msra.mxu0 0.0
        %5747 = vmatprep.subr.mxu0 0.0
        %5748 = vmatpush2.msra.mxu0 0.0
        %5749 = vmatprep.subr.mxu0 0.0
        %5750 = vmatpush2.msra.mxu0 0.0
        %5751 = vmatprep.subr.mxu0 0.0
        %5752 = vmatpush2.msra.mxu0 0.0
        %5753 = vmatprep.subr.mxu0 0.0
        %5754 = vmatpush2.msra.mxu0 0.0
        %5755 = vmatprep.subr.mxu0 0.0
        %5756 = vmatpush2.msra.mxu0 0.0
        %5757 = vmatprep.subr.mxu0 0.0
        %5758 = vmatpush2.msra.mxu0 0.0
        %5759 = vmatprep.subr.mxu0 0.0
        %5760 = vmatpush2.msra.mxu0 0.0
        %5761 = vmatprep.subr.mxu0 0.0
        %5762 = vmatpush2.msra.mxu0 0.0
        %5763 = vmatprep.subr.mxu0 0.0
        %5764 = vmatpush2.msra.mxu0 0.0
        %5765 = vmatprep.subr.mxu0 0.0
        %5766 = vmatpush2.msra.mxu0 0.0
        %5767 = vmatprep.mubr.f32.mxu0 0.0
        %5768 = vmatmul.mubr.f32.gmra.mxu0 %v5692
        %v5769 = vpop.f32.mrf.mxu0
        %v5770 = vadd.f32 %v5673, %v5769
        %v5771 = vpop.f32.mrf.mxu0
        %v5772 = vadd.f32 %v5673, %v5771
        %5773 = vmatprep.mubr.f32.mxu0 0.0
        %5774 = vmatmul.mubr.f32.gmra.mxu0 %v5695
        %v5775 = vpop.f32.mrf.mxu0
        %v5776 = vadd.f32 %v5678, %v5775
        %v5777 = vpop.f32.mrf.mxu0
        %v5778 = vadd.f32 %v5678, %v5777
        %5779 = vmatprep.mubr.f32.mxu0 0.0
        %5780 = vmatmul.mubr.f32.gmra.mxu0 %v5698
        %v5781 = vpop.f32.mrf.mxu0
        %v5782 = vadd.f32 %v5683, %v5781
        %v5783 = vpop.f32.mrf.mxu0
        %v5784 = vadd.f32 %v5683, %v5783
        %5785 = vmatprep.mubr.f32.mxu0 0.0
        %5786 = vmatmul.mubr.f32.gmra.mxu0 %v5701
        %v5787 = vpop.f32.mrf.mxu0
        %v5788 = vadd.f32 %v5688, %v5787
        %v5789 = vpop.f32.mrf.mxu0
        %v5790 = vadd.f32 %v5688, %v5789
        %5791 = vdwg.mxu0
        %v5792 = vsub.f32 0.0, %v5770
        %v5793 = vsub.f32 0.0, %v5772
        %v5794 = vsub.f32 0.0, %v5776
        %v5795 = vsub.f32 0.0, %v5778
        %v5796 = vsub.f32 0.0, %v5782
        %v5797 = vsub.f32 0.0, %v5784
        %v5798 = vsub.f32 0.0, %v5788
        %v5799 = vsub.f32 0.0, %v5790
        %v5800 = vmul.f32 %v5792, 1.442695
        %v5801 = vpow.pop %v5800
        %v5802 = vmul.f32 %v5793, 1.442695
        %v5803 = vpow.pop %v5802
        %v5804 = vmul.f32 %v5794, 1.442695
        %v5805 = vpow.pop %v5804
        %v5806 = vmul.f32 %v5795, 1.442695
        %v5807 = vpow.pop %v5806
        %v5808 = vmul.f32 %v5796, 1.442695
        %v5809 = vpow.pop %v5808
        %v5810 = vmul.f32 %v5797, 1.442695
        %v5811 = vpow.pop %v5810
        %v5812 = vmul.f32 %v5798, 1.442695
        %v5813 = vpow.pop %v5812
        %v5814 = vmul.f32 %v5799, 1.442695
        %v5815 = vpow.pop %v5814
        %v5816 = vadd.f32 %v5801, 1.0
        %v5817 = vadd.f32 %v5803, 1.0
        %v5818 = vadd.f32 %v5805, 1.0
        %v5819 = vadd.f32 %v5807, 1.0
        %v5820 = vadd.f32 %v5809, 1.0
        %v5821 = vadd.f32 %v5811, 1.0
        %v5822 = vadd.f32 %v5813, 1.0
        %v5823 = vadd.f32 %v5815, 1.0
        %v5824 = vrcp.pop %v5816
        %v5825 = vrcp.pop %v5817
        %v5826 = vrcp.pop %v5818
        %v5827 = vrcp.pop %v5819
        %v5828 = vrcp.pop %v5820
        %v5829 = vrcp.pop %v5821
        %v5830 = vrcp.pop %v5822
        %v5831 = vrcp.pop %v5823
        %v5832 = vmul.f32 %v1359, %v5824
        %v5833 = vmul.f32 %v1360, %v5825
        %v5834 = vmul.f32 %v1361, %v5826
        %v5835 = vmul.f32 %v1362, %v5827
        %v5836 = vmul.f32 %v1363, %v5828
        %v5837 = vmul.f32 %v1364, %v5829
        %v5838 = vmul.f32 %v1365, %v5830
        %v5839 = vmul.f32 %v1366, %v5831
        %v5840 = vadd.f32 %v925, %v5832
        %v5841 = vadd.f32 %v926, %v5833
        %v5842 = vadd.f32 %v927, %v5834
        %v5843 = vadd.f32 %v928, %v5835
        %v5844 = vadd.f32 %v929, %v5836
        %v5845 = vadd.f32 %v930, %v5837
        %v5846 = vadd.f32 %v931, %v5838
        %v5847 = vadd.f32 %v932, %v5839
        %v5848 = vld [vmem:[%s21] sm:$0xff]
        %v5849 = vld [vmem:[%s21 + $0x8] sm:$0xff]
        %v5850 = vld [vmem:[%s21 + $0x10] sm:$0xff]
        %v5851 = vld [vmem:[%s21 + $0x18] sm:$0xff]
        %v5852 = vld [vmem:[%s21 + $0x20] sm:$0xff]
        %v5853 = vld [vmem:[%s21 + $0x28] sm:$0xff]
        %v5854 = vld [vmem:[%s21 + $0x30] sm:$0xff]
        %v5855 = vld [vmem:[%s21 + $0x38] sm:$0xff]
        %v5856 = vld [vmem:[%s21 + $0x40] sm:$0xff]
        %v5857 = vld [vmem:[%s21 + $0x48] sm:$0xff]
        %v5858 = vld [vmem:[%s21 + $0x50] sm:$0xff]
        %v5859 = vld [vmem:[%s21 + $0x58] sm:$0xff]
        %v5860 = vld [vmem:[%s21 + $0x60] sm:$0xff]
        %v5861 = vld [vmem:[%s21 + $0x68] sm:$0xff]
        %v5862 = vld [vmem:[%s21 + $0x70] sm:$0xff]
        %v5863 = vld [vmem:[%s21 + $0x78] sm:$0xff]
        %v5864 = vld [vmem:[%s22] sm:$0xff]
        %v5865 = vld [vmem:[%s22 + $0x8] sm:$0xff]
        %v5866 = vld [vmem:[%s22 + $0x10] sm:$0xff]
        %v5867 = vld [vmem:[%s22 + $0x18] sm:$0xff]
        %v5868 = vld [vmem:[%s22 + $0x20] sm:$0xff]
        %v5869 = vld [vmem:[%s22 + $0x28] sm:$0xff]
        %v5870 = vld [vmem:[%s22 + $0x30] sm:$0xff]
        %v5871 = vld [vmem:[%s22 + $0x38] sm:$0xff]
        %v5872 = vld [vmem:[%s22 + $0x40] sm:$0xff]
        %v5873 = vld [vmem:[%s22 + $0x48] sm:$0xff]
        %v5874 = vld [vmem:[%s22 + $0x50] sm:$0xff]
        %v5875 = vld [vmem:[%s22 + $0x58] sm:$0xff]
        %v5876 = vld [vmem:[%s22 + $0x60] sm:$0xff]
        %v5877 = vld [vmem:[%s22 + $0x68] sm:$0xff]
        %v5878 = vld [vmem:[%s22 + $0x70] sm:$0xff]
        %v5879 = vld [vmem:[%s22 + $0x78] sm:$0xff]
        %5881 = vset.pattern.permute.xlu0 0
        %5882 = vperm.xlu0 %5881, %v5864
        %v5883 = vpop.permute.xlu0 %5882
        %5886 = vset.pattern.permute.xlu0 0
        %5887 = vperm.xlu0 %5886, %v5865
        %v5888 = vpop.permute.xlu0 %5887
        %5891 = vset.pattern.permute.xlu0 0
        %5892 = vperm.xlu0 %5891, %v5866
        %v5893 = vpop.permute.xlu0 %5892
        %5896 = vset.pattern.permute.xlu0 0
        %5897 = vperm.xlu0 %5896, %v5867
        %v5898 = vpop.permute.xlu0 %5897
        %5901 = vset.pattern.permute.xlu0 0
        %5902 = vperm.xlu0 %5901, %v5868
        %v5903 = vpop.permute.xlu0 %5902
        %5906 = vset.pattern.permute.xlu0 0
        %5907 = vperm.xlu0 %5906, %v5869
        %v5908 = vpop.permute.xlu0 %5907
        %5911 = vset.pattern.permute.xlu0 0
        %5912 = vperm.xlu0 %5911, %v5870
        %v5913 = vpop.permute.xlu0 %5912
        %5916 = vset.pattern.permute.xlu0 0
        %5917 = vperm.xlu0 %5916, %v5871
        %v5918 = vpop.permute.xlu0 %5917
        %5921 = vset.pattern.permute.xlu0 0
        %5922 = vperm.xlu0 %5921, %v5872
        %v5923 = vpop.permute.xlu0 %5922
        %5926 = vset.pattern.permute.xlu0 0
        %5927 = vperm.xlu0 %5926, %v5873
        %v5928 = vpop.permute.xlu0 %5927
        %5931 = vset.pattern.permute.xlu0 0
        %5932 = vperm.xlu0 %5931, %v5874
        %v5933 = vpop.permute.xlu0 %5932
        %5936 = vset.pattern.permute.xlu0 0
        %5937 = vperm.xlu0 %5936, %v5875
        %v5938 = vpop.permute.xlu0 %5937
        %5941 = vset.pattern.permute.xlu0 0
        %5942 = vperm.xlu0 %5941, %v5876
        %v5943 = vpop.permute.xlu0 %5942
        %5946 = vset.pattern.permute.xlu0 0
        %5947 = vperm.xlu0 %5946, %v5877
        %v5948 = vpop.permute.xlu0 %5947
        %5951 = vset.pattern.permute.xlu0 0
        %5952 = vperm.xlu0 %5951, %v5878
        %v5953 = vpop.permute.xlu0 %5952
        %5956 = vset.pattern.permute.xlu0 0
        %5957 = vperm.xlu0 %5956, %v5879
        %v5958 = vpop.permute.xlu0 %5957
        %v5961 = vsel %vm5569, %v5848, 0
        %v5964 = vsel %vm5569, %v5849, 0
        %v5967 = vsel %vm5569, %v5850, 0
        %v5970 = vsel %vm5569, %v5851, 0
        %v5973 = vsel %vm5569, %v5852, 0
        %v5976 = vsel %vm5569, %v5853, 0
        %v5979 = vsel %vm5569, %v5854, 0
        %v5982 = vsel %vm5569, %v5855, 0
        %v5985 = vsel %vm5569, %v5856, 0
        %v5988 = vsel %vm5569, %v5857, 0
        %v5991 = vsel %vm5569, %v5858, 0
        %v5994 = vsel %vm5569, %v5859, 0
        %v5997 = vsel %vm5569, %v5860, 0
        %v6000 = vsel %vm5569, %v5861, 0
        %v6003 = vsel %vm5569, %v5862, 0
        %v6006 = vsel %vm5569, %v5863, 0
        %6008 = vmatprep.subr.mxu0 0.0
        %6009 = vmatpush1.msra.mxu0 0.0
        %6010 = vmatprep.subr.mxu0 0.0
        %6011 = vmatpush1.msra.mxu0 0.0
        %6012 = vmatprep.subr.mxu0 0.0
        %6013 = vmatpush1.msra.mxu0 0.0
        %6014 = vmatprep.subr.mxu0 0.0
        %6015 = vmatpush1.msra.mxu0 0.0
        %6016 = vmatprep.subr.mxu0 0.0
        %6017 = vmatpush1.msra.mxu0 0.0
        %6018 = vmatprep.subr.mxu0 0.0
        %6019 = vmatpush1.msra.mxu0 0.0
        %6020 = vmatprep.subr.mxu0 0.0
        %6021 = vmatpush1.msra.mxu0 0.0
        %6022 = vmatprep.subr.mxu0 0.0
        %6023 = vmatpush1.msra.mxu0 0.0
        %6024 = vmatprep.subr.mxu0 0.0
        %6025 = vmatpush1.msra.mxu0 0.0
        %6026 = vmatprep.subr.mxu0 0.0
        %6027 = vmatpush1.msra.mxu0 0.0
        %6028 = vmatprep.subr.mxu0 0.0
        %6029 = vmatpush1.msra.mxu0 0.0
        %6030 = vmatprep.subr.mxu0 0.0
        %6031 = vmatpush1.msra.mxu0 0.0
        %6032 = vmatprep.subr.mxu0 %v5847
        %6033 = vmatpush1.msra.mxu0 %v5846
        %6034 = vmatprep.subr.mxu0 %v5845
        %6035 = vmatpush1.msra.mxu0 %v5844
        %6036 = vmatprep.subr.mxu0 %v5843
        %6037 = vmatpush1.msra.mxu0 %v5842
        %6038 = vmatprep.subr.mxu0 %v5841
        %6039 = vmatpush1.msra.mxu0 %v5840
        %6040 = vmatprep.subr.mxu0 0.0
        %6041 = vmatpush2.msra.mxu0 0.0
        %6042 = vmatprep.subr.mxu0 0.0
        %6043 = vmatpush2.msra.mxu0 0.0
        %6044 = vmatprep.subr.mxu0 0.0
        %6045 = vmatpush2.msra.mxu0 0.0
        %6046 = vmatprep.subr.mxu0 0.0
        %6047 = vmatpush2.msra.mxu0 0.0
        %6048 = vmatprep.subr.mxu0 0.0
        %6049 = vmatpush2.msra.mxu0 0.0
        %6050 = vmatprep.subr.mxu0 0.0
        %6051 = vmatpush2.msra.mxu0 0.0
        %6052 = vmatprep.subr.mxu0 0.0
        %6053 = vmatpush2.msra.mxu0 0.0
        %6054 = vmatprep.subr.mxu0 0.0
        %6055 = vmatpush2.msra.mxu0 0.0
        %6056 = vmatprep.subr.mxu0 0.0
        %6057 = vmatpush2.msra.mxu0 0.0
        %6058 = vmatprep.subr.mxu0 0.0
        %6059 = vmatpush2.msra.mxu0 0.0
        %6060 = vmatprep.subr.mxu0 0.0
        %6061 = vmatpush2.msra.mxu0 0.0
        %6062 = vmatprep.subr.mxu0 0.0
        %6063 = vmatpush2.msra.mxu0 0.0
        %6064 = vmatprep.subr.mxu0 0.0
        %6065 = vmatpush2.msra.mxu0 0.0
        %6066 = vmatprep.subr.mxu0 0.0
        %6067 = vmatpush2.msra.mxu0 0.0
        %6068 = vmatprep.subr.mxu0 0.0
        %6069 = vmatpush2.msra.mxu0 0.0
        %6070 = vmatprep.subr.mxu0 0.0
        %6071 = vmatpush2.msra.mxu0 0.0
        %6072 = vmatprep.mubr.f32.mxu0 0.0
        %6073 = vmatmul.mubr.f32.gmra.mxu0 %v5961
        %v6074 = vpop.f32.mrf.mxu0
        %v6075 = vadd.f32 %v5883, %v6074
        %v6076 = vpop.f32.mrf.mxu0
        %v6077 = vadd.f32 %v5883, %v6076
        %6078 = vmatprep.mubr.f32.mxu0 0.0
        %6079 = vmatmul.mubr.f32.gmra.mxu0 %v5964
        %v6080 = vpop.f32.mrf.mxu0
        %v6081 = vadd.f32 %v5888, %v6080
        %v6082 = vpop.f32.mrf.mxu0
        %v6083 = vadd.f32 %v5888, %v6082
        %6084 = vmatprep.mubr.f32.mxu0 0.0
        %6085 = vmatmul.mubr.f32.gmra.mxu0 %v5967
        %v6086 = vpop.f32.mrf.mxu0
        %v6087 = vadd.f32 %v5893, %v6086
        %v6088 = vpop.f32.mrf.mxu0
        %v6089 = vadd.f32 %v5893, %v6088
        %6090 = vmatprep.mubr.f32.mxu0 0.0
        %6091 = vmatmul.mubr.f32.gmra.mxu0 %v5970
        %v6092 = vpop.f32.mrf.mxu0
        %v6093 = vadd.f32 %v5898, %v6092
        %v6094 = vpop.f32.mrf.mxu0
        %v6095 = vadd.f32 %v5898, %v6094
        %6096 = vmatprep.mubr.f32.mxu0 0.0
        %6097 = vmatmul.mubr.f32.gmra.mxu0 %v5973
        %v6098 = vpop.f32.mrf.mxu0
        %v6099 = vadd.f32 %v5903, %v6098
        %v6100 = vpop.f32.mrf.mxu0
        %v6101 = vadd.f32 %v5903, %v6100
        %6102 = vmatprep.mubr.f32.mxu0 0.0
        %6103 = vmatmul.mubr.f32.gmra.mxu0 %v5976
        %v6104 = vpop.f32.mrf.mxu0
        %v6105 = vadd.f32 %v5908, %v6104
        %v6106 = vpop.f32.mrf.mxu0
        %v6107 = vadd.f32 %v5908, %v6106
        %6108 = vmatprep.mubr.f32.mxu0 0.0
        %6109 = vmatmul.mubr.f32.gmra.mxu0 %v5979
        %v6110 = vpop.f32.mrf.mxu0
        %v6111 = vadd.f32 %v5913, %v6110
        %v6112 = vpop.f32.mrf.mxu0
        %v6113 = vadd.f32 %v5913, %v6112
        %6114 = vmatprep.mubr.f32.mxu0 0.0
        %6115 = vmatmul.mubr.f32.gmra.mxu0 %v5982
        %v6116 = vpop.f32.mrf.mxu0
        %v6117 = vadd.f32 %v5918, %v6116
        %v6118 = vpop.f32.mrf.mxu0
        %v6119 = vadd.f32 %v5918, %v6118
        %6120 = vmatprep.mubr.f32.mxu0 0.0
        %6121 = vmatmul.mubr.f32.gmra.mxu0 %v5985
        %v6122 = vpop.f32.mrf.mxu0
        %v6123 = vadd.f32 %v5923, %v6122
        %v6124 = vpop.f32.mrf.mxu0
        %v6125 = vadd.f32 %v5923, %v6124
        %6126 = vmatprep.mubr.f32.mxu0 0.0
        %6127 = vmatmul.mubr.f32.gmra.mxu0 %v5988
        %v6128 = vpop.f32.mrf.mxu0
        %v6129 = vadd.f32 %v5928, %v6128
        %v6130 = vpop.f32.mrf.mxu0
        %v6131 = vadd.f32 %v5928, %v6130
        %6132 = vmatprep.mubr.f32.mxu0 0.0
        %6133 = vmatmul.mubr.f32.gmra.mxu0 %v5991
        %v6134 = vpop.f32.mrf.mxu0
        %v6135 = vadd.f32 %v5933, %v6134
        %v6136 = vpop.f32.mrf.mxu0
        %v6137 = vadd.f32 %v5933, %v6136
        %6138 = vmatprep.mubr.f32.mxu0 0.0
        %6139 = vmatmul.mubr.f32.gmra.mxu0 %v5994
        %v6140 = vpop.f32.mrf.mxu0
        %v6141 = vadd.f32 %v5938, %v6140
        %v6142 = vpop.f32.mrf.mxu0
        %v6143 = vadd.f32 %v5938, %v6142
        %6144 = vmatprep.mubr.f32.mxu0 0.0
        %6145 = vmatmul.mubr.f32.gmra.mxu0 %v5997
        %v6146 = vpop.f32.mrf.mxu0
        %v6147 = vadd.f32 %v5943, %v6146
        %v6148 = vpop.f32.mrf.mxu0
        %v6149 = vadd.f32 %v5943, %v6148
        %6150 = vmatprep.mubr.f32.mxu0 0.0
        %6151 = vmatmul.mubr.f32.gmra.mxu0 %v6000
        %v6152 = vpop.f32.mrf.mxu0
        %v6153 = vadd.f32 %v5948, %v6152
        %v6154 = vpop.f32.mrf.mxu0
        %v6155 = vadd.f32 %v5948, %v6154
        %6156 = vmatprep.mubr.f32.mxu0 0.0
        %6157 = vmatmul.mubr.f32.gmra.mxu0 %v6003
        %v6158 = vpop.f32.mrf.mxu0
        %v6159 = vadd.f32 %v5953, %v6158
        %v6160 = vpop.f32.mrf.mxu0
        %v6161 = vadd.f32 %v5953, %v6160
        %6162 = vmatprep.mubr.f32.mxu0 0.0
        %6163 = vmatmul.mubr.f32.gmra.mxu0 %v6006
        %v6164 = vpop.f32.mrf.mxu0
        %v6165 = vadd.f32 %v5958, %v6164
        %v6166 = vpop.f32.mrf.mxu0
        %v6167 = vadd.f32 %v5958, %v6166
        %6168 = vdwg.mxu0
        %v6169 = vmul.f32 %v6075, 0.5
        %v6170 = vmul.f32 %v6077, 0.5
        %v6171 = vmul.f32 %v6081, 0.5
        %v6172 = vmul.f32 %v6083, 0.5
        %v6173 = vmul.f32 %v6087, 0.5
        %v6174 = vmul.f32 %v6089, 0.5
        %v6175 = vmul.f32 %v6093, 0.5
        %v6176 = vmul.f32 %v6095, 0.5
        %v6177 = vmul.f32 %v6099, 0.5
        %v6178 = vmul.f32 %v6101, 0.5
        %v6179 = vmul.f32 %v6105, 0.5
        %v6180 = vmul.f32 %v6107, 0.5
        %v6181 = vmul.f32 %v6111, 0.5
        %v6182 = vmul.f32 %v6113, 0.5
        %v6183 = vmul.f32 %v6117, 0.5
        %v6184 = vmul.f32 %v6119, 0.5
        %v6185 = vmul.f32 %v6123, 0.5
        %v6186 = vmul.f32 %v6125, 0.5
        %v6187 = vmul.f32 %v6129, 0.5
        %v6188 = vmul.f32 %v6131, 0.5
        %v6189 = vmul.f32 %v6135, 0.5
        %v6190 = vmul.f32 %v6137, 0.5
        %v6191 = vmul.f32 %v6141, 0.5
        %v6192 = vmul.f32 %v6143, 0.5
        %v6193 = vmul.f32 %v6147, 0.5
        %v6194 = vmul.f32 %v6149, 0.5
        %v6195 = vmul.f32 %v6153, 0.5
        %v6196 = vmul.f32 %v6155, 0.5
        %v6197 = vmul.f32 %v6159, 0.5
        %v6198 = vmul.f32 %v6161, 0.5
        %v6199 = vmul.f32 %v6165, 0.5
        %v6200 = vmul.f32 %v6167, 0.5
        %v6201 = vmul.f32 %v6075, 0.044715
        %v6202 = vmul.f32 %v6077, 0.044715
        %v6203 = vmul.f32 %v6081, 0.044715
        %v6204 = vmul.f32 %v6083, 0.044715
        %v6205 = vmul.f32 %v6087, 0.044715
        %v6206 = vmul.f32 %v6089, 0.044715
        %v6207 = vmul.f32 %v6093, 0.044715
        %v6208 = vmul.f32 %v6095, 0.044715
        %v6209 = vmul.f32 %v6099, 0.044715
        %v6210 = vmul.f32 %v6101, 0.044715
        %v6211 = vmul.f32 %v6105, 0.044715
        %v6212 = vmul.f32 %v6107, 0.044715
        %v6213 = vmul.f32 %v6111, 0.044715
        %v6214 = vmul.f32 %v6113, 0.044715
        %v6215 = vmul.f32 %v6117, 0.044715
        %v6216 = vmul.f32 %v6119, 0.044715
        %v6217 = vmul.f32 %v6123, 0.044715
        %v6218 = vmul.f32 %v6125, 0.044715
        %v6219 = vmul.f32 %v6129, 0.044715
        %v6220 = vmul.f32 %v6131, 0.044715
        %v6221 = vmul.f32 %v6135, 0.044715
        %v6222 = vmul.f32 %v6137, 0.044715
        %v6223 = vmul.f32 %v6141, 0.044715
        %v6224 = vmul.f32 %v6143, 0.044715
        %v6225 = vmul.f32 %v6147, 0.044715
        %v6226 = vmul.f32 %v6149, 0.044715
        %v6227 = vmul.f32 %v6153, 0.044715
        %v6228 = vmul.f32 %v6155, 0.044715
        %v6229 = vmul.f32 %v6159, 0.044715
        %v6230 = vmul.f32 %v6161, 0.044715
        %v6231 = vmul.f32 %v6165, 0.044715
        %v6232 = vmul.f32 %v6167, 0.044715
        %v6233 = vmul.f32 %v6201, %v6075
        %v6234 = vmul.f32 %v6202, %v6077
        %v6235 = vmul.f32 %v6203, %v6081
        %v6236 = vmul.f32 %v6204, %v6083
        %v6237 = vmul.f32 %v6205, %v6087
        %v6238 = vmul.f32 %v6206, %v6089
        %v6239 = vmul.f32 %v6207, %v6093
        %v6240 = vmul.f32 %v6208, %v6095
        %v6241 = vmul.f32 %v6209, %v6099
        %v6242 = vmul.f32 %v6210, %v6101
        %v6243 = vmul.f32 %v6211, %v6105
        %v6244 = vmul.f32 %v6212, %v6107
        %v6245 = vmul.f32 %v6213, %v6111
        %v6246 = vmul.f32 %v6214, %v6113
        %v6247 = vmul.f32 %v6215, %v6117
        %v6248 = vmul.f32 %v6216, %v6119
        %v6249 = vmul.f32 %v6217, %v6123
        %v6250 = vmul.f32 %v6218, %v6125
        %v6251 = vmul.f32 %v6219, %v6129
        %v6252 = vmul.f32 %v6220, %v6131
        %v6253 = vmul.f32 %v6221, %v6135
        %v6254 = vmul.f32 %v6222, %v6137
        %v6255 = vmul.f32 %v6223, %v6141
        %v6256 = vmul.f32 %v6224, %v6143
        %v6257 = vmul.f32 %v6225, %v6147
        %v6258 = vmul.f32 %v6226, %v6149
        %v6259 = vmul.f32 %v6227, %v6153
        %v6260 = vmul.f32 %v6228, %v6155
        %v6261 = vmul.f32 %v6229, %v6159
        %v6262 = vmul.f32 %v6230, %v6161
        %v6263 = vmul.f32 %v6231, %v6165
        %v6264 = vmul.f32 %v6232, %v6167
        %v6265 = vmul.f32 %v6233, %v6075
        %v6266 = vmul.f32 %v6234, %v6077
        %v6267 = vmul.f32 %v6235, %v6081
        %v6268 = vmul.f32 %v6236, %v6083
        %v6269 = vmul.f32 %v6237, %v6087
        %v6270 = vmul.f32 %v6238, %v6089
        %v6271 = vmul.f32 %v6239, %v6093
        %v6272 = vmul.f32 %v6240, %v6095
        %v6273 = vmul.f32 %v6241, %v6099
        %v6274 = vmul.f32 %v6242, %v6101
        %v6275 = vmul.f32 %v6243, %v6105
        %v6276 = vmul.f32 %v6244, %v6107
        %v6277 = vmul.f32 %v6245, %v6111
        %v6278 = vmul.f32 %v6246, %v6113
        %v6279 = vmul.f32 %v6247, %v6117
        %v6280 = vmul.f32 %v6248, %v6119
        %v6281 = vmul.f32 %v6249, %v6123
        %v6282 = vmul.f32 %v6250, %v6125
        %v6283 = vmul.f32 %v6251, %v6129
        %v6284 = vmul.f32 %v6252, %v6131
        %v6285 = vmul.f32 %v6253, %v6135
        %v6286 = vmul.f32 %v6254, %v6137
        %v6287 = vmul.f32 %v6255, %v6141
        %v6288 = vmul.f32 %v6256, %v6143
        %v6289 = vmul.f32 %v6257, %v6147
        %v6290 = vmul.f32 %v6258, %v6149
        %v6291 = vmul.f32 %v6259, %v6153
        %v6292 = vmul.f32 %v6260, %v6155
        %v6293 = vmul.f32 %v6261, %v6159
        %v6294 = vmul.f32 %v6262, %v6161
        %v6295 = vmul.f32 %v6263, %v6165
        %v6296 = vmul.f32 %v6264, %v6167
        %v6297 = vadd.f32 %v6075, %v6265
        %v6298 = vadd.f32 %v6077, %v6266
        %v6299 = vadd.f32 %v6081, %v6267
        %v6300 = vadd.f32 %v6083, %v6268
        %v6301 = vadd.f32 %v6087, %v6269
        %v6302 = vadd.f32 %v6089, %v6270
        %v6303 = vadd.f32 %v6093, %v6271
        %v6304 = vadd.f32 %v6095, %v6272
        %v6305 = vadd.f32 %v6099, %v6273
        %v6306 = vadd.f32 %v6101, %v6274
        %v6307 = vadd.f32 %v6105, %v6275
        %v6308 = vadd.f32 %v6107, %v6276
        %v6309 = vadd.f32 %v6111, %v6277
        %v6310 = vadd.f32 %v6113, %v6278
        %v6311 = vadd.f32 %v6117, %v6279
        %v6312 = vadd.f32 %v6119, %v6280
        %v6313 = vadd.f32 %v6123, %v6281
        %v6314 = vadd.f32 %v6125, %v6282
        %v6315 = vadd.f32 %v6129, %v6283
        %v6316 = vadd.f32 %v6131, %v6284
        %v6317 = vadd.f32 %v6135, %v6285
        %v6318 = vadd.f32 %v6137, %v6286
        %v6319 = vadd.f32 %v6141, %v6287
        %v6320 = vadd.f32 %v6143, %v6288
        %v6321 = vadd.f32 %v6147, %v6289
        %v6322 = vadd.f32 %v6149, %v6290
        %v6323 = vadd.f32 %v6153, %v6291
        %v6324 = vadd.f32 %v6155, %v6292
        %v6325 = vadd.f32 %v6159, %v6293
        %v6326 = vadd.f32 %v6161, %v6294
        %v6327 = vadd.f32 %v6165, %v6295
        %v6328 = vadd.f32 %v6167, %v6296
        %v6329 = vmul.f32 %v6297, 0.7978846
        %v6330 = vmul.f32 %v6298, 0.7978846
        %v6331 = vmul.f32 %v6299, 0.7978846
        %v6332 = vmul.f32 %v6300, 0.7978846
        %v6333 = vmul.f32 %v6301, 0.7978846
        %v6334 = vmul.f32 %v6302, 0.7978846
        %v6335 = vmul.f32 %v6303, 0.7978846
        %v6336 = vmul.f32 %v6304, 0.7978846
        %v6337 = vmul.f32 %v6305, 0.7978846
        %v6338 = vmul.f32 %v6306, 0.7978846
        %v6339 = vmul.f32 %v6307, 0.7978846
        %v6340 = vmul.f32 %v6308, 0.7978846
        %v6341 = vmul.f32 %v6309, 0.7978846
        %v6342 = vmul.f32 %v6310, 0.7978846
        %v6343 = vmul.f32 %v6311, 0.7978846
        %v6344 = vmul.f32 %v6312, 0.7978846
        %v6345 = vmul.f32 %v6313, 0.7978846
        %v6346 = vmul.f32 %v6314, 0.7978846
        %v6347 = vmul.f32 %v6315, 0.7978846
        %v6348 = vmul.f32 %v6316, 0.7978846
        %v6349 = vmul.f32 %v6317, 0.7978846
        %v6350 = vmul.f32 %v6318, 0.7978846
        %v6351 = vmul.f32 %v6319, 0.7978846
        %v6352 = vmul.f32 %v6320, 0.7978846
        %v6353 = vmul.f32 %v6321, 0.7978846
        %v6354 = vmul.f32 %v6322, 0.7978846
        %v6355 = vmul.f32 %v6323, 0.7978846
        %v6356 = vmul.f32 %v6324, 0.7978846
        %v6357 = vmul.f32 %v6325, 0.7978846
        %v6358 = vmul.f32 %v6326, 0.7978846
        %v6359 = vmul.f32 %v6327, 0.7978846
        %v6360 = vmul.f32 %v6328, 0.7978846
        %v6361 = vtanh.pop %v6329
        %v6362 = vtanh.pop %v6330
        %v6363 = vtanh.pop %v6331
        %v6364 = vtanh.pop %v6332
        %v6365 = vtanh.pop %v6333
        %v6366 = vtanh.pop %v6334
        %v6367 = vtanh.pop %v6335
        %v6368 = vtanh.pop %v6336
        %v6369 = vtanh.pop %v6337
        %v6370 = vtanh.pop %v6338
        %v6371 = vtanh.pop %v6339
        %v6372 = vtanh.pop %v6340
        %v6373 = vtanh.pop %v6341
        %v6374 = vtanh.pop %v6342
        %v6375 = vtanh.pop %v6343
        %v6376 = vtanh.pop %v6344
        %v6377 = vtanh.pop %v6345
        %v6378 = vtanh.pop %v6346
        %v6379 = vtanh.pop %v6347
        %v6380 = vtanh.pop %v6348
        %v6381 = vtanh.pop %v6349
        %v6382 = vtanh.pop %v6350
        %v6383 = vtanh.pop %v6351
        %v6384 = vtanh.pop %v6352
        %v6385 = vtanh.pop %v6353
        %v6386 = vtanh.pop %v6354
        %v6387 = vtanh.pop %v6355
        %v6388 = vtanh.pop %v6356
        %v6389 = vtanh.pop %v6357
        %v6390 = vtanh.pop %v6358
        %v6391 = vtanh.pop %v6359
        %v6392 = vtanh.pop %v6360
        %v6393 = vadd.f32 %v6361, 1.0
        %v6394 = vadd.f32 %v6362, 1.0
        %v6395 = vadd.f32 %v6363, 1.0
        %v6396 = vadd.f32 %v6364, 1.0
        %v6397 = vadd.f32 %v6365, 1.0
        %v6398 = vadd.f32 %v6366, 1.0
        %v6399 = vadd.f32 %v6367, 1.0
        %v6400 = vadd.f32 %v6368, 1.0
        %v6401 = vadd.f32 %v6369, 1.0
        %v6402 = vadd.f32 %v6370, 1.0
        %v6403 = vadd.f32 %v6371, 1.0
        %v6404 = vadd.f32 %v6372, 1.0
        %v6405 = vadd.f32 %v6373, 1.0
        %v6406 = vadd.f32 %v6374, 1.0
        %v6407 = vadd.f32 %v6375, 1.0
        %v6408 = vadd.f32 %v6376, 1.0
        %v6409 = vadd.f32 %v6377, 1.0
        %v6410 = vadd.f32 %v6378, 1.0
        %v6411 = vadd.f32 %v6379, 1.0
        %v6412 = vadd.f32 %v6380, 1.0
        %v6413 = vadd.f32 %v6381, 1.0
        %v6414 = vadd.f32 %v6382, 1.0
        %v6415 = vadd.f32 %v6383, 1.0
        %v6416 = vadd.f32 %v6384, 1.0
        %v6417 = vadd.f32 %v6385, 1.0
        %v6418 = vadd.f32 %v6386, 1.0
        %v6419 = vadd.f32 %v6387, 1.0
        %v6420 = vadd.f32 %v6388, 1.0
        %v6421 = vadd.f32 %v6389, 1.0
        %v6422 = vadd.f32 %v6390, 1.0
        %v6423 = vadd.f32 %v6391, 1.0
        %v6424 = vadd.f32 %v6392, 1.0
        %v6425 = vmul.f32 %v6169, %v6393
        %v6426 = vmul.f32 %v6170, %v6394
        %v6427 = vmul.f32 %v6171, %v6395
        %v6428 = vmul.f32 %v6172, %v6396
        %v6429 = vmul.f32 %v6173, %v6397
        %v6430 = vmul.f32 %v6174, %v6398
        %v6431 = vmul.f32 %v6175, %v6399
        %v6432 = vmul.f32 %v6176, %v6400
        %v6433 = vmul.f32 %v6177, %v6401
        %v6434 = vmul.f32 %v6178, %v6402
        %v6435 = vmul.f32 %v6179, %v6403
        %v6436 = vmul.f32 %v6180, %v6404
        %v6437 = vmul.f32 %v6181, %v6405
        %v6438 = vmul.f32 %v6182, %v6406
        %v6439 = vmul.f32 %v6183, %v6407
        %v6440 = vmul.f32 %v6184, %v6408
        %v6441 = vmul.f32 %v6185, %v6409
        %v6442 = vmul.f32 %v6186, %v6410
        %v6443 = vmul.f32 %v6187, %v6411
        %v6444 = vmul.f32 %v6188, %v6412
        %v6445 = vmul.f32 %v6189, %v6413
        %v6446 = vmul.f32 %v6190, %v6414
        %v6447 = vmul.f32 %v6191, %v6415
        %v6448 = vmul.f32 %v6192, %v6416
        %v6449 = vmul.f32 %v6193, %v6417
        %v6450 = vmul.f32 %v6194, %v6418
        %v6451 = vmul.f32 %v6195, %v6419
        %v6452 = vmul.f32 %v6196, %v6420
        %v6453 = vmul.f32 %v6197, %v6421
        %v6454 = vmul.f32 %v6198, %v6422
        %v6455 = vmul.f32 %v6199, %v6423
        %v6456 = vmul.f32 %v6200, %v6424
        %v6457 = vld [vmem:[#allocation18] sm:$0xff]
        %v6458 = vld [vmem:[#allocation18 + $0x8] sm:$0xff]
        %v6459 = vld [vmem:[#allocation18 + $0x10] sm:$0xff]
        %v6460 = vld [vmem:[#allocation18 + $0x18] sm:$0xff]
        %v6461 = vld [vmem:[%s24] sm:$0xff]
        %v6462 = vld [vmem:[%s24 + $0x8] sm:$0xff]
        %v6463 = vld [vmem:[%s24 + $0x10] sm:$0xff]
        %v6464 = vld [vmem:[%s24 + $0x18] sm:$0xff]
        %6466 = vset.pattern.permute.xlu0 0
        %6467 = vperm.xlu0 %6466, %v6461
        %v6468 = vpop.permute.xlu0 %6467
        %6471 = vset.pattern.permute.xlu0 0
        %6472 = vperm.xlu0 %6471, %v6462
        %v6473 = vpop.permute.xlu0 %6472
        %6476 = vset.pattern.permute.xlu0 0
        %6477 = vperm.xlu0 %6476, %v6463
        %v6478 = vpop.permute.xlu0 %6477
        %6481 = vset.pattern.permute.xlu0 0
        %6482 = vperm.xlu0 %6481, %v6464
        %v6483 = vpop.permute.xlu0 %6482
        %6485 = vmatprep.subr.mxu0 %v6456
        %6486 = vmatpush1.msra.mxu0 %v6455
        %6487 = vmatprep.subr.mxu0 %v6454
        %6488 = vmatpush1.msra.mxu0 %v6453
        %6489 = vmatprep.subr.mxu0 %v6452
        %6490 = vmatpush1.msra.mxu0 %v6451
        %6491 = vmatprep.subr.mxu0 %v6450
        %6492 = vmatpush1.msra.mxu0 %v6449
        %6493 = vmatprep.subr.mxu0 %v6448
        %6494 = vmatpush1.msra.mxu0 %v6447
        %6495 = vmatprep.subr.mxu0 %v6446
        %6496 = vmatpush1.msra.mxu0 %v6445
        %6497 = vmatprep.subr.mxu0 %v6444
        %6498 = vmatpush1.msra.mxu0 %v6443
        %6499 = vmatprep.subr.mxu0 %v6442
        %6500 = vmatpush1.msra.mxu0 %v6441
        %6501 = vmatprep.subr.mxu0 %v6440
        %6502 = vmatpush1.msra.mxu0 %v6439
        %6503 = vmatprep.subr.mxu0 %v6438
        %6504 = vmatpush1.msra.mxu0 %v6437
        %6505 = vmatprep.subr.mxu0 %v6436
        %6506 = vmatpush1.msra.mxu0 %v6435
        %6507 = vmatprep.subr.mxu0 %v6434
        %6508 = vmatpush1.msra.mxu0 %v6433
        %6509 = vmatprep.subr.mxu0 %v6432
        %6510 = vmatpush1.msra.mxu0 %v6431
        %6511 = vmatprep.subr.mxu0 %v6430
        %6512 = vmatpush1.msra.mxu0 %v6429
        %6513 = vmatprep.subr.mxu0 %v6428
        %6514 = vmatpush1.msra.mxu0 %v6427
        %6515 = vmatprep.subr.mxu0 %v6426
        %6516 = vmatpush1.msra.mxu0 %v6425
        %6517 = vmatprep.subr.mxu0 0.0
        %6518 = vmatpush2.msra.mxu0 0.0
        %6519 = vmatprep.subr.mxu0 0.0
        %6520 = vmatpush2.msra.mxu0 0.0
        %6521 = vmatprep.subr.mxu0 0.0
        %6522 = vmatpush2.msra.mxu0 0.0
        %6523 = vmatprep.subr.mxu0 0.0
        %6524 = vmatpush2.msra.mxu0 0.0
        %6525 = vmatprep.subr.mxu0 0.0
        %6526 = vmatpush2.msra.mxu0 0.0
        %6527 = vmatprep.subr.mxu0 0.0
        %6528 = vmatpush2.msra.mxu0 0.0
        %6529 = vmatprep.subr.mxu0 0.0
        %6530 = vmatpush2.msra.mxu0 0.0
        %6531 = vmatprep.subr.mxu0 0.0
        %6532 = vmatpush2.msra.mxu0 0.0
        %6533 = vmatprep.subr.mxu0 0.0
        %6534 = vmatpush2.msra.mxu0 0.0
        %6535 = vmatprep.subr.mxu0 0.0
        %6536 = vmatpush2.msra.mxu0 0.0
        %6537 = vmatprep.subr.mxu0 0.0
        %6538 = vmatpush2.msra.mxu0 0.0
        %6539 = vmatprep.subr.mxu0 0.0
        %6540 = vmatpush2.msra.mxu0 0.0
        %6541 = vmatprep.subr.mxu0 0.0
        %6542 = vmatpush2.msra.mxu0 0.0
        %6543 = vmatprep.subr.mxu0 0.0
        %6544 = vmatpush2.msra.mxu0 0.0
        %6545 = vmatprep.subr.mxu0 0.0
        %6546 = vmatpush2.msra.mxu0 0.0
        %6547 = vmatprep.subr.mxu0 0.0
        %6548 = vmatpush2.msra.mxu0 0.0
        %6549 = vmatprep.mubr.f32.mxu0 0.0
        %6550 = vmatmul.mubr.f32.gmra.mxu0 %v6457
        %v6551 = vpop.f32.mrf.mxu0
        %v6552 = vadd.f32 %v6468, %v6551
        %v6553 = vpop.f32.mrf.mxu0
        %v6554 = vadd.f32 %v6468, %v6553
        %6555 = vmatprep.mubr.f32.mxu0 0.0
        %6556 = vmatmul.mubr.f32.gmra.mxu0 %v6458
        %v6557 = vpop.f32.mrf.mxu0
        %v6558 = vadd.f32 %v6473, %v6557
        %v6559 = vpop.f32.mrf.mxu0
        %v6560 = vadd.f32 %v6473, %v6559
        %6561 = vmatprep.mubr.f32.mxu0 0.0
        %6562 = vmatmul.mubr.f32.gmra.mxu0 %v6459
        %v6563 = vpop.f32.mrf.mxu0
        %v6564 = vadd.f32 %v6478, %v6563
        %v6565 = vpop.f32.mrf.mxu0
        %v6566 = vadd.f32 %v6478, %v6565
        %6567 = vmatprep.mubr.f32.mxu0 0.0
        %6568 = vmatmul.mubr.f32.gmra.mxu0 %v6460
        %v6569 = vpop.f32.mrf.mxu0
        %v6570 = vadd.f32 %v6483, %v6569
        %v6571 = vpop.f32.mrf.mxu0
        %v6572 = vadd.f32 %v6483, %v6571
        %6573 = vdwg.mxu0
        %v6574 = vadd.f32 %v5840, %v6552
        %v6575 = vadd.f32 %v5841, %v6554
        %v6576 = vadd.f32 %v5842, %v6558
        %v6577 = vadd.f32 %v5843, %v6560
        %v6578 = vadd.f32 %v5844, %v6564
        %v6579 = vadd.f32 %v5845, %v6566
        %v6580 = vadd.f32 %v5846, %v6570
        %v6581 = vadd.f32 %v5847, %v6572
        %6582 = vst [vmem:[%s924] sm:$0xff] %v6574
        %6583 = vst [vmem:[%s924 + $0x8] sm:$0xff] %v6575
        %6584 = vst [vmem:[%s924 + $0x10] sm:$0xff] %v6576
        %6585 = vst [vmem:[%s924 + $0x18] sm:$0xff] %v6577
        %6586 = vst [vmem:[%s924 + $0x20] sm:$0xff] %v6578
        %6587 = vst [vmem:[%s924 + $0x28] sm:$0xff] %v6579
        %6588 = vst [vmem:[%s924 + $0x30] sm:$0xff] %v6580
        %6589 = vst [vmem:[%s924 + $0x38] sm:$0xff] %v6581
        %p6590 = scmp.lt.s32.totalorder %s42, 1
        %s6591 = scalar_select %p6590, %s42, 1
        %s6592 = smul.addr %s6591, 8
        %s6593 = smul.addr %s6592, 8
        %s6594 = scalar_lea.vmem %s25, %s6593
        // Predicated region
        $region165: #{msca_block_forward.1} parent=119 // pred_check
          %p6595 = pneg %p590
        $region166: #{msca_block_forward.1} parent=119 // pred_check_branch
          %6597 = sbr.rel (%p6595) target = $region168
        $region167: #{msca_block_forward.1} parent=119 // pred_region
          _
        $region168: #{msca_block_forward.1} parent=119 // pred_fallthru
          _
      $region120: #{msca_block_forward.1} parent=5 // pred_fallthru
        _
      %p6598 = scmp.le.s32.totalorder 2, %s37
      // Predicated region
      $region169: #{msca_block_forward.1} parent=5 // pred_check
        %p6599 = pneg %p6598
      $region170: #{msca_block_forward.1} parent=5 // pred_check_branch
        %6601 = sbr.rel (%p6599) target = $region172
      $region171: #{msca_block_forward.1} parent=5 // pred_region
        %s6602 = ssub.s32 %s37, 2
        // Predicated region
        $region173: #{msca_block_forward.1} parent=171 // pred_check
          %p6603 = pneg %p596
        $region174: #{msca_block_forward.1} parent=171 // pred_check_branch
          %6605 = sbr.rel (%p6603) target = $region176
        $region175: #{msca_block_forward.1} parent=171 // pred_region
          %p6606 = scmp.lt.s32.totalorder %s43, 1
          %s6607 = scalar_select %p6606, %s43, 1
          %s6608 = smul.addr %s6607, 8
          %s6609 = smul.addr %s6608, 8
          %s6610 = scalar_lea.vmem %s25, %s6609
        $region176: #{msca_block_forward.1} parent=171 // pred_fallthru
          _
      $region172: #{msca_block_forward.1} parent=5 // pred_fallthru
        _
    $region6: #{msca_block_forward.1} parent=1 // loop_footer
      %s41 = sadd.s32 1, %s37
    $region7: #{msca_block_forward.1} parent=1 // loop_footer_branch
      %36 = sbr.rel target = $region3
    $region8: #{msca_block_forward.1} parent=1 // loop_exit
      _
    %6611 = vsyncpa [#allocation3], 1
    %s6612 = scalar_lea.sflag [#allocation3], 1
    %6613 = vsyncpa %s6612, 1
    %6614 = vsyncpa [#allocation5], 1
    %6615 = vsyncpa [#allocation8], 1
    %6616 = vsyncpa [#allocation11], 1
    %6617 = vsyncpa [#allocation14], 1
    %6618 = vsyncpa [#allocation17], 1

</llo_original>
